<compile_context>
chip_gen: v7x
topology: tpu7x:2x2x1
jax: 0.10.0
libtpu: 0.0.40
codegen_flags: <defaults>
</compile_context>

<pallas_src>
import functools
import math

import jax
import jax.numpy as jnp
from jax.experimental import pallas as pl
from jax.experimental.pallas import tpu as pltpu

EPS = 1e-5
VMEM_LIMIT = 32 * 1024 * 1024      # fits v5e / v6e / v7x scoped-VMEM budgets
MAX_TM = 256                       # M-tile rows (multiple of 8)


def _choose_tm(m):
    """Largest M-tile <= MAX_TM that evenly divides m (multiple of 8 when tiling)."""
    if m <= MAX_TM:
        return m
    for tm in range(MAX_TM, 0, -8):
        if m % tm == 0:
            return tm
    return m


# ----------------------------------------------------------------------------
# Pallas kernels
# ----------------------------------------------------------------------------
def _gemm_stats_kernel(a_ref, b_ref, o_ref, sum_ref, sq_ref):
    """bf16 GEMM tile, f32 accumulation, fused per-channel BN-stat partials."""
    acc = jnp.dot(a_ref[...], b_ref[...], preferred_element_type=jnp.float32)
    o_ref[...] = acc
    sum_ref[...] = jnp.sum(acc, axis=0, keepdims=True)[None]        # (1,1,C)
    sq_ref[...] = jnp.sum(acc * acc, axis=0, keepdims=True)[None]   # (1,1,C)


def _affine_kernel(relu, x_ref, s_ref, b_ref, o_ref):
    y = x_ref[...] * s_ref[...] + b_ref[...]
    if relu:
        y = jnp.maximum(y, 0.0)
    o_ref[...] = y


def _affine_res_kernel(relu, x_ref, s_ref, b_ref, r_ref, o_ref):
    y = x_ref[...] * s_ref[...] + b_ref[...] + r_ref[...]
    if relu:
        y = jnp.maximum(y, 0.0)
    o_ref[...] = y


def _affine_res_affine_kernel(relu, x_ref, s_ref, b_ref, r_ref, rs_ref, rb_ref,
                              o_ref):
    y = (x_ref[...] * s_ref[...] + b_ref[...]
         + r_ref[...] * rs_ref[...] + rb_ref[...])
    if relu:
        y = jnp.maximum(y, 0.0)
    o_ref[...] = y


def _head_kernel(x_ref, w_ref, b_ref, o_ref):
    pooled = jnp.mean(x_ref[...], axis=1)                           # [N, C]
    o_ref[...] = (jnp.dot(pooled, w_ref[...],
                          preferred_element_type=jnp.float32) + b_ref[...])


# ----------------------------------------------------------------------------
# Shape-memoized pallas_call builders
# ----------------------------------------------------------------------------
@functools.lru_cache(maxsize=None)
def _gemm_stats_call(M, K, N, tm):
    g = M // tm
    return pl.pallas_call(
        _gemm_stats_kernel,
        grid=(g,),
        in_specs=[pl.BlockSpec((tm, K), lambda i: (i, 0)),
                  pl.BlockSpec((K, N), lambda i: (0, 0))],
        out_specs=[pl.BlockSpec((tm, N), lambda i: (i, 0)),
                   pl.BlockSpec((1, 1, N), lambda i: (i, 0, 0)),
                   pl.BlockSpec((1, 1, N), lambda i: (i, 0, 0))],
        out_shape=(jax.ShapeDtypeStruct((M, N), jnp.float32),
                   jax.ShapeDtypeStruct((g, 1, N), jnp.float32),
                   jax.ShapeDtypeStruct((g, 1, N), jnp.float32)),
        compiler_params=pltpu.CompilerParams(
            dimension_semantics=("parallel",),
            vmem_limit_bytes=VMEM_LIMIT),
    )


@functools.lru_cache(maxsize=None)
def _affine_call(M, C, tm, relu, mode):
    g = M // tm
    x_spec = pl.BlockSpec((tm, C), lambda i: (i, 0))
    v_spec = pl.BlockSpec((1, C), lambda i: (0, 0))
    if mode == "plain":
        kernel = functools.partial(_affine_kernel, relu)
        in_specs = [x_spec, v_spec, v_spec]
    elif mode == "res":
        kernel = functools.partial(_affine_res_kernel, relu)
        in_specs = [x_spec, v_spec, v_spec, x_spec]
    elif mode == "res_affine":
        kernel = functools.partial(_affine_res_affine_kernel, relu)
        in_specs = [x_spec, v_spec, v_spec, x_spec, v_spec, v_spec]
    else:
        raise ValueError(mode)
    return pl.pallas_call(
        kernel,
        grid=(g,),
        in_specs=in_specs,
        out_specs=x_spec,
        out_shape=jax.ShapeDtypeStruct((M, C), jnp.float32),
        input_output_aliases={0: 0},     # write result in place over GEMM out
        compiler_params=pltpu.CompilerParams(
            dimension_semantics=("parallel",),
            vmem_limit_bytes=VMEM_LIMIT),
    )


@functools.lru_cache(maxsize=None)
def _head_call(N, HW, C, num_classes):
    return pl.pallas_call(
        _head_kernel,
        grid=(1,),
        in_specs=[pl.BlockSpec((N, HW, C), lambda i: (0, 0, 0)),
                  pl.BlockSpec((C, num_classes), lambda i: (0, 0)),
                  pl.BlockSpec((1, num_classes), lambda i: (0, 0))],
        out_specs=pl.BlockSpec((N, num_classes), lambda i: (0, 0)),
        out_shape=jax.ShapeDtypeStruct((N, num_classes), jnp.float32),
        compiler_params=pltpu.CompilerParams(
            dimension_semantics=("arbitrary",),
            vmem_limit_bytes=VMEM_LIMIT),
    )


# ----------------------------------------------------------------------------
# Thin wrappers / glue
# ----------------------------------------------------------------------------
def conv_gemm_stats(pmat_bf16, wmat_bf16):
    M, K = pmat_bf16.shape
    N = wmat_bf16.shape[1]
    tm = _choose_tm(M)
    y, sums, sqs = _gemm_stats_call(M, K, N, tm)(pmat_bf16, wmat_bf16)
    return y, sums, sqs, tm


def bn_scale_shift(sums, sqs, m_rows, gamma, beta):
    """Training-mode BN: biased batch stats, all math in f32."""
    total = jnp.sum(sums, axis=(0, 1))
    total_sq = jnp.sum(sqs, axis=(0, 1))
    mean = total / m_rows
    var = jnp.maximum(total_sq / m_rows - mean * mean, 0.0)
    scale = gamma * jax.lax.rsqrt(var + EPS)
    shift = beta - mean * scale
    return scale.reshape(1, -1), shift.reshape(1, -1)


def conv3x3_patches(x, stride):
    """NHWC x -> bf16 patch matrix [N*Ho*Wo, 9*Cin] (pad=1, no bias)."""
    N, H, W, Cin = x.shape
    Ho = (H + 2 - 3) // stride + 1
    Wo = (W + 2 - 3) // stride + 1
    xp = jnp.pad(x, ((0, 0), (1, 1), (1, 1), (0, 0))).astype(jnp.bfloat16)
    cols = []
    for kh in range(3):
        for kw in range(3):
            cols.append(xp[:, kh: kh + (Ho - 1) * stride + 1: stride,
                           kw: kw + (Wo - 1) * stride + 1: stride, :])
    pmat = jnp.stack(cols, axis=3).reshape(N * Ho * Wo, 9 * Cin)
    return pmat, (N, Ho, Wo)


def w3x3_mat(w):
    """torch layout [Cout, Cin, 3, 3] -> bf16 [9*Cin, Cout] (kh, kw, cin order)."""
    cout = w.shape[0]
    return jnp.transpose(w, (2, 3, 1, 0)).reshape(-1, cout).astype(jnp.bfloat16)


def conv3x3_bn(x, w, gamma, beta, stride):
    """Fused conv3x3 GEMM + BN stats; returns (y2d, scale, shift, tm, (n,ho,wo))."""
    pmat, (n, ho, wo) = conv3x3_patches(x, stride)
    y, sums, sqs, tm = conv_gemm_stats(pmat, w3x3_mat(w))
    scale, shift = bn_scale_shift(sums, sqs, pmat.shape[0], gamma, beta)
    return y, scale, shift, tm, (n, ho, wo)


# ----------------------------------------------------------------------------
# ResNet18 parameters + forward
# ----------------------------------------------------------------------------
def _conv_init(key, cout, cin, k):
    fan_in = cin * k * k
    return (jax.random.normal(key, (cout, cin, k, k), jnp.float32)
            * math.sqrt(2.0 / fan_in))


def make_params(key, base_width=16, num_classes=10):
    keys = iter(jax.random.split(key, 64))
    params = {
        "conv1_w": _conv_init(next(keys), base_width, 3, 3),
        "bn1_g": jnp.ones((base_width,), jnp.float32),
        "bn1_b": jnp.zeros((base_width,), jnp.float32),
    }
    in_planes = base_width
    for li, (mult, stride0) in enumerate([(1, 1), (2, 2), (4, 2), (8, 2)]):
        planes = base_width * mult
        blocks = []
        for stride in (stride0, 1):
            bp = {
                "stride": stride,
                "conv1_w": _conv_init(next(keys), planes, in_planes, 3),
                "bn1_g": jnp.ones((planes,), jnp.float32),
                "bn1_b": jnp.zeros((planes,), jnp.float32),
                "conv2_w": _conv_init(next(keys), planes, planes, 3),
                "bn2_g": jnp.ones((planes,), jnp.float32),
                "bn2_b": jnp.zeros((planes,), jnp.float32),
            }
            if stride != 1 or in_planes != planes:
                bp["sc_w"] = _conv_init(next(keys), planes, in_planes, 1)
                bp["sc_g"] = jnp.ones((planes,), jnp.float32)
                bp["sc_b"] = jnp.zeros((planes,), jnp.float32)
            blocks.append(bp)
            in_planes = planes
        params[f"layer{li + 1}"] = blocks
    params["fc_w"] = (jax.random.normal(next(keys),
                                        (num_classes, in_planes, 1, 1),
                                        jnp.float32)
                      * (1.0 / math.sqrt(in_planes)))
    params["fc_b"] = jnp.zeros((num_classes,), jnp.float32)
    return params


def basic_block(x, p):
    """out = relu(bn2(conv2(relu(bn1(conv1(x))))) + shortcut(x)); NHWC in/out."""
    stride = p["stride"]
    planes = p["conv1_w"].shape[0]

    # conv1 + bn1 + relu  (2 pallas_calls: fused GEMM/stats, fused affine)
    y1, s1, b1, tm, (n, ho, wo) = conv3x3_bn(
        x, p["conv1_w"], p["bn1_g"], p["bn1_b"], stride)
    M = y1.shape[0]
    h2d = _affine_call(M, planes, tm, True, "plain")(y1, s1, b1)
    h = h2d.reshape(n, ho, wo, planes)

    # conv2 + bn2 stats (affine folded into the final fused epilogue)
    y2, s2, b2, _, _ = conv3x3_bn(h, p["conv2_w"], p["bn2_g"], p["bn2_b"], 1)

    if "sc_w" in p:
        # 1x1 stride-s shortcut conv + its BN stats; its BN affine is fused
        # into the same epilogue as bn2 + residual add + ReLU.
        # TODO(synk): express the stride-s subsample in the GEMM input
        # BlockSpec instead of a JAX strided slice.
        xs = x[:, ::stride, ::stride, :]
        cin = xs.shape[-1]
        pms = xs.reshape(-1, cin).astype(jnp.bfloat16)
        wsc = p["sc_w"].reshape(planes, cin).T.astype(jnp.bfloat16)
        ysc, ssum, ssq, _ = conv_gemm_stats(pms, wsc)
        ssc, bsc = bn_scale_shift(ssum, ssq, M, p["sc_g"], p["sc_b"])
        out2d = _affine_call(M, planes, tm, True, "res_affine")(
            y2, s2, b2, ysc, ssc, bsc)
    else:
        res = x.reshape(M, planes)
        out2d = _affine_call(M, planes, tm, True, "res")(y2, s2, b2, res)

    return out2d.reshape(n, ho, wo, planes)


def resnet18_forward(x_nchw, params):
    """Mirrors ResNet18.forward(x, feature=False): returns (out, feature_list)."""
    x = jnp.transpose(x_nchw, (0, 2, 3, 1)).astype(jnp.float32)   # NCHW -> NHWC

    y, s, b, tm, (n, ho, wo) = conv3x3_bn(
        x, params["conv1_w"], params["bn1_g"], params["bn1_b"], 1)
    cw = params["conv1_w"].shape[0]
    c1 = _affine_call(y.shape[0], cw, tm, True, "plain")(y, s, b).reshape(
        n, ho, wo, cw)

    feats = []
    h = c1
    for li in range(1, 5):
        for bp in params[f"layer{li}"]:
            h = basic_block(h, bp)
            feats.append(h)

    # Fused head: global average pool -> FC (1x1 conv) -> bias, one kernel.
    N, H, W, C = h.shape
    num_classes = params["fc_w"].shape[0]
    wfc = params["fc_w"].reshape(num_classes, C).T                 # [C, classes]
    bfc = params["fc_b"].reshape(1, num_classes)
    logits = _head_call(N, H * W, C, num_classes)(
        h.reshape(N, H * W, C), wfc, bfc)
    out = logits.reshape(N, num_classes, 1, 1)                     # NCHW

    feats_nchw = ([jnp.transpose(c1, (0, 3, 1, 2))]
                  + [jnp.transpose(f, (0, 3, 1, 2)) for f in feats]
                  + [out])
    return out, feats_nchw


# ----------------------------------------------------------------------------
if __name__ == "__main__":
    key = jax.random.PRNGKey(0)
    pkey, xkey = jax.random.split(key)

    base_width = 16        # small width so the synthetic test stays tiny
    num_classes = 10
    params = make_params(pkey, base_width=base_width, num_classes=num_classes)

    # PyTorch-style NCHW input: batch=2, 3 channels, 16x16 spatial.
    x = jax.random.normal(xkey, (2, 3, 16, 16), jnp.float32)

    # jit the whole forward so im2col glue fuses and in/out aliases are honored.
    fwd = jax.jit(lambda inp: resnet18_forward(inp, params))
    out, feats = fwd(x)
    out = jax.block_until_ready(out)
    feats = jax.block_until_ready(feats)

    assert out.shape == (2, num_classes, 1, 1)
    assert len(feats) == 10
    assert feats[0].shape == (2, base_width, 16, 16)       # c1
    assert feats[8].shape == (2, base_width * 8, 2, 2)     # l4
    assert bool(jnp.all(jnp.isfinite(out)))
    print("KERNEL_OK")
</pallas_src>

<mosaic_0001>
module attributes {stable_mosaic.version = 11 : i64} {
  func.func @_gemm_stats_kernel(%arg0: i32, %arg1: memref<256x27xbf16, #tpu.memory_space<vmem>>, %arg2: memref<27x16xbf16, #tpu.memory_space<vmem>>, %arg3: memref<256x16xf32, #tpu.memory_space<vmem>>, %arg4: memref<1x1x16xf32, #tpu.memory_space<vmem>>, %arg5: memref<1x1x16xf32, #tpu.memory_space<vmem>>) attributes {dimension_semantics = [#tpu.dimension_semantics<parallel>], iteration_bounds = array<i64: 2>, scalar_prefetch = 0 : i64, scratch_operands = 0 : i64, tpu.core_type = #tpu.core_type<tc>, window_params = [{transform_indices = @transform_0, window_bounds = array<i64: 256, 27>}, {pipeline_mode = #tpu.pipeline_mode<synchronous>, transform_indices = @transform_1, window_bounds = array<i64: 27, 16>}, {transform_indices = @transform_2, window_bounds = array<i64: 256, 16>}, {transform_indices = @transform_3, window_bounds = array<i64: 1, 1, 16>}, {transform_indices = @transform_4, window_bounds = array<i64: 1, 1, 16>}]} {
    %c0 = arith.constant 0 : index
    %c0_0 = arith.constant 0 : index
    %0 = vector.load %arg1[%c0, %c0_0] : memref<256x27xbf16, #tpu.memory_space<vmem>>, vector<256x27xbf16>
    %c0_1 = arith.constant 0 : index
    %c0_2 = arith.constant 0 : index
    %1 = vector.load %arg2[%c0_1, %c0_2] : memref<27x16xbf16, #tpu.memory_space<vmem>>, vector<27x16xbf16>
    %cst = arith.constant dense<0.000000e+00> : vector<256x16xf32>
    %2 = tpu.matmul %0, %1, %cst {dimension_numbers = #tpu.dot_dimension_numbers<[1], [0], [0], [1], [0, 0, 1, 1], [], []>} : vector<256x27xbf16>, vector<27x16xbf16>, vector<256x16xf32> -> vector<256x16xf32>
    %c0_3 = arith.constant 0 : index
    %c0_4 = arith.constant 0 : index
    %3 = vector.load %arg3[%c0_3, %c0_4] : memref<256x16xf32, #tpu.memory_space<vmem>>, vector<256x16xf32>
    tpu.vector_store %arg3[%c0_3, %c0_4], %2 {strides = array<i32>} : memref<256x16xf32, #tpu.memory_space<vmem>>, vector<256x16xf32>,
    %cst_5 = arith.constant dense<0.000000e+00> : vector<16xf32>
    %4 = vector.multi_reduction <add>, %2, %cst_5 [0] : vector<256x16xf32> to vector<16xf32>
    %5 = vector.shape_cast %4 : vector<16xf32> to vector<1x16xf32>
    %6 = vector.shape_cast %5 : vector<1x16xf32> to vector<1x1x16xf32>
    %c0_6 = arith.constant 0 : index
    %c0_7 = arith.constant 0 : index
    %c0_8 = arith.constant 0 : index
    %7 = vector.load %arg4[%c0_6, %c0_7, %c0_8] : memref<1x1x16xf32, #tpu.memory_space<vmem>>, vector<1x1x16xf32>
    tpu.vector_store %arg4[%c0_6, %c0_7, %c0_8], %6 {strides = array<i32>} : memref<1x1x16xf32, #tpu.memory_space<vmem>>, vector<1x1x16xf32>,
    %8 = arith.mulf %2, %2 : vector<256x16xf32>
    %cst_9 = arith.constant dense<0.000000e+00> : vector<16xf32>
    %9 = vector.multi_reduction <add>, %8, %cst_9 [0] : vector<256x16xf32> to vector<16xf32>
    %10 = vector.shape_cast %9 : vector<16xf32> to vector<1x16xf32>
    %11 = vector.shape_cast %10 : vector<1x16xf32> to vector<1x1x16xf32>
    %c0_10 = arith.constant 0 : index
    %c0_11 = arith.constant 0 : index
    %c0_12 = arith.constant 0 : index
    %12 = vector.load %arg5[%c0_10, %c0_11, %c0_12] : memref<1x1x16xf32, #tpu.memory_space<vmem>>, vector<1x1x16xf32>
    tpu.vector_store %arg5[%c0_10, %c0_11, %c0_12], %11 {strides = array<i32>} : memref<1x1x16xf32, #tpu.memory_space<vmem>>, vector<1x1x16xf32>,
    return
  }
  func.func @transform_0(%arg0: i32) -> (i32, i32) {
    %c0_i32 = arith.constant 0 : i32
    %c0_i32_0 = arith.constant 0 : i32
    return %arg0, %c0_i32 : i32, i32
  }
  func.func @transform_1(%arg0: i32) -> (i32, i32) {
    %c0_i32 = arith.constant 0 : i32
    %c0_i32_0 = arith.constant 0 : i32
    %c0_i32_1 = arith.constant 0 : i32
    return %c0_i32, %c0_i32_0 : i32, i32
  }
  func.func @transform_2(%arg0: i32) -> (i32, i32) {
    %c0_i32 = arith.constant 0 : i32
    %c0_i32_0 = arith.constant 0 : i32
    return %arg0, %c0_i32 : i32, i32
  }
  func.func @transform_3(%arg0: i32) -> (i32, i32, i32) {
    %c0_i32 = arith.constant 0 : i32
    %c0_i32_0 = arith.constant 0 : i32
    %c0_i32_1 = arith.constant 0 : i32
    return %arg0, %c0_i32, %c0_i32_0 : i32, i32, i32
  }
  func.func @transform_4(%arg0: i32) -> (i32, i32, i32) {
    %c0_i32 = arith.constant 0 : i32
    %c0_i32_0 = arith.constant 0 : i32
    %c0_i32_1 = arith.constant 0 : i32
    return %arg0, %c0_i32, %c0_i32_0 : i32, i32, i32
  }
}

module attributes {stable_mosaic.version = 11 : i64} {
  func.func @_affine_kernel(%arg0: i32, %arg1: memref<256x16xf32, #tpu.memory_space<vmem>>, %arg2: memref<1x16xf32, #tpu.memory_space<vmem>>, %arg3: memref<1x16xf32, #tpu.memory_space<vmem>>, %arg4: memref<256x16xf32, #tpu.memory_space<vmem>>) attributes {dimension_semantics = [#tpu.dimension_semantics<parallel>], iteration_bounds = array<i64: 2>, scalar_prefetch = 0 : i64, scratch_operands = 0 : i64, tpu.core_type = #tpu.core_type<tc>, window_params = [{transform_indices = @transform_0, window_bounds = array<i64: 256, 16>}, {pipeline_mode = #tpu.pipeline_mode<synchronous>, transform_indices = @transform_1, window_bounds = array<i64: 1, 16>}, {pipeline_mode = #tpu.pipeline_mode<synchronous>, transform_indices = @transform_2, window_bounds = array<i64: 1, 16>}, {transform_indices = @transform_3, window_bounds = array<i64: 256, 16>}]} {
    %c0 = arith.constant 0 : index
    %c0_0 = arith.constant 0 : index
    %0 = vector.load %arg1[%c0, %c0_0] : memref<256x16xf32, #tpu.memory_space<vmem>>, vector<256x16xf32>
    %c0_1 = arith.constant 0 : index
    %c0_2 = arith.constant 0 : index
    %1 = vector.load %arg2[%c0_1, %c0_2] : memref<1x16xf32, #tpu.memory_space<vmem>>, vector<1x16xf32>
    %2 = vector.broadcast %1 : vector<1x16xf32> to vector<256x16xf32>
    %3 = arith.mulf %0, %2 : vector<256x16xf32>
    %c0_3 = arith.constant 0 : index
    %c0_4 = arith.constant 0 : index
    %4 = vector.load %arg3[%c0_3, %c0_4] : memref<1x16xf32, #tpu.memory_space<vmem>>, vector<1x16xf32>
    %5 = vector.broadcast %4 : vector<1x16xf32> to vector<256x16xf32>
    %6 = arith.addf %3, %5 : vector<256x16xf32>
    %cst = arith.constant 0.000000e+00 : f32
    %7 = vector.broadcast %cst : f32 to vector<256x16xf32>
    %8 = arith.maximumf %6, %7 : vector<256x16xf32>
    %c0_5 = arith.constant 0 : index
    %c0_6 = arith.constant 0 : index
    %9 = vector.load %arg4[%c0_5, %c0_6] : memref<256x16xf32, #tpu.memory_space<vmem>>, vector<256x16xf32>
    tpu.vector_store %arg4[%c0_5, %c0_6], %8 {strides = array<i32>} : memref<256x16xf32, #tpu.memory_space<vmem>>, vector<256x16xf32>,
    return
  }
  func.func @transform_0(%arg0: i32) -> (i32, i32) {
    %c0_i32 = arith.constant 0 : i32
    %c0_i32_0 = arith.constant 0 : i32
    return %arg0, %c0_i32 : i32, i32
  }
  func.func @transform_1(%arg0: i32) -> (i32, i32) {
    %c0_i32 = arith.constant 0 : i32
    %c0_i32_0 = arith.constant 0 : i32
    %c0_i32_1 = arith.constant 0 : i32
    return %c0_i32, %c0_i32_0 : i32, i32
  }
  func.func @transform_2(%arg0: i32) -> (i32, i32) {
    %c0_i32 = arith.constant 0 : i32
    %c0_i32_0 = arith.constant 0 : i32
    %c0_i32_1 = arith.constant 0 : i32
    return %c0_i32, %c0_i32_0 : i32, i32
  }
  func.func @transform_3(%arg0: i32) -> (i32, i32) {
    %c0_i32 = arith.constant 0 : i32
    %c0_i32_0 = arith.constant 0 : i32
    return %arg0, %c0_i32 : i32, i32
  }
}

module attributes {stable_mosaic.version = 11 : i64} {
  func.func @_gemm_stats_kernel(%arg0: i32, %arg1: memref<256x144xbf16, #tpu.memory_space<vmem>>, %arg2: memref<144x16xbf16, #tpu.memory_space<vmem>>, %arg3: memref<256x16xf32, #tpu.memory_space<vmem>>, %arg4: memref<1x1x16xf32, #tpu.memory_space<vmem>>, %arg5: memref<1x1x16xf32, #tpu.memory_space<vmem>>) attributes {dimension_semantics = [#tpu.dimension_semantics<parallel>], iteration_bounds = array<i64: 2>, scalar_prefetch = 0 : i64, scratch_operands = 0 : i64, tpu.core_type = #tpu.core_type<tc>, window_params = [{transform_indices = @transform_0, window_bounds = array<i64: 256, 144>}, {pipeline_mode = #tpu.pipeline_mode<synchronous>, transform_indices = @transform_1, window_bounds = array<i64: 144, 16>}, {transform_indices = @transform_2, window_bounds = array<i64: 256, 16>}, {transform_indices = @transform_3, window_bounds = array<i64: 1, 1, 16>}, {transform_indices = @transform_4, window_bounds = array<i64: 1, 1, 16>}]} {
    %c0 = arith.constant 0 : index
    %c0_0 = arith.constant 0 : index
    %0 = vector.load %arg1[%c0, %c0_0] : memref<256x144xbf16, #tpu.memory_space<vmem>>, vector<256x144xbf16>
    %c0_1 = arith.constant 0 : index
    %c0_2 = arith.constant 0 : index
    %1 = vector.load %arg2[%c0_1, %c0_2] : memref<144x16xbf16, #tpu.memory_space<vmem>>, vector<144x16xbf16>
    %cst = arith.constant dense<0.000000e+00> : vector<256x16xf32>
    %2 = tpu.matmul %0, %1, %cst {dimension_numbers = #tpu.dot_dimension_numbers<[1], [0], [0], [1], [0, 0, 1, 1], [], []>} : vector<256x144xbf16>, vector<144x16xbf16>, vector<256x16xf32> -> vector<256x16xf32>
    %c0_3 = arith.constant 0 : index
    %c0_4 = arith.constant 0 : index
    %3 = vector.load %arg3[%c0_3, %c0_4] : memref<256x16xf32, #tpu.memory_space<vmem>>, vector<256x16xf32>
    tpu.vector_store %arg3[%c0_3, %c0_4], %2 {strides = array<i32>} : memref<256x16xf32, #tpu.memory_space<vmem>>, vector<256x16xf32>,
    %cst_5 = arith.constant dense<0.000000e+00> : vector<16xf32>
    %4 = vector.multi_reduction <add>, %2, %cst_5 [0] : vector<256x16xf32> to vector<16xf32>
    %5 = vector.shape_cast %4 : vector<16xf32> to vector<1x16xf32>
    %6 = vector.shape_cast %5 : vector<1x16xf32> to vector<1x1x16xf32>
    %c0_6 = arith.constant 0 : index
    %c0_7 = arith.constant 0 : index
    %c0_8 = arith.constant 0 : index
    %7 = vector.load %arg4[%c0_6, %c0_7, %c0_8] : memref<1x1x16xf32, #tpu.memory_space<vmem>>, vector<1x1x16xf32>
    tpu.vector_store %arg4[%c0_6, %c0_7, %c0_8], %6 {strides = array<i32>} : memref<1x1x16xf32, #tpu.memory_space<vmem>>, vector<1x1x16xf32>,
    %8 = arith.mulf %2, %2 : vector<256x16xf32>
    %cst_9 = arith.constant dense<0.000000e+00> : vector<16xf32>
    %9 = vector.multi_reduction <add>, %8, %cst_9 [0] : vector<256x16xf32> to vector<16xf32>
    %10 = vector.shape_cast %9 : vector<16xf32> to vector<1x16xf32>
    %11 = vector.shape_cast %10 : vector<1x16xf32> to vector<1x1x16xf32>
    %c0_10 = arith.constant 0 : index
    %c0_11 = arith.constant 0 : index
    %c0_12 = arith.constant 0 : index
    %12 = vector.load %arg5[%c0_10, %c0_11, %c0_12] : memref<1x1x16xf32, #tpu.memory_space<vmem>>, vector<1x1x16xf32>
    tpu.vector_store %arg5[%c0_10, %c0_11, %c0_12], %11 {strides = array<i32>} : memref<1x1x16xf32, #tpu.memory_space<vmem>>, vector<1x1x16xf32>,
    return
  }
  func.func @transform_0(%arg0: i32) -> (i32, i32) {
    %c0_i32 = arith.constant 0 : i32
    %c0_i32_0 = arith.constant 0 : i32
    return %arg0, %c0_i32 : i32, i32
  }
  func.func @transform_1(%arg0: i32) -> (i32, i32) {
    %c0_i32 = arith.constant 0 : i32
    %c0_i32_0 = arith.constant 0 : i32
    %c0_i32_1 = arith.constant 0 : i32
    return %c0_i32, %c0_i32_0 : i32, i32
  }
  func.func @transform_2(%arg0: i32) -> (i32, i32) {
    %c0_i32 = arith.constant 0 : i32
    %c0_i32_0 = arith.constant 0 : i32
    return %arg0, %c0_i32 : i32, i32
  }
  func.func @transform_3(%arg0: i32) -> (i32, i32, i32) {
    %c0_i32 = arith.constant 0 : i32
    %c0_i32_0 = arith.constant 0 : i32
    %c0_i32_1 = arith.constant 0 : i32
    return %arg0, %c0_i32, %c0_i32_0 : i32, i32, i32
  }
  func.func @transform_4(%arg0: i32) -> (i32, i32, i32) {
    %c0_i32 = arith.constant 0 : i32
    %c0_i32_0 = arith.constant 0 : i32
    %c0_i32_1 = arith.constant 0 : i32
    return %arg0, %c0_i32, %c0_i32_0 : i32, i32, i32
  }
}

module attributes {stable_mosaic.version = 11 : i64} {
  func.func @_affine_res_kernel(%arg0: i32, %arg1: memref<256x16xf32, #tpu.memory_space<vmem>>, %arg2: memref<1x16xf32, #tpu.memory_space<vmem>>, %arg3: memref<1x16xf32, #tpu.memory_space<vmem>>, %arg4: memref<256x16xf32, #tpu.memory_space<vmem>>, %arg5: memref<256x16xf32, #tpu.memory_space<vmem>>) attributes {dimension_semantics = [#tpu.dimension_semantics<parallel>], iteration_bounds = array<i64: 2>, scalar_prefetch = 0 : i64, scratch_operands = 0 : i64, tpu.core_type = #tpu.core_type<tc>, window_params = [{transform_indices = @transform_0, window_bounds = array<i64: 256, 16>}, {pipeline_mode = #tpu.pipeline_mode<synchronous>, transform_indices = @transform_1, window_bounds = array<i64: 1, 16>}, {pipeline_mode = #tpu.pipeline_mode<synchronous>, transform_indices = @transform_2, window_bounds = array<i64: 1, 16>}, {transform_indices = @transform_3, window_bounds = array<i64: 256, 16>}, {transform_indices = @transform_4, window_bounds = array<i64: 256, 16>}]} {
    %c0 = arith.constant 0 : index
    %c0_0 = arith.constant 0 : index
    %0 = vector.load %arg1[%c0, %c0_0] : memref<256x16xf32, #tpu.memory_space<vmem>>, vector<256x16xf32>
    %c0_1 = arith.constant 0 : index
    %c0_2 = arith.constant 0 : index
    %1 = vector.load %arg2[%c0_1, %c0_2] : memref<1x16xf32, #tpu.memory_space<vmem>>, vector<1x16xf32>
    %2 = vector.broadcast %1 : vector<1x16xf32> to vector<256x16xf32>
    %3 = arith.mulf %0, %2 : vector<256x16xf32>
    %c0_3 = arith.constant 0 : index
    %c0_4 = arith.constant 0 : index
    %4 = vector.load %arg3[%c0_3, %c0_4] : memref<1x16xf32, #tpu.memory_space<vmem>>, vector<1x16xf32>
    %5 = vector.broadcast %4 : vector<1x16xf32> to vector<256x16xf32>
    %6 = arith.addf %3, %5 : vector<256x16xf32>
    %c0_5 = arith.constant 0 : index
    %c0_6 = arith.constant 0 : index
    %7 = vector.load %arg4[%c0_5, %c0_6] : memref<256x16xf32, #tpu.memory_space<vmem>>, vector<256x16xf32>
    %8 = arith.addf %6, %7 : vector<256x16xf32>
    %cst = arith.constant 0.000000e+00 : f32
    %9 = vector.broadcast %cst : f32 to vector<256x16xf32>
    %10 = arith.maximumf %8, %9 : vector<256x16xf32>
    %c0_7 = arith.constant 0 : index
    %c0_8 = arith.constant 0 : index
    %11 = vector.load %arg5[%c0_7, %c0_8] : memref<256x16xf32, #tpu.memory_space<vmem>>, vector<256x16xf32>
    tpu.vector_store %arg5[%c0_7, %c0_8], %10 {strides = array<i32>} : memref<256x16xf32, #tpu.memory_space<vmem>>, vector<256x16xf32>,
    return
  }
  func.func @transform_0(%arg0: i32) -> (i32, i32) {
    %c0_i32 = arith.constant 0 : i32
    %c0_i32_0 = arith.constant 0 : i32
    return %arg0, %c0_i32 : i32, i32
  }
  func.func @transform_1(%arg0: i32) -> (i32, i32) {
    %c0_i32 = arith.constant 0 : i32
    %c0_i32_0 = arith.constant 0 : i32
    %c0_i32_1 = arith.constant 0 : i32
    return %c0_i32, %c0_i32_0 : i32, i32
  }
  func.func @transform_2(%arg0: i32) -> (i32, i32) {
    %c0_i32 = arith.constant 0 : i32
    %c0_i32_0 = arith.constant 0 : i32
    %c0_i32_1 = arith.constant 0 : i32
    return %c0_i32, %c0_i32_0 : i32, i32
  }
  func.func @transform_3(%arg0: i32) -> (i32, i32) {
    %c0_i32 = arith.constant 0 : i32
    %c0_i32_0 = arith.constant 0 : i32
    return %arg0, %c0_i32 : i32, i32
  }
  func.func @transform_4(%arg0: i32) -> (i32, i32) {
    %c0_i32 = arith.constant 0 : i32
    %c0_i32_0 = arith.constant 0 : i32
    return %arg0, %c0_i32 : i32, i32
  }
}

module attributes {stable_mosaic.version = 11 : i64} {
  func.func @_gemm_stats_kernel(%arg0: i32, %arg1: memref<128x144xbf16, #tpu.memory_space<vmem>>, %arg2: memref<144x32xbf16, #tpu.memory_space<vmem>>, %arg3: memref<128x32xf32, #tpu.memory_space<vmem>>, %arg4: memref<1x1x32xf32, #tpu.memory_space<vmem>>, %arg5: memref<1x1x32xf32, #tpu.memory_space<vmem>>) attributes {dimension_semantics = [#tpu.dimension_semantics<parallel>], iteration_bounds = array<i64: 1>, scalar_prefetch = 0 : i64, scratch_operands = 0 : i64, tpu.core_type = #tpu.core_type<tc>, window_params = [{transform_indices = @transform_0, window_bounds = array<i64: 128, 144>}, {pipeline_mode = #tpu.pipeline_mode<synchronous>, transform_indices = @transform_1, window_bounds = array<i64: 144, 32>}, {transform_indices = @transform_2, window_bounds = array<i64: 128, 32>}, {transform_indices = @transform_3, window_bounds = array<i64: 1, 1, 32>}, {transform_indices = @transform_4, window_bounds = array<i64: 1, 1, 32>}]} {
    %c0 = arith.constant 0 : index
    %c0_0 = arith.constant 0 : index
    %0 = vector.load %arg1[%c0, %c0_0] : memref<128x144xbf16, #tpu.memory_space<vmem>>, vector<128x144xbf16>
    %c0_1 = arith.constant 0 : index
    %c0_2 = arith.constant 0 : index
    %1 = vector.load %arg2[%c0_1, %c0_2] : memref<144x32xbf16, #tpu.memory_space<vmem>>, vector<144x32xbf16>
    %cst = arith.constant dense<0.000000e+00> : vector<128x32xf32>
    %2 = tpu.matmul %0, %1, %cst {dimension_numbers = #tpu.dot_dimension_numbers<[1], [0], [0], [1], [0, 0, 1, 1], [], []>} : vector<128x144xbf16>, vector<144x32xbf16>, vector<128x32xf32> -> vector<128x32xf32>
    %c0_3 = arith.constant 0 : index
    %c0_4 = arith.constant 0 : index
    %3 = vector.load %arg3[%c0_3, %c0_4] : memref<128x32xf32, #tpu.memory_space<vmem>>, vector<128x32xf32>
    tpu.vector_store %arg3[%c0_3, %c0_4], %2 {strides = array<i32>} : memref<128x32xf32, #tpu.memory_space<vmem>>, vector<128x32xf32>,
    %cst_5 = arith.constant dense<0.000000e+00> : vector<32xf32>
    %4 = vector.multi_reduction <add>, %2, %cst_5 [0] : vector<128x32xf32> to vector<32xf32>
    %5 = vector.shape_cast %4 : vector<32xf32> to vector<1x32xf32>
    %6 = vector.shape_cast %5 : vector<1x32xf32> to vector<1x1x32xf32>
    %c0_6 = arith.constant 0 : index
    %c0_7 = arith.constant 0 : index
    %c0_8 = arith.constant 0 : index
    %7 = vector.load %arg4[%c0_6, %c0_7, %c0_8] : memref<1x1x32xf32, #tpu.memory_space<vmem>>, vector<1x1x32xf32>
    tpu.vector_store %arg4[%c0_6, %c0_7, %c0_8], %6 {strides = array<i32>} : memref<1x1x32xf32, #tpu.memory_space<vmem>>, vector<1x1x32xf32>,
    %8 = arith.mulf %2, %2 : vector<128x32xf32>
    %cst_9 = arith.constant dense<0.000000e+00> : vector<32xf32>
    %9 = vector.multi_reduction <add>, %8, %cst_9 [0] : vector<128x32xf32> to vector<32xf32>
    %10 = vector.shape_cast %9 : vector<32xf32> to vector<1x32xf32>
    %11 = vector.shape_cast %10 : vector<1x32xf32> to vector<1x1x32xf32>
    %c0_10 = arith.constant 0 : index
    %c0_11 = arith.constant 0 : index
    %c0_12 = arith.constant 0 : index
    %12 = vector.load %arg5[%c0_10, %c0_11, %c0_12] : memref<1x1x32xf32, #tpu.memory_space<vmem>>, vector<1x1x32xf32>
    tpu.vector_store %arg5[%c0_10, %c0_11, %c0_12], %11 {strides = array<i32>} : memref<1x1x32xf32, #tpu.memory_space<vmem>>, vector<1x1x32xf32>,
    return
  }
  func.func @transform_0(%arg0: i32) -> (i32, i32) {
    %c0_i32 = arith.constant 0 : i32
    %c0_i32_0 = arith.constant 0 : i32
    return %arg0, %c0_i32 : i32, i32
  }
  func.func @transform_1(%arg0: i32) -> (i32, i32) {
    %c0_i32 = arith.constant 0 : i32
    %c0_i32_0 = arith.constant 0 : i32
    %c0_i32_1 = arith.constant 0 : i32
    return %c0_i32, %c0_i32_0 : i32, i32
  }
  func.func @transform_2(%arg0: i32) -> (i32, i32) {
    %c0_i32 = arith.constant 0 : i32
    %c0_i32_0 = arith.constant 0 : i32
    return %arg0, %c0_i32 : i32, i32
  }
  func.func @transform_3(%arg0: i32) -> (i32, i32, i32) {
    %c0_i32 = arith.constant 0 : i32
    %c0_i32_0 = arith.constant 0 : i32
    %c0_i32_1 = arith.constant 0 : i32
    return %arg0, %c0_i32, %c0_i32_0 : i32, i32, i32
  }
  func.func @transform_4(%arg0: i32) -> (i32, i32, i32) {
    %c0_i32 = arith.constant 0 : i32
    %c0_i32_0 = arith.constant 0 : i32
    %c0_i32_1 = arith.constant 0 : i32
    return %arg0, %c0_i32, %c0_i32_0 : i32, i32, i32
  }
}

module attributes {stable_mosaic.version = 11 : i64} {
  func.func @_affine_kernel(%arg0: i32, %arg1: memref<128x32xf32, #tpu.memory_space<vmem>>, %arg2: memref<1x32xf32, #tpu.memory_space<vmem>>, %arg3: memref<1x32xf32, #tpu.memory_space<vmem>>, %arg4: memref<128x32xf32, #tpu.memory_space<vmem>>) attributes {dimension_semantics = [#tpu.dimension_semantics<parallel>], iteration_bounds = array<i64: 1>, scalar_prefetch = 0 : i64, scratch_operands = 0 : i64, tpu.core_type = #tpu.core_type<tc>, window_params = [{transform_indices = @transform_0, window_bounds = array<i64: 128, 32>}, {pipeline_mode = #tpu.pipeline_mode<synchronous>, transform_indices = @transform_1, window_bounds = array<i64: 1, 32>}, {pipeline_mode = #tpu.pipeline_mode<synchronous>, transform_indices = @transform_2, window_bounds = array<i64: 1, 32>}, {transform_indices = @transform_3, window_bounds = array<i64: 128, 32>}]} {
    %c0 = arith.constant 0 : index
    %c0_0 = arith.constant 0 : index
    %0 = vector.load %arg1[%c0, %c0_0] : memref<128x32xf32, #tpu.memory_space<vmem>>, vector<128x32xf32>
    %c0_1 = arith.constant 0 : index
    %c0_2 = arith.constant 0 : index
    %1 = vector.load %arg2[%c0_1, %c0_2] : memref<1x32xf32, #tpu.memory_space<vmem>>, vector<1x32xf32>
    %2 = vector.broadcast %1 : vector<1x32xf32> to vector<128x32xf32>
    %3 = arith.mulf %0, %2 : vector<128x32xf32>
    %c0_3 = arith.constant 0 : index
    %c0_4 = arith.constant 0 : index
    %4 = vector.load %arg3[%c0_3, %c0_4] : memref<1x32xf32, #tpu.memory_space<vmem>>, vector<1x32xf32>
    %5 = vector.broadcast %4 : vector<1x32xf32> to vector<128x32xf32>
    %6 = arith.addf %3, %5 : vector<128x32xf32>
    %cst = arith.constant 0.000000e+00 : f32
    %7 = vector.broadcast %cst : f32 to vector<128x32xf32>
    %8 = arith.maximumf %6, %7 : vector<128x32xf32>
    %c0_5 = arith.constant 0 : index
    %c0_6 = arith.constant 0 : index
    %9 = vector.load %arg4[%c0_5, %c0_6] : memref<128x32xf32, #tpu.memory_space<vmem>>, vector<128x32xf32>
    tpu.vector_store %arg4[%c0_5, %c0_6], %8 {strides = array<i32>} : memref<128x32xf32, #tpu.memory_space<vmem>>, vector<128x32xf32>,
    return
  }
  func.func @transform_0(%arg0: i32) -> (i32, i32) {
    %c0_i32 = arith.constant 0 : i32
    %c0_i32_0 = arith.constant 0 : i32
    return %arg0, %c0_i32 : i32, i32
  }
  func.func @transform_1(%arg0: i32) -> (i32, i32) {
    %c0_i32 = arith.constant 0 : i32
    %c0_i32_0 = arith.constant 0 : i32
    %c0_i32_1 = arith.constant 0 : i32
    return %c0_i32, %c0_i32_0 : i32, i32
  }
  func.func @transform_2(%arg0: i32) -> (i32, i32) {
    %c0_i32 = arith.constant 0 : i32
    %c0_i32_0 = arith.constant 0 : i32
    %c0_i32_1 = arith.constant 0 : i32
    return %c0_i32, %c0_i32_0 : i32, i32
  }
  func.func @transform_3(%arg0: i32) -> (i32, i32) {
    %c0_i32 = arith.constant 0 : i32
    %c0_i32_0 = arith.constant 0 : i32
    return %arg0, %c0_i32 : i32, i32
  }
}

module attributes {stable_mosaic.version = 11 : i64} {
  func.func @_gemm_stats_kernel(%arg0: i32, %arg1: memref<128x288xbf16, #tpu.memory_space<vmem>>, %arg2: memref<288x32xbf16, #tpu.memory_space<vmem>>, %arg3: memref<128x32xf32, #tpu.memory_space<vmem>>, %arg4: memref<1x1x32xf32, #tpu.memory_space<vmem>>, %arg5: memref<1x1x32xf32, #tpu.memory_space<vmem>>) attributes {dimension_semantics = [#tpu.dimension_semantics<parallel>], iteration_bounds = array<i64: 1>, scalar_prefetch = 0 : i64, scratch_operands = 0 : i64, tpu.core_type = #tpu.core_type<tc>, window_params = [{transform_indices = @transform_0, window_bounds = array<i64: 128, 288>}, {pipeline_mode = #tpu.pipeline_mode<synchronous>, transform_indices = @transform_1, window_bounds = array<i64: 288, 32>}, {transform_indices = @transform_2, window_bounds = array<i64: 128, 32>}, {transform_indices = @transform_3, window_bounds = array<i64: 1, 1, 32>}, {transform_indices = @transform_4, window_bounds = array<i64: 1, 1, 32>}]} {
    %c0 = arith.constant 0 : index
    %c0_0 = arith.constant 0 : index
    %0 = vector.load %arg1[%c0, %c0_0] : memref<128x288xbf16, #tpu.memory_space<vmem>>, vector<128x288xbf16>
    %c0_1 = arith.constant 0 : index
    %c0_2 = arith.constant 0 : index
    %1 = vector.load %arg2[%c0_1, %c0_2] : memref<288x32xbf16, #tpu.memory_space<vmem>>, vector<288x32xbf16>
    %cst = arith.constant dense<0.000000e+00> : vector<128x32xf32>
    %2 = tpu.matmul %0, %1, %cst {dimension_numbers = #tpu.dot_dimension_numbers<[1], [0], [0], [1], [0, 0, 1, 1], [], []>} : vector<128x288xbf16>, vector<288x32xbf16>, vector<128x32xf32> -> vector<128x32xf32>
    %c0_3 = arith.constant 0 : index
    %c0_4 = arith.constant 0 : index
    %3 = vector.load %arg3[%c0_3, %c0_4] : memref<128x32xf32, #tpu.memory_space<vmem>>, vector<128x32xf32>
    tpu.vector_store %arg3[%c0_3, %c0_4], %2 {strides = array<i32>} : memref<128x32xf32, #tpu.memory_space<vmem>>, vector<128x32xf32>,
    %cst_5 = arith.constant dense<0.000000e+00> : vector<32xf32>
    %4 = vector.multi_reduction <add>, %2, %cst_5 [0] : vector<128x32xf32> to vector<32xf32>
    %5 = vector.shape_cast %4 : vector<32xf32> to vector<1x32xf32>
    %6 = vector.shape_cast %5 : vector<1x32xf32> to vector<1x1x32xf32>
    %c0_6 = arith.constant 0 : index
    %c0_7 = arith.constant 0 : index
    %c0_8 = arith.constant 0 : index
    %7 = vector.load %arg4[%c0_6, %c0_7, %c0_8] : memref<1x1x32xf32, #tpu.memory_space<vmem>>, vector<1x1x32xf32>
    tpu.vector_store %arg4[%c0_6, %c0_7, %c0_8], %6 {strides = array<i32>} : memref<1x1x32xf32, #tpu.memory_space<vmem>>, vector<1x1x32xf32>,
    %8 = arith.mulf %2, %2 : vector<128x32xf32>
    %cst_9 = arith.constant dense<0.000000e+00> : vector<32xf32>
    %9 = vector.multi_reduction <add>, %8, %cst_9 [0] : vector<128x32xf32> to vector<32xf32>
    %10 = vector.shape_cast %9 : vector<32xf32> to vector<1x32xf32>
    %11 = vector.shape_cast %10 : vector<1x32xf32> to vector<1x1x32xf32>
    %c0_10 = arith.constant 0 : index
    %c0_11 = arith.constant 0 : index
    %c0_12 = arith.constant 0 : index
    %12 = vector.load %arg5[%c0_10, %c0_11, %c0_12] : memref<1x1x32xf32, #tpu.memory_space<vmem>>, vector<1x1x32xf32>
    tpu.vector_store %arg5[%c0_10, %c0_11, %c0_12], %11 {strides = array<i32>} : memref<1x1x32xf32, #tpu.memory_space<vmem>>, vector<1x1x32xf32>,
    return
  }
  func.func @transform_0(%arg0: i32) -> (i32, i32) {
    %c0_i32 = arith.constant 0 : i32
    %c0_i32_0 = arith.constant 0 : i32
    return %arg0, %c0_i32 : i32, i32
  }
  func.func @transform_1(%arg0: i32) -> (i32, i32) {
    %c0_i32 = arith.constant 0 : i32
    %c0_i32_0 = arith.constant 0 : i32
    %c0_i32_1 = arith.constant 0 : i32
    return %c0_i32, %c0_i32_0 : i32, i32
  }
  func.func @transform_2(%arg0: i32) -> (i32, i32) {
    %c0_i32 = arith.constant 0 : i32
    %c0_i32_0 = arith.constant 0 : i32
    return %arg0, %c0_i32 : i32, i32
  }
  func.func @transform_3(%arg0: i32) -> (i32, i32, i32) {
    %c0_i32 = arith.constant 0 : i32
    %c0_i32_0 = arith.constant 0 : i32
    %c0_i32_1 = arith.constant 0 : i32
    return %arg0, %c0_i32, %c0_i32_0 : i32, i32, i32
  }
  func.func @transform_4(%arg0: i32) -> (i32, i32, i32) {
    %c0_i32 = arith.constant 0 : i32
    %c0_i32_0 = arith.constant 0 : i32
    %c0_i32_1 = arith.constant 0 : i32
    return %arg0, %c0_i32, %c0_i32_0 : i32, i32, i32
  }
}

module attributes {stable_mosaic.version = 11 : i64} {
  func.func @_gemm_stats_kernel(%arg0: i32, %arg1: memref<128x16xbf16, #tpu.memory_space<vmem>>, %arg2: memref<16x32xbf16, #tpu.memory_space<vmem>>, %arg3: memref<128x32xf32, #tpu.memory_space<vmem>>, %arg4: memref<1x1x32xf32, #tpu.memory_space<vmem>>, %arg5: memref<1x1x32xf32, #tpu.memory_space<vmem>>) attributes {dimension_semantics = [#tpu.dimension_semantics<parallel>], iteration_bounds = array<i64: 1>, scalar_prefetch = 0 : i64, scratch_operands = 0 : i64, tpu.core_type = #tpu.core_type<tc>, window_params = [{transform_indices = @transform_0, window_bounds = array<i64: 128, 16>}, {pipeline_mode = #tpu.pipeline_mode<synchronous>, transform_indices = @transform_1, window_bounds = array<i64: 16, 32>}, {transform_indices = @transform_2, window_bounds = array<i64: 128, 32>}, {transform_indices = @transform_3, window_bounds = array<i64: 1, 1, 32>}, {transform_indices = @transform_4, window_bounds = array<i64: 1, 1, 32>}]} {
    %c0 = arith.constant 0 : index
    %c0_0 = arith.constant 0 : index
    %0 = vector.load %arg1[%c0, %c0_0] : memref<128x16xbf16, #tpu.memory_space<vmem>>, vector<128x16xbf16>
    %c0_1 = arith.constant 0 : index
    %c0_2 = arith.constant 0 : index
    %1 = vector.load %arg2[%c0_1, %c0_2] : memref<16x32xbf16, #tpu.memory_space<vmem>>, vector<16x32xbf16>
    %cst = arith.constant dense<0.000000e+00> : vector<128x32xf32>
    %2 = tpu.matmul %0, %1, %cst {dimension_numbers = #tpu.dot_dimension_numbers<[1], [0], [0], [1], [0, 0, 1, 1], [], []>} : vector<128x16xbf16>, vector<16x32xbf16>, vector<128x32xf32> -> vector<128x32xf32>
    %c0_3 = arith.constant 0 : index
    %c0_4 = arith.constant 0 : index
    %3 = vector.load %arg3[%c0_3, %c0_4] : memref<128x32xf32, #tpu.memory_space<vmem>>, vector<128x32xf32>
    tpu.vector_store %arg3[%c0_3, %c0_4], %2 {strides = array<i32>} : memref<128x32xf32, #tpu.memory_space<vmem>>, vector<128x32xf32>,
    %cst_5 = arith.constant dense<0.000000e+00> : vector<32xf32>
    %4 = vector.multi_reduction <add>, %2, %cst_5 [0] : vector<128x32xf32> to vector<32xf32>
    %5 = vector.shape_cast %4 : vector<32xf32> to vector<1x32xf32>
    %6 = vector.shape_cast %5 : vector<1x32xf32> to vector<1x1x32xf32>
    %c0_6 = arith.constant 0 : index
    %c0_7 = arith.constant 0 : index
    %c0_8 = arith.constant 0 : index
    %7 = vector.load %arg4[%c0_6, %c0_7, %c0_8] : memref<1x1x32xf32, #tpu.memory_space<vmem>>, vector<1x1x32xf32>
    tpu.vector_store %arg4[%c0_6, %c0_7, %c0_8], %6 {strides = array<i32>} : memref<1x1x32xf32, #tpu.memory_space<vmem>>, vector<1x1x32xf32>,
    %8 = arith.mulf %2, %2 : vector<128x32xf32>
    %cst_9 = arith.constant dense<0.000000e+00> : vector<32xf32>
    %9 = vector.multi_reduction <add>, %8, %cst_9 [0] : vector<128x32xf32> to vector<32xf32>
    %10 = vector.shape_cast %9 : vector<32xf32> to vector<1x32xf32>
    %11 = vector.shape_cast %10 : vector<1x32xf32> to vector<1x1x32xf32>
    %c0_10 = arith.constant 0 : index
    %c0_11 = arith.constant 0 : index
    %c0_12 = arith.constant 0 : index
    %12 = vector.load %arg5[%c0_10, %c0_11, %c0_12] : memref<1x1x32xf32, #tpu.memory_space<vmem>>, vector<1x1x32xf32>
    tpu.vector_store %arg5[%c0_10, %c0_11, %c0_12], %11 {strides = array<i32>} : memref<1x1x32xf32, #tpu.memory_space<vmem>>, vector<1x1x32xf32>,
    return
  }
  func.func @transform_0(%arg0: i32) -> (i32, i32) {
    %c0_i32 = arith.constant 0 : i32
    %c0_i32_0 = arith.constant 0 : i32
    return %arg0, %c0_i32 : i32, i32
  }
  func.func @transform_1(%arg0: i32) -> (i32, i32) {
    %c0_i32 = arith.constant 0 : i32
    %c0_i32_0 = arith.constant 0 : i32
    %c0_i32_1 = arith.constant 0 : i32
    return %c0_i32, %c0_i32_0 : i32, i32
  }
  func.func @transform_2(%arg0: i32) -> (i32, i32) {
    %c0_i32 = arith.constant 0 : i32
    %c0_i32_0 = arith.constant 0 : i32
    return %arg0, %c0_i32 : i32, i32
  }
  func.func @transform_3(%arg0: i32) -> (i32, i32, i32) {
    %c0_i32 = arith.constant 0 : i32
    %c0_i32_0 = arith.constant 0 : i32
    %c0_i32_1 = arith.constant 0 : i32
    return %arg0, %c0_i32, %c0_i32_0 : i32, i32, i32
  }
  func.func @transform_4(%arg0: i32) -> (i32, i32, i32) {
    %c0_i32 = arith.constant 0 : i32
    %c0_i32_0 = arith.constant 0 : i32
    %c0_i32_1 = arith.constant 0 : i32
    return %arg0, %c0_i32, %c0_i32_0 : i32, i32, i32
  }
}

module attributes {stable_mosaic.version = 11 : i64} {
  func.func @_affine_res_affine_kernel(%arg0: i32, %arg1: memref<128x32xf32, #tpu.memory_space<vmem>>, %arg2: memref<1x32xf32, #tpu.memory_space<vmem>>, %arg3: memref<1x32xf32, #tpu.memory_space<vmem>>, %arg4: memref<128x32xf32, #tpu.memory_space<vmem>>, %arg5: memref<1x32xf32, #tpu.memory_space<vmem>>, %arg6: memref<1x32xf32, #tpu.memory_space<vmem>>, %arg7: memref<128x32xf32, #tpu.memory_space<vmem>>) attributes {dimension_semantics = [#tpu.dimension_semantics<parallel>], iteration_bounds = array<i64: 1>, scalar_prefetch = 0 : i64, scratch_operands = 0 : i64, tpu.core_type = #tpu.core_type<tc>, window_params = [{transform_indices = @transform_0, window_bounds = array<i64: 128, 32>}, {pipeline_mode = #tpu.pipeline_mode<synchronous>, transform_indices = @transform_1, window_bounds = array<i64: 1, 32>}, {pipeline_mode = #tpu.pipeline_mode<synchronous>, transform_indices = @transform_2, window_bounds = array<i64: 1, 32>}, {transform_indices = @transform_3, window_bounds = array<i64: 128, 32>}, {pipeline_mode = #tpu.pipeline_mode<synchronous>, transform_indices = @transform_4, window_bounds = array<i64: 1, 32>}, {pipeline_mode = #tpu.pipeline_mode<synchronous>, transform_indices = @transform_5, window_bounds = array<i64: 1, 32>}, {transform_indices = @transform_6, window_bounds = array<i64: 128, 32>}]} {
    %c0 = arith.constant 0 : index
    %c0_0 = arith.constant 0 : index
    %0 = vector.load %arg1[%c0, %c0_0] : memref<128x32xf32, #tpu.memory_space<vmem>>, vector<128x32xf32>
    %c0_1 = arith.constant 0 : index
    %c0_2 = arith.constant 0 : index
    %1 = vector.load %arg2[%c0_1, %c0_2] : memref<1x32xf32, #tpu.memory_space<vmem>>, vector<1x32xf32>
    %2 = vector.broadcast %1 : vector<1x32xf32> to vector<128x32xf32>
    %3 = arith.mulf %0, %2 : vector<128x32xf32>
    %c0_3 = arith.constant 0 : index
    %c0_4 = arith.constant 0 : index
    %4 = vector.load %arg3[%c0_3, %c0_4] : memref<1x32xf32, #tpu.memory_space<vmem>>, vector<1x32xf32>
    %5 = vector.broadcast %4 : vector<1x32xf32> to vector<128x32xf32>
    %6 = arith.addf %3, %5 : vector<128x32xf32>
    %c0_5 = arith.constant 0 : index
    %c0_6 = arith.constant 0 : index
    %7 = vector.load %arg4[%c0_5, %c0_6] : memref<128x32xf32, #tpu.memory_space<vmem>>, vector<128x32xf32>
    %c0_7 = arith.constant 0 : index
    %c0_8 = arith.constant 0 : index
    %8 = vector.load %arg5[%c0_7, %c0_8] : memref<1x32xf32, #tpu.memory_space<vmem>>, vector<1x32xf32>
    %9 = vector.broadcast %8 : vector<1x32xf32> to vector<128x32xf32>
    %10 = arith.mulf %7, %9 : vector<128x32xf32>
    %11 = arith.addf %6, %10 : vector<128x32xf32>
    %c0_9 = arith.constant 0 : index
    %c0_10 = arith.constant 0 : index
    %12 = vector.load %arg6[%c0_9, %c0_10] : memref<1x32xf32, #tpu.memory_space<vmem>>, vector<1x32xf32>
    %13 = vector.broadcast %12 : vector<1x32xf32> to vector<128x32xf32>
    %14 = arith.addf %11, %13 : vector<128x32xf32>
    %cst = arith.constant 0.000000e+00 : f32
    %15 = vector.broadcast %cst : f32 to vector<128x32xf32>
    %16 = arith.maximumf %14, %15 : vector<128x32xf32>
    %c0_11 = arith.constant 0 : index
    %c0_12 = arith.constant 0 : index
    %17 = vector.load %arg7[%c0_11, %c0_12] : memref<128x32xf32, #tpu.memory_space<vmem>>, vector<128x32xf32>
    tpu.vector_store %arg7[%c0_11, %c0_12], %16 {strides = array<i32>} : memref<128x32xf32, #tpu.memory_space<vmem>>, vector<128x32xf32>,
    return
  }
  func.func @transform_0(%arg0: i32) -> (i32, i32) {
    %c0_i32 = arith.constant 0 : i32
    %c0_i32_0 = arith.constant 0 : i32
    return %arg0, %c0_i32 : i32, i32
  }
  func.func @transform_1(%arg0: i32) -> (i32, i32) {
    %c0_i32 = arith.constant 0 : i32
    %c0_i32_0 = arith.constant 0 : i32
    %c0_i32_1 = arith.constant 0 : i32
    return %c0_i32, %c0_i32_0 : i32, i32
  }
  func.func @transform_2(%arg0: i32) -> (i32, i32) {
    %c0_i32 = arith.constant 0 : i32
    %c0_i32_0 = arith.constant 0 : i32
    %c0_i32_1 = arith.constant 0 : i32
    return %c0_i32, %c0_i32_0 : i32, i32
  }
  func.func @transform_3(%arg0: i32) -> (i32, i32) {
    %c0_i32 = arith.constant 0 : i32
    %c0_i32_0 = arith.constant 0 : i32
    return %arg0, %c0_i32 : i32, i32
  }
  func.func @transform_4(%arg0: i32) -> (i32, i32) {
    %c0_i32 = arith.constant 0 : i32
    %c0_i32_0 = arith.constant 0 : i32
    %c0_i32_1 = arith.constant 0 : i32
    return %c0_i32, %c0_i32_0 : i32, i32
  }
  func.func @transform_5(%arg0: i32) -> (i32, i32) {
    %c0_i32 = arith.constant 0 : i32
    %c0_i32_0 = arith.constant 0 : i32
    %c0_i32_1 = arith.constant 0 : i32
    return %c0_i32, %c0_i32_0 : i32, i32
  }
  func.func @transform_6(%arg0: i32) -> (i32, i32) {
    %c0_i32 = arith.constant 0 : i32
    %c0_i32_0 = arith.constant 0 : i32
    return %arg0, %c0_i32 : i32, i32
  }
}

module attributes {stable_mosaic.version = 11 : i64} {
  func.func @_affine_res_kernel(%arg0: i32, %arg1: memref<128x32xf32, #tpu.memory_space<vmem>>, %arg2: memref<1x32xf32, #tpu.memory_space<vmem>>, %arg3: memref<1x32xf32, #tpu.memory_space<vmem>>, %arg4: memref<128x32xf32, #tpu.memory_space<vmem>>, %arg5: memref<128x32xf32, #tpu.memory_space<vmem>>) attributes {dimension_semantics = [#tpu.dimension_semantics<parallel>], iteration_bounds = array<i64: 1>, scalar_prefetch = 0 : i64, scratch_operands = 0 : i64, tpu.core_type = #tpu.core_type<tc>, window_params = [{transform_indices = @transform_0, window_bounds = array<i64: 128, 32>}, {pipeline_mode = #tpu.pipeline_mode<synchronous>, transform_indices = @transform_1, window_bounds = array<i64: 1, 32>}, {pipeline_mode = #tpu.pipeline_mode<synchronous>, transform_indices = @transform_2, window_bounds = array<i64: 1, 32>}, {transform_indices = @transform_3, window_bounds = array<i64: 128, 32>}, {transform_indices = @transform_4, window_bounds = array<i64: 128, 32>}]} {
    %c0 = arith.constant 0 : index
    %c0_0 = arith.constant 0 : index
    %0 = vector.load %arg1[%c0, %c0_0] : memref<128x32xf32, #tpu.memory_space<vmem>>, vector<128x32xf32>
    %c0_1 = arith.constant 0 : index
    %c0_2 = arith.constant 0 : index
    %1 = vector.load %arg2[%c0_1, %c0_2] : memref<1x32xf32, #tpu.memory_space<vmem>>, vector<1x32xf32>
    %2 = vector.broadcast %1 : vector<1x32xf32> to vector<128x32xf32>
    %3 = arith.mulf %0, %2 : vector<128x32xf32>
    %c0_3 = arith.constant 0 : index
    %c0_4 = arith.constant 0 : index
    %4 = vector.load %arg3[%c0_3, %c0_4] : memref<1x32xf32, #tpu.memory_space<vmem>>, vector<1x32xf32>
    %5 = vector.broadcast %4 : vector<1x32xf32> to vector<128x32xf32>
    %6 = arith.addf %3, %5 : vector<128x32xf32>
    %c0_5 = arith.constant 0 : index
    %c0_6 = arith.constant 0 : index
    %7 = vector.load %arg4[%c0_5, %c0_6] : memref<128x32xf32, #tpu.memory_space<vmem>>, vector<128x32xf32>
    %8 = arith.addf %6, %7 : vector<128x32xf32>
    %cst = arith.constant 0.000000e+00 : f32
    %9 = vector.broadcast %cst : f32 to vector<128x32xf32>
    %10 = arith.maximumf %8, %9 : vector<128x32xf32>
    %c0_7 = arith.constant 0 : index
    %c0_8 = arith.constant 0 : index
    %11 = vector.load %arg5[%c0_7, %c0_8] : memref<128x32xf32, #tpu.memory_space<vmem>>, vector<128x32xf32>
    tpu.vector_store %arg5[%c0_7, %c0_8], %10 {strides = array<i32>} : memref<128x32xf32, #tpu.memory_space<vmem>>, vector<128x32xf32>,
    return
  }
  func.func @transform_0(%arg0: i32) -> (i32, i32) {
    %c0_i32 = arith.constant 0 : i32
    %c0_i32_0 = arith.constant 0 : i32
    return %arg0, %c0_i32 : i32, i32
  }
  func.func @transform_1(%arg0: i32) -> (i32, i32) {
    %c0_i32 = arith.constant 0 : i32
    %c0_i32_0 = arith.constant 0 : i32
    %c0_i32_1 = arith.constant 0 : i32
    return %c0_i32, %c0_i32_0 : i32, i32
  }
  func.func @transform_2(%arg0: i32) -> (i32, i32) {
    %c0_i32 = arith.constant 0 : i32
    %c0_i32_0 = arith.constant 0 : i32
    %c0_i32_1 = arith.constant 0 : i32
    return %c0_i32, %c0_i32_0 : i32, i32
  }
  func.func @transform_3(%arg0: i32) -> (i32, i32) {
    %c0_i32 = arith.constant 0 : i32
    %c0_i32_0 = arith.constant 0 : i32
    return %arg0, %c0_i32 : i32, i32
  }
  func.func @transform_4(%arg0: i32) -> (i32, i32) {
    %c0_i32 = arith.constant 0 : i32
    %c0_i32_0 = arith.constant 0 : i32
    return %arg0, %c0_i32 : i32, i32
  }
}

module attributes {stable_mosaic.version = 11 : i64} {
  func.func @_gemm_stats_kernel(%arg0: i32, %arg1: memref<32x32xbf16, #tpu.memory_space<vmem>>, %arg2: memref<32x64xbf16, #tpu.memory_space<vmem>>, %arg3: memref<32x64xf32, #tpu.memory_space<vmem>>, %arg4: memref<1x1x64xf32, #tpu.memory_space<vmem>>, %arg5: memref<1x1x64xf32, #tpu.memory_space<vmem>>) attributes {dimension_semantics = [#tpu.dimension_semantics<parallel>], iteration_bounds = array<i64: 1>, scalar_prefetch = 0 : i64, scratch_operands = 0 : i64, tpu.core_type = #tpu.core_type<tc>, window_params = [{transform_indices = @transform_0, window_bounds = array<i64: 32, 32>}, {pipeline_mode = #tpu.pipeline_mode<synchronous>, transform_indices = @transform_1, window_bounds = array<i64: 32, 64>}, {transform_indices = @transform_2, window_bounds = array<i64: 32, 64>}, {transform_indices = @transform_3, window_bounds = array<i64: 1, 1, 64>}, {transform_indices = @transform_4, window_bounds = array<i64: 1, 1, 64>}]} {
    %c0 = arith.constant 0 : index
    %c0_0 = arith.constant 0 : index
    %0 = vector.load %arg1[%c0, %c0_0] : memref<32x32xbf16, #tpu.memory_space<vmem>>, vector<32x32xbf16>
    %c0_1 = arith.constant 0 : index
    %c0_2 = arith.constant 0 : index
    %1 = vector.load %arg2[%c0_1, %c0_2] : memref<32x64xbf16, #tpu.memory_space<vmem>>, vector<32x64xbf16>
    %cst = arith.constant dense<0.000000e+00> : vector<32x64xf32>
    %2 = tpu.matmul %0, %1, %cst {dimension_numbers = #tpu.dot_dimension_numbers<[1], [0], [0], [1], [0, 0, 1, 1], [], []>} : vector<32x32xbf16>, vector<32x64xbf16>, vector<32x64xf32> -> vector<32x64xf32>
    %c0_3 = arith.constant 0 : index
    %c0_4 = arith.constant 0 : index
    %3 = vector.load %arg3[%c0_3, %c0_4] : memref<32x64xf32, #tpu.memory_space<vmem>>, vector<32x64xf32>
    tpu.vector_store %arg3[%c0_3, %c0_4], %2 {strides = array<i32>} : memref<32x64xf32, #tpu.memory_space<vmem>>, vector<32x64xf32>,
    %cst_5 = arith.constant dense<0.000000e+00> : vector<64xf32>
    %4 = vector.multi_reduction <add>, %2, %cst_5 [0] : vector<32x64xf32> to vector<64xf32>
    %5 = vector.shape_cast %4 : vector<64xf32> to vector<1x64xf32>
    %6 = vector.shape_cast %5 : vector<1x64xf32> to vector<1x1x64xf32>
    %c0_6 = arith.constant 0 : index
    %c0_7 = arith.constant 0 : index
    %c0_8 = arith.constant 0 : index
    %7 = vector.load %arg4[%c0_6, %c0_7, %c0_8] : memref<1x1x64xf32, #tpu.memory_space<vmem>>, vector<1x1x64xf32>
    tpu.vector_store %arg4[%c0_6, %c0_7, %c0_8], %6 {strides = array<i32>} : memref<1x1x64xf32, #tpu.memory_space<vmem>>, vector<1x1x64xf32>,
    %8 = arith.mulf %2, %2 : vector<32x64xf32>
    %cst_9 = arith.constant dense<0.000000e+00> : vector<64xf32>
    %9 = vector.multi_reduction <add>, %8, %cst_9 [0] : vector<32x64xf32> to vector<64xf32>
    %10 = vector.shape_cast %9 : vector<64xf32> to vector<1x64xf32>
    %11 = vector.shape_cast %10 : vector<1x64xf32> to vector<1x1x64xf32>
    %c0_10 = arith.constant 0 : index
    %c0_11 = arith.constant 0 : index
    %c0_12 = arith.constant 0 : index
    %12 = vector.load %arg5[%c0_10, %c0_11, %c0_12] : memref<1x1x64xf32, #tpu.memory_space<vmem>>, vector<1x1x64xf32>
    tpu.vector_store %arg5[%c0_10, %c0_11, %c0_12], %11 {strides = array<i32>} : memref<1x1x64xf32, #tpu.memory_space<vmem>>, vector<1x1x64xf32>,
    return
  }
  func.func @transform_0(%arg0: i32) -> (i32, i32) {
    %c0_i32 = arith.constant 0 : i32
    %c0_i32_0 = arith.constant 0 : i32
    return %arg0, %c0_i32 : i32, i32
  }
  func.func @transform_1(%arg0: i32) -> (i32, i32) {
    %c0_i32 = arith.constant 0 : i32
    %c0_i32_0 = arith.constant 0 : i32
    %c0_i32_1 = arith.constant 0 : i32
    return %c0_i32, %c0_i32_0 : i32, i32
  }
  func.func @transform_2(%arg0: i32) -> (i32, i32) {
    %c0_i32 = arith.constant 0 : i32
    %c0_i32_0 = arith.constant 0 : i32
    return %arg0, %c0_i32 : i32, i32
  }
  func.func @transform_3(%arg0: i32) -> (i32, i32, i32) {
    %c0_i32 = arith.constant 0 : i32
    %c0_i32_0 = arith.constant 0 : i32
    %c0_i32_1 = arith.constant 0 : i32
    return %arg0, %c0_i32, %c0_i32_0 : i32, i32, i32
  }
  func.func @transform_4(%arg0: i32) -> (i32, i32, i32) {
    %c0_i32 = arith.constant 0 : i32
    %c0_i32_0 = arith.constant 0 : i32
    %c0_i32_1 = arith.constant 0 : i32
    return %arg0, %c0_i32, %c0_i32_0 : i32, i32, i32
  }
}

module attributes {stable_mosaic.version = 11 : i64} {
  func.func @_gemm_stats_kernel(%arg0: i32, %arg1: memref<32x288xbf16, #tpu.memory_space<vmem>>, %arg2: memref<288x64xbf16, #tpu.memory_space<vmem>>, %arg3: memref<32x64xf32, #tpu.memory_space<vmem>>, %arg4: memref<1x1x64xf32, #tpu.memory_space<vmem>>, %arg5: memref<1x1x64xf32, #tpu.memory_space<vmem>>) attributes {dimension_semantics = [#tpu.dimension_semantics<parallel>], iteration_bounds = array<i64: 1>, scalar_prefetch = 0 : i64, scratch_operands = 0 : i64, tpu.core_type = #tpu.core_type<tc>, window_params = [{transform_indices = @transform_0, window_bounds = array<i64: 32, 288>}, {pipeline_mode = #tpu.pipeline_mode<synchronous>, transform_indices = @transform_1, window_bounds = array<i64: 288, 64>}, {transform_indices = @transform_2, window_bounds = array<i64: 32, 64>}, {transform_indices = @transform_3, window_bounds = array<i64: 1, 1, 64>}, {transform_indices = @transform_4, window_bounds = array<i64: 1, 1, 64>}]} {
    %c0 = arith.constant 0 : index
    %c0_0 = arith.constant 0 : index
    %0 = vector.load %arg1[%c0, %c0_0] : memref<32x288xbf16, #tpu.memory_space<vmem>>, vector<32x288xbf16>
    %c0_1 = arith.constant 0 : index
    %c0_2 = arith.constant 0 : index
    %1 = vector.load %arg2[%c0_1, %c0_2] : memref<288x64xbf16, #tpu.memory_space<vmem>>, vector<288x64xbf16>
    %cst = arith.constant dense<0.000000e+00> : vector<32x64xf32>
    %2 = tpu.matmul %0, %1, %cst {dimension_numbers = #tpu.dot_dimension_numbers<[1], [0], [0], [1], [0, 0, 1, 1], [], []>} : vector<32x288xbf16>, vector<288x64xbf16>, vector<32x64xf32> -> vector<32x64xf32>
    %c0_3 = arith.constant 0 : index
    %c0_4 = arith.constant 0 : index
    %3 = vector.load %arg3[%c0_3, %c0_4] : memref<32x64xf32, #tpu.memory_space<vmem>>, vector<32x64xf32>
    tpu.vector_store %arg3[%c0_3, %c0_4], %2 {strides = array<i32>} : memref<32x64xf32, #tpu.memory_space<vmem>>, vector<32x64xf32>,
    %cst_5 = arith.constant dense<0.000000e+00> : vector<64xf32>
    %4 = vector.multi_reduction <add>, %2, %cst_5 [0] : vector<32x64xf32> to vector<64xf32>
    %5 = vector.shape_cast %4 : vector<64xf32> to vector<1x64xf32>
    %6 = vector.shape_cast %5 : vector<1x64xf32> to vector<1x1x64xf32>
    %c0_6 = arith.constant 0 : index
    %c0_7 = arith.constant 0 : index
    %c0_8 = arith.constant 0 : index
    %7 = vector.load %arg4[%c0_6, %c0_7, %c0_8] : memref<1x1x64xf32, #tpu.memory_space<vmem>>, vector<1x1x64xf32>
    tpu.vector_store %arg4[%c0_6, %c0_7, %c0_8], %6 {strides = array<i32>} : memref<1x1x64xf32, #tpu.memory_space<vmem>>, vector<1x1x64xf32>,
    %8 = arith.mulf %2, %2 : vector<32x64xf32>
    %cst_9 = arith.constant dense<0.000000e+00> : vector<64xf32>
    %9 = vector.multi_reduction <add>, %8, %cst_9 [0] : vector<32x64xf32> to vector<64xf32>
    %10 = vector.shape_cast %9 : vector<64xf32> to vector<1x64xf32>
    %11 = vector.shape_cast %10 : vector<1x64xf32> to vector<1x1x64xf32>
    %c0_10 = arith.constant 0 : index
    %c0_11 = arith.constant 0 : index
    %c0_12 = arith.constant 0 : index
    %12 = vector.load %arg5[%c0_10, %c0_11, %c0_12] : memref<1x1x64xf32, #tpu.memory_space<vmem>>, vector<1x1x64xf32>
    tpu.vector_store %arg5[%c0_10, %c0_11, %c0_12], %11 {strides = array<i32>} : memref<1x1x64xf32, #tpu.memory_space<vmem>>, vector<1x1x64xf32>,
    return
  }
  func.func @transform_0(%arg0: i32) -> (i32, i32) {
    %c0_i32 = arith.constant 0 : i32
    %c0_i32_0 = arith.constant 0 : i32
    return %arg0, %c0_i32 : i32, i32
  }
  func.func @transform_1(%arg0: i32) -> (i32, i32) {
    %c0_i32 = arith.constant 0 : i32
    %c0_i32_0 = arith.constant 0 : i32
    %c0_i32_1 = arith.constant 0 : i32
    return %c0_i32, %c0_i32_0 : i32, i32
  }
  func.func @transform_2(%arg0: i32) -> (i32, i32) {
    %c0_i32 = arith.constant 0 : i32
    %c0_i32_0 = arith.constant 0 : i32
    return %arg0, %c0_i32 : i32, i32
  }
  func.func @transform_3(%arg0: i32) -> (i32, i32, i32) {
    %c0_i32 = arith.constant 0 : i32
    %c0_i32_0 = arith.constant 0 : i32
    %c0_i32_1 = arith.constant 0 : i32
    return %arg0, %c0_i32, %c0_i32_0 : i32, i32, i32
  }
  func.func @transform_4(%arg0: i32) -> (i32, i32, i32) {
    %c0_i32 = arith.constant 0 : i32
    %c0_i32_0 = arith.constant 0 : i32
    %c0_i32_1 = arith.constant 0 : i32
    return %arg0, %c0_i32, %c0_i32_0 : i32, i32, i32
  }
}

module attributes {stable_mosaic.version = 11 : i64} {
  func.func @_affine_kernel(%arg0: i32, %arg1: memref<32x64xf32, #tpu.memory_space<vmem>>, %arg2: memref<1x64xf32, #tpu.memory_space<vmem>>, %arg3: memref<1x64xf32, #tpu.memory_space<vmem>>, %arg4: memref<32x64xf32, #tpu.memory_space<vmem>>) attributes {dimension_semantics = [#tpu.dimension_semantics<parallel>], iteration_bounds = array<i64: 1>, scalar_prefetch = 0 : i64, scratch_operands = 0 : i64, tpu.core_type = #tpu.core_type<tc>, window_params = [{transform_indices = @transform_0, window_bounds = array<i64: 32, 64>}, {pipeline_mode = #tpu.pipeline_mode<synchronous>, transform_indices = @transform_1, window_bounds = array<i64: 1, 64>}, {pipeline_mode = #tpu.pipeline_mode<synchronous>, transform_indices = @transform_2, window_bounds = array<i64: 1, 64>}, {transform_indices = @transform_3, window_bounds = array<i64: 32, 64>}]} {
    %c0 = arith.constant 0 : index
    %c0_0 = arith.constant 0 : index
    %0 = vector.load %arg1[%c0, %c0_0] : memref<32x64xf32, #tpu.memory_space<vmem>>, vector<32x64xf32>
    %c0_1 = arith.constant 0 : index
    %c0_2 = arith.constant 0 : index
    %1 = vector.load %arg2[%c0_1, %c0_2] : memref<1x64xf32, #tpu.memory_space<vmem>>, vector<1x64xf32>
    %2 = vector.broadcast %1 : vector<1x64xf32> to vector<32x64xf32>
    %3 = arith.mulf %0, %2 : vector<32x64xf32>
    %c0_3 = arith.constant 0 : index
    %c0_4 = arith.constant 0 : index
    %4 = vector.load %arg3[%c0_3, %c0_4] : memref<1x64xf32, #tpu.memory_space<vmem>>, vector<1x64xf32>
    %5 = vector.broadcast %4 : vector<1x64xf32> to vector<32x64xf32>
    %6 = arith.addf %3, %5 : vector<32x64xf32>
    %cst = arith.constant 0.000000e+00 : f32
    %7 = vector.broadcast %cst : f32 to vector<32x64xf32>
    %8 = arith.maximumf %6, %7 : vector<32x64xf32>
    %c0_5 = arith.constant 0 : index
    %c0_6 = arith.constant 0 : index
    %9 = vector.load %arg4[%c0_5, %c0_6] : memref<32x64xf32, #tpu.memory_space<vmem>>, vector<32x64xf32>
    tpu.vector_store %arg4[%c0_5, %c0_6], %8 {strides = array<i32>} : memref<32x64xf32, #tpu.memory_space<vmem>>, vector<32x64xf32>,
    return
  }
  func.func @transform_0(%arg0: i32) -> (i32, i32) {
    %c0_i32 = arith.constant 0 : i32
    %c0_i32_0 = arith.constant 0 : i32
    return %arg0, %c0_i32 : i32, i32
  }
  func.func @transform_1(%arg0: i32) -> (i32, i32) {
    %c0_i32 = arith.constant 0 : i32
    %c0_i32_0 = arith.constant 0 : i32
    %c0_i32_1 = arith.constant 0 : i32
    return %c0_i32, %c0_i32_0 : i32, i32
  }
  func.func @transform_2(%arg0: i32) -> (i32, i32) {
    %c0_i32 = arith.constant 0 : i32
    %c0_i32_0 = arith.constant 0 : i32
    %c0_i32_1 = arith.constant 0 : i32
    return %c0_i32, %c0_i32_0 : i32, i32
  }
  func.func @transform_3(%arg0: i32) -> (i32, i32) {
    %c0_i32 = arith.constant 0 : i32
    %c0_i32_0 = arith.constant 0 : i32
    return %arg0, %c0_i32 : i32, i32
  }
}

module attributes {stable_mosaic.version = 11 : i64} {
  func.func @_gemm_stats_kernel(%arg0: i32, %arg1: memref<32x576xbf16, #tpu.memory_space<vmem>>, %arg2: memref<576x64xbf16, #tpu.memory_space<vmem>>, %arg3: memref<32x64xf32, #tpu.memory_space<vmem>>, %arg4: memref<1x1x64xf32, #tpu.memory_space<vmem>>, %arg5: memref<1x1x64xf32, #tpu.memory_space<vmem>>) attributes {dimension_semantics = [#tpu.dimension_semantics<parallel>], iteration_bounds = array<i64: 1>, scalar_prefetch = 0 : i64, scratch_operands = 0 : i64, tpu.core_type = #tpu.core_type<tc>, window_params = [{transform_indices = @transform_0, window_bounds = array<i64: 32, 576>}, {pipeline_mode = #tpu.pipeline_mode<synchronous>, transform_indices = @transform_1, window_bounds = array<i64: 576, 64>}, {transform_indices = @transform_2, window_bounds = array<i64: 32, 64>}, {transform_indices = @transform_3, window_bounds = array<i64: 1, 1, 64>}, {transform_indices = @transform_4, window_bounds = array<i64: 1, 1, 64>}]} {
    %c0 = arith.constant 0 : index
    %c0_0 = arith.constant 0 : index
    %0 = vector.load %arg1[%c0, %c0_0] : memref<32x576xbf16, #tpu.memory_space<vmem>>, vector<32x576xbf16>
    %c0_1 = arith.constant 0 : index
    %c0_2 = arith.constant 0 : index
    %1 = vector.load %arg2[%c0_1, %c0_2] : memref<576x64xbf16, #tpu.memory_space<vmem>>, vector<576x64xbf16>
    %cst = arith.constant dense<0.000000e+00> : vector<32x64xf32>
    %2 = tpu.matmul %0, %1, %cst {dimension_numbers = #tpu.dot_dimension_numbers<[1], [0], [0], [1], [0, 0, 1, 1], [], []>} : vector<32x576xbf16>, vector<576x64xbf16>, vector<32x64xf32> -> vector<32x64xf32>
    %c0_3 = arith.constant 0 : index
    %c0_4 = arith.constant 0 : index
    %3 = vector.load %arg3[%c0_3, %c0_4] : memref<32x64xf32, #tpu.memory_space<vmem>>, vector<32x64xf32>
    tpu.vector_store %arg3[%c0_3, %c0_4], %2 {strides = array<i32>} : memref<32x64xf32, #tpu.memory_space<vmem>>, vector<32x64xf32>,
    %cst_5 = arith.constant dense<0.000000e+00> : vector<64xf32>
    %4 = vector.multi_reduction <add>, %2, %cst_5 [0] : vector<32x64xf32> to vector<64xf32>
    %5 = vector.shape_cast %4 : vector<64xf32> to vector<1x64xf32>
    %6 = vector.shape_cast %5 : vector<1x64xf32> to vector<1x1x64xf32>
    %c0_6 = arith.constant 0 : index
    %c0_7 = arith.constant 0 : index
    %c0_8 = arith.constant 0 : index
    %7 = vector.load %arg4[%c0_6, %c0_7, %c0_8] : memref<1x1x64xf32, #tpu.memory_space<vmem>>, vector<1x1x64xf32>
    tpu.vector_store %arg4[%c0_6, %c0_7, %c0_8], %6 {strides = array<i32>} : memref<1x1x64xf32, #tpu.memory_space<vmem>>, vector<1x1x64xf32>,
    %8 = arith.mulf %2, %2 : vector<32x64xf32>
    %cst_9 = arith.constant dense<0.000000e+00> : vector<64xf32>
    %9 = vector.multi_reduction <add>, %8, %cst_9 [0] : vector<32x64xf32> to vector<64xf32>
    %10 = vector.shape_cast %9 : vector<64xf32> to vector<1x64xf32>
    %11 = vector.shape_cast %10 : vector<1x64xf32> to vector<1x1x64xf32>
    %c0_10 = arith.constant 0 : index
    %c0_11 = arith.constant 0 : index
    %c0_12 = arith.constant 0 : index
    %12 = vector.load %arg5[%c0_10, %c0_11, %c0_12] : memref<1x1x64xf32, #tpu.memory_space<vmem>>, vector<1x1x64xf32>
    tpu.vector_store %arg5[%c0_10, %c0_11, %c0_12], %11 {strides = array<i32>} : memref<1x1x64xf32, #tpu.memory_space<vmem>>, vector<1x1x64xf32>,
    return
  }
  func.func @transform_0(%arg0: i32) -> (i32, i32) {
    %c0_i32 = arith.constant 0 : i32
    %c0_i32_0 = arith.constant 0 : i32
    return %arg0, %c0_i32 : i32, i32
  }
  func.func @transform_1(%arg0: i32) -> (i32, i32) {
    %c0_i32 = arith.constant 0 : i32
    %c0_i32_0 = arith.constant 0 : i32
    %c0_i32_1 = arith.constant 0 : i32
    return %c0_i32, %c0_i32_0 : i32, i32
  }
  func.func @transform_2(%arg0: i32) -> (i32, i32) {
    %c0_i32 = arith.constant 0 : i32
    %c0_i32_0 = arith.constant 0 : i32
    return %arg0, %c0_i32 : i32, i32
  }
  func.func @transform_3(%arg0: i32) -> (i32, i32, i32) {
    %c0_i32 = arith.constant 0 : i32
    %c0_i32_0 = arith.constant 0 : i32
    %c0_i32_1 = arith.constant 0 : i32
    return %arg0, %c0_i32, %c0_i32_0 : i32, i32, i32
  }
  func.func @transform_4(%arg0: i32) -> (i32, i32, i32) {
    %c0_i32 = arith.constant 0 : i32
    %c0_i32_0 = arith.constant 0 : i32
    %c0_i32_1 = arith.constant 0 : i32
    return %arg0, %c0_i32, %c0_i32_0 : i32, i32, i32
  }
}

module attributes {stable_mosaic.version = 11 : i64} {
  func.func @_affine_res_affine_kernel(%arg0: i32, %arg1: memref<32x64xf32, #tpu.memory_space<vmem>>, %arg2: memref<1x64xf32, #tpu.memory_space<vmem>>, %arg3: memref<1x64xf32, #tpu.memory_space<vmem>>, %arg4: memref<32x64xf32, #tpu.memory_space<vmem>>, %arg5: memref<1x64xf32, #tpu.memory_space<vmem>>, %arg6: memref<1x64xf32, #tpu.memory_space<vmem>>, %arg7: memref<32x64xf32, #tpu.memory_space<vmem>>) attributes {dimension_semantics = [#tpu.dimension_semantics<parallel>], iteration_bounds = array<i64: 1>, scalar_prefetch = 0 : i64, scratch_operands = 0 : i64, tpu.core_type = #tpu.core_type<tc>, window_params = [{transform_indices = @transform_0, window_bounds = array<i64: 32, 64>}, {pipeline_mode = #tpu.pipeline_mode<synchronous>, transform_indices = @transform_1, window_bounds = array<i64: 1, 64>}, {pipeline_mode = #tpu.pipeline_mode<synchronous>, transform_indices = @transform_2, window_bounds = array<i64: 1, 64>}, {transform_indices = @transform_3, window_bounds = array<i64: 32, 64>}, {pipeline_mode = #tpu.pipeline_mode<synchronous>, transform_indices = @transform_4, window_bounds = array<i64: 1, 64>}, {pipeline_mode = #tpu.pipeline_mode<synchronous>, transform_indices = @transform_5, window_bounds = array<i64: 1, 64>}, {transform_indices = @transform_6, window_bounds = array<i64: 32, 64>}]} {
    %c0 = arith.constant 0 : index
    %c0_0 = arith.constant 0 : index
    %0 = vector.load %arg1[%c0, %c0_0] : memref<32x64xf32, #tpu.memory_space<vmem>>, vector<32x64xf32>
    %c0_1 = arith.constant 0 : index
    %c0_2 = arith.constant 0 : index
    %1 = vector.load %arg2[%c0_1, %c0_2] : memref<1x64xf32, #tpu.memory_space<vmem>>, vector<1x64xf32>
    %2 = vector.broadcast %1 : vector<1x64xf32> to vector<32x64xf32>
    %3 = arith.mulf %0, %2 : vector<32x64xf32>
    %c0_3 = arith.constant 0 : index
    %c0_4 = arith.constant 0 : index
    %4 = vector.load %arg3[%c0_3, %c0_4] : memref<1x64xf32, #tpu.memory_space<vmem>>, vector<1x64xf32>
    %5 = vector.broadcast %4 : vector<1x64xf32> to vector<32x64xf32>
    %6 = arith.addf %3, %5 : vector<32x64xf32>
    %c0_5 = arith.constant 0 : index
    %c0_6 = arith.constant 0 : index
    %7 = vector.load %arg4[%c0_5, %c0_6] : memref<32x64xf32, #tpu.memory_space<vmem>>, vector<32x64xf32>
    %c0_7 = arith.constant 0 : index
    %c0_8 = arith.constant 0 : index
    %8 = vector.load %arg5[%c0_7, %c0_8] : memref<1x64xf32, #tpu.memory_space<vmem>>, vector<1x64xf32>
    %9 = vector.broadcast %8 : vector<1x64xf32> to vector<32x64xf32>
    %10 = arith.mulf %7, %9 : vector<32x64xf32>
    %11 = arith.addf %6, %10 : vector<32x64xf32>
    %c0_9 = arith.constant 0 : index
    %c0_10 = arith.constant 0 : index
    %12 = vector.load %arg6[%c0_9, %c0_10] : memref<1x64xf32, #tpu.memory_space<vmem>>, vector<1x64xf32>
    %13 = vector.broadcast %12 : vector<1x64xf32> to vector<32x64xf32>
    %14 = arith.addf %11, %13 : vector<32x64xf32>
    %cst = arith.constant 0.000000e+00 : f32
    %15 = vector.broadcast %cst : f32 to vector<32x64xf32>
    %16 = arith.maximumf %14, %15 : vector<32x64xf32>
    %c0_11 = arith.constant 0 : index
    %c0_12 = arith.constant 0 : index
    %17 = vector.load %arg7[%c0_11, %c0_12] : memref<32x64xf32, #tpu.memory_space<vmem>>, vector<32x64xf32>
    tpu.vector_store %arg7[%c0_11, %c0_12], %16 {strides = array<i32>} : memref<32x64xf32, #tpu.memory_space<vmem>>, vector<32x64xf32>,
    return
  }
  func.func @transform_0(%arg0: i32) -> (i32, i32) {
    %c0_i32 = arith.constant 0 : i32
    %c0_i32_0 = arith.constant 0 : i32
    return %arg0, %c0_i32 : i32, i32
  }
  func.func @transform_1(%arg0: i32) -> (i32, i32) {
    %c0_i32 = arith.constant 0 : i32
    %c0_i32_0 = arith.constant 0 : i32
    %c0_i32_1 = arith.constant 0 : i32
    return %c0_i32, %c0_i32_0 : i32, i32
  }
  func.func @transform_2(%arg0: i32) -> (i32, i32) {
    %c0_i32 = arith.constant 0 : i32
    %c0_i32_0 = arith.constant 0 : i32
    %c0_i32_1 = arith.constant 0 : i32
    return %c0_i32, %c0_i32_0 : i32, i32
  }
  func.func @transform_3(%arg0: i32) -> (i32, i32) {
    %c0_i32 = arith.constant 0 : i32
    %c0_i32_0 = arith.constant 0 : i32
    return %arg0, %c0_i32 : i32, i32
  }
  func.func @transform_4(%arg0: i32) -> (i32, i32) {
    %c0_i32 = arith.constant 0 : i32
    %c0_i32_0 = arith.constant 0 : i32
    %c0_i32_1 = arith.constant 0 : i32
    return %c0_i32, %c0_i32_0 : i32, i32
  }
  func.func @transform_5(%arg0: i32) -> (i32, i32) {
    %c0_i32 = arith.constant 0 : i32
    %c0_i32_0 = arith.constant 0 : i32
    %c0_i32_1 = arith.constant 0 : i32
    return %c0_i32, %c0_i32_0 : i32, i32
  }
  func.func @transform_6(%arg0: i32) -> (i32, i32) {
    %c0_i32 = arith.constant 0 : i32
    %c0_i32_0 = arith.constant 0 : i32
    return %arg0, %c0_i32 : i32, i32
  }
}

module attributes {stable_mosaic.version = 11 : i64} {
  func.func @_affine_res_kernel(%arg0: i32, %arg1: memref<32x64xf32, #tpu.memory_space<vmem>>, %arg2: memref<1x64xf32, #tpu.memory_space<vmem>>, %arg3: memref<1x64xf32, #tpu.memory_space<vmem>>, %arg4: memref<32x64xf32, #tpu.memory_space<vmem>>, %arg5: memref<32x64xf32, #tpu.memory_space<vmem>>) attributes {dimension_semantics = [#tpu.dimension_semantics<parallel>], iteration_bounds = array<i64: 1>, scalar_prefetch = 0 : i64, scratch_operands = 0 : i64, tpu.core_type = #tpu.core_type<tc>, window_params = [{transform_indices = @transform_0, window_bounds = array<i64: 32, 64>}, {pipeline_mode = #tpu.pipeline_mode<synchronous>, transform_indices = @transform_1, window_bounds = array<i64: 1, 64>}, {pipeline_mode = #tpu.pipeline_mode<synchronous>, transform_indices = @transform_2, window_bounds = array<i64: 1, 64>}, {transform_indices = @transform_3, window_bounds = array<i64: 32, 64>}, {transform_indices = @transform_4, window_bounds = array<i64: 32, 64>}]} {
    %c0 = arith.constant 0 : index
    %c0_0 = arith.constant 0 : index
    %0 = vector.load %arg1[%c0, %c0_0] : memref<32x64xf32, #tpu.memory_space<vmem>>, vector<32x64xf32>
    %c0_1 = arith.constant 0 : index
    %c0_2 = arith.constant 0 : index
    %1 = vector.load %arg2[%c0_1, %c0_2] : memref<1x64xf32, #tpu.memory_space<vmem>>, vector<1x64xf32>
    %2 = vector.broadcast %1 : vector<1x64xf32> to vector<32x64xf32>
    %3 = arith.mulf %0, %2 : vector<32x64xf32>
    %c0_3 = arith.constant 0 : index
    %c0_4 = arith.constant 0 : index
    %4 = vector.load %arg3[%c0_3, %c0_4] : memref<1x64xf32, #tpu.memory_space<vmem>>, vector<1x64xf32>
    %5 = vector.broadcast %4 : vector<1x64xf32> to vector<32x64xf32>
    %6 = arith.addf %3, %5 : vector<32x64xf32>
    %c0_5 = arith.constant 0 : index
    %c0_6 = arith.constant 0 : index
    %7 = vector.load %arg4[%c0_5, %c0_6] : memref<32x64xf32, #tpu.memory_space<vmem>>, vector<32x64xf32>
    %8 = arith.addf %6, %7 : vector<32x64xf32>
    %cst = arith.constant 0.000000e+00 : f32
    %9 = vector.broadcast %cst : f32 to vector<32x64xf32>
    %10 = arith.maximumf %8, %9 : vector<32x64xf32>
    %c0_7 = arith.constant 0 : index
    %c0_8 = arith.constant 0 : index
    %11 = vector.load %arg5[%c0_7, %c0_8] : memref<32x64xf32, #tpu.memory_space<vmem>>, vector<32x64xf32>
    tpu.vector_store %arg5[%c0_7, %c0_8], %10 {strides = array<i32>} : memref<32x64xf32, #tpu.memory_space<vmem>>, vector<32x64xf32>,
    return
  }
  func.func @transform_0(%arg0: i32) -> (i32, i32) {
    %c0_i32 = arith.constant 0 : i32
    %c0_i32_0 = arith.constant 0 : i32
    return %arg0, %c0_i32 : i32, i32
  }
  func.func @transform_1(%arg0: i32) -> (i32, i32) {
    %c0_i32 = arith.constant 0 : i32
    %c0_i32_0 = arith.constant 0 : i32
    %c0_i32_1 = arith.constant 0 : i32
    return %c0_i32, %c0_i32_0 : i32, i32
  }
  func.func @transform_2(%arg0: i32) -> (i32, i32) {
    %c0_i32 = arith.constant 0 : i32
    %c0_i32_0 = arith.constant 0 : i32
    %c0_i32_1 = arith.constant 0 : i32
    return %c0_i32, %c0_i32_0 : i32, i32
  }
  func.func @transform_3(%arg0: i32) -> (i32, i32) {
    %c0_i32 = arith.constant 0 : i32
    %c0_i32_0 = arith.constant 0 : i32
    return %arg0, %c0_i32 : i32, i32
  }
  func.func @transform_4(%arg0: i32) -> (i32, i32) {
    %c0_i32 = arith.constant 0 : i32
    %c0_i32_0 = arith.constant 0 : i32
    return %arg0, %c0_i32 : i32, i32
  }
}

module attributes {stable_mosaic.version = 11 : i64} {
  func.func @_gemm_stats_kernel(%arg0: i32, %arg1: memref<8x64xbf16, #tpu.memory_space<vmem>>, %arg2: memref<64x128xbf16, #tpu.memory_space<vmem>>, %arg3: memref<8x128xf32, #tpu.memory_space<vmem>>, %arg4: memref<1x1x128xf32, #tpu.memory_space<vmem>>, %arg5: memref<1x1x128xf32, #tpu.memory_space<vmem>>) attributes {dimension_semantics = [#tpu.dimension_semantics<parallel>], iteration_bounds = array<i64: 1>, scalar_prefetch = 0 : i64, scratch_operands = 0 : i64, tpu.core_type = #tpu.core_type<tc>, window_params = [{transform_indices = @transform_0, window_bounds = array<i64: 8, 64>}, {pipeline_mode = #tpu.pipeline_mode<synchronous>, transform_indices = @transform_1, window_bounds = array<i64: 64, 128>}, {transform_indices = @transform_2, window_bounds = array<i64: 8, 128>}, {transform_indices = @transform_3, window_bounds = array<i64: 1, 1, 128>}, {transform_indices = @transform_4, window_bounds = array<i64: 1, 1, 128>}]} {
    %c0 = arith.constant 0 : index
    %c0_0 = arith.constant 0 : index
    %0 = vector.load %arg1[%c0, %c0_0] : memref<8x64xbf16, #tpu.memory_space<vmem>>, vector<8x64xbf16>
    %c0_1 = arith.constant 0 : index
    %c0_2 = arith.constant 0 : index
    %1 = vector.load %arg2[%c0_1, %c0_2] : memref<64x128xbf16, #tpu.memory_space<vmem>>, vector<64x128xbf16>
    %cst = arith.constant dense<0.000000e+00> : vector<8x128xf32>
    %2 = tpu.matmul %0, %1, %cst {dimension_numbers = #tpu.dot_dimension_numbers<[1], [0], [0], [1], [0, 0, 1, 1], [], []>} : vector<8x64xbf16>, vector<64x128xbf16>, vector<8x128xf32> -> vector<8x128xf32>
    %c0_3 = arith.constant 0 : index
    %c0_4 = arith.constant 0 : index
    %3 = vector.load %arg3[%c0_3, %c0_4] : memref<8x128xf32, #tpu.memory_space<vmem>>, vector<8x128xf32>
    tpu.vector_store %arg3[%c0_3, %c0_4], %2 {strides = array<i32>} : memref<8x128xf32, #tpu.memory_space<vmem>>, vector<8x128xf32>,
    %cst_5 = arith.constant dense<0.000000e+00> : vector<128xf32>
    %4 = vector.multi_reduction <add>, %2, %cst_5 [0] : vector<8x128xf32> to vector<128xf32>
    %5 = vector.shape_cast %4 : vector<128xf32> to vector<1x128xf32>
    %6 = vector.shape_cast %5 : vector<1x128xf32> to vector<1x1x128xf32>
    %c0_6 = arith.constant 0 : index
    %c0_7 = arith.constant 0 : index
    %c0_8 = arith.constant 0 : index
    %7 = vector.load %arg4[%c0_6, %c0_7, %c0_8] : memref<1x1x128xf32, #tpu.memory_space<vmem>>, vector<1x1x128xf32>
    tpu.vector_store %arg4[%c0_6, %c0_7, %c0_8], %6 {strides = array<i32>} : memref<1x1x128xf32, #tpu.memory_space<vmem>>, vector<1x1x128xf32>,
    %8 = arith.mulf %2, %2 : vector<8x128xf32>
    %cst_9 = arith.constant dense<0.000000e+00> : vector<128xf32>
    %9 = vector.multi_reduction <add>, %8, %cst_9 [0] : vector<8x128xf32> to vector<128xf32>
    %10 = vector.shape_cast %9 : vector<128xf32> to vector<1x128xf32>
    %11 = vector.shape_cast %10 : vector<1x128xf32> to vector<1x1x128xf32>
    %c0_10 = arith.constant 0 : index
    %c0_11 = arith.constant 0 : index
    %c0_12 = arith.constant 0 : index
    %12 = vector.load %arg5[%c0_10, %c0_11, %c0_12] : memref<1x1x128xf32, #tpu.memory_space<vmem>>, vector<1x1x128xf32>
    tpu.vector_store %arg5[%c0_10, %c0_11, %c0_12], %11 {strides = array<i32>} : memref<1x1x128xf32, #tpu.memory_space<vmem>>, vector<1x1x128xf32>,
    return
  }
  func.func @transform_0(%arg0: i32) -> (i32, i32) {
    %c0_i32 = arith.constant 0 : i32
    %c0_i32_0 = arith.constant 0 : i32
    return %arg0, %c0_i32 : i32, i32
  }
  func.func @transform_1(%arg0: i32) -> (i32, i32) {
    %c0_i32 = arith.constant 0 : i32
    %c0_i32_0 = arith.constant 0 : i32
    %c0_i32_1 = arith.constant 0 : i32
    return %c0_i32, %c0_i32_0 : i32, i32
  }
  func.func @transform_2(%arg0: i32) -> (i32, i32) {
    %c0_i32 = arith.constant 0 : i32
    %c0_i32_0 = arith.constant 0 : i32
    return %arg0, %c0_i32 : i32, i32
  }
  func.func @transform_3(%arg0: i32) -> (i32, i32, i32) {
    %c0_i32 = arith.constant 0 : i32
    %c0_i32_0 = arith.constant 0 : i32
    %c0_i32_1 = arith.constant 0 : i32
    return %arg0, %c0_i32, %c0_i32_0 : i32, i32, i32
  }
  func.func @transform_4(%arg0: i32) -> (i32, i32, i32) {
    %c0_i32 = arith.constant 0 : i32
    %c0_i32_0 = arith.constant 0 : i32
    %c0_i32_1 = arith.constant 0 : i32
    return %arg0, %c0_i32, %c0_i32_0 : i32, i32, i32
  }
}

module attributes {stable_mosaic.version = 11 : i64} {
  func.func @_gemm_stats_kernel(%arg0: i32, %arg1: memref<8x576xbf16, #tpu.memory_space<vmem>>, %arg2: memref<576x128xbf16, #tpu.memory_space<vmem>>, %arg3: memref<8x128xf32, #tpu.memory_space<vmem>>, %arg4: memref<1x1x128xf32, #tpu.memory_space<vmem>>, %arg5: memref<1x1x128xf32, #tpu.memory_space<vmem>>) attributes {dimension_semantics = [#tpu.dimension_semantics<parallel>], iteration_bounds = array<i64: 1>, scalar_prefetch = 0 : i64, scratch_operands = 0 : i64, tpu.core_type = #tpu.core_type<tc>, window_params = [{transform_indices = @transform_0, window_bounds = array<i64: 8, 576>}, {pipeline_mode = #tpu.pipeline_mode<synchronous>, transform_indices = @transform_1, window_bounds = array<i64: 576, 128>}, {transform_indices = @transform_2, window_bounds = array<i64: 8, 128>}, {transform_indices = @transform_3, window_bounds = array<i64: 1, 1, 128>}, {transform_indices = @transform_4, window_bounds = array<i64: 1, 1, 128>}]} {
    %c0 = arith.constant 0 : index
    %c0_0 = arith.constant 0 : index
    %0 = vector.load %arg1[%c0, %c0_0] : memref<8x576xbf16, #tpu.memory_space<vmem>>, vector<8x576xbf16>
    %c0_1 = arith.constant 0 : index
    %c0_2 = arith.constant 0 : index
    %1 = vector.load %arg2[%c0_1, %c0_2] : memref<576x128xbf16, #tpu.memory_space<vmem>>, vector<576x128xbf16>
    %cst = arith.constant dense<0.000000e+00> : vector<8x128xf32>
    %2 = tpu.matmul %0, %1, %cst {dimension_numbers = #tpu.dot_dimension_numbers<[1], [0], [0], [1], [0, 0, 1, 1], [], []>} : vector<8x576xbf16>, vector<576x128xbf16>, vector<8x128xf32> -> vector<8x128xf32>
    %c0_3 = arith.constant 0 : index
    %c0_4 = arith.constant 0 : index
    %3 = vector.load %arg3[%c0_3, %c0_4] : memref<8x128xf32, #tpu.memory_space<vmem>>, vector<8x128xf32>
    tpu.vector_store %arg3[%c0_3, %c0_4], %2 {strides = array<i32>} : memref<8x128xf32, #tpu.memory_space<vmem>>, vector<8x128xf32>,
    %cst_5 = arith.constant dense<0.000000e+00> : vector<128xf32>
    %4 = vector.multi_reduction <add>, %2, %cst_5 [0] : vector<8x128xf32> to vector<128xf32>
    %5 = vector.shape_cast %4 : vector<128xf32> to vector<1x128xf32>
    %6 = vector.shape_cast %5 : vector<1x128xf32> to vector<1x1x128xf32>
    %c0_6 = arith.constant 0 : index
    %c0_7 = arith.constant 0 : index
    %c0_8 = arith.constant 0 : index
    %7 = vector.load %arg4[%c0_6, %c0_7, %c0_8] : memref<1x1x128xf32, #tpu.memory_space<vmem>>, vector<1x1x128xf32>
    tpu.vector_store %arg4[%c0_6, %c0_7, %c0_8], %6 {strides = array<i32>} : memref<1x1x128xf32, #tpu.memory_space<vmem>>, vector<1x1x128xf32>,
    %8 = arith.mulf %2, %2 : vector<8x128xf32>
    %cst_9 = arith.constant dense<0.000000e+00> : vector<128xf32>
    %9 = vector.multi_reduction <add>, %8, %cst_9 [0] : vector<8x128xf32> to vector<128xf32>
    %10 = vector.shape_cast %9 : vector<128xf32> to vector<1x128xf32>
    %11 = vector.shape_cast %10 : vector<1x128xf32> to vector<1x1x128xf32>
    %c0_10 = arith.constant 0 : index
    %c0_11 = arith.constant 0 : index
    %c0_12 = arith.constant 0 : index
    %12 = vector.load %arg5[%c0_10, %c0_11, %c0_12] : memref<1x1x128xf32, #tpu.memory_space<vmem>>, vector<1x1x128xf32>
    tpu.vector_store %arg5[%c0_10, %c0_11, %c0_12], %11 {strides = array<i32>} : memref<1x1x128xf32, #tpu.memory_space<vmem>>, vector<1x1x128xf32>,
    return
  }
  func.func @transform_0(%arg0: i32) -> (i32, i32) {
    %c0_i32 = arith.constant 0 : i32
    %c0_i32_0 = arith.constant 0 : i32
    return %arg0, %c0_i32 : i32, i32
  }
  func.func @transform_1(%arg0: i32) -> (i32, i32) {
    %c0_i32 = arith.constant 0 : i32
    %c0_i32_0 = arith.constant 0 : i32
    %c0_i32_1 = arith.constant 0 : i32
    return %c0_i32, %c0_i32_0 : i32, i32
  }
  func.func @transform_2(%arg0: i32) -> (i32, i32) {
    %c0_i32 = arith.constant 0 : i32
    %c0_i32_0 = arith.constant 0 : i32
    return %arg0, %c0_i32 : i32, i32
  }
  func.func @transform_3(%arg0: i32) -> (i32, i32, i32) {
    %c0_i32 = arith.constant 0 : i32
    %c0_i32_0 = arith.constant 0 : i32
    %c0_i32_1 = arith.constant 0 : i32
    return %arg0, %c0_i32, %c0_i32_0 : i32, i32, i32
  }
  func.func @transform_4(%arg0: i32) -> (i32, i32, i32) {
    %c0_i32 = arith.constant 0 : i32
    %c0_i32_0 = arith.constant 0 : i32
    %c0_i32_1 = arith.constant 0 : i32
    return %arg0, %c0_i32, %c0_i32_0 : i32, i32, i32
  }
}

module attributes {stable_mosaic.version = 11 : i64} {
  func.func @_affine_kernel(%arg0: i32, %arg1: memref<8x128xf32, #tpu.memory_space<vmem>>, %arg2: memref<1x128xf32, #tpu.memory_space<vmem>>, %arg3: memref<1x128xf32, #tpu.memory_space<vmem>>, %arg4: memref<8x128xf32, #tpu.memory_space<vmem>>) attributes {dimension_semantics = [#tpu.dimension_semantics<parallel>], iteration_bounds = array<i64: 1>, scalar_prefetch = 0 : i64, scratch_operands = 0 : i64, tpu.core_type = #tpu.core_type<tc>, window_params = [{transform_indices = @transform_0, window_bounds = array<i64: 8, 128>}, {pipeline_mode = #tpu.pipeline_mode<synchronous>, transform_indices = @transform_1, window_bounds = array<i64: 1, 128>}, {pipeline_mode = #tpu.pipeline_mode<synchronous>, transform_indices = @transform_2, window_bounds = array<i64: 1, 128>}, {transform_indices = @transform_3, window_bounds = array<i64: 8, 128>}]} {
    %c0 = arith.constant 0 : index
    %c0_0 = arith.constant 0 : index
    %0 = vector.load %arg1[%c0, %c0_0] : memref<8x128xf32, #tpu.memory_space<vmem>>, vector<8x128xf32>
    %c0_1 = arith.constant 0 : index
    %c0_2 = arith.constant 0 : index
    %1 = vector.load %arg2[%c0_1, %c0_2] : memref<1x128xf32, #tpu.memory_space<vmem>>, vector<1x128xf32>
    %2 = vector.broadcast %1 : vector<1x128xf32> to vector<8x128xf32>
    %3 = arith.mulf %0, %2 : vector<8x128xf32>
    %c0_3 = arith.constant 0 : index
    %c0_4 = arith.constant 0 : index
    %4 = vector.load %arg3[%c0_3, %c0_4] : memref<1x128xf32, #tpu.memory_space<vmem>>, vector<1x128xf32>
    %5 = vector.broadcast %4 : vector<1x128xf32> to vector<8x128xf32>
    %6 = arith.addf %3, %5 : vector<8x128xf32>
    %cst = arith.constant 0.000000e+00 : f32
    %7 = vector.broadcast %cst : f32 to vector<8x128xf32>
    %8 = arith.maximumf %6, %7 : vector<8x128xf32>
    %c0_5 = arith.constant 0 : index
    %c0_6 = arith.constant 0 : index
    %9 = vector.load %arg4[%c0_5, %c0_6] : memref<8x128xf32, #tpu.memory_space<vmem>>, vector<8x128xf32>
    tpu.vector_store %arg4[%c0_5, %c0_6], %8 {strides = array<i32>} : memref<8x128xf32, #tpu.memory_space<vmem>>, vector<8x128xf32>,
    return
  }
  func.func @transform_0(%arg0: i32) -> (i32, i32) {
    %c0_i32 = arith.constant 0 : i32
    %c0_i32_0 = arith.constant 0 : i32
    return %arg0, %c0_i32 : i32, i32
  }
  func.func @transform_1(%arg0: i32) -> (i32, i32) {
    %c0_i32 = arith.constant 0 : i32
    %c0_i32_0 = arith.constant 0 : i32
    %c0_i32_1 = arith.constant 0 : i32
    return %c0_i32, %c0_i32_0 : i32, i32
  }
  func.func @transform_2(%arg0: i32) -> (i32, i32) {
    %c0_i32 = arith.constant 0 : i32
    %c0_i32_0 = arith.constant 0 : i32
    %c0_i32_1 = arith.constant 0 : i32
    return %c0_i32, %c0_i32_0 : i32, i32
  }
  func.func @transform_3(%arg0: i32) -> (i32, i32) {
    %c0_i32 = arith.constant 0 : i32
    %c0_i32_0 = arith.constant 0 : i32
    return %arg0, %c0_i32 : i32, i32
  }
}

module attributes {stable_mosaic.version = 11 : i64} {
  func.func @_gemm_stats_kernel(%arg0: i32, %arg1: memref<8x1152xbf16, #tpu.memory_space<vmem>>, %arg2: memref<1152x128xbf16, #tpu.memory_space<vmem>>, %arg3: memref<8x128xf32, #tpu.memory_space<vmem>>, %arg4: memref<1x1x128xf32, #tpu.memory_space<vmem>>, %arg5: memref<1x1x128xf32, #tpu.memory_space<vmem>>) attributes {dimension_semantics = [#tpu.dimension_semantics<parallel>], iteration_bounds = array<i64: 1>, scalar_prefetch = 0 : i64, scratch_operands = 0 : i64, tpu.core_type = #tpu.core_type<tc>, window_params = [{transform_indices = @transform_0, window_bounds = array<i64: 8, 1152>}, {pipeline_mode = #tpu.pipeline_mode<synchronous>, transform_indices = @transform_1, window_bounds = array<i64: 1152, 128>}, {transform_indices = @transform_2, window_bounds = array<i64: 8, 128>}, {transform_indices = @transform_3, window_bounds = array<i64: 1, 1, 128>}, {transform_indices = @transform_4, window_bounds = array<i64: 1, 1, 128>}]} {
    %c0 = arith.constant 0 : index
    %c0_0 = arith.constant 0 : index
    %0 = vector.load %arg1[%c0, %c0_0] : memref<8x1152xbf16, #tpu.memory_space<vmem>>, vector<8x1152xbf16>
    %c0_1 = arith.constant 0 : index
    %c0_2 = arith.constant 0 : index
    %1 = vector.load %arg2[%c0_1, %c0_2] : memref<1152x128xbf16, #tpu.memory_space<vmem>>, vector<1152x128xbf16>
    %cst = arith.constant dense<0.000000e+00> : vector<8x128xf32>
    %2 = tpu.matmul %0, %1, %cst {dimension_numbers = #tpu.dot_dimension_numbers<[1], [0], [0], [1], [0, 0, 1, 1], [], []>} : vector<8x1152xbf16>, vector<1152x128xbf16>, vector<8x128xf32> -> vector<8x128xf32>
    %c0_3 = arith.constant 0 : index
    %c0_4 = arith.constant 0 : index
    %3 = vector.load %arg3[%c0_3, %c0_4] : memref<8x128xf32, #tpu.memory_space<vmem>>, vector<8x128xf32>
    tpu.vector_store %arg3[%c0_3, %c0_4], %2 {strides = array<i32>} : memref<8x128xf32, #tpu.memory_space<vmem>>, vector<8x128xf32>,
    %cst_5 = arith.constant dense<0.000000e+00> : vector<128xf32>
    %4 = vector.multi_reduction <add>, %2, %cst_5 [0] : vector<8x128xf32> to vector<128xf32>
    %5 = vector.shape_cast %4 : vector<128xf32> to vector<1x128xf32>
    %6 = vector.shape_cast %5 : vector<1x128xf32> to vector<1x1x128xf32>
    %c0_6 = arith.constant 0 : index
    %c0_7 = arith.constant 0 : index
    %c0_8 = arith.constant 0 : index
    %7 = vector.load %arg4[%c0_6, %c0_7, %c0_8] : memref<1x1x128xf32, #tpu.memory_space<vmem>>, vector<1x1x128xf32>
    tpu.vector_store %arg4[%c0_6, %c0_7, %c0_8], %6 {strides = array<i32>} : memref<1x1x128xf32, #tpu.memory_space<vmem>>, vector<1x1x128xf32>,
    %8 = arith.mulf %2, %2 : vector<8x128xf32>
    %cst_9 = arith.constant dense<0.000000e+00> : vector<128xf32>
    %9 = vector.multi_reduction <add>, %8, %cst_9 [0] : vector<8x128xf32> to vector<128xf32>
    %10 = vector.shape_cast %9 : vector<128xf32> to vector<1x128xf32>
    %11 = vector.shape_cast %10 : vector<1x128xf32> to vector<1x1x128xf32>
    %c0_10 = arith.constant 0 : index
    %c0_11 = arith.constant 0 : index
    %c0_12 = arith.constant 0 : index
    %12 = vector.load %arg5[%c0_10, %c0_11, %c0_12] : memref<1x1x128xf32, #tpu.memory_space<vmem>>, vector<1x1x128xf32>
    tpu.vector_store %arg5[%c0_10, %c0_11, %c0_12], %11 {strides = array<i32>} : memref<1x1x128xf32, #tpu.memory_space<vmem>>, vector<1x1x128xf32>,
    return
  }
  func.func @transform_0(%arg0: i32) -> (i32, i32) {
    %c0_i32 = arith.constant 0 : i32
    %c0_i32_0 = arith.constant 0 : i32
    return %arg0, %c0_i32 : i32, i32
  }
  func.func @transform_1(%arg0: i32) -> (i32, i32) {
    %c0_i32 = arith.constant 0 : i32
    %c0_i32_0 = arith.constant 0 : i32
    %c0_i32_1 = arith.constant 0 : i32
    return %c0_i32, %c0_i32_0 : i32, i32
  }
  func.func @transform_2(%arg0: i32) -> (i32, i32) {
    %c0_i32 = arith.constant 0 : i32
    %c0_i32_0 = arith.constant 0 : i32
    return %arg0, %c0_i32 : i32, i32
  }
  func.func @transform_3(%arg0: i32) -> (i32, i32, i32) {
    %c0_i32 = arith.constant 0 : i32
    %c0_i32_0 = arith.constant 0 : i32
    %c0_i32_1 = arith.constant 0 : i32
    return %arg0, %c0_i32, %c0_i32_0 : i32, i32, i32
  }
  func.func @transform_4(%arg0: i32) -> (i32, i32, i32) {
    %c0_i32 = arith.constant 0 : i32
    %c0_i32_0 = arith.constant 0 : i32
    %c0_i32_1 = arith.constant 0 : i32
    return %arg0, %c0_i32, %c0_i32_0 : i32, i32, i32
  }
}

module attributes {stable_mosaic.version = 11 : i64} {
  func.func @_affine_res_affine_kernel(%arg0: i32, %arg1: memref<8x128xf32, #tpu.memory_space<vmem>>, %arg2: memref<1x128xf32, #tpu.memory_space<vmem>>, %arg3: memref<1x128xf32, #tpu.memory_space<vmem>>, %arg4: memref<8x128xf32, #tpu.memory_space<vmem>>, %arg5: memref<1x128xf32, #tpu.memory_space<vmem>>, %arg6: memref<1x128xf32, #tpu.memory_space<vmem>>, %arg7: memref<8x128xf32, #tpu.memory_space<vmem>>) attributes {dimension_semantics = [#tpu.dimension_semantics<parallel>], iteration_bounds = array<i64: 1>, scalar_prefetch = 0 : i64, scratch_operands = 0 : i64, tpu.core_type = #tpu.core_type<tc>, window_params = [{transform_indices = @transform_0, window_bounds = array<i64: 8, 128>}, {pipeline_mode = #tpu.pipeline_mode<synchronous>, transform_indices = @transform_1, window_bounds = array<i64: 1, 128>}, {pipeline_mode = #tpu.pipeline_mode<synchronous>, transform_indices = @transform_2, window_bounds = array<i64: 1, 128>}, {transform_indices = @transform_3, window_bounds = array<i64: 8, 128>}, {pipeline_mode = #tpu.pipeline_mode<synchronous>, transform_indices = @transform_4, window_bounds = array<i64: 1, 128>}, {pipeline_mode = #tpu.pipeline_mode<synchronous>, transform_indices = @transform_5, window_bounds = array<i64: 1, 128>}, {transform_indices = @transform_6, window_bounds = array<i64: 8, 128>}]} {
    %c0 = arith.constant 0 : index
    %c0_0 = arith.constant 0 : index
    %0 = vector.load %arg1[%c0, %c0_0] : memref<8x128xf32, #tpu.memory_space<vmem>>, vector<8x128xf32>
    %c0_1 = arith.constant 0 : index
    %c0_2 = arith.constant 0 : index
    %1 = vector.load %arg2[%c0_1, %c0_2] : memref<1x128xf32, #tpu.memory_space<vmem>>, vector<1x128xf32>
    %2 = vector.broadcast %1 : vector<1x128xf32> to vector<8x128xf32>
    %3 = arith.mulf %0, %2 : vector<8x128xf32>
    %c0_3 = arith.constant 0 : index
    %c0_4 = arith.constant 0 : index
    %4 = vector.load %arg3[%c0_3, %c0_4] : memref<1x128xf32, #tpu.memory_space<vmem>>, vector<1x128xf32>
    %5 = vector.broadcast %4 : vector<1x128xf32> to vector<8x128xf32>
    %6 = arith.addf %3, %5 : vector<8x128xf32>
    %c0_5 = arith.constant 0 : index
    %c0_6 = arith.constant 0 : index
    %7 = vector.load %arg4[%c0_5, %c0_6] : memref<8x128xf32, #tpu.memory_space<vmem>>, vector<8x128xf32>
    %c0_7 = arith.constant 0 : index
    %c0_8 = arith.constant 0 : index
    %8 = vector.load %arg5[%c0_7, %c0_8] : memref<1x128xf32, #tpu.memory_space<vmem>>, vector<1x128xf32>
    %9 = vector.broadcast %8 : vector<1x128xf32> to vector<8x128xf32>
    %10 = arith.mulf %7, %9 : vector<8x128xf32>
    %11 = arith.addf %6, %10 : vector<8x128xf32>
    %c0_9 = arith.constant 0 : index
    %c0_10 = arith.constant 0 : index
    %12 = vector.load %arg6[%c0_9, %c0_10] : memref<1x128xf32, #tpu.memory_space<vmem>>, vector<1x128xf32>
    %13 = vector.broadcast %12 : vector<1x128xf32> to vector<8x128xf32>
    %14 = arith.addf %11, %13 : vector<8x128xf32>
    %cst = arith.constant 0.000000e+00 : f32
    %15 = vector.broadcast %cst : f32 to vector<8x128xf32>
    %16 = arith.maximumf %14, %15 : vector<8x128xf32>
    %c0_11 = arith.constant 0 : index
    %c0_12 = arith.constant 0 : index
    %17 = vector.load %arg7[%c0_11, %c0_12] : memref<8x128xf32, #tpu.memory_space<vmem>>, vector<8x128xf32>
    tpu.vector_store %arg7[%c0_11, %c0_12], %16 {strides = array<i32>} : memref<8x128xf32, #tpu.memory_space<vmem>>, vector<8x128xf32>,
    return
  }
  func.func @transform_0(%arg0: i32) -> (i32, i32) {
    %c0_i32 = arith.constant 0 : i32
    %c0_i32_0 = arith.constant 0 : i32
    return %arg0, %c0_i32 : i32, i32
  }
  func.func @transform_1(%arg0: i32) -> (i32, i32) {
    %c0_i32 = arith.constant 0 : i32
    %c0_i32_0 = arith.constant 0 : i32
    %c0_i32_1 = arith.constant 0 : i32
    return %c0_i32, %c0_i32_0 : i32, i32
  }
  func.func @transform_2(%arg0: i32) -> (i32, i32) {
    %c0_i32 = arith.constant 0 : i32
    %c0_i32_0 = arith.constant 0 : i32
    %c0_i32_1 = arith.constant 0 : i32
    return %c0_i32, %c0_i32_0 : i32, i32
  }
  func.func @transform_3(%arg0: i32) -> (i32, i32) {
    %c0_i32 = arith.constant 0 : i32
    %c0_i32_0 = arith.constant 0 : i32
    return %arg0, %c0_i32 : i32, i32
  }
  func.func @transform_4(%arg0: i32) -> (i32, i32) {
    %c0_i32 = arith.constant 0 : i32
    %c0_i32_0 = arith.constant 0 : i32
    %c0_i32_1 = arith.constant 0 : i32
    return %c0_i32, %c0_i32_0 : i32, i32
  }
  func.func @transform_5(%arg0: i32) -> (i32, i32) {
    %c0_i32 = arith.constant 0 : i32
    %c0_i32_0 = arith.constant 0 : i32
    %c0_i32_1 = arith.constant 0 : i32
    return %c0_i32, %c0_i32_0 : i32, i32
  }
  func.func @transform_6(%arg0: i32) -> (i32, i32) {
    %c0_i32 = arith.constant 0 : i32
    %c0_i32_0 = arith.constant 0 : i32
    return %arg0, %c0_i32 : i32, i32
  }
}

module attributes {stable_mosaic.version = 11 : i64} {
  func.func @_affine_res_kernel(%arg0: i32, %arg1: memref<8x128xf32, #tpu.memory_space<vmem>>, %arg2: memref<1x128xf32, #tpu.memory_space<vmem>>, %arg3: memref<1x128xf32, #tpu.memory_space<vmem>>, %arg4: memref<8x128xf32, #tpu.memory_space<vmem>>, %arg5: memref<8x128xf32, #tpu.memory_space<vmem>>) attributes {dimension_semantics = [#tpu.dimension_semantics<parallel>], iteration_bounds = array<i64: 1>, scalar_prefetch = 0 : i64, scratch_operands = 0 : i64, tpu.core_type = #tpu.core_type<tc>, window_params = [{transform_indices = @transform_0, window_bounds = array<i64: 8, 128>}, {pipeline_mode = #tpu.pipeline_mode<synchronous>, transform_indices = @transform_1, window_bounds = array<i64: 1, 128>}, {pipeline_mode = #tpu.pipeline_mode<synchronous>, transform_indices = @transform_2, window_bounds = array<i64: 1, 128>}, {transform_indices = @transform_3, window_bounds = array<i64: 8, 128>}, {transform_indices = @transform_4, window_bounds = array<i64: 8, 128>}]} {
    %c0 = arith.constant 0 : index
    %c0_0 = arith.constant 0 : index
    %0 = vector.load %arg1[%c0, %c0_0] : memref<8x128xf32, #tpu.memory_space<vmem>>, vector<8x128xf32>
    %c0_1 = arith.constant 0 : index
    %c0_2 = arith.constant 0 : index
    %1 = vector.load %arg2[%c0_1, %c0_2] : memref<1x128xf32, #tpu.memory_space<vmem>>, vector<1x128xf32>
    %2 = vector.broadcast %1 : vector<1x128xf32> to vector<8x128xf32>
    %3 = arith.mulf %0, %2 : vector<8x128xf32>
    %c0_3 = arith.constant 0 : index
    %c0_4 = arith.constant 0 : index
    %4 = vector.load %arg3[%c0_3, %c0_4] : memref<1x128xf32, #tpu.memory_space<vmem>>, vector<1x128xf32>
    %5 = vector.broadcast %4 : vector<1x128xf32> to vector<8x128xf32>
    %6 = arith.addf %3, %5 : vector<8x128xf32>
    %c0_5 = arith.constant 0 : index
    %c0_6 = arith.constant 0 : index
    %7 = vector.load %arg4[%c0_5, %c0_6] : memref<8x128xf32, #tpu.memory_space<vmem>>, vector<8x128xf32>
    %8 = arith.addf %6, %7 : vector<8x128xf32>
    %cst = arith.constant 0.000000e+00 : f32
    %9 = vector.broadcast %cst : f32 to vector<8x128xf32>
    %10 = arith.maximumf %8, %9 : vector<8x128xf32>
    %c0_7 = arith.constant 0 : index
    %c0_8 = arith.constant 0 : index
    %11 = vector.load %arg5[%c0_7, %c0_8] : memref<8x128xf32, #tpu.memory_space<vmem>>, vector<8x128xf32>
    tpu.vector_store %arg5[%c0_7, %c0_8], %10 {strides = array<i32>} : memref<8x128xf32, #tpu.memory_space<vmem>>, vector<8x128xf32>,
    return
  }
  func.func @transform_0(%arg0: i32) -> (i32, i32) {
    %c0_i32 = arith.constant 0 : i32
    %c0_i32_0 = arith.constant 0 : i32
    return %arg0, %c0_i32 : i32, i32
  }
  func.func @transform_1(%arg0: i32) -> (i32, i32) {
    %c0_i32 = arith.constant 0 : i32
    %c0_i32_0 = arith.constant 0 : i32
    %c0_i32_1 = arith.constant 0 : i32
    return %c0_i32, %c0_i32_0 : i32, i32
  }
  func.func @transform_2(%arg0: i32) -> (i32, i32) {
    %c0_i32 = arith.constant 0 : i32
    %c0_i32_0 = arith.constant 0 : i32
    %c0_i32_1 = arith.constant 0 : i32
    return %c0_i32, %c0_i32_0 : i32, i32
  }
  func.func @transform_3(%arg0: i32) -> (i32, i32) {
    %c0_i32 = arith.constant 0 : i32
    %c0_i32_0 = arith.constant 0 : i32
    return %arg0, %c0_i32 : i32, i32
  }
  func.func @transform_4(%arg0: i32) -> (i32, i32) {
    %c0_i32 = arith.constant 0 : i32
    %c0_i32_0 = arith.constant 0 : i32
    return %arg0, %c0_i32 : i32, i32
  }
}

module attributes {stable_mosaic.version = 11 : i64} {
  func.func @_head_kernel(%arg0: i32, %arg1: memref<2x4x128xf32, #tpu.memory_space<vmem>>, %arg2: memref<128x10xf32, #tpu.memory_space<vmem>>, %arg3: memref<1x10xf32, #tpu.memory_space<vmem>>, %arg4: memref<2x10xf32, #tpu.memory_space<vmem>>) attributes {dimension_semantics = [#tpu.dimension_semantics<arbitrary>], iteration_bounds = array<i64: 1>, scalar_prefetch = 0 : i64, scratch_operands = 0 : i64, tpu.core_type = #tpu.core_type<tc>, window_params = [{pipeline_mode = #tpu.pipeline_mode<synchronous>, transform_indices = @transform_0, window_bounds = array<i64: 2, 4, 128>}, {pipeline_mode = #tpu.pipeline_mode<synchronous>, transform_indices = @transform_1, window_bounds = array<i64: 128, 10>}, {pipeline_mode = #tpu.pipeline_mode<synchronous>, transform_indices = @transform_2, window_bounds = array<i64: 1, 10>}, {pipeline_mode = #tpu.pipeline_mode<synchronous>, transform_indices = @transform_3, window_bounds = array<i64: 2, 10>}]} {
    %c0 = arith.constant 0 : index
    %c0_0 = arith.constant 0 : index
    %c0_1 = arith.constant 0 : index
    %0 = vector.load %arg1[%c0, %c0_0, %c0_1] : memref<2x4x128xf32, #tpu.memory_space<vmem>>, vector<2x4x128xf32>
    %cst = arith.constant dense<0.000000e+00> : vector<2x128xf32>
    %1 = vector.multi_reduction <add>, %0, %cst [1] : vector<2x4x128xf32> to vector<2x128xf32>
    %cst_2 = arith.constant 4.000000e+00 : f32
    %2 = vector.broadcast %cst_2 : f32 to vector<2x128xf32>
    %3 = arith.divf %1, %2 : vector<2x128xf32>
    %c0_3 = arith.constant 0 : index
    %c0_4 = arith.constant 0 : index
    %4 = vector.load %arg2[%c0_3, %c0_4] : memref<128x10xf32, #tpu.memory_space<vmem>>, vector<128x10xf32>
    %cst_5 = arith.constant dense<0.000000e+00> : vector<2x10xf32>
    %5 = tpu.matmul %3, %4, %cst_5 {dimension_numbers = #tpu.dot_dimension_numbers<[1], [0], [0], [1], [0, 0, 1, 1], [], []>} : vector<2x128xf32>, vector<128x10xf32>, vector<2x10xf32> -> vector<2x10xf32>
    %c0_6 = arith.constant 0 : index
    %c0_7 = arith.constant 0 : index
    %6 = vector.load %arg3[%c0_6, %c0_7] : memref<1x10xf32, #tpu.memory_space<vmem>>, vector<1x10xf32>
    %7 = vector.broadcast %6 : vector<1x10xf32> to vector<2x10xf32>
    %8 = arith.addf %5, %7 : vector<2x10xf32>
    %c0_8 = arith.constant 0 : index
    %c0_9 = arith.constant 0 : index
    %9 = vector.load %arg4[%c0_8, %c0_9] : memref<2x10xf32, #tpu.memory_space<vmem>>, vector<2x10xf32>
    tpu.vector_store %arg4[%c0_8, %c0_9], %8 {strides = array<i32>} : memref<2x10xf32, #tpu.memory_space<vmem>>, vector<2x10xf32>,
    return
  }
  func.func @transform_0(%arg0: i32) -> (i32, i32, i32) {
    %c0_i32 = arith.constant 0 : i32
    %c0_i32_0 = arith.constant 0 : i32
    %c0_i32_1 = arith.constant 0 : i32
    %c0_i32_2 = arith.constant 0 : i32
    return %c0_i32, %c0_i32_0, %c0_i32_1 : i32, i32, i32
  }
  func.func @transform_1(%arg0: i32) -> (i32, i32) {
    %c0_i32 = arith.constant 0 : i32
    %c0_i32_0 = arith.constant 0 : i32
    %c0_i32_1 = arith.constant 0 : i32
    return %c0_i32, %c0_i32_0 : i32, i32
  }
  func.func @transform_2(%arg0: i32) -> (i32, i32) {
    %c0_i32 = arith.constant 0 : i32
    %c0_i32_0 = arith.constant 0 : i32
    %c0_i32_1 = arith.constant 0 : i32
    return %c0_i32, %c0_i32_0 : i32, i32
  }
  func.func @transform_3(%arg0: i32) -> (i32, i32) {
    %c0_i32 = arith.constant 0 : i32
    %c0_i32_0 = arith.constant 0 : i32
    %c0_i32_1 = arith.constant 0 : i32
    return %c0_i32, %c0_i32_0 : i32, i32
  }
}

</mosaic_0001>

<llo_original>
// kernel: _lambda_.39
$region0: #{_lambda_.39}
  #allocation0 [shape = 'u32[]', space=smem, size = 0x4, offset = 0x4, fixed_abs, tag = 'smem constant byte address 0x4 - core index']
  #allocation1 [shape = 'u32[144,128]{1,0:T(1,128)}', space=vmem, size = 0x12000, scoped, tag = 'internal scratch']
  %s0 = inlined_call_operand.vmem [shape: f32[512,16], index: 0, kind: input, shape index: {}, may-alias: {0,3}]
  %s1 = inlined_call_operand.vmem [shape: f32[1,16], index: 1, kind: input, shape index: {}]
  %s2 = inlined_call_operand.vmem [shape: f32[1,16], index: 2, kind: input, shape index: {}]
  %s3 = inlined_call_operand.vmem [shape: f32[512,16], index: 3, kind: output, shape index: {}, may-alias: {0,3}]
  %s4 = sld [smem:[#allocation0]]
  $region45: #{_lambda_.39} parent=0
    _
  %s6 = ssub.s32 1, %s4
  %s7 = scalar_select 0, %s6, %s4
  loop: start=0, step=1, limit=4
  $region2: #{_lambda_.39} parent=0 // loop_pre_header
    _
  $region3: #{_lambda_.39} parent=0 // loop_header
    %s9 = sphi 0, %s13
    %p10 = scmp.ge.s32.totalorder %s9, 4
    %s19 = sphi 0, %s21
    %s22 = sphi 0, %s19
    %s23 = sphi 0, %s22
    %s39 = sphi 0, %s23
    %s43 = sphi 0, %s43
    %s45 = sphi 0, %s43
    %s46 = sphi 0, %s45
    %s60 = sphi 0, %s46
    %s64 = sphi 0, %s64
    %s66 = sphi 0, %s64
    %s67 = sphi 0, %s66
    %s81 = sphi 0, %s67
    %s87 = sphi 0, %s89
    %s90 = sphi 0, %s87
    %s91 = sphi 0, %s90
    %s107 = sphi 0, %s91
  $region4: #{_lambda_.39} parent=0 // loop_header_branch
    %12 = sbr.rel (%p10) target = $region8
  $region5: #{_lambda_.39} parent=0 // loop_body
    %s14 = ssub.s32 %s9, 1
    %s15 = ssub.s32 %s9, 2
    %s16 = sadd.s32 %s9, 1
    %s17 = ssub.s32 %s9, %s16
    %p18 = scmp.eq.s32.totalorder %s17, 0
    %s20 = sadd.s32 %s19, 1
    %s21 = scalar_select %p18, %s19, %s20
    %p24 = pneg %p18
    %p25 = scmp.eq.s32.totalorder %s9, 1
    %p26 = por %p24, %p25
    %p27 = scmp.ne.s32.totalorder %s19, %s22
    %p28 = scmp.eq.s32.totalorder %s9, 0
    %p29 = por %p27, %p28
    %p30 = scmp.ne.s32.totalorder %s19, %s22
    %p31 = scmp.eq.s32.totalorder %s14, 1
    %p32 = por %p30, %p31
    %p33 = scmp.ne.s32.totalorder %s22, %s23
    %p34 = scmp.eq.s32.totalorder %s14, 0
    %p35 = por %p33, %p34
    %p36 = scmp.ne.s32.totalorder %s22, %s23
    %p37 = scmp.eq.s32.totalorder %s15, 1
    %p38 = por %p36, %p37
    %p40 = scmp.ne.s32.totalorder %s23, %s39
    %p41 = scmp.eq.s32.totalorder %s15, 0
    %p42 = por %p40, %p41
    %s44 = sadd.s32 %s43, 1
    %p47 = scmp.eq.s32.totalorder %s9, 1
    %p48 = scmp.ne.s32.totalorder %s43, %s45
    %p49 = scmp.eq.s32.totalorder %s9, 0
    %p50 = por %p48, %p49
    %p51 = scmp.ne.s32.totalorder %s43, %s45
    %p52 = scmp.eq.s32.totalorder %s14, 1
    %p53 = por %p51, %p52
    %p54 = scmp.ne.s32.totalorder %s45, %s46
    %p55 = scmp.eq.s32.totalorder %s14, 0
    %p56 = por %p54, %p55
    %p57 = scmp.ne.s32.totalorder %s45, %s46
    %p58 = scmp.eq.s32.totalorder %s15, 1
    %p59 = por %p57, %p58
    %p61 = scmp.ne.s32.totalorder %s46, %s60
    %p62 = scmp.eq.s32.totalorder %s15, 0
    %p63 = por %p61, %p62
    %s65 = sadd.s32 %s64, 1
    %p68 = scmp.eq.s32.totalorder %s9, 1
    %p69 = scmp.ne.s32.totalorder %s64, %s66
    %p70 = scmp.eq.s32.totalorder %s9, 0
    %p71 = por %p69, %p70
    %p72 = scmp.ne.s32.totalorder %s64, %s66
    %p73 = scmp.eq.s32.totalorder %s14, 1
    %p74 = por %p72, %p73
    %p75 = scmp.ne.s32.totalorder %s66, %s67
    %p76 = scmp.eq.s32.totalorder %s14, 0
    %p77 = por %p75, %p76
    %p78 = scmp.ne.s32.totalorder %s66, %s67
    %p79 = scmp.eq.s32.totalorder %s15, 1
    %p80 = por %p78, %p79
    %p82 = scmp.ne.s32.totalorder %s67, %s81
    %p83 = scmp.eq.s32.totalorder %s15, 0
    %p84 = por %p82, %p83
    %s85 = ssub.s32 %s9, %s16
    %p86 = scmp.eq.s32.totalorder %s85, 0
    %s88 = sadd.s32 %s87, 1
    %s89 = scalar_select %p86, %s87, %s88
    %p92 = pneg %p86
    %p93 = scmp.eq.s32.totalorder %s9, 1
    %p94 = por %p92, %p93
    %p95 = scmp.ne.s32.totalorder %s87, %s90
    %p96 = scmp.eq.s32.totalorder %s9, 0
    %p97 = por %p95, %p96
    %p98 = scmp.ne.s32.totalorder %s87, %s90
    %p99 = scmp.eq.s32.totalorder %s14, 1
    %p100 = por %p98, %p99
    %p101 = scmp.ne.s32.totalorder %s90, %s91
    %p102 = scmp.eq.s32.totalorder %s14, 0
    %p103 = por %p101, %p102
    %p104 = scmp.ne.s32.totalorder %s90, %s91
    %p105 = scmp.eq.s32.totalorder %s15, 1
    %p106 = por %p104, %p105
    %p108 = scmp.ne.s32.totalorder %s91, %s107
    %p109 = scmp.eq.s32.totalorder %s15, 0
    %p110 = por %p108, %p109
    %p111 = scmp.le.s32.totalorder 1, %s9
    %p112 = scmp.lt.s32.totalorder %s9, 3
    %p113 = pnand %p111, %p112
    %p114 = pneg %p113
    // Predicated region
    $region9: #{_lambda_.39} parent=5 // pred_check
      _
    $region10: #{_lambda_.39} parent=5 // pred_check_branch
      %116 = sbr.rel (%p113) target = $region12
    $region11: #{_lambda_.39} parent=5 // pred_region
      %s117 = ssub.s32 %s9, 1
      // Predicated region
      $region13: #{_lambda_.39} parent=11 // pred_check
        %p118 = pneg %p56
      $region14: #{_lambda_.39} parent=11 // pred_check_branch
        %120 = sbr.rel (%p118) target = $region16
      $region15: #{_lambda_.39} parent=11 // pred_region
        _
      $region16: #{_lambda_.39} parent=11 // pred_fallthru
        _
      // Predicated region
      $region17: #{_lambda_.39} parent=11 // pred_check
        %p121 = pneg %p77
      $region18: #{_lambda_.39} parent=11 // pred_check_branch
        %123 = sbr.rel (%p121) target = $region20
      $region19: #{_lambda_.39} parent=11 // pred_region
        _
      $region20: #{_lambda_.39} parent=11 // pred_fallthru
        _
    $region12: #{_lambda_.39} parent=5 // pred_fallthru
      _
    %p124 = scmp.lt.s32.totalorder %s9, 2
    // Predicated region
    $region21: #{_lambda_.39} parent=5 // pred_check
      %p125 = pneg %p124
    $region22: #{_lambda_.39} parent=5 // pred_check_branch
      %127 = sbr.rel (%p125) target = $region24
    $region23: #{_lambda_.39} parent=5 // pred_region
      // Predicated region
      $region25: #{_lambda_.39} parent=23 // pred_check
        %p128 = pneg %p29
      $region26: #{_lambda_.39} parent=23 // pred_check_branch
        %130 = sbr.rel (%p128) target = $region28
      $region27: #{_lambda_.39} parent=23 // pred_region
        %s131 = smul.u32 32, %s9
        %p132 = scmp.lt.s32.totalorder %s131, 63
        %s133 = scalar_select %p132, %s131, 63
        %s134 = smul.addr %s133, 8
        %s135 = scalar_lea.vmem %s0, %s134
        %s136 = smul.u32 32, %s9
      $region28: #{_lambda_.39} parent=23 // pred_fallthru
        _
    $region24: #{_lambda_.39} parent=5 // pred_fallthru
      _
    %p137 = scmp.le.s32.totalorder 1, %s9
    %p138 = scmp.lt.s32.totalorder %s9, 3
    %p139 = pnand %p137, %p138
    %p140 = pneg %p139
    // Predicated region
    $region29: #{_lambda_.39} parent=5 // pred_check
      _
    $region30: #{_lambda_.39} parent=5 // pred_check_branch
      %142 = sbr.rel (%p139) target = $region32
    $region31: #{_lambda_.39} parent=5 // pred_region
      %s143 = ssub.s32 %s9, 1
      %s144 = smul.u32 32, %s14
      %p145 = scmp.lt.s32.totalorder %s144, 63
      %s146 = scalar_select %p145, %s144, 63
      %s147 = smul.addr %s146, 8
      %s148 = scalar_lea.vmem %s0, %s147
      %p149 = pneg %p35
      %p150 = pneg %p32
      %p151 = pneg %p56
      %p152 = pneg %p53
      %p153 = pneg %p77
      %p154 = pneg %p74
      %p155 = pneg %p103
      %p156 = pneg %p100
      %s157 = smul.u32 32, %s14
      %p158 = scmp.lt.s32.totalorder %s157, 63
      %s159 = scalar_select %p158, %s157, 63
      %s160 = smul.addr %s159, 8
      %s161 = scalar_lea.vmem %s3, %s160
      %s162 = smul.u32 32, %s14
      %p163 = scmp.lt.s32.totalorder %s162, 63
      %s164 = scalar_select %p163, %s162, 63
      %s165 = smul.addr %s164, 8
      %s166 = scalar_lea.vmem %s0, %s165
      %s167 = smul.u32 32, %s14
      %s168 = smul.u32 32, %s14
      %p169 = scmp.lt.s32.totalorder %s168, 63
      %s170 = scalar_select %p169, %s168, 63
      %s171 = smul.addr %s170, 8
      %s172 = scalar_lea.vmem %s3, %s171
      %s173 = smul.u32 32, %s14
      %v174 = vld [vmem:[%s166] sm:$0xff]
      %v175 = vld [vmem:[%s166 + $0x8] sm:$0xff]
      %v176 = vld [vmem:[%s166 + $0x10] sm:$0xff]
      %v177 = vld [vmem:[%s166 + $0x18] sm:$0xff]
      %v178 = vld [vmem:[%s166 + $0x20] sm:$0xff]
      %v179 = vld [vmem:[%s166 + $0x28] sm:$0xff]
      %v180 = vld [vmem:[%s166 + $0x30] sm:$0xff]
      %v181 = vld [vmem:[%s166 + $0x38] sm:$0xff]
      %v182 = vld [vmem:[%s166 + $0x40] sm:$0xff]
      %v183 = vld [vmem:[%s166 + $0x48] sm:$0xff]
      %v184 = vld [vmem:[%s166 + $0x50] sm:$0xff]
      %v185 = vld [vmem:[%s166 + $0x58] sm:$0xff]
      %v186 = vld [vmem:[%s166 + $0x60] sm:$0xff]
      %v187 = vld [vmem:[%s166 + $0x68] sm:$0xff]
      %v188 = vld [vmem:[%s166 + $0x70] sm:$0xff]
      %v189 = vld [vmem:[%s166 + $0x78] sm:$0xff]
      %v190 = vld [vmem:[%s166 + $0x80] sm:$0xff]
      %v191 = vld [vmem:[%s166 + $0x88] sm:$0xff]
      %v192 = vld [vmem:[%s166 + $0x90] sm:$0xff]
      %v193 = vld [vmem:[%s166 + $0x98] sm:$0xff]
      %v194 = vld [vmem:[%s166 + $0xa0] sm:$0xff]
      %v195 = vld [vmem:[%s166 + $0xa8] sm:$0xff]
      %v196 = vld [vmem:[%s166 + $0xb0] sm:$0xff]
      %v197 = vld [vmem:[%s166 + $0xb8] sm:$0xff]
      %v198 = vld [vmem:[%s166 + $0xc0] sm:$0xff]
      %v199 = vld [vmem:[%s166 + $0xc8] sm:$0xff]
      %v200 = vld [vmem:[%s166 + $0xd0] sm:$0xff]
      %v201 = vld [vmem:[%s166 + $0xd8] sm:$0xff]
      %v202 = vld [vmem:[%s166 + $0xe0] sm:$0xff]
      %v203 = vld [vmem:[%s166 + $0xe8] sm:$0xff]
      %v204 = vld [vmem:[%s166 + $0xf0] sm:$0xff]
      %v205 = vld [vmem:[%s166 + $0xf8] sm:$0xff]
      %v206 = vld [vmem:[%s1] sm:$0x1]
      %v208 = vlaneseq
      %v209 = vshrl.u32 %v208, 7
      %v210 = vsub.s32 0, %v209
      %v211 = vrot.slane %v206, %v210
      %v213 = vmul.f32 %v174, %v211
      %v214 = vmul.f32 %v175, %v211
      %v215 = vmul.f32 %v176, %v211
      %v216 = vmul.f32 %v177, %v211
      %v217 = vmul.f32 %v178, %v211
      %v218 = vmul.f32 %v179, %v211
      %v219 = vmul.f32 %v180, %v211
      %v220 = vmul.f32 %v181, %v211
      %v221 = vmul.f32 %v182, %v211
      %v222 = vmul.f32 %v183, %v211
      %v223 = vmul.f32 %v184, %v211
      %v224 = vmul.f32 %v185, %v211
      %v225 = vmul.f32 %v186, %v211
      %v226 = vmul.f32 %v187, %v211
      %v227 = vmul.f32 %v188, %v211
      %v228 = vmul.f32 %v189, %v211
      %v229 = vmul.f32 %v190, %v211
      %v230 = vmul.f32 %v191, %v211
      %v231 = vmul.f32 %v192, %v211
      %v232 = vmul.f32 %v193, %v211
      %v233 = vmul.f32 %v194, %v211
      %v234 = vmul.f32 %v195, %v211
      %v235 = vmul.f32 %v196, %v211
      %v236 = vmul.f32 %v197, %v211
      %v237 = vmul.f32 %v198, %v211
      %v238 = vmul.f32 %v199, %v211
      %v239 = vmul.f32 %v200, %v211
      %v240 = vmul.f32 %v201, %v211
      %v241 = vmul.f32 %v202, %v211
      %v242 = vmul.f32 %v203, %v211
      %v243 = vmul.f32 %v204, %v211
      %v244 = vmul.f32 %v205, %v211
      %v245 = vld [vmem:[%s2] sm:$0x1]
      %v247 = vlaneseq
      %v248 = vshrl.u32 %v247, 7
      %v249 = vsub.s32 0, %v248
      %v250 = vrot.slane %v245, %v249
      %v252 = vadd.f32 %v213, %v250
      %v253 = vadd.f32 %v214, %v250
      %v254 = vadd.f32 %v215, %v250
      %v255 = vadd.f32 %v216, %v250
      %v256 = vadd.f32 %v217, %v250
      %v257 = vadd.f32 %v218, %v250
      %v258 = vadd.f32 %v219, %v250
      %v259 = vadd.f32 %v220, %v250
      %v260 = vadd.f32 %v221, %v250
      %v261 = vadd.f32 %v222, %v250
      %v262 = vadd.f32 %v223, %v250
      %v263 = vadd.f32 %v224, %v250
      %v264 = vadd.f32 %v225, %v250
      %v265 = vadd.f32 %v226, %v250
      %v266 = vadd.f32 %v227, %v250
      %v267 = vadd.f32 %v228, %v250
      %v268 = vadd.f32 %v229, %v250
      %v269 = vadd.f32 %v230, %v250
      %v270 = vadd.f32 %v231, %v250
      %v271 = vadd.f32 %v232, %v250
      %v272 = vadd.f32 %v233, %v250
      %v273 = vadd.f32 %v234, %v250
      %v274 = vadd.f32 %v235, %v250
      %v275 = vadd.f32 %v236, %v250
      %v276 = vadd.f32 %v237, %v250
      %v277 = vadd.f32 %v238, %v250
      %v278 = vadd.f32 %v239, %v250
      %v279 = vadd.f32 %v240, %v250
      %v280 = vadd.f32 %v241, %v250
      %v281 = vadd.f32 %v242, %v250
      %v282 = vadd.f32 %v243, %v250
      %v283 = vadd.f32 %v244, %v250
      %v284 = vmax.f32 %v252, 0.0
      %v285 = vmax.f32 %v253, 0.0
      %v286 = vmax.f32 %v254, 0.0
      %v287 = vmax.f32 %v255, 0.0
      %v288 = vmax.f32 %v256, 0.0
      %v289 = vmax.f32 %v257, 0.0
      %v290 = vmax.f32 %v258, 0.0
      %v291 = vmax.f32 %v259, 0.0
      %v292 = vmax.f32 %v260, 0.0
      %v293 = vmax.f32 %v261, 0.0
      %v294 = vmax.f32 %v262, 0.0
      %v295 = vmax.f32 %v263, 0.0
      %v296 = vmax.f32 %v264, 0.0
      %v297 = vmax.f32 %v265, 0.0
      %v298 = vmax.f32 %v266, 0.0
      %v299 = vmax.f32 %v267, 0.0
      %v300 = vmax.f32 %v268, 0.0
      %v301 = vmax.f32 %v269, 0.0
      %v302 = vmax.f32 %v270, 0.0
      %v303 = vmax.f32 %v271, 0.0
      %v304 = vmax.f32 %v272, 0.0
      %v305 = vmax.f32 %v273, 0.0
      %v306 = vmax.f32 %v274, 0.0
      %v307 = vmax.f32 %v275, 0.0
      %v308 = vmax.f32 %v276, 0.0
      %v309 = vmax.f32 %v277, 0.0
      %v310 = vmax.f32 %v278, 0.0
      %v311 = vmax.f32 %v279, 0.0
      %v312 = vmax.f32 %v280, 0.0
      %v313 = vmax.f32 %v281, 0.0
      %v314 = vmax.f32 %v282, 0.0
      %v315 = vmax.f32 %v283, 0.0
      %vm316 = vcmask 130048
      %317 = vst.msk [vmem:[%s172] sm:$0xff] %vm316, %v284
      %318 = vst.msk [vmem:[%s172 + $0x8] sm:$0xff] %vm316, %v285
      %319 = vst.msk [vmem:[%s172 + $0x10] sm:$0xff] %vm316, %v286
      %320 = vst.msk [vmem:[%s172 + $0x18] sm:$0xff] %vm316, %v287
      %321 = vst.msk [vmem:[%s172 + $0x20] sm:$0xff] %vm316, %v288
      %322 = vst.msk [vmem:[%s172 + $0x28] sm:$0xff] %vm316, %v289
      %323 = vst.msk [vmem:[%s172 + $0x30] sm:$0xff] %vm316, %v290
      %324 = vst.msk [vmem:[%s172 + $0x38] sm:$0xff] %vm316, %v291
      %325 = vst.msk [vmem:[%s172 + $0x40] sm:$0xff] %vm316, %v292
      %326 = vst.msk [vmem:[%s172 + $0x48] sm:$0xff] %vm316, %v293
      %327 = vst.msk [vmem:[%s172 + $0x50] sm:$0xff] %vm316, %v294
      %328 = vst.msk [vmem:[%s172 + $0x58] sm:$0xff] %vm316, %v295
      %329 = vst.msk [vmem:[%s172 + $0x60] sm:$0xff] %vm316, %v296
      %330 = vst.msk [vmem:[%s172 + $0x68] sm:$0xff] %vm316, %v297
      %331 = vst.msk [vmem:[%s172 + $0x70] sm:$0xff] %vm316, %v298
      %332 = vst.msk [vmem:[%s172 + $0x78] sm:$0xff] %vm316, %v299
      %333 = vst.msk [vmem:[%s172 + $0x80] sm:$0xff] %vm316, %v300
      %334 = vst.msk [vmem:[%s172 + $0x88] sm:$0xff] %vm316, %v301
      %335 = vst.msk [vmem:[%s172 + $0x90] sm:$0xff] %vm316, %v302
      %336 = vst.msk [vmem:[%s172 + $0x98] sm:$0xff] %vm316, %v303
      %337 = vst.msk [vmem:[%s172 + $0xa0] sm:$0xff] %vm316, %v304
      %338 = vst.msk [vmem:[%s172 + $0xa8] sm:$0xff] %vm316, %v305
      %339 = vst.msk [vmem:[%s172 + $0xb0] sm:$0xff] %vm316, %v306
      %340 = vst.msk [vmem:[%s172 + $0xb8] sm:$0xff] %vm316, %v307
      %341 = vst.msk [vmem:[%s172 + $0xc0] sm:$0xff] %vm316, %v308
      %342 = vst.msk [vmem:[%s172 + $0xc8] sm:$0xff] %vm316, %v309
      %343 = vst.msk [vmem:[%s172 + $0xd0] sm:$0xff] %vm316, %v310
      %344 = vst.msk [vmem:[%s172 + $0xd8] sm:$0xff] %vm316, %v311
      %345 = vst.msk [vmem:[%s172 + $0xe0] sm:$0xff] %vm316, %v312
      %346 = vst.msk [vmem:[%s172 + $0xe8] sm:$0xff] %vm316, %v313
      %347 = vst.msk [vmem:[%s172 + $0xf0] sm:$0xff] %vm316, %v314
      %348 = vst.msk [vmem:[%s172 + $0xf8] sm:$0xff] %vm316, %v315
      %s349 = smul.u32 32, %s14
      %p350 = scmp.lt.s32.totalorder %s349, 63
      %s351 = scalar_select %p350, %s349, 63
      %s352 = smul.addr %s351, 8
      %s353 = scalar_lea.vmem %s3, %s352
      // Predicated region
      $region33: #{_lambda_.39} parent=31 // pred_check
        %p354 = pneg %p100
      $region34: #{_lambda_.39} parent=31 // pred_check_branch
        %356 = sbr.rel (%p354) target = $region36
      $region35: #{_lambda_.39} parent=31 // pred_region
        %s357 = smul.u32 32, %s14
      $region36: #{_lambda_.39} parent=31 // pred_fallthru
        _
    $region32: #{_lambda_.39} parent=5 // pred_fallthru
      _
    %p358 = scmp.le.s32.totalorder 2, %s9
    // Predicated region
    $region37: #{_lambda_.39} parent=5 // pred_check
      %p359 = pneg %p358
    $region38: #{_lambda_.39} parent=5 // pred_check_branch
      %361 = sbr.rel (%p359) target = $region40
    $region39: #{_lambda_.39} parent=5 // pred_region
      %s362 = ssub.s32 %s9, 2
      // Predicated region
      $region41: #{_lambda_.39} parent=39 // pred_check
        %p363 = pneg %p106
      $region42: #{_lambda_.39} parent=39 // pred_check_branch
        %365 = sbr.rel (%p363) target = $region44
      $region43: #{_lambda_.39} parent=39 // pred_region
        %s366 = smul.u32 32, %s15
        %p367 = scmp.lt.s32.totalorder %s366, 63
        %s368 = scalar_select %p367, %s366, 63
        %s369 = smul.addr %s368, 8
        %s370 = scalar_lea.vmem %s3, %s369
      $region44: #{_lambda_.39} parent=39 // pred_fallthru
        _
    $region40: #{_lambda_.39} parent=5 // pred_fallthru
      _
  $region6: #{_lambda_.39} parent=0 // loop_footer
    %s13 = sadd.s32 1, %s9
  $region7: #{_lambda_.39} parent=0 // loop_footer_branch
    %8 = sbr.rel target = $region3
  $region8: #{_lambda_.39} parent=0 // loop_exit
    _

// kernel: _lambda_.38
$region0: #{_lambda_.38}
  #allocation0 [shape = 'u32[]', space=smem, size = 0x4, offset = 0x4, fixed_abs, tag = 'smem constant byte address 0x4 - core index']
  #allocation1 [shape = 'u32[144,128]{1,0:T(1,128)}', space=vmem, size = 0x12000, scoped, tag = 'internal scratch']
  %s0 = inlined_call_operand.vmem [shape: bf16[512,27], index: 0, kind: input, shape index: {}]
  %s1 = inlined_call_operand.vmem [shape: bf16[27,16], index: 1, kind: input, shape index: {}]
  %s2 = inlined_call_operand.vmem [shape: f32[512,16], index: 2, kind: output, shape index: {0}]
  %s3 = inlined_call_operand.vmem [shape: f32[2,1,16], index: 3, kind: output, shape index: {1}]
  %s4 = inlined_call_operand.vmem [shape: f32[2,1,16], index: 4, kind: output, shape index: {2}]
  %5 = xla_tuple %s2, %s3, %s4
  %s6 = sld [smem:[#allocation0]]
  $region57: #{_lambda_.38} parent=0
    _
  %s8 = ssub.s32 1, %s6
  %s9 = scalar_select 0, %s8, %s6
  loop: start=0, step=1, limit=4
  $region2: #{_lambda_.38} parent=0 // loop_pre_header
    _
  $region3: #{_lambda_.38} parent=0 // loop_header
    %s11 = sphi 0, %s15
    %p12 = scmp.ge.s32.totalorder %s11, 4
    %s21 = sphi 0, %s23
    %s24 = sphi 0, %s21
    %s25 = sphi 0, %s24
    %s41 = sphi 0, %s25
    %s45 = sphi 0, %s45
    %s47 = sphi 0, %s45
    %s48 = sphi 0, %s47
    %s62 = sphi 0, %s48
    %s68 = sphi 0, %s70
    %s71 = sphi 0, %s68
    %s72 = sphi 0, %s71
    %s88 = sphi 0, %s72
    %s94 = sphi 0, %s96
    %s97 = sphi 0, %s94
    %s98 = sphi 0, %s97
    %s114 = sphi 0, %s98
    %s120 = sphi 0, %s122
    %s123 = sphi 0, %s120
    %s124 = sphi 0, %s123
    %s140 = sphi 0, %s124
  $region4: #{_lambda_.38} parent=0 // loop_header_branch
    %14 = sbr.rel (%p12) target = $region8
  $region5: #{_lambda_.38} parent=0 // loop_body
    %s16 = ssub.s32 %s11, 1
    %s17 = ssub.s32 %s11, 2
    %s18 = sadd.s32 %s11, 1
    %s19 = ssub.s32 %s11, %s18
    %p20 = scmp.eq.s32.totalorder %s19, 0
    %s22 = sadd.s32 %s21, 1
    %s23 = scalar_select %p20, %s21, %s22
    %p26 = pneg %p20
    %p27 = scmp.eq.s32.totalorder %s11, 1
    %p28 = por %p26, %p27
    %p29 = scmp.ne.s32.totalorder %s21, %s24
    %p30 = scmp.eq.s32.totalorder %s11, 0
    %p31 = por %p29, %p30
    %p32 = scmp.ne.s32.totalorder %s21, %s24
    %p33 = scmp.eq.s32.totalorder %s16, 1
    %p34 = por %p32, %p33
    %p35 = scmp.ne.s32.totalorder %s24, %s25
    %p36 = scmp.eq.s32.totalorder %s16, 0
    %p37 = por %p35, %p36
    %p38 = scmp.ne.s32.totalorder %s24, %s25
    %p39 = scmp.eq.s32.totalorder %s17, 1
    %p40 = por %p38, %p39
    %p42 = scmp.ne.s32.totalorder %s25, %s41
    %p43 = scmp.eq.s32.totalorder %s17, 0
    %p44 = por %p42, %p43
    %s46 = sadd.s32 %s45, 1
    %p49 = scmp.eq.s32.totalorder %s11, 1
    %p50 = scmp.ne.s32.totalorder %s45, %s47
    %p51 = scmp.eq.s32.totalorder %s11, 0
    %p52 = por %p50, %p51
    %p53 = scmp.ne.s32.totalorder %s45, %s47
    %p54 = scmp.eq.s32.totalorder %s16, 1
    %p55 = por %p53, %p54
    %p56 = scmp.ne.s32.totalorder %s47, %s48
    %p57 = scmp.eq.s32.totalorder %s16, 0
    %p58 = por %p56, %p57
    %p59 = scmp.ne.s32.totalorder %s47, %s48
    %p60 = scmp.eq.s32.totalorder %s17, 1
    %p61 = por %p59, %p60
    %p63 = scmp.ne.s32.totalorder %s48, %s62
    %p64 = scmp.eq.s32.totalorder %s17, 0
    %p65 = por %p63, %p64
    %s66 = ssub.s32 %s11, %s18
    %p67 = scmp.eq.s32.totalorder %s66, 0
    %s69 = sadd.s32 %s68, 1
    %s70 = scalar_select %p67, %s68, %s69
    %p73 = pneg %p67
    %p74 = scmp.eq.s32.totalorder %s11, 1
    %p75 = por %p73, %p74
    %p76 = scmp.ne.s32.totalorder %s68, %s71
    %p77 = scmp.eq.s32.totalorder %s11, 0
    %p78 = por %p76, %p77
    %p79 = scmp.ne.s32.totalorder %s68, %s71
    %p80 = scmp.eq.s32.totalorder %s16, 1
    %p81 = por %p79, %p80
    %p82 = scmp.ne.s32.totalorder %s71, %s72
    %p83 = scmp.eq.s32.totalorder %s16, 0
    %p84 = por %p82, %p83
    %p85 = scmp.ne.s32.totalorder %s71, %s72
    %p86 = scmp.eq.s32.totalorder %s17, 1
    %p87 = por %p85, %p86
    %p89 = scmp.ne.s32.totalorder %s72, %s88
    %p90 = scmp.eq.s32.totalorder %s17, 0
    %p91 = por %p89, %p90
    %s92 = ssub.s32 %s11, %s18
    %p93 = scmp.eq.s32.totalorder %s92, 0
    %s95 = sadd.s32 %s94, 1
    %s96 = scalar_select %p93, %s94, %s95
    %p99 = pneg %p93
    %p100 = scmp.eq.s32.totalorder %s11, 1
    %p101 = por %p99, %p100
    %p102 = scmp.ne.s32.totalorder %s94, %s97
    %p103 = scmp.eq.s32.totalorder %s11, 0
    %p104 = por %p102, %p103
    %p105 = scmp.ne.s32.totalorder %s94, %s97
    %p106 = scmp.eq.s32.totalorder %s16, 1
    %p107 = por %p105, %p106
    %p108 = scmp.ne.s32.totalorder %s97, %s98
    %p109 = scmp.eq.s32.totalorder %s16, 0
    %p110 = por %p108, %p109
    %p111 = scmp.ne.s32.totalorder %s97, %s98
    %p112 = scmp.eq.s32.totalorder %s17, 1
    %p113 = por %p111, %p112
    %p115 = scmp.ne.s32.totalorder %s98, %s114
    %p116 = scmp.eq.s32.totalorder %s17, 0
    %p117 = por %p115, %p116
    %s118 = ssub.s32 %s11, %s18
    %p119 = scmp.eq.s32.totalorder %s118, 0
    %s121 = sadd.s32 %s120, 1
    %s122 = scalar_select %p119, %s120, %s121
    %p125 = pneg %p119
    %p126 = scmp.eq.s32.totalorder %s11, 1
    %p127 = por %p125, %p126
    %p128 = scmp.ne.s32.totalorder %s120, %s123
    %p129 = scmp.eq.s32.totalorder %s11, 0
    %p130 = por %p128, %p129
    %p131 = scmp.ne.s32.totalorder %s120, %s123
    %p132 = scmp.eq.s32.totalorder %s16, 1
    %p133 = por %p131, %p132
    %p134 = scmp.ne.s32.totalorder %s123, %s124
    %p135 = scmp.eq.s32.totalorder %s16, 0
    %p136 = por %p134, %p135
    %p137 = scmp.ne.s32.totalorder %s123, %s124
    %p138 = scmp.eq.s32.totalorder %s17, 1
    %p139 = por %p137, %p138
    %p141 = scmp.ne.s32.totalorder %s124, %s140
    %p142 = scmp.eq.s32.totalorder %s17, 0
    %p143 = por %p141, %p142
    %p144 = scmp.le.s32.totalorder 1, %s11
    %p145 = scmp.lt.s32.totalorder %s11, 3
    %p146 = pnand %p144, %p145
    %p147 = pneg %p146
    // Predicated region
    $region9: #{_lambda_.38} parent=5 // pred_check
      _
    $region10: #{_lambda_.38} parent=5 // pred_check_branch
      %149 = sbr.rel (%p146) target = $region12
    $region11: #{_lambda_.38} parent=5 // pred_region
      %s150 = ssub.s32 %s11, 1
      // Predicated region
      $region13: #{_lambda_.38} parent=11 // pred_check
        %p151 = pneg %p58
      $region14: #{_lambda_.38} parent=11 // pred_check_branch
        %153 = sbr.rel (%p151) target = $region16
      $region15: #{_lambda_.38} parent=11 // pred_region
        _
      $region16: #{_lambda_.38} parent=11 // pred_fallthru
        _
    $region12: #{_lambda_.38} parent=5 // pred_fallthru
      _
    %p154 = scmp.lt.s32.totalorder %s11, 2
    // Predicated region
    $region17: #{_lambda_.38} parent=5 // pred_check
      %p155 = pneg %p154
    $region18: #{_lambda_.38} parent=5 // pred_check_branch
      %157 = sbr.rel (%p155) target = $region20
    $region19: #{_lambda_.38} parent=5 // pred_region
      // Predicated region
      $region21: #{_lambda_.38} parent=19 // pred_check
        %p158 = pneg %p31
      $region22: #{_lambda_.38} parent=19 // pred_check_branch
        %160 = sbr.rel (%p158) target = $region24
      $region23: #{_lambda_.38} parent=19 // pred_region
        %s161 = smul.u32 32, %s11
        %p162 = scmp.lt.s32.totalorder %s161, 63
        %s163 = scalar_select %p162, %s161, 63
        %s164 = smul.addr %s163, 4
        %s165 = scalar_lea.vmem %s0, %s164
        %s166 = smul.u32 32, %s11
      $region24: #{_lambda_.38} parent=19 // pred_fallthru
        _
    $region20: #{_lambda_.38} parent=5 // pred_fallthru
      _
    %p167 = scmp.le.s32.totalorder 1, %s11
    %p168 = scmp.lt.s32.totalorder %s11, 3
    %p169 = pnand %p167, %p168
    %p170 = pneg %p169
    // Predicated region
    $region25: #{_lambda_.38} parent=5 // pred_check
      _
    $region26: #{_lambda_.38} parent=5 // pred_check_branch
      %172 = sbr.rel (%p169) target = $region28
    $region27: #{_lambda_.38} parent=5 // pred_region
      %s173 = ssub.s32 %s11, 1
      %s174 = smul.u32 32, %s16
      %p175 = scmp.lt.s32.totalorder %s174, 63
      %s176 = scalar_select %p175, %s174, 63
      %s177 = smul.addr %s176, 4
      %s178 = scalar_lea.vmem %s0, %s177
      %p179 = pneg %p37
      %p180 = pneg %p34
      %p181 = pneg %p58
      %p182 = pneg %p55
      %p183 = pneg %p84
      %p184 = pneg %p81
      %s185 = smul.u32 32, %s16
      %p186 = scmp.lt.s32.totalorder %s185, 63
      %s187 = scalar_select %p186, %s185, 63
      %s188 = smul.addr %s187, 8
      %s189 = scalar_lea.vmem %s2, %s188
      %p190 = pneg %p110
      %p191 = pneg %p107
      %p192 = scmp.lt.s32.totalorder %s16, 1
      %s193 = scalar_select %p192, %s16, 1
      %s194 = scalar_lea.vmem %s3, %s193
      %p195 = pneg %p136
      %p196 = pneg %p133
      %p197 = scmp.lt.s32.totalorder %s16, 1
      %s198 = scalar_select %p197, %s16, 1
      %s199 = scalar_lea.vmem %s4, %s198
      %s200 = smul.u32 32, %s16
      %p201 = scmp.lt.s32.totalorder %s200, 63
      %s202 = scalar_select %p201, %s200, 63
      %s203 = smul.addr %s202, 4
      %s204 = scalar_lea.vmem %s0, %s203
      %s205 = smul.u32 32, %s16
      %s206 = smul.u32 32, %s16
      %p207 = scmp.lt.s32.totalorder %s206, 63
      %s208 = scalar_select %p207, %s206, 63
      %s209 = smul.addr %s208, 8
      %s210 = scalar_lea.vmem %s2, %s209
      %s211 = smul.u32 32, %s16
      %p212 = scmp.lt.s32.totalorder %s16, 1
      %s213 = scalar_select %p212, %s16, 1
      %s214 = scalar_lea.vmem %s3, %s213
      %p215 = scmp.lt.s32.totalorder %s16, 1
      %s216 = scalar_select %p215, %s16, 1
      %s217 = scalar_lea.vmem %s4, %s216
      %v219 = vld [vmem:[%s204] sm:$0xf]
      %v220 = vld [vmem:[%s204 + $0x4] sm:$0xf]
      %v221 = vld [vmem:[%s204 + $0x8] sm:$0xf]
      %v222 = vld [vmem:[%s204 + $0xc] sm:$0xf]
      %v223 = vld [vmem:[%s204 + $0x10] sm:$0xf]
      %v224 = vld [vmem:[%s204 + $0x14] sm:$0xf]
      %v225 = vld [vmem:[%s204 + $0x18] sm:$0xf]
      %v226 = vld [vmem:[%s204 + $0x1c] sm:$0xf]
      %v227 = vld [vmem:[%s204 + $0x20] sm:$0xf]
      %v228 = vld [vmem:[%s204 + $0x24] sm:$0xf]
      %v229 = vld [vmem:[%s204 + $0x28] sm:$0xf]
      %v230 = vld [vmem:[%s204 + $0x2c] sm:$0xf]
      %v231 = vld [vmem:[%s204 + $0x30] sm:$0xf]
      %v232 = vld [vmem:[%s204 + $0x34] sm:$0xf]
      %v233 = vld [vmem:[%s204 + $0x38] sm:$0xf]
      %v234 = vld [vmem:[%s204 + $0x3c] sm:$0xf]
      %v235 = vld [vmem:[%s204 + $0x40] sm:$0xf]
      %v236 = vld [vmem:[%s204 + $0x44] sm:$0xf]
      %v237 = vld [vmem:[%s204 + $0x48] sm:$0xf]
      %v238 = vld [vmem:[%s204 + $0x4c] sm:$0xf]
      %v239 = vld [vmem:[%s204 + $0x50] sm:$0xf]
      %v240 = vld [vmem:[%s204 + $0x54] sm:$0xf]
      %v241 = vld [vmem:[%s204 + $0x58] sm:$0xf]
      %v242 = vld [vmem:[%s204 + $0x5c] sm:$0xf]
      %v243 = vld [vmem:[%s204 + $0x60] sm:$0xf]
      %v244 = vld [vmem:[%s204 + $0x64] sm:$0xf]
      %v245 = vld [vmem:[%s204 + $0x68] sm:$0xf]
      %v246 = vld [vmem:[%s204 + $0x6c] sm:$0xf]
      %v247 = vld [vmem:[%s204 + $0x70] sm:$0xf]
      %v248 = vld [vmem:[%s204 + $0x74] sm:$0xf]
      %v249 = vld [vmem:[%s204 + $0x78] sm:$0xf]
      %v250 = vld [vmem:[%s204 + $0x7c] sm:$0xf]
      %v251 = vld [vmem:[%s1] sm:$0xf]
      %v252 = vld [vmem:[%s1 + $0x4] sm:$0xf]
      %v253 = vld [vmem:[%s1 + $0x8] sm:$0xf]
      %v254 = vld [vmem:[%s1 + $0xc] sm:$0x3]
      %v287 = vunpack.c.l.b16 %v219
      %v288 = vunpack.c.l.b16 %v220
      %v289 = vunpack.c.l.b16 %v221
      %v290 = vunpack.c.l.b16 %v222
      %v291 = vunpack.c.l.b16 %v223
      %v292 = vunpack.c.l.b16 %v224
      %v293 = vunpack.c.l.b16 %v225
      %v294 = vunpack.c.l.b16 %v226
      %v295 = vunpack.c.l.b16 %v227
      %v296 = vunpack.c.l.b16 %v228
      %v297 = vunpack.c.l.b16 %v229
      %v298 = vunpack.c.l.b16 %v230
      %v299 = vunpack.c.l.b16 %v231
      %v300 = vunpack.c.l.b16 %v232
      %v301 = vunpack.c.l.b16 %v233
      %v302 = vunpack.c.l.b16 %v234
      %v303 = vunpack.c.l.b16 %v235
      %v304 = vunpack.c.l.b16 %v236
      %v305 = vunpack.c.l.b16 %v237
      %v306 = vunpack.c.l.b16 %v238
      %v307 = vunpack.c.l.b16 %v239
      %v308 = vunpack.c.l.b16 %v240
      %v309 = vunpack.c.l.b16 %v241
      %v310 = vunpack.c.l.b16 %v242
      %v311 = vunpack.c.l.b16 %v243
      %v312 = vunpack.c.l.b16 %v244
      %v313 = vunpack.c.l.b16 %v245
      %v314 = vunpack.c.l.b16 %v246
      %v315 = vunpack.c.l.b16 %v247
      %v316 = vunpack.c.l.b16 %v248
      %v317 = vunpack.c.l.b16 %v249
      %v318 = vunpack.c.l.b16 %v250
      %v319 = vpack.c.b16 %v288, %v287
      %v320 = vpack.c.b16 %v290, %v289
      %v321 = vpack.c.b16 %v292, %v291
      %v322 = vpack.c.b16 %v294, %v293
      %v323 = vpack.c.b16 %v296, %v295
      %v324 = vpack.c.b16 %v298, %v297
      %v325 = vpack.c.b16 %v300, %v299
      %v326 = vpack.c.b16 %v302, %v301
      %v327 = vpack.c.b16 %v304, %v303
      %v328 = vpack.c.b16 %v306, %v305
      %v329 = vpack.c.b16 %v308, %v307
      %v330 = vpack.c.b16 %v310, %v309
      %v331 = vpack.c.b16 %v312, %v311
      %v332 = vpack.c.b16 %v314, %v313
      %v333 = vpack.c.b16 %v316, %v315
      %v334 = vpack.c.b16 %v318, %v317
      %v339 = vunpack.c.l.b16 %v251
      %v340 = vunpack.c.l.b16 %v252
      %v341 = vunpack.c.l.b16 %v253
      %v342 = vunpack.c.l.b16 %v254
      %v343 = vpack.c.b16 %v340, %v339
      %v344 = vpack.c.b16 %v342, %v341
      %vm346 = vcmask 220160
      %v348 = vsel %vm346, %v319, 0
      %v351 = vsel %vm346, %v320, 0
      %v354 = vsel %vm346, %v321, 0
      %v357 = vsel %vm346, %v322, 0
      %v360 = vsel %vm346, %v323, 0
      %v363 = vsel %vm346, %v324, 0
      %v366 = vsel %vm346, %v325, 0
      %v369 = vsel %vm346, %v326, 0
      %v372 = vsel %vm346, %v327, 0
      %v375 = vsel %vm346, %v328, 0
      %v378 = vsel %vm346, %v329, 0
      %v381 = vsel %vm346, %v330, 0
      %v384 = vsel %vm346, %v331, 0
      %v387 = vsel %vm346, %v332, 0
      %v390 = vsel %vm346, %v333, 0
      %v393 = vsel %vm346, %v334, 0
      %vm395 = vcmask 1044480
      %vm396 = vcmask 1045504
      %v397 = vsel %vm395, 4294967295, 65535
      %v398 = vsel %vm396, %v397, 0
      %v400 = vand.u32 %v344, %v398
      %402 = vmatprep.subr.bf16.mxu0 0
      %403 = vmatpush1.bf16.msra.mxu0 %v343
      %404 = vmatprep.subr.bf16.mxu0 0
      %405 = vmatpush1.bf16.msra.mxu0 %v400
      %406 = vmatprep.subr.bf16.mxu0 0
      %407 = vmatpush1.bf16.msra.mxu0 0
      %408 = vmatprep.subr.bf16.mxu0 0
      %409 = vmatpush1.bf16.msra.mxu0 0
      %410 = vmatprep.subr.bf16.mxu0 0
      %411 = vmatpush1.bf16.msra.mxu0 0
      %412 = vmatprep.subr.bf16.mxu0 0
      %413 = vmatpush1.bf16.msra.mxu0 0
      %414 = vmatprep.subr.bf16.mxu0 0
      %415 = vmatpush1.bf16.msra.mxu0 0
      %416 = vmatprep.subr.bf16.mxu0 0
      %417 = vmatpush1.bf16.msra.mxu0 0
      %418 = vmatprep.subr.bf16.mxu0 0
      %419 = vmatpush1.bf16.msra.mxu0 0
      %420 = vmatprep.subr.bf16.mxu0 0
      %421 = vmatpush1.bf16.msra.mxu0 0
      %422 = vmatprep.subr.bf16.mxu0 0
      %423 = vmatpush1.bf16.msra.mxu0 0
      %424 = vmatprep.subr.bf16.mxu0 0
      %425 = vmatpush1.bf16.msra.mxu0 0
      %426 = vmatprep.subr.bf16.mxu0 0
      %427 = vmatpush1.bf16.msra.mxu0 0
      %428 = vmatprep.subr.bf16.mxu0 0
      %429 = vmatpush1.bf16.msra.mxu0 0
      %430 = vmatprep.subr.bf16.mxu0 0
      %431 = vmatpush1.bf16.msra.mxu0 0
      %432 = vmatprep.subr.bf16.mxu0 0
      %433 = vmatpush1.bf16.msra.mxu0 0
      %434 = vmatprep.mubr.bf16.mxu0 0
      %435 = vmatmul.mubr.bf16.gmra.mrb[0].mxu0 %v348
      %v436 = vpop.f32.mrb[0].mxu0
      %v437 = vadd.f32 0.0, %v436
      %v438 = vpop.f32.mrb[0].mxu0
      %v439 = vpop.f32.mrb[0].mxu0
      %v440 = vadd.f32 0.0, %v439
      %v441 = vpop.f32.mrb[0].mxu0
      %442 = vmatprep.mubr.bf16.mxu0 0
      %443 = vmatmul.mubr.bf16.gmra.mrb[0].mxu0 %v351
      %v444 = vpop.f32.mrb[0].mxu0
      %v445 = vadd.f32 0.0, %v444
      %v446 = vpop.f32.mrb[0].mxu0
      %v447 = vpop.f32.mrb[0].mxu0
      %v448 = vadd.f32 0.0, %v447
      %v449 = vpop.f32.mrb[0].mxu0
      %450 = vmatprep.mubr.bf16.mxu0 0
      %451 = vmatmul.mubr.bf16.gmra.mrb[0].mxu0 %v354
      %v452 = vpop.f32.mrb[0].mxu0
      %v453 = vadd.f32 0.0, %v452
      %v454 = vpop.f32.mrb[0].mxu0
      %v455 = vpop.f32.mrb[0].mxu0
      %v456 = vadd.f32 0.0, %v455
      %v457 = vpop.f32.mrb[0].mxu0
      %458 = vmatprep.mubr.bf16.mxu0 0
      %459 = vmatmul.mubr.bf16.gmra.mrb[0].mxu0 %v357
      %v460 = vpop.f32.mrb[0].mxu0
      %v461 = vadd.f32 0.0, %v460
      %v462 = vpop.f32.mrb[0].mxu0
      %v463 = vpop.f32.mrb[0].mxu0
      %v464 = vadd.f32 0.0, %v463
      %v465 = vpop.f32.mrb[0].mxu0
      %466 = vmatprep.mubr.bf16.mxu0 0
      %467 = vmatmul.mubr.bf16.gmra.mrb[0].mxu0 %v360
      %v468 = vpop.f32.mrb[0].mxu0
      %v469 = vadd.f32 0.0, %v468
      %v470 = vpop.f32.mrb[0].mxu0
      %v471 = vpop.f32.mrb[0].mxu0
      %v472 = vadd.f32 0.0, %v471
      %v473 = vpop.f32.mrb[0].mxu0
      %474 = vmatprep.mubr.bf16.mxu0 0
      %475 = vmatmul.mubr.bf16.gmra.mrb[0].mxu0 %v363
      %v476 = vpop.f32.mrb[0].mxu0
      %v477 = vadd.f32 0.0, %v476
      %v478 = vpop.f32.mrb[0].mxu0
      %v479 = vpop.f32.mrb[0].mxu0
      %v480 = vadd.f32 0.0, %v479
      %v481 = vpop.f32.mrb[0].mxu0
      %482 = vmatprep.mubr.bf16.mxu0 0
      %483 = vmatmul.mubr.bf16.gmra.mrb[0].mxu0 %v366
      %v484 = vpop.f32.mrb[0].mxu0
      %v485 = vadd.f32 0.0, %v484
      %v486 = vpop.f32.mrb[0].mxu0
      %v487 = vpop.f32.mrb[0].mxu0
      %v488 = vadd.f32 0.0, %v487
      %v489 = vpop.f32.mrb[0].mxu0
      %490 = vmatprep.mubr.bf16.mxu0 0
      %491 = vmatmul.mubr.bf16.gmra.mrb[0].mxu0 %v369
      %v492 = vpop.f32.mrb[0].mxu0
      %v493 = vadd.f32 0.0, %v492
      %v494 = vpop.f32.mrb[0].mxu0
      %v495 = vpop.f32.mrb[0].mxu0
      %v496 = vadd.f32 0.0, %v495
      %v497 = vpop.f32.mrb[0].mxu0
      %498 = vmatprep.mubr.bf16.mxu0 0
      %499 = vmatmul.mubr.bf16.gmra.mrb[0].mxu0 %v372
      %v500 = vpop.f32.mrb[0].mxu0
      %v501 = vadd.f32 0.0, %v500
      %v502 = vpop.f32.mrb[0].mxu0
      %v503 = vpop.f32.mrb[0].mxu0
      %v504 = vadd.f32 0.0, %v503
      %v505 = vpop.f32.mrb[0].mxu0
      %506 = vmatprep.mubr.bf16.mxu0 0
      %507 = vmatmul.mubr.bf16.gmra.mrb[0].mxu0 %v375
      %v508 = vpop.f32.mrb[0].mxu0
      %v509 = vadd.f32 0.0, %v508
      %v510 = vpop.f32.mrb[0].mxu0
      %v511 = vpop.f32.mrb[0].mxu0
      %v512 = vadd.f32 0.0, %v511
      %v513 = vpop.f32.mrb[0].mxu0
      %514 = vmatprep.mubr.bf16.mxu0 0
      %515 = vmatmul.mubr.bf16.gmra.mrb[0].mxu0 %v378
      %v516 = vpop.f32.mrb[0].mxu0
      %v517 = vadd.f32 0.0, %v516
      %v518 = vpop.f32.mrb[0].mxu0
      %v519 = vpop.f32.mrb[0].mxu0
      %v520 = vadd.f32 0.0, %v519
      %v521 = vpop.f32.mrb[0].mxu0
      %522 = vmatprep.mubr.bf16.mxu0 0
      %523 = vmatmul.mubr.bf16.gmra.mrb[0].mxu0 %v381
      %v524 = vpop.f32.mrb[0].mxu0
      %v525 = vadd.f32 0.0, %v524
      %v526 = vpop.f32.mrb[0].mxu0
      %v527 = vpop.f32.mrb[0].mxu0
      %v528 = vadd.f32 0.0, %v527
      %v529 = vpop.f32.mrb[0].mxu0
      %530 = vmatprep.mubr.bf16.mxu0 0
      %531 = vmatmul.mubr.bf16.gmra.mrb[0].mxu0 %v384
      %v532 = vpop.f32.mrb[0].mxu0
      %v533 = vadd.f32 0.0, %v532
      %v534 = vpop.f32.mrb[0].mxu0
      %v535 = vpop.f32.mrb[0].mxu0
      %v536 = vadd.f32 0.0, %v535
      %v537 = vpop.f32.mrb[0].mxu0
      %538 = vmatprep.mubr.bf16.mxu0 0
      %539 = vmatmul.mubr.bf16.gmra.mrb[0].mxu0 %v387
      %v540 = vpop.f32.mrb[0].mxu0
      %v541 = vadd.f32 0.0, %v540
      %v542 = vpop.f32.mrb[0].mxu0
      %v543 = vpop.f32.mrb[0].mxu0
      %v544 = vadd.f32 0.0, %v543
      %v545 = vpop.f32.mrb[0].mxu0
      %546 = vmatprep.mubr.bf16.mxu0 0
      %547 = vmatmul.mubr.bf16.gmra.mrb[0].mxu0 %v390
      %v548 = vpop.f32.mrb[0].mxu0
      %v549 = vadd.f32 0.0, %v548
      %v550 = vpop.f32.mrb[0].mxu0
      %v551 = vpop.f32.mrb[0].mxu0
      %v552 = vadd.f32 0.0, %v551
      %v553 = vpop.f32.mrb[0].mxu0
      %554 = vmatprep.mubr.bf16.mxu0 0
      %555 = vmatmul.mubr.bf16.gmra.mrb[0].mxu0 %v393
      %v556 = vpop.f32.mrb[0].mxu0
      %v557 = vadd.f32 0.0, %v556
      %v558 = vpop.f32.mrb[0].mxu0
      %v559 = vpop.f32.mrb[0].mxu0
      %v560 = vadd.f32 0.0, %v559
      %v561 = vpop.f32.mrb[0].mxu0
      %562 = vdwg.mxu0
      %vm563 = vcmask 130048
      %564 = vst.msk [vmem:[%s210] sm:$0xff] %vm563, %v437
      %565 = vst.msk [vmem:[%s210 + $0x8] sm:$0xff] %vm563, %v440
      %566 = vst.msk [vmem:[%s210 + $0x10] sm:$0xff] %vm563, %v445
      %567 = vst.msk [vmem:[%s210 + $0x18] sm:$0xff] %vm563, %v448
      %568 = vst.msk [vmem:[%s210 + $0x20] sm:$0xff] %vm563, %v453
      %569 = vst.msk [vmem:[%s210 + $0x28] sm:$0xff] %vm563, %v456
      %570 = vst.msk [vmem:[%s210 + $0x30] sm:$0xff] %vm563, %v461
      %571 = vst.msk [vmem:[%s210 + $0x38] sm:$0xff] %vm563, %v464
      %572 = vst.msk [vmem:[%s210 + $0x40] sm:$0xff] %vm563, %v469
      %573 = vst.msk [vmem:[%s210 + $0x48] sm:$0xff] %vm563, %v472
      %574 = vst.msk [vmem:[%s210 + $0x50] sm:$0xff] %vm563, %v477
      %575 = vst.msk [vmem:[%s210 + $0x58] sm:$0xff] %vm563, %v480
      %576 = vst.msk [vmem:[%s210 + $0x60] sm:$0xff] %vm563, %v485
      %577 = vst.msk [vmem:[%s210 + $0x68] sm:$0xff] %vm563, %v488
      %578 = vst.msk [vmem:[%s210 + $0x70] sm:$0xff] %vm563, %v493
      %579 = vst.msk [vmem:[%s210 + $0x78] sm:$0xff] %vm563, %v496
      %580 = vst.msk [vmem:[%s210 + $0x80] sm:$0xff] %vm563, %v501
      %581 = vst.msk [vmem:[%s210 + $0x88] sm:$0xff] %vm563, %v504
      %582 = vst.msk [vmem:[%s210 + $0x90] sm:$0xff] %vm563, %v509
      %583 = vst.msk [vmem:[%s210 + $0x98] sm:$0xff] %vm563, %v512
      %584 = vst.msk [vmem:[%s210 + $0xa0] sm:$0xff] %vm563, %v517
      %585 = vst.msk [vmem:[%s210 + $0xa8] sm:$0xff] %vm563, %v520
      %586 = vst.msk [vmem:[%s210 + $0xb0] sm:$0xff] %vm563, %v525
      %587 = vst.msk [vmem:[%s210 + $0xb8] sm:$0xff] %vm563, %v528
      %588 = vst.msk [vmem:[%s210 + $0xc0] sm:$0xff] %vm563, %v533
      %589 = vst.msk [vmem:[%s210 + $0xc8] sm:$0xff] %vm563, %v536
      %590 = vst.msk [vmem:[%s210 + $0xd0] sm:$0xff] %vm563, %v541
      %591 = vst.msk [vmem:[%s210 + $0xd8] sm:$0xff] %vm563, %v544
      %592 = vst.msk [vmem:[%s210 + $0xe0] sm:$0xff] %vm563, %v549
      %593 = vst.msk [vmem:[%s210 + $0xe8] sm:$0xff] %vm563, %v552
      %594 = vst.msk [vmem:[%s210 + $0xf0] sm:$0xff] %vm563, %v557
      %595 = vst.msk [vmem:[%s210 + $0xf8] sm:$0xff] %vm563, %v560
      %v596 = vsel %vm563, %v437, 0.0
      %v597 = vsel %vm563, %v440, 0.0
      %v598 = vadd.f32 %v596, %v597
      %v599 = vsel %vm563, %v445, 0.0
      %v600 = vadd.f32 %v598, %v599
      %v601 = vsel %vm563, %v448, 0.0
      %v602 = vadd.f32 %v600, %v601
      %v603 = vsel %vm563, %v453, 0.0
      %v604 = vadd.f32 %v602, %v603
      %v605 = vsel %vm563, %v456, 0.0
      %v606 = vadd.f32 %v604, %v605
      %v607 = vsel %vm563, %v461, 0.0
      %v608 = vadd.f32 %v606, %v607
      %v609 = vsel %vm563, %v464, 0.0
      %v610 = vadd.f32 %v608, %v609
      %v611 = vsel %vm563, %v469, 0.0
      %v612 = vadd.f32 %v610, %v611
      %v613 = vsel %vm563, %v472, 0.0
      %v614 = vadd.f32 %v612, %v613
      %v615 = vsel %vm563, %v477, 0.0
      %v616 = vadd.f32 %v614, %v615
      %v617 = vsel %vm563, %v480, 0.0
      %v618 = vadd.f32 %v616, %v617
      %v619 = vsel %vm563, %v485, 0.0
      %v620 = vadd.f32 %v618, %v619
      %v621 = vsel %vm563, %v488, 0.0
      %v622 = vadd.f32 %v620, %v621
      %v623 = vsel %vm563, %v493, 0.0
      %v624 = vadd.f32 %v622, %v623
      %v625 = vsel %vm563, %v496, 0.0
      %v626 = vadd.f32 %v624, %v625
      %v627 = vsel %vm563, %v501, 0.0
      %v628 = vadd.f32 %v626, %v627
      %v629 = vsel %vm563, %v504, 0.0
      %v630 = vadd.f32 %v628, %v629
      %v631 = vsel %vm563, %v509, 0.0
      %v632 = vadd.f32 %v630, %v631
      %v633 = vsel %vm563, %v512, 0.0
      %v634 = vadd.f32 %v632, %v633
      %v635 = vsel %vm563, %v517, 0.0
      %v636 = vadd.f32 %v634, %v635
      %v637 = vsel %vm563, %v520, 0.0
      %v638 = vadd.f32 %v636, %v637
      %v639 = vsel %vm563, %v525, 0.0
      %v640 = vadd.f32 %v638, %v639
      %v641 = vsel %vm563, %v528, 0.0
      %v642 = vadd.f32 %v640, %v641
      %v643 = vsel %vm563, %v533, 0.0
      %v644 = vadd.f32 %v642, %v643
      %v645 = vsel %vm563, %v536, 0.0
      %v646 = vadd.f32 %v644, %v645
      %v647 = vsel %vm563, %v541, 0.0
      %v648 = vadd.f32 %v646, %v647
      %v649 = vsel %vm563, %v544, 0.0
      %v650 = vadd.f32 %v648, %v649
      %v651 = vsel %vm563, %v549, 0.0
      %v652 = vadd.f32 %v650, %v651
      %v653 = vsel %vm563, %v552, 0.0
      %v654 = vadd.f32 %v652, %v653
      %v655 = vsel %vm563, %v557, 0.0
      %v656 = vadd.f32 %v654, %v655
      %v657 = vsel %vm563, %v560, 0.0
      %v658 = vadd.f32 %v656, %v657
      %v659 = vrot.slane %v658, 4
      %v660 = vadd.f32 %v658, %v659
      %v661 = vrot.slane %v660, 2
      %v662 = vadd.f32 %v660, %v661
      %v663 = vrot.slane %v662, 1
      %v664 = vadd.f32 %v662, %v663
      %vm665 = vcmask 122880
      %666 = vst.msk [vmem:[%s214] sm:$0x1] %vm665, %v664
      %v667 = vmul.f32 %v437, %v437
      %v668 = vmul.f32 %v440, %v440
      %v669 = vmul.f32 %v445, %v445
      %v670 = vmul.f32 %v448, %v448
      %v671 = vmul.f32 %v453, %v453
      %v672 = vmul.f32 %v456, %v456
      %v673 = vmul.f32 %v461, %v461
      %v674 = vmul.f32 %v464, %v464
      %v675 = vmul.f32 %v469, %v469
      %v676 = vmul.f32 %v472, %v472
      %v677 = vmul.f32 %v477, %v477
      %v678 = vmul.f32 %v480, %v480
      %v679 = vmul.f32 %v485, %v485
      %v680 = vmul.f32 %v488, %v488
      %v681 = vmul.f32 %v493, %v493
      %v682 = vmul.f32 %v496, %v496
      %v683 = vmul.f32 %v501, %v501
      %v684 = vmul.f32 %v504, %v504
      %v685 = vmul.f32 %v509, %v509
      %v686 = vmul.f32 %v512, %v512
      %v687 = vmul.f32 %v517, %v517
      %v688 = vmul.f32 %v520, %v520
      %v689 = vmul.f32 %v525, %v525
      %v690 = vmul.f32 %v528, %v528
      %v691 = vmul.f32 %v533, %v533
      %v692 = vmul.f32 %v536, %v536
      %v693 = vmul.f32 %v541, %v541
      %v694 = vmul.f32 %v544, %v544
      %v695 = vmul.f32 %v549, %v549
      %v696 = vmul.f32 %v552, %v552
      %v697 = vmul.f32 %v557, %v557
      %v698 = vmul.f32 %v560, %v560
      %v699 = vsel %vm563, %v667, 0.0
      %v700 = vsel %vm563, %v668, 0.0
      %v701 = vadd.f32 %v699, %v700
      %v702 = vsel %vm563, %v669, 0.0
      %v703 = vadd.f32 %v701, %v702
      %v704 = vsel %vm563, %v670, 0.0
      %v705 = vadd.f32 %v703, %v704
      %v706 = vsel %vm563, %v671, 0.0
      %v707 = vadd.f32 %v705, %v706
      %v708 = vsel %vm563, %v672, 0.0
      %v709 = vadd.f32 %v707, %v708
      %v710 = vsel %vm563, %v673, 0.0
      %v711 = vadd.f32 %v709, %v710
      %v712 = vsel %vm563, %v674, 0.0
      %v713 = vadd.f32 %v711, %v712
      %v714 = vsel %vm563, %v675, 0.0
      %v715 = vadd.f32 %v713, %v714
      %v716 = vsel %vm563, %v676, 0.0
      %v717 = vadd.f32 %v715, %v716
      %v718 = vsel %vm563, %v677, 0.0
      %v719 = vadd.f32 %v717, %v718
      %v720 = vsel %vm563, %v678, 0.0
      %v721 = vadd.f32 %v719, %v720
      %v722 = vsel %vm563, %v679, 0.0
      %v723 = vadd.f32 %v721, %v722
      %v724 = vsel %vm563, %v680, 0.0
      %v725 = vadd.f32 %v723, %v724
      %v726 = vsel %vm563, %v681, 0.0
      %v727 = vadd.f32 %v725, %v726
      %v728 = vsel %vm563, %v682, 0.0
      %v729 = vadd.f32 %v727, %v728
      %v730 = vsel %vm563, %v683, 0.0
      %v731 = vadd.f32 %v729, %v730
      %v732 = vsel %vm563, %v684, 0.0
      %v733 = vadd.f32 %v731, %v732
      %v734 = vsel %vm563, %v685, 0.0
      %v735 = vadd.f32 %v733, %v734
      %v736 = vsel %vm563, %v686, 0.0
      %v737 = vadd.f32 %v735, %v736
      %v738 = vsel %vm563, %v687, 0.0
      %v739 = vadd.f32 %v737, %v738
      %v740 = vsel %vm563, %v688, 0.0
      %v741 = vadd.f32 %v739, %v740
      %v742 = vsel %vm563, %v689, 0.0
      %v743 = vadd.f32 %v741, %v742
      %v744 = vsel %vm563, %v690, 0.0
      %v745 = vadd.f32 %v743, %v744
      %v746 = vsel %vm563, %v691, 0.0
      %v747 = vadd.f32 %v745, %v746
      %v748 = vsel %vm563, %v692, 0.0
      %v749 = vadd.f32 %v747, %v748
      %v750 = vsel %vm563, %v693, 0.0
      %v751 = vadd.f32 %v749, %v750
      %v752 = vsel %vm563, %v694, 0.0
      %v753 = vadd.f32 %v751, %v752
      %v754 = vsel %vm563, %v695, 0.0
      %v755 = vadd.f32 %v753, %v754
      %v756 = vsel %vm563, %v696, 0.0
      %v757 = vadd.f32 %v755, %v756
      %v758 = vsel %vm563, %v697, 0.0
      %v759 = vadd.f32 %v757, %v758
      %v760 = vsel %vm563, %v698, 0.0
      %v761 = vadd.f32 %v759, %v760
      %v762 = vrot.slane %v761, 4
      %v763 = vadd.f32 %v761, %v762
      %v764 = vrot.slane %v763, 2
      %v765 = vadd.f32 %v763, %v764
      %v766 = vrot.slane %v765, 1
      %v767 = vadd.f32 %v765, %v766
      %768 = vst.msk [vmem:[%s217] sm:$0x1] %vm665, %v767
      %s769 = smul.u32 32, %s16
      %p770 = scmp.lt.s32.totalorder %s769, 63
      %s771 = scalar_select %p770, %s769, 63
      %s772 = smul.addr %s771, 8
      %s773 = scalar_lea.vmem %s2, %s772
      %p774 = scmp.lt.s32.totalorder %s16, 1
      %s775 = scalar_select %p774, %s16, 1
      %s776 = scalar_lea.vmem %s3, %s775
      %p777 = scmp.lt.s32.totalorder %s16, 1
      %s778 = scalar_select %p777, %s16, 1
      %s779 = scalar_lea.vmem %s4, %s778
      // Predicated region
      $region29: #{_lambda_.38} parent=27 // pred_check
        %p780 = pneg %p81
      $region30: #{_lambda_.38} parent=27 // pred_check_branch
        %782 = sbr.rel (%p780) target = $region32
      $region31: #{_lambda_.38} parent=27 // pred_region
        %s783 = smul.u32 32, %s16
      $region32: #{_lambda_.38} parent=27 // pred_fallthru
        _
      // Predicated region
      $region33: #{_lambda_.38} parent=27 // pred_check
        %p784 = pneg %p107
      $region34: #{_lambda_.38} parent=27 // pred_check_branch
        %786 = sbr.rel (%p784) target = $region36
      $region35: #{_lambda_.38} parent=27 // pred_region
        _
      $region36: #{_lambda_.38} parent=27 // pred_fallthru
        _
      // Predicated region
      $region37: #{_lambda_.38} parent=27 // pred_check
        %p787 = pneg %p133
      $region38: #{_lambda_.38} parent=27 // pred_check_branch
        %789 = sbr.rel (%p787) target = $region40
      $region39: #{_lambda_.38} parent=27 // pred_region
        _
      $region40: #{_lambda_.38} parent=27 // pred_fallthru
        _
    $region28: #{_lambda_.38} parent=5 // pred_fallthru
      _
    %p790 = scmp.le.s32.totalorder 2, %s11
    // Predicated region
    $region41: #{_lambda_.38} parent=5 // pred_check
      %p791 = pneg %p790
    $region42: #{_lambda_.38} parent=5 // pred_check_branch
      %793 = sbr.rel (%p791) target = $region44
    $region43: #{_lambda_.38} parent=5 // pred_region
      %s794 = ssub.s32 %s11, 2
      // Predicated region
      $region45: #{_lambda_.38} parent=43 // pred_check
        %p795 = pneg %p87
      $region46: #{_lambda_.38} parent=43 // pred_check_branch
        %797 = sbr.rel (%p795) target = $region48
      $region47: #{_lambda_.38} parent=43 // pred_region
        %s798 = smul.u32 32, %s17
        %p799 = scmp.lt.s32.totalorder %s798, 63
        %s800 = scalar_select %p799, %s798, 63
        %s801 = smul.addr %s800, 8
        %s802 = scalar_lea.vmem %s2, %s801
      $region48: #{_lambda_.38} parent=43 // pred_fallthru
        _
      // Predicated region
      $region49: #{_lambda_.38} parent=43 // pred_check
        %p803 = pneg %p113
      $region50: #{_lambda_.38} parent=43 // pred_check_branch
        %805 = sbr.rel (%p803) target = $region52
      $region51: #{_lambda_.38} parent=43 // pred_region
        %p806 = scmp.lt.s32.totalorder %s17, 1
        %s807 = scalar_select %p806, %s17, 1
        %s808 = scalar_lea.vmem %s3, %s807
      $region52: #{_lambda_.38} parent=43 // pred_fallthru
        _
      // Predicated region
      $region53: #{_lambda_.38} parent=43 // pred_check
        %p809 = pneg %p139
      $region54: #{_lambda_.38} parent=43 // pred_check_branch
        %811 = sbr.rel (%p809) target = $region56
      $region55: #{_lambda_.38} parent=43 // pred_region
        %p812 = scmp.lt.s32.totalorder %s17, 1
        %s813 = scalar_select %p812, %s17, 1
        %s814 = scalar_lea.vmem %s4, %s813
      $region56: #{_lambda_.38} parent=43 // pred_fallthru
        _
    $region44: #{_lambda_.38} parent=5 // pred_fallthru
      _
  $region6: #{_lambda_.38} parent=0 // loop_footer
    %s15 = sadd.s32 1, %s11
  $region7: #{_lambda_.38} parent=0 // loop_footer_branch
    %10 = sbr.rel target = $region3
  $region8: #{_lambda_.38} parent=0 // loop_exit
    _

// kernel: _lambda_.43
$region0: #{_lambda_.43}
  #allocation0 [shape = 'u32[]', space=smem, size = 0x4, offset = 0x4, fixed_abs, tag = 'smem constant byte address 0x4 - core index']
  #allocation1 [shape = 'u32[144,128]{1,0:T(1,128)}', space=vmem, size = 0x12000, scoped, tag = 'internal scratch']
  %s0 = inlined_call_operand.vmem [shape: f32[512,16], index: 0, kind: input, shape index: {}, may-alias: {0,4}]
  %s1 = inlined_call_operand.vmem [shape: f32[1,16], index: 1, kind: input, shape index: {}]
  %s2 = inlined_call_operand.vmem [shape: f32[1,16], index: 2, kind: input, shape index: {}]
  %s3 = inlined_call_operand.vmem [shape: f32[512,16], index: 3, kind: input, shape index: {}]
  %s4 = inlined_call_operand.vmem [shape: f32[512,16], index: 4, kind: output, shape index: {}, may-alias: {0,4}]
  %s5 = sld [smem:[#allocation0]]
  $region49: #{_lambda_.43} parent=0
    _
  %s7 = ssub.s32 1, %s5
  %s8 = scalar_select 0, %s7, %s5
  loop: start=0, step=1, limit=4
  $region2: #{_lambda_.43} parent=0 // loop_pre_header
    _
  $region3: #{_lambda_.43} parent=0 // loop_header
    %s10 = sphi 0, %s14
    %p11 = scmp.ge.s32.totalorder %s10, 4
    %s20 = sphi 0, %s22
    %s23 = sphi 0, %s20
    %s24 = sphi 0, %s23
    %s40 = sphi 0, %s24
    %s44 = sphi 0, %s44
    %s46 = sphi 0, %s44
    %s47 = sphi 0, %s46
    %s61 = sphi 0, %s47
    %s65 = sphi 0, %s65
    %s67 = sphi 0, %s65
    %s68 = sphi 0, %s67
    %s82 = sphi 0, %s68
    %s88 = sphi 0, %s90
    %s91 = sphi 0, %s88
    %s92 = sphi 0, %s91
    %s108 = sphi 0, %s92
    %s114 = sphi 0, %s116
    %s117 = sphi 0, %s114
    %s118 = sphi 0, %s117
    %s134 = sphi 0, %s118
  $region4: #{_lambda_.43} parent=0 // loop_header_branch
    %13 = sbr.rel (%p11) target = $region8
  $region5: #{_lambda_.43} parent=0 // loop_body
    %s15 = ssub.s32 %s10, 1
    %s16 = ssub.s32 %s10, 2
    %s17 = sadd.s32 %s10, 1
    %s18 = ssub.s32 %s10, %s17
    %p19 = scmp.eq.s32.totalorder %s18, 0
    %s21 = sadd.s32 %s20, 1
    %s22 = scalar_select %p19, %s20, %s21
    %p25 = pneg %p19
    %p26 = scmp.eq.s32.totalorder %s10, 1
    %p27 = por %p25, %p26
    %p28 = scmp.ne.s32.totalorder %s20, %s23
    %p29 = scmp.eq.s32.totalorder %s10, 0
    %p30 = por %p28, %p29
    %p31 = scmp.ne.s32.totalorder %s20, %s23
    %p32 = scmp.eq.s32.totalorder %s15, 1
    %p33 = por %p31, %p32
    %p34 = scmp.ne.s32.totalorder %s23, %s24
    %p35 = scmp.eq.s32.totalorder %s15, 0
    %p36 = por %p34, %p35
    %p37 = scmp.ne.s32.totalorder %s23, %s24
    %p38 = scmp.eq.s32.totalorder %s16, 1
    %p39 = por %p37, %p38
    %p41 = scmp.ne.s32.totalorder %s24, %s40
    %p42 = scmp.eq.s32.totalorder %s16, 0
    %p43 = por %p41, %p42
    %s45 = sadd.s32 %s44, 1
    %p48 = scmp.eq.s32.totalorder %s10, 1
    %p49 = scmp.ne.s32.totalorder %s44, %s46
    %p50 = scmp.eq.s32.totalorder %s10, 0
    %p51 = por %p49, %p50
    %p52 = scmp.ne.s32.totalorder %s44, %s46
    %p53 = scmp.eq.s32.totalorder %s15, 1
    %p54 = por %p52, %p53
    %p55 = scmp.ne.s32.totalorder %s46, %s47
    %p56 = scmp.eq.s32.totalorder %s15, 0
    %p57 = por %p55, %p56
    %p58 = scmp.ne.s32.totalorder %s46, %s47
    %p59 = scmp.eq.s32.totalorder %s16, 1
    %p60 = por %p58, %p59
    %p62 = scmp.ne.s32.totalorder %s47, %s61
    %p63 = scmp.eq.s32.totalorder %s16, 0
    %p64 = por %p62, %p63
    %s66 = sadd.s32 %s65, 1
    %p69 = scmp.eq.s32.totalorder %s10, 1
    %p70 = scmp.ne.s32.totalorder %s65, %s67
    %p71 = scmp.eq.s32.totalorder %s10, 0
    %p72 = por %p70, %p71
    %p73 = scmp.ne.s32.totalorder %s65, %s67
    %p74 = scmp.eq.s32.totalorder %s15, 1
    %p75 = por %p73, %p74
    %p76 = scmp.ne.s32.totalorder %s67, %s68
    %p77 = scmp.eq.s32.totalorder %s15, 0
    %p78 = por %p76, %p77
    %p79 = scmp.ne.s32.totalorder %s67, %s68
    %p80 = scmp.eq.s32.totalorder %s16, 1
    %p81 = por %p79, %p80
    %p83 = scmp.ne.s32.totalorder %s68, %s82
    %p84 = scmp.eq.s32.totalorder %s16, 0
    %p85 = por %p83, %p84
    %s86 = ssub.s32 %s10, %s17
    %p87 = scmp.eq.s32.totalorder %s86, 0
    %s89 = sadd.s32 %s88, 1
    %s90 = scalar_select %p87, %s88, %s89
    %p93 = pneg %p87
    %p94 = scmp.eq.s32.totalorder %s10, 1
    %p95 = por %p93, %p94
    %p96 = scmp.ne.s32.totalorder %s88, %s91
    %p97 = scmp.eq.s32.totalorder %s10, 0
    %p98 = por %p96, %p97
    %p99 = scmp.ne.s32.totalorder %s88, %s91
    %p100 = scmp.eq.s32.totalorder %s15, 1
    %p101 = por %p99, %p100
    %p102 = scmp.ne.s32.totalorder %s91, %s92
    %p103 = scmp.eq.s32.totalorder %s15, 0
    %p104 = por %p102, %p103
    %p105 = scmp.ne.s32.totalorder %s91, %s92
    %p106 = scmp.eq.s32.totalorder %s16, 1
    %p107 = por %p105, %p106
    %p109 = scmp.ne.s32.totalorder %s92, %s108
    %p110 = scmp.eq.s32.totalorder %s16, 0
    %p111 = por %p109, %p110
    %s112 = ssub.s32 %s10, %s17
    %p113 = scmp.eq.s32.totalorder %s112, 0
    %s115 = sadd.s32 %s114, 1
    %s116 = scalar_select %p113, %s114, %s115
    %p119 = pneg %p113
    %p120 = scmp.eq.s32.totalorder %s10, 1
    %p121 = por %p119, %p120
    %p122 = scmp.ne.s32.totalorder %s114, %s117
    %p123 = scmp.eq.s32.totalorder %s10, 0
    %p124 = por %p122, %p123
    %p125 = scmp.ne.s32.totalorder %s114, %s117
    %p126 = scmp.eq.s32.totalorder %s15, 1
    %p127 = por %p125, %p126
    %p128 = scmp.ne.s32.totalorder %s117, %s118
    %p129 = scmp.eq.s32.totalorder %s15, 0
    %p130 = por %p128, %p129
    %p131 = scmp.ne.s32.totalorder %s117, %s118
    %p132 = scmp.eq.s32.totalorder %s16, 1
    %p133 = por %p131, %p132
    %p135 = scmp.ne.s32.totalorder %s118, %s134
    %p136 = scmp.eq.s32.totalorder %s16, 0
    %p137 = por %p135, %p136
    %p138 = scmp.le.s32.totalorder 1, %s10
    %p139 = scmp.lt.s32.totalorder %s10, 3
    %p140 = pnand %p138, %p139
    %p141 = pneg %p140
    // Predicated region
    $region9: #{_lambda_.43} parent=5 // pred_check
      _
    $region10: #{_lambda_.43} parent=5 // pred_check_branch
      %143 = sbr.rel (%p140) target = $region12
    $region11: #{_lambda_.43} parent=5 // pred_region
      %s144 = ssub.s32 %s10, 1
      // Predicated region
      $region13: #{_lambda_.43} parent=11 // pred_check
        %p145 = pneg %p57
      $region14: #{_lambda_.43} parent=11 // pred_check_branch
        %147 = sbr.rel (%p145) target = $region16
      $region15: #{_lambda_.43} parent=11 // pred_region
        _
      $region16: #{_lambda_.43} parent=11 // pred_fallthru
        _
      // Predicated region
      $region17: #{_lambda_.43} parent=11 // pred_check
        %p148 = pneg %p78
      $region18: #{_lambda_.43} parent=11 // pred_check_branch
        %150 = sbr.rel (%p148) target = $region20
      $region19: #{_lambda_.43} parent=11 // pred_region
        _
      $region20: #{_lambda_.43} parent=11 // pred_fallthru
        _
    $region12: #{_lambda_.43} parent=5 // pred_fallthru
      _
    %p151 = scmp.lt.s32.totalorder %s10, 2
    // Predicated region
    $region21: #{_lambda_.43} parent=5 // pred_check
      %p152 = pneg %p151
    $region22: #{_lambda_.43} parent=5 // pred_check_branch
      %154 = sbr.rel (%p152) target = $region24
    $region23: #{_lambda_.43} parent=5 // pred_region
      // Predicated region
      $region25: #{_lambda_.43} parent=23 // pred_check
        %p155 = pneg %p30
      $region26: #{_lambda_.43} parent=23 // pred_check_branch
        %157 = sbr.rel (%p155) target = $region28
      $region27: #{_lambda_.43} parent=23 // pred_region
        %s158 = smul.u32 32, %s10
        %p159 = scmp.lt.s32.totalorder %s158, 63
        %s160 = scalar_select %p159, %s158, 63
        %s161 = smul.addr %s160, 8
        %s162 = scalar_lea.vmem %s0, %s161
        %s163 = smul.u32 32, %s10
      $region28: #{_lambda_.43} parent=23 // pred_fallthru
        _
      // Predicated region
      $region29: #{_lambda_.43} parent=23 // pred_check
        %p164 = pneg %p98
      $region30: #{_lambda_.43} parent=23 // pred_check_branch
        %166 = sbr.rel (%p164) target = $region32
      $region31: #{_lambda_.43} parent=23 // pred_region
        %s167 = smul.u32 32, %s10
        %p168 = scmp.lt.s32.totalorder %s167, 63
        %s169 = scalar_select %p168, %s167, 63
        %s170 = smul.addr %s169, 8
        %s171 = scalar_lea.vmem %s3, %s170
        %s172 = smul.u32 32, %s10
      $region32: #{_lambda_.43} parent=23 // pred_fallthru
        _
    $region24: #{_lambda_.43} parent=5 // pred_fallthru
      _
    %p173 = scmp.le.s32.totalorder 1, %s10
    %p174 = scmp.lt.s32.totalorder %s10, 3
    %p175 = pnand %p173, %p174
    %p176 = pneg %p175
    // Predicated region
    $region33: #{_lambda_.43} parent=5 // pred_check
      _
    $region34: #{_lambda_.43} parent=5 // pred_check_branch
      %178 = sbr.rel (%p175) target = $region36
    $region35: #{_lambda_.43} parent=5 // pred_region
      %s179 = ssub.s32 %s10, 1
      %s180 = smul.u32 32, %s15
      %p181 = scmp.lt.s32.totalorder %s180, 63
      %s182 = scalar_select %p181, %s180, 63
      %s183 = smul.addr %s182, 8
      %s184 = scalar_lea.vmem %s0, %s183
      %p185 = pneg %p36
      %p186 = pneg %p33
      %p187 = pneg %p57
      %p188 = pneg %p54
      %p189 = pneg %p78
      %p190 = pneg %p75
      %s191 = smul.u32 32, %s15
      %p192 = scmp.lt.s32.totalorder %s191, 63
      %s193 = scalar_select %p192, %s191, 63
      %s194 = smul.addr %s193, 8
      %s195 = scalar_lea.vmem %s3, %s194
      %p196 = pneg %p104
      %p197 = pneg %p101
      %p198 = pneg %p130
      %p199 = pneg %p127
      %s200 = smul.u32 32, %s15
      %p201 = scmp.lt.s32.totalorder %s200, 63
      %s202 = scalar_select %p201, %s200, 63
      %s203 = smul.addr %s202, 8
      %s204 = scalar_lea.vmem %s4, %s203
      %s205 = smul.u32 32, %s15
      %p206 = scmp.lt.s32.totalorder %s205, 63
      %s207 = scalar_select %p206, %s205, 63
      %s208 = smul.addr %s207, 8
      %s209 = scalar_lea.vmem %s0, %s208
      %s210 = smul.u32 32, %s15
      %s211 = smul.u32 32, %s15
      %p212 = scmp.lt.s32.totalorder %s211, 63
      %s213 = scalar_select %p212, %s211, 63
      %s214 = smul.addr %s213, 8
      %s215 = scalar_lea.vmem %s3, %s214
      %s216 = smul.u32 32, %s15
      %s217 = smul.u32 32, %s15
      %p218 = scmp.lt.s32.totalorder %s217, 63
      %s219 = scalar_select %p218, %s217, 63
      %s220 = smul.addr %s219, 8
      %s221 = scalar_lea.vmem %s4, %s220
      %s222 = smul.u32 32, %s15
      %v223 = vld [vmem:[%s209] sm:$0xff]
      %v224 = vld [vmem:[%s209 + $0x8] sm:$0xff]
      %v225 = vld [vmem:[%s209 + $0x10] sm:$0xff]
      %v226 = vld [vmem:[%s209 + $0x18] sm:$0xff]
      %v227 = vld [vmem:[%s209 + $0x20] sm:$0xff]
      %v228 = vld [vmem:[%s209 + $0x28] sm:$0xff]
      %v229 = vld [vmem:[%s209 + $0x30] sm:$0xff]
      %v230 = vld [vmem:[%s209 + $0x38] sm:$0xff]
      %v231 = vld [vmem:[%s209 + $0x40] sm:$0xff]
      %v232 = vld [vmem:[%s209 + $0x48] sm:$0xff]
      %v233 = vld [vmem:[%s209 + $0x50] sm:$0xff]
      %v234 = vld [vmem:[%s209 + $0x58] sm:$0xff]
      %v235 = vld [vmem:[%s209 + $0x60] sm:$0xff]
      %v236 = vld [vmem:[%s209 + $0x68] sm:$0xff]
      %v237 = vld [vmem:[%s209 + $0x70] sm:$0xff]
      %v238 = vld [vmem:[%s209 + $0x78] sm:$0xff]
      %v239 = vld [vmem:[%s209 + $0x80] sm:$0xff]
      %v240 = vld [vmem:[%s209 + $0x88] sm:$0xff]
      %v241 = vld [vmem:[%s209 + $0x90] sm:$0xff]
      %v242 = vld [vmem:[%s209 + $0x98] sm:$0xff]
      %v243 = vld [vmem:[%s209 + $0xa0] sm:$0xff]
      %v244 = vld [vmem:[%s209 + $0xa8] sm:$0xff]
      %v245 = vld [vmem:[%s209 + $0xb0] sm:$0xff]
      %v246 = vld [vmem:[%s209 + $0xb8] sm:$0xff]
      %v247 = vld [vmem:[%s209 + $0xc0] sm:$0xff]
      %v248 = vld [vmem:[%s209 + $0xc8] sm:$0xff]
      %v249 = vld [vmem:[%s209 + $0xd0] sm:$0xff]
      %v250 = vld [vmem:[%s209 + $0xd8] sm:$0xff]
      %v251 = vld [vmem:[%s209 + $0xe0] sm:$0xff]
      %v252 = vld [vmem:[%s209 + $0xe8] sm:$0xff]
      %v253 = vld [vmem:[%s209 + $0xf0] sm:$0xff]
      %v254 = vld [vmem:[%s209 + $0xf8] sm:$0xff]
      %v255 = vld [vmem:[%s1] sm:$0x1]
      %v257 = vlaneseq
      %v258 = vshrl.u32 %v257, 7
      %v259 = vsub.s32 0, %v258
      %v260 = vrot.slane %v255, %v259
      %v262 = vmul.f32 %v223, %v260
      %v263 = vmul.f32 %v224, %v260
      %v264 = vmul.f32 %v225, %v260
      %v265 = vmul.f32 %v226, %v260
      %v266 = vmul.f32 %v227, %v260
      %v267 = vmul.f32 %v228, %v260
      %v268 = vmul.f32 %v229, %v260
      %v269 = vmul.f32 %v230, %v260
      %v270 = vmul.f32 %v231, %v260
      %v271 = vmul.f32 %v232, %v260
      %v272 = vmul.f32 %v233, %v260
      %v273 = vmul.f32 %v234, %v260
      %v274 = vmul.f32 %v235, %v260
      %v275 = vmul.f32 %v236, %v260
      %v276 = vmul.f32 %v237, %v260
      %v277 = vmul.f32 %v238, %v260
      %v278 = vmul.f32 %v239, %v260
      %v279 = vmul.f32 %v240, %v260
      %v280 = vmul.f32 %v241, %v260
      %v281 = vmul.f32 %v242, %v260
      %v282 = vmul.f32 %v243, %v260
      %v283 = vmul.f32 %v244, %v260
      %v284 = vmul.f32 %v245, %v260
      %v285 = vmul.f32 %v246, %v260
      %v286 = vmul.f32 %v247, %v260
      %v287 = vmul.f32 %v248, %v260
      %v288 = vmul.f32 %v249, %v260
      %v289 = vmul.f32 %v250, %v260
      %v290 = vmul.f32 %v251, %v260
      %v291 = vmul.f32 %v252, %v260
      %v292 = vmul.f32 %v253, %v260
      %v293 = vmul.f32 %v254, %v260
      %v294 = vld [vmem:[%s2] sm:$0x1]
      %v296 = vlaneseq
      %v297 = vshrl.u32 %v296, 7
      %v298 = vsub.s32 0, %v297
      %v299 = vrot.slane %v294, %v298
      %v301 = vadd.f32 %v262, %v299
      %v302 = vadd.f32 %v263, %v299
      %v303 = vadd.f32 %v264, %v299
      %v304 = vadd.f32 %v265, %v299
      %v305 = vadd.f32 %v266, %v299
      %v306 = vadd.f32 %v267, %v299
      %v307 = vadd.f32 %v268, %v299
      %v308 = vadd.f32 %v269, %v299
      %v309 = vadd.f32 %v270, %v299
      %v310 = vadd.f32 %v271, %v299
      %v311 = vadd.f32 %v272, %v299
      %v312 = vadd.f32 %v273, %v299
      %v313 = vadd.f32 %v274, %v299
      %v314 = vadd.f32 %v275, %v299
      %v315 = vadd.f32 %v276, %v299
      %v316 = vadd.f32 %v277, %v299
      %v317 = vadd.f32 %v278, %v299
      %v318 = vadd.f32 %v279, %v299
      %v319 = vadd.f32 %v280, %v299
      %v320 = vadd.f32 %v281, %v299
      %v321 = vadd.f32 %v282, %v299
      %v322 = vadd.f32 %v283, %v299
      %v323 = vadd.f32 %v284, %v299
      %v324 = vadd.f32 %v285, %v299
      %v325 = vadd.f32 %v286, %v299
      %v326 = vadd.f32 %v287, %v299
      %v327 = vadd.f32 %v288, %v299
      %v328 = vadd.f32 %v289, %v299
      %v329 = vadd.f32 %v290, %v299
      %v330 = vadd.f32 %v291, %v299
      %v331 = vadd.f32 %v292, %v299
      %v332 = vadd.f32 %v293, %v299
      %v333 = vld [vmem:[%s215] sm:$0xff]
      %v334 = vld [vmem:[%s215 + $0x8] sm:$0xff]
      %v335 = vld [vmem:[%s215 + $0x10] sm:$0xff]
      %v336 = vld [vmem:[%s215 + $0x18] sm:$0xff]
      %v337 = vld [vmem:[%s215 + $0x20] sm:$0xff]
      %v338 = vld [vmem:[%s215 + $0x28] sm:$0xff]
      %v339 = vld [vmem:[%s215 + $0x30] sm:$0xff]
      %v340 = vld [vmem:[%s215 + $0x38] sm:$0xff]
      %v341 = vld [vmem:[%s215 + $0x40] sm:$0xff]
      %v342 = vld [vmem:[%s215 + $0x48] sm:$0xff]
      %v343 = vld [vmem:[%s215 + $0x50] sm:$0xff]
      %v344 = vld [vmem:[%s215 + $0x58] sm:$0xff]
      %v345 = vld [vmem:[%s215 + $0x60] sm:$0xff]
      %v346 = vld [vmem:[%s215 + $0x68] sm:$0xff]
      %v347 = vld [vmem:[%s215 + $0x70] sm:$0xff]
      %v348 = vld [vmem:[%s215 + $0x78] sm:$0xff]
      %v349 = vld [vmem:[%s215 + $0x80] sm:$0xff]
      %v350 = vld [vmem:[%s215 + $0x88] sm:$0xff]
      %v351 = vld [vmem:[%s215 + $0x90] sm:$0xff]
      %v352 = vld [vmem:[%s215 + $0x98] sm:$0xff]
      %v353 = vld [vmem:[%s215 + $0xa0] sm:$0xff]
      %v354 = vld [vmem:[%s215 + $0xa8] sm:$0xff]
      %v355 = vld [vmem:[%s215 + $0xb0] sm:$0xff]
      %v356 = vld [vmem:[%s215 + $0xb8] sm:$0xff]
      %v357 = vld [vmem:[%s215 + $0xc0] sm:$0xff]
      %v358 = vld [vmem:[%s215 + $0xc8] sm:$0xff]
      %v359 = vld [vmem:[%s215 + $0xd0] sm:$0xff]
      %v360 = vld [vmem:[%s215 + $0xd8] sm:$0xff]
      %v361 = vld [vmem:[%s215 + $0xe0] sm:$0xff]
      %v362 = vld [vmem:[%s215 + $0xe8] sm:$0xff]
      %v363 = vld [vmem:[%s215 + $0xf0] sm:$0xff]
      %v364 = vld [vmem:[%s215 + $0xf8] sm:$0xff]
      %v365 = vadd.f32 %v301, %v333
      %v366 = vadd.f32 %v302, %v334
      %v367 = vadd.f32 %v303, %v335
      %v368 = vadd.f32 %v304, %v336
      %v369 = vadd.f32 %v305, %v337
      %v370 = vadd.f32 %v306, %v338
      %v371 = vadd.f32 %v307, %v339
      %v372 = vadd.f32 %v308, %v340
      %v373 = vadd.f32 %v309, %v341
      %v374 = vadd.f32 %v310, %v342
      %v375 = vadd.f32 %v311, %v343
      %v376 = vadd.f32 %v312, %v344
      %v377 = vadd.f32 %v313, %v345
      %v378 = vadd.f32 %v314, %v346
      %v379 = vadd.f32 %v315, %v347
      %v380 = vadd.f32 %v316, %v348
      %v381 = vadd.f32 %v317, %v349
      %v382 = vadd.f32 %v318, %v350
      %v383 = vadd.f32 %v319, %v351
      %v384 = vadd.f32 %v320, %v352
      %v385 = vadd.f32 %v321, %v353
      %v386 = vadd.f32 %v322, %v354
      %v387 = vadd.f32 %v323, %v355
      %v388 = vadd.f32 %v324, %v356
      %v389 = vadd.f32 %v325, %v357
      %v390 = vadd.f32 %v326, %v358
      %v391 = vadd.f32 %v327, %v359
      %v392 = vadd.f32 %v328, %v360
      %v393 = vadd.f32 %v329, %v361
      %v394 = vadd.f32 %v330, %v362
      %v395 = vadd.f32 %v331, %v363
      %v396 = vadd.f32 %v332, %v364
      %v397 = vmax.f32 %v365, 0.0
      %v398 = vmax.f32 %v366, 0.0
      %v399 = vmax.f32 %v367, 0.0
      %v400 = vmax.f32 %v368, 0.0
      %v401 = vmax.f32 %v369, 0.0
      %v402 = vmax.f32 %v370, 0.0
      %v403 = vmax.f32 %v371, 0.0
      %v404 = vmax.f32 %v372, 0.0
      %v405 = vmax.f32 %v373, 0.0
      %v406 = vmax.f32 %v374, 0.0
      %v407 = vmax.f32 %v375, 0.0
      %v408 = vmax.f32 %v376, 0.0
      %v409 = vmax.f32 %v377, 0.0
      %v410 = vmax.f32 %v378, 0.0
      %v411 = vmax.f32 %v379, 0.0
      %v412 = vmax.f32 %v380, 0.0
      %v413 = vmax.f32 %v381, 0.0
      %v414 = vmax.f32 %v382, 0.0
      %v415 = vmax.f32 %v383, 0.0
      %v416 = vmax.f32 %v384, 0.0
      %v417 = vmax.f32 %v385, 0.0
      %v418 = vmax.f32 %v386, 0.0
      %v419 = vmax.f32 %v387, 0.0
      %v420 = vmax.f32 %v388, 0.0
      %v421 = vmax.f32 %v389, 0.0
      %v422 = vmax.f32 %v390, 0.0
      %v423 = vmax.f32 %v391, 0.0
      %v424 = vmax.f32 %v392, 0.0
      %v425 = vmax.f32 %v393, 0.0
      %v426 = vmax.f32 %v394, 0.0
      %v427 = vmax.f32 %v395, 0.0
      %v428 = vmax.f32 %v396, 0.0
      %vm429 = vcmask 130048
      %430 = vst.msk [vmem:[%s221] sm:$0xff] %vm429, %v397
      %431 = vst.msk [vmem:[%s221 + $0x8] sm:$0xff] %vm429, %v398
      %432 = vst.msk [vmem:[%s221 + $0x10] sm:$0xff] %vm429, %v399
      %433 = vst.msk [vmem:[%s221 + $0x18] sm:$0xff] %vm429, %v400
      %434 = vst.msk [vmem:[%s221 + $0x20] sm:$0xff] %vm429, %v401
      %435 = vst.msk [vmem:[%s221 + $0x28] sm:$0xff] %vm429, %v402
      %436 = vst.msk [vmem:[%s221 + $0x30] sm:$0xff] %vm429, %v403
      %437 = vst.msk [vmem:[%s221 + $0x38] sm:$0xff] %vm429, %v404
      %438 = vst.msk [vmem:[%s221 + $0x40] sm:$0xff] %vm429, %v405
      %439 = vst.msk [vmem:[%s221 + $0x48] sm:$0xff] %vm429, %v406
      %440 = vst.msk [vmem:[%s221 + $0x50] sm:$0xff] %vm429, %v407
      %441 = vst.msk [vmem:[%s221 + $0x58] sm:$0xff] %vm429, %v408
      %442 = vst.msk [vmem:[%s221 + $0x60] sm:$0xff] %vm429, %v409
      %443 = vst.msk [vmem:[%s221 + $0x68] sm:$0xff] %vm429, %v410
      %444 = vst.msk [vmem:[%s221 + $0x70] sm:$0xff] %vm429, %v411
      %445 = vst.msk [vmem:[%s221 + $0x78] sm:$0xff] %vm429, %v412
      %446 = vst.msk [vmem:[%s221 + $0x80] sm:$0xff] %vm429, %v413
      %447 = vst.msk [vmem:[%s221 + $0x88] sm:$0xff] %vm429, %v414
      %448 = vst.msk [vmem:[%s221 + $0x90] sm:$0xff] %vm429, %v415
      %449 = vst.msk [vmem:[%s221 + $0x98] sm:$0xff] %vm429, %v416
      %450 = vst.msk [vmem:[%s221 + $0xa0] sm:$0xff] %vm429, %v417
      %451 = vst.msk [vmem:[%s221 + $0xa8] sm:$0xff] %vm429, %v418
      %452 = vst.msk [vmem:[%s221 + $0xb0] sm:$0xff] %vm429, %v419
      %453 = vst.msk [vmem:[%s221 + $0xb8] sm:$0xff] %vm429, %v420
      %454 = vst.msk [vmem:[%s221 + $0xc0] sm:$0xff] %vm429, %v421
      %455 = vst.msk [vmem:[%s221 + $0xc8] sm:$0xff] %vm429, %v422
      %456 = vst.msk [vmem:[%s221 + $0xd0] sm:$0xff] %vm429, %v423
      %457 = vst.msk [vmem:[%s221 + $0xd8] sm:$0xff] %vm429, %v424
      %458 = vst.msk [vmem:[%s221 + $0xe0] sm:$0xff] %vm429, %v425
      %459 = vst.msk [vmem:[%s221 + $0xe8] sm:$0xff] %vm429, %v426
      %460 = vst.msk [vmem:[%s221 + $0xf0] sm:$0xff] %vm429, %v427
      %461 = vst.msk [vmem:[%s221 + $0xf8] sm:$0xff] %vm429, %v428
      %s462 = smul.u32 32, %s15
      %p463 = scmp.lt.s32.totalorder %s462, 63
      %s464 = scalar_select %p463, %s462, 63
      %s465 = smul.addr %s464, 8
      %s466 = scalar_lea.vmem %s4, %s465
      // Predicated region
      $region37: #{_lambda_.43} parent=35 // pred_check
        %p467 = pneg %p127
      $region38: #{_lambda_.43} parent=35 // pred_check_branch
        %469 = sbr.rel (%p467) target = $region40
      $region39: #{_lambda_.43} parent=35 // pred_region
        %s470 = smul.u32 32, %s15
      $region40: #{_lambda_.43} parent=35 // pred_fallthru
        _
    $region36: #{_lambda_.43} parent=5 // pred_fallthru
      _
    %p471 = scmp.le.s32.totalorder 2, %s10
    // Predicated region
    $region41: #{_lambda_.43} parent=5 // pred_check
      %p472 = pneg %p471
    $region42: #{_lambda_.43} parent=5 // pred_check_branch
      %474 = sbr.rel (%p472) target = $region44
    $region43: #{_lambda_.43} parent=5 // pred_region
      %s475 = ssub.s32 %s10, 2
      // Predicated region
      $region45: #{_lambda_.43} parent=43 // pred_check
        %p476 = pneg %p133
      $region46: #{_lambda_.43} parent=43 // pred_check_branch
        %478 = sbr.rel (%p476) target = $region48
      $region47: #{_lambda_.43} parent=43 // pred_region
        %s479 = smul.u32 32, %s16
        %p480 = scmp.lt.s32.totalorder %s479, 63
        %s481 = scalar_select %p480, %s479, 63
        %s482 = smul.addr %s481, 8
        %s483 = scalar_lea.vmem %s4, %s482
      $region48: #{_lambda_.43} parent=43 // pred_fallthru
        _
    $region44: #{_lambda_.43} parent=5 // pred_fallthru
      _
  $region6: #{_lambda_.43} parent=0 // loop_footer
    %s14 = sadd.s32 1, %s10
  $region7: #{_lambda_.43} parent=0 // loop_footer_branch
    %9 = sbr.rel target = $region3
  $region8: #{_lambda_.43} parent=0 // loop_exit
    _

// kernel: _lambda_.40
$region0: #{_lambda_.40}
  #allocation0 [shape = 'u32[]', space=smem, size = 0x4, offset = 0x4, fixed_abs, tag = 'smem constant byte address 0x4 - core index']
  #allocation1 [shape = 'u32[144,128]{1,0:T(1,128)}', space=vmem, size = 0x12000, scoped, tag = 'internal scratch']
  %s0 = inlined_call_operand.vmem [shape: bf16[512,144], index: 0, kind: input, shape index: {}]
  %s1 = inlined_call_operand.vmem [shape: bf16[144,16], index: 1, kind: input, shape index: {}]
  %s2 = inlined_call_operand.vmem [shape: f32[512,16], index: 2, kind: output, shape index: {0}]
  %s3 = inlined_call_operand.vmem [shape: f32[2,1,16], index: 3, kind: output, shape index: {1}]
  %s4 = inlined_call_operand.vmem [shape: f32[2,1,16], index: 4, kind: output, shape index: {2}]
  %5 = xla_tuple %s2, %s3, %s4
  %s6 = sld [smem:[#allocation0]]
  $region57: #{_lambda_.40} parent=0
    _
  %s8 = ssub.s32 1, %s6
  %s9 = scalar_select 0, %s8, %s6
  loop: start=0, step=1, limit=4
  $region2: #{_lambda_.40} parent=0 // loop_pre_header
    _
  $region3: #{_lambda_.40} parent=0 // loop_header
    %s11 = sphi 0, %s15
    %p12 = scmp.ge.s32.totalorder %s11, 4
    %s21 = sphi 0, %s23
    %s24 = sphi 0, %s21
    %s25 = sphi 0, %s24
    %s41 = sphi 0, %s25
    %s45 = sphi 0, %s45
    %s47 = sphi 0, %s45
    %s48 = sphi 0, %s47
    %s62 = sphi 0, %s48
    %s68 = sphi 0, %s70
    %s71 = sphi 0, %s68
    %s72 = sphi 0, %s71
    %s88 = sphi 0, %s72
    %s94 = sphi 0, %s96
    %s97 = sphi 0, %s94
    %s98 = sphi 0, %s97
    %s114 = sphi 0, %s98
    %s120 = sphi 0, %s122
    %s123 = sphi 0, %s120
    %s124 = sphi 0, %s123
    %s140 = sphi 0, %s124
  $region4: #{_lambda_.40} parent=0 // loop_header_branch
    %14 = sbr.rel (%p12) target = $region8
  $region5: #{_lambda_.40} parent=0 // loop_body
    %s16 = ssub.s32 %s11, 1
    %s17 = ssub.s32 %s11, 2
    %s18 = sadd.s32 %s11, 1
    %s19 = ssub.s32 %s11, %s18
    %p20 = scmp.eq.s32.totalorder %s19, 0
    %s22 = sadd.s32 %s21, 1
    %s23 = scalar_select %p20, %s21, %s22
    %p26 = pneg %p20
    %p27 = scmp.eq.s32.totalorder %s11, 1
    %p28 = por %p26, %p27
    %p29 = scmp.ne.s32.totalorder %s21, %s24
    %p30 = scmp.eq.s32.totalorder %s11, 0
    %p31 = por %p29, %p30
    %p32 = scmp.ne.s32.totalorder %s21, %s24
    %p33 = scmp.eq.s32.totalorder %s16, 1
    %p34 = por %p32, %p33
    %p35 = scmp.ne.s32.totalorder %s24, %s25
    %p36 = scmp.eq.s32.totalorder %s16, 0
    %p37 = por %p35, %p36
    %p38 = scmp.ne.s32.totalorder %s24, %s25
    %p39 = scmp.eq.s32.totalorder %s17, 1
    %p40 = por %p38, %p39
    %p42 = scmp.ne.s32.totalorder %s25, %s41
    %p43 = scmp.eq.s32.totalorder %s17, 0
    %p44 = por %p42, %p43
    %s46 = sadd.s32 %s45, 1
    %p49 = scmp.eq.s32.totalorder %s11, 1
    %p50 = scmp.ne.s32.totalorder %s45, %s47
    %p51 = scmp.eq.s32.totalorder %s11, 0
    %p52 = por %p50, %p51
    %p53 = scmp.ne.s32.totalorder %s45, %s47
    %p54 = scmp.eq.s32.totalorder %s16, 1
    %p55 = por %p53, %p54
    %p56 = scmp.ne.s32.totalorder %s47, %s48
    %p57 = scmp.eq.s32.totalorder %s16, 0
    %p58 = por %p56, %p57
    %p59 = scmp.ne.s32.totalorder %s47, %s48
    %p60 = scmp.eq.s32.totalorder %s17, 1
    %p61 = por %p59, %p60
    %p63 = scmp.ne.s32.totalorder %s48, %s62
    %p64 = scmp.eq.s32.totalorder %s17, 0
    %p65 = por %p63, %p64
    %s66 = ssub.s32 %s11, %s18
    %p67 = scmp.eq.s32.totalorder %s66, 0
    %s69 = sadd.s32 %s68, 1
    %s70 = scalar_select %p67, %s68, %s69
    %p73 = pneg %p67
    %p74 = scmp.eq.s32.totalorder %s11, 1
    %p75 = por %p73, %p74
    %p76 = scmp.ne.s32.totalorder %s68, %s71
    %p77 = scmp.eq.s32.totalorder %s11, 0
    %p78 = por %p76, %p77
    %p79 = scmp.ne.s32.totalorder %s68, %s71
    %p80 = scmp.eq.s32.totalorder %s16, 1
    %p81 = por %p79, %p80
    %p82 = scmp.ne.s32.totalorder %s71, %s72
    %p83 = scmp.eq.s32.totalorder %s16, 0
    %p84 = por %p82, %p83
    %p85 = scmp.ne.s32.totalorder %s71, %s72
    %p86 = scmp.eq.s32.totalorder %s17, 1
    %p87 = por %p85, %p86
    %p89 = scmp.ne.s32.totalorder %s72, %s88
    %p90 = scmp.eq.s32.totalorder %s17, 0
    %p91 = por %p89, %p90
    %s92 = ssub.s32 %s11, %s18
    %p93 = scmp.eq.s32.totalorder %s92, 0
    %s95 = sadd.s32 %s94, 1
    %s96 = scalar_select %p93, %s94, %s95
    %p99 = pneg %p93
    %p100 = scmp.eq.s32.totalorder %s11, 1
    %p101 = por %p99, %p100
    %p102 = scmp.ne.s32.totalorder %s94, %s97
    %p103 = scmp.eq.s32.totalorder %s11, 0
    %p104 = por %p102, %p103
    %p105 = scmp.ne.s32.totalorder %s94, %s97
    %p106 = scmp.eq.s32.totalorder %s16, 1
    %p107 = por %p105, %p106
    %p108 = scmp.ne.s32.totalorder %s97, %s98
    %p109 = scmp.eq.s32.totalorder %s16, 0
    %p110 = por %p108, %p109
    %p111 = scmp.ne.s32.totalorder %s97, %s98
    %p112 = scmp.eq.s32.totalorder %s17, 1
    %p113 = por %p111, %p112
    %p115 = scmp.ne.s32.totalorder %s98, %s114
    %p116 = scmp.eq.s32.totalorder %s17, 0
    %p117 = por %p115, %p116
    %s118 = ssub.s32 %s11, %s18
    %p119 = scmp.eq.s32.totalorder %s118, 0
    %s121 = sadd.s32 %s120, 1
    %s122 = scalar_select %p119, %s120, %s121
    %p125 = pneg %p119
    %p126 = scmp.eq.s32.totalorder %s11, 1
    %p127 = por %p125, %p126
    %p128 = scmp.ne.s32.totalorder %s120, %s123
    %p129 = scmp.eq.s32.totalorder %s11, 0
    %p130 = por %p128, %p129
    %p131 = scmp.ne.s32.totalorder %s120, %s123
    %p132 = scmp.eq.s32.totalorder %s16, 1
    %p133 = por %p131, %p132
    %p134 = scmp.ne.s32.totalorder %s123, %s124
    %p135 = scmp.eq.s32.totalorder %s16, 0
    %p136 = por %p134, %p135
    %p137 = scmp.ne.s32.totalorder %s123, %s124
    %p138 = scmp.eq.s32.totalorder %s17, 1
    %p139 = por %p137, %p138
    %p141 = scmp.ne.s32.totalorder %s124, %s140
    %p142 = scmp.eq.s32.totalorder %s17, 0
    %p143 = por %p141, %p142
    %p144 = scmp.le.s32.totalorder 1, %s11
    %p145 = scmp.lt.s32.totalorder %s11, 3
    %p146 = pnand %p144, %p145
    %p147 = pneg %p146
    // Predicated region
    $region9: #{_lambda_.40} parent=5 // pred_check
      _
    $region10: #{_lambda_.40} parent=5 // pred_check_branch
      %149 = sbr.rel (%p146) target = $region12
    $region11: #{_lambda_.40} parent=5 // pred_region
      %s150 = ssub.s32 %s11, 1
      // Predicated region
      $region13: #{_lambda_.40} parent=11 // pred_check
        %p151 = pneg %p58
      $region14: #{_lambda_.40} parent=11 // pred_check_branch
        %153 = sbr.rel (%p151) target = $region16
      $region15: #{_lambda_.40} parent=11 // pred_region
        _
      $region16: #{_lambda_.40} parent=11 // pred_fallthru
        _
    $region12: #{_lambda_.40} parent=5 // pred_fallthru
      _
    %p154 = scmp.lt.s32.totalorder %s11, 2
    // Predicated region
    $region17: #{_lambda_.40} parent=5 // pred_check
      %p155 = pneg %p154
    $region18: #{_lambda_.40} parent=5 // pred_check_branch
      %157 = sbr.rel (%p155) target = $region20
    $region19: #{_lambda_.40} parent=5 // pred_region
      // Predicated region
      $region21: #{_lambda_.40} parent=19 // pred_check
        %p158 = pneg %p31
      $region22: #{_lambda_.40} parent=19 // pred_check_branch
        %160 = sbr.rel (%p158) target = $region24
      $region23: #{_lambda_.40} parent=19 // pred_region
        %s161 = smul.u32 32, %s11
        %p162 = scmp.lt.s32.totalorder %s161, 63
        %s163 = scalar_select %p162, %s161, 63
        %s164 = smul.addr %s163, 2
        %s165 = smul.addr %s164, 4
        %s166 = scalar_lea.vmem %s0, %s165
        %s167 = smul.u32 32, %s11
      $region24: #{_lambda_.40} parent=19 // pred_fallthru
        _
    $region20: #{_lambda_.40} parent=5 // pred_fallthru
      _
    %p168 = scmp.le.s32.totalorder 1, %s11
    %p169 = scmp.lt.s32.totalorder %s11, 3
    %p170 = pnand %p168, %p169
    %p171 = pneg %p170
    // Predicated region
    $region25: #{_lambda_.40} parent=5 // pred_check
      _
    $region26: #{_lambda_.40} parent=5 // pred_check_branch
      %173 = sbr.rel (%p170) target = $region28
    $region27: #{_lambda_.40} parent=5 // pred_region
      %s174 = ssub.s32 %s11, 1
      %s175 = smul.u32 32, %s16
      %p176 = scmp.lt.s32.totalorder %s175, 63
      %s177 = scalar_select %p176, %s175, 63
      %s178 = smul.addr %s177, 2
      %s179 = smul.addr %s178, 4
      %s180 = scalar_lea.vmem %s0, %s179
      %p181 = pneg %p37
      %p182 = pneg %p34
      %p183 = pneg %p58
      %p184 = pneg %p55
      %p185 = pneg %p84
      %p186 = pneg %p81
      %s187 = smul.u32 32, %s16
      %p188 = scmp.lt.s32.totalorder %s187, 63
      %s189 = scalar_select %p188, %s187, 63
      %s190 = smul.addr %s189, 8
      %s191 = scalar_lea.vmem %s2, %s190
      %p192 = pneg %p110
      %p193 = pneg %p107
      %p194 = scmp.lt.s32.totalorder %s16, 1
      %s195 = scalar_select %p194, %s16, 1
      %s196 = scalar_lea.vmem %s3, %s195
      %p197 = pneg %p136
      %p198 = pneg %p133
      %p199 = scmp.lt.s32.totalorder %s16, 1
      %s200 = scalar_select %p199, %s16, 1
      %s201 = scalar_lea.vmem %s4, %s200
      %s202 = smul.u32 32, %s16
      %p203 = scmp.lt.s32.totalorder %s202, 63
      %s204 = scalar_select %p203, %s202, 63
      %s205 = smul.addr %s204, 2
      %s206 = smul.addr %s205, 4
      %s207 = scalar_lea.vmem %s0, %s206
      %s208 = smul.u32 32, %s16
      %s209 = smul.u32 32, %s16
      %p210 = scmp.lt.s32.totalorder %s209, 63
      %s211 = scalar_select %p210, %s209, 63
      %s212 = smul.addr %s211, 8
      %s213 = scalar_lea.vmem %s2, %s212
      %s214 = smul.u32 32, %s16
      %p215 = scmp.lt.s32.totalorder %s16, 1
      %s216 = scalar_select %p215, %s16, 1
      %s217 = scalar_lea.vmem %s3, %s216
      %p218 = scmp.lt.s32.totalorder %s16, 1
      %s219 = scalar_select %p218, %s16, 1
      %s220 = scalar_lea.vmem %s4, %s219
      %v222 = vld [vmem:[%s207] sm:$0xff]
      %v223 = vld [vmem:[%s207 + $0x8] sm:$0xff]
      %v224 = vld [vmem:[%s207 + $0x10] sm:$0xff]
      %v225 = vld [vmem:[%s207 + $0x18] sm:$0xff]
      %v226 = vld [vmem:[%s207 + $0x20] sm:$0xff]
      %v227 = vld [vmem:[%s207 + $0x28] sm:$0xff]
      %v228 = vld [vmem:[%s207 + $0x30] sm:$0xff]
      %v229 = vld [vmem:[%s207 + $0x38] sm:$0xff]
      %v230 = vld [vmem:[%s207 + $0x40] sm:$0xff]
      %v231 = vld [vmem:[%s207 + $0x48] sm:$0xff]
      %v232 = vld [vmem:[%s207 + $0x50] sm:$0xff]
      %v233 = vld [vmem:[%s207 + $0x58] sm:$0xff]
      %v234 = vld [vmem:[%s207 + $0x60] sm:$0xff]
      %v235 = vld [vmem:[%s207 + $0x68] sm:$0xff]
      %v236 = vld [vmem:[%s207 + $0x70] sm:$0xff]
      %v237 = vld [vmem:[%s207 + $0x78] sm:$0xff]
      %v238 = vld [vmem:[%s207 + $0x80] sm:$0xff]
      %v239 = vld [vmem:[%s207 + $0x88] sm:$0xff]
      %v240 = vld [vmem:[%s207 + $0x90] sm:$0xff]
      %v241 = vld [vmem:[%s207 + $0x98] sm:$0xff]
      %v242 = vld [vmem:[%s207 + $0xa0] sm:$0xff]
      %v243 = vld [vmem:[%s207 + $0xa8] sm:$0xff]
      %v244 = vld [vmem:[%s207 + $0xb0] sm:$0xff]
      %v245 = vld [vmem:[%s207 + $0xb8] sm:$0xff]
      %v246 = vld [vmem:[%s207 + $0xc0] sm:$0xff]
      %v247 = vld [vmem:[%s207 + $0xc8] sm:$0xff]
      %v248 = vld [vmem:[%s207 + $0xd0] sm:$0xff]
      %v249 = vld [vmem:[%s207 + $0xd8] sm:$0xff]
      %v250 = vld [vmem:[%s207 + $0xe0] sm:$0xff]
      %v251 = vld [vmem:[%s207 + $0xe8] sm:$0xff]
      %v252 = vld [vmem:[%s207 + $0xf0] sm:$0xff]
      %v253 = vld [vmem:[%s207 + $0xf8] sm:$0xff]
      %v254 = vld [vmem:[%s1] sm:$0xf]
      %v255 = vld [vmem:[%s1 + $0x4] sm:$0xf]
      %v256 = vld [vmem:[%s1 + $0x8] sm:$0xf]
      %v257 = vld [vmem:[%s1 + $0xc] sm:$0xf]
      %v258 = vld [vmem:[%s1 + $0x10] sm:$0xf]
      %v259 = vld [vmem:[%s1 + $0x14] sm:$0xf]
      %v260 = vld [vmem:[%s1 + $0x18] sm:$0xf]
      %v261 = vld [vmem:[%s1 + $0x1c] sm:$0xf]
      %v262 = vld [vmem:[%s1 + $0x20] sm:$0xf]
      %v263 = vld [vmem:[%s1 + $0x24] sm:$0xf]
      %v264 = vld [vmem:[%s1 + $0x28] sm:$0xf]
      %v265 = vld [vmem:[%s1 + $0x2c] sm:$0xf]
      %v266 = vld [vmem:[%s1 + $0x30] sm:$0xf]
      %v267 = vld [vmem:[%s1 + $0x34] sm:$0xf]
      %v268 = vld [vmem:[%s1 + $0x38] sm:$0xf]
      %v269 = vld [vmem:[%s1 + $0x3c] sm:$0xf]
      %v270 = vld [vmem:[%s1 + $0x40] sm:$0xf]
      %v271 = vld [vmem:[%s1 + $0x44] sm:$0xf]
      %v304 = vunpack.c.l.b16 %v222
      %v305 = vunpack.c.h.b16 %v222
      %v306 = vunpack.c.l.b16 %v223
      %v307 = vunpack.c.h.b16 %v223
      %v308 = vunpack.c.l.b16 %v224
      %v309 = vunpack.c.h.b16 %v224
      %v310 = vunpack.c.l.b16 %v225
      %v311 = vunpack.c.h.b16 %v225
      %v312 = vunpack.c.l.b16 %v226
      %v313 = vunpack.c.h.b16 %v226
      %v314 = vunpack.c.l.b16 %v227
      %v315 = vunpack.c.h.b16 %v227
      %v316 = vunpack.c.l.b16 %v228
      %v317 = vunpack.c.h.b16 %v228
      %v318 = vunpack.c.l.b16 %v229
      %v319 = vunpack.c.h.b16 %v229
      %v320 = vunpack.c.l.b16 %v230
      %v321 = vunpack.c.h.b16 %v230
      %v322 = vunpack.c.l.b16 %v231
      %v323 = vunpack.c.h.b16 %v231
      %v324 = vunpack.c.l.b16 %v232
      %v325 = vunpack.c.h.b16 %v232
      %v326 = vunpack.c.l.b16 %v233
      %v327 = vunpack.c.h.b16 %v233
      %v328 = vunpack.c.l.b16 %v234
      %v329 = vunpack.c.h.b16 %v234
      %v330 = vunpack.c.l.b16 %v235
      %v331 = vunpack.c.h.b16 %v235
      %v332 = vunpack.c.l.b16 %v236
      %v333 = vunpack.c.h.b16 %v236
      %v334 = vunpack.c.l.b16 %v237
      %v335 = vunpack.c.h.b16 %v237
      %v336 = vunpack.c.l.b16 %v238
      %v337 = vunpack.c.h.b16 %v238
      %v338 = vunpack.c.l.b16 %v239
      %v339 = vunpack.c.h.b16 %v239
      %v340 = vunpack.c.l.b16 %v240
      %v341 = vunpack.c.h.b16 %v240
      %v342 = vunpack.c.l.b16 %v241
      %v343 = vunpack.c.h.b16 %v241
      %v344 = vunpack.c.l.b16 %v242
      %v345 = vunpack.c.h.b16 %v242
      %v346 = vunpack.c.l.b16 %v243
      %v347 = vunpack.c.h.b16 %v243
      %v348 = vunpack.c.l.b16 %v244
      %v349 = vunpack.c.h.b16 %v244
      %v350 = vunpack.c.l.b16 %v245
      %v351 = vunpack.c.h.b16 %v245
      %v352 = vunpack.c.l.b16 %v246
      %v353 = vunpack.c.h.b16 %v246
      %v354 = vunpack.c.l.b16 %v247
      %v355 = vunpack.c.h.b16 %v247
      %v356 = vunpack.c.l.b16 %v248
      %v357 = vunpack.c.h.b16 %v248
      %v358 = vunpack.c.l.b16 %v249
      %v359 = vunpack.c.h.b16 %v249
      %v360 = vunpack.c.l.b16 %v250
      %v361 = vunpack.c.h.b16 %v250
      %v362 = vunpack.c.l.b16 %v251
      %v363 = vunpack.c.h.b16 %v251
      %v364 = vunpack.c.l.b16 %v252
      %v365 = vunpack.c.h.b16 %v252
      %v366 = vunpack.c.l.b16 %v253
      %v367 = vunpack.c.h.b16 %v253
      %v368 = vpack.c.b16 %v306, %v304
      %v369 = vpack.c.b16 %v307, %v305
      %v370 = vpack.c.b16 %v310, %v308
      %v371 = vpack.c.b16 %v311, %v309
      %v372 = vpack.c.b16 %v314, %v312
      %v373 = vpack.c.b16 %v315, %v313
      %v374 = vpack.c.b16 %v318, %v316
      %v375 = vpack.c.b16 %v319, %v317
      %v376 = vpack.c.b16 %v322, %v320
      %v377 = vpack.c.b16 %v323, %v321
      %v378 = vpack.c.b16 %v326, %v324
      %v379 = vpack.c.b16 %v327, %v325
      %v380 = vpack.c.b16 %v330, %v328
      %v381 = vpack.c.b16 %v331, %v329
      %v382 = vpack.c.b16 %v334, %v332
      %v383 = vpack.c.b16 %v335, %v333
      %v384 = vpack.c.b16 %v338, %v336
      %v385 = vpack.c.b16 %v339, %v337
      %v386 = vpack.c.b16 %v342, %v340
      %v387 = vpack.c.b16 %v343, %v341
      %v388 = vpack.c.b16 %v346, %v344
      %v389 = vpack.c.b16 %v347, %v345
      %v390 = vpack.c.b16 %v350, %v348
      %v391 = vpack.c.b16 %v351, %v349
      %v392 = vpack.c.b16 %v354, %v352
      %v393 = vpack.c.b16 %v355, %v353
      %v394 = vpack.c.b16 %v358, %v356
      %v395 = vpack.c.b16 %v359, %v357
      %v396 = vpack.c.b16 %v362, %v360
      %v397 = vpack.c.b16 %v363, %v361
      %v398 = vpack.c.b16 %v366, %v364
      %v399 = vpack.c.b16 %v367, %v365
      %v434 = vunpack.c.l.b16 %v254
      %v435 = vunpack.c.l.b16 %v255
      %v436 = vunpack.c.l.b16 %v256
      %v437 = vunpack.c.l.b16 %v257
      %v438 = vunpack.c.l.b16 %v258
      %v439 = vunpack.c.l.b16 %v259
      %v440 = vunpack.c.l.b16 %v260
      %v441 = vunpack.c.l.b16 %v261
      %v442 = vunpack.c.l.b16 %v262
      %v443 = vunpack.c.l.b16 %v263
      %v444 = vunpack.c.l.b16 %v264
      %v445 = vunpack.c.l.b16 %v265
      %v446 = vunpack.c.l.b16 %v266
      %v447 = vunpack.c.l.b16 %v267
      %v448 = vunpack.c.l.b16 %v268
      %v449 = vunpack.c.l.b16 %v269
      %v450 = vunpack.c.l.b16 %v270
      %v451 = vunpack.c.l.b16 %v271
      %v452 = vpack.c.b16 %v435, %v434
      %v453 = vpack.c.b16 %v437, %v436
      %v454 = vpack.c.b16 %v439, %v438
      %v455 = vpack.c.b16 %v441, %v440
      %v456 = vpack.c.b16 %v443, %v442
      %v457 = vpack.c.b16 %v445, %v444
      %v458 = vpack.c.b16 %v447, %v446
      %v459 = vpack.c.b16 %v449, %v448
      %v460 = vpack.c.b16 %v451, %v450
      %vm470 = vcmask 130048
      %v472 = vsel %vm470, %v369, 0
      %v475 = vsel %vm470, %v371, 0
      %v478 = vsel %vm470, %v373, 0
      %v481 = vsel %vm470, %v375, 0
      %v484 = vsel %vm470, %v377, 0
      %v487 = vsel %vm470, %v379, 0
      %v490 = vsel %vm470, %v381, 0
      %v493 = vsel %vm470, %v383, 0
      %v496 = vsel %vm470, %v385, 0
      %v499 = vsel %vm470, %v387, 0
      %v502 = vsel %vm470, %v389, 0
      %v505 = vsel %vm470, %v391, 0
      %v508 = vsel %vm470, %v393, 0
      %v511 = vsel %vm470, %v395, 0
      %v514 = vsel %vm470, %v397, 0
      %v517 = vsel %vm470, %v399, 0
      %519 = vmatprep.subr.bf16.mxu0 0
      %520 = vmatpush1.bf16.msra.mxu0 %v452
      %521 = vmatprep.subr.bf16.mxu0 0
      %522 = vmatpush1.bf16.msra.mxu0 %v453
      %523 = vmatprep.subr.bf16.mxu0 0
      %524 = vmatpush1.bf16.msra.mxu0 %v454
      %525 = vmatprep.subr.bf16.mxu0 0
      %526 = vmatpush1.bf16.msra.mxu0 %v455
      %527 = vmatprep.subr.bf16.mxu0 0
      %528 = vmatpush1.bf16.msra.mxu0 %v456
      %529 = vmatprep.subr.bf16.mxu0 0
      %530 = vmatpush1.bf16.msra.mxu0 %v457
      %531 = vmatprep.subr.bf16.mxu0 0
      %532 = vmatpush1.bf16.msra.mxu0 %v458
      %533 = vmatprep.subr.bf16.mxu0 0
      %534 = vmatpush1.bf16.msra.mxu0 %v459
      %535 = vmatprep.subr.bf16.mxu0 0
      %536 = vmatpush1.bf16.msra.mxu0 %v460
      %537 = vmatprep.subr.bf16.mxu0 0
      %538 = vmatpush1.bf16.msra.mxu0 0
      %539 = vmatprep.subr.bf16.mxu0 0
      %540 = vmatpush1.bf16.msra.mxu0 0
      %541 = vmatprep.subr.bf16.mxu0 0
      %542 = vmatpush1.bf16.msra.mxu0 0
      %543 = vmatprep.subr.bf16.mxu0 0
      %544 = vmatpush1.bf16.msra.mxu0 0
      %545 = vmatprep.subr.bf16.mxu0 0
      %546 = vmatpush1.bf16.msra.mxu0 0
      %547 = vmatprep.subr.bf16.mxu0 0
      %548 = vmatpush1.bf16.msra.mxu0 0
      %549 = vmatprep.subr.bf16.mxu0 0
      %550 = vmatpush1.bf16.msra.mxu0 0
      %551 = vmatprep.mubr.bf16.mxu0 %v472
      %552 = vmatmul.mubr.bf16.gmra.mrb[0].mxu0 %v368
      %v553 = vpop.f32.mrb[0].mxu0
      %v554 = vadd.f32 0.0, %v553
      %v555 = vpop.f32.mrb[0].mxu0
      %v556 = vpop.f32.mrb[0].mxu0
      %v557 = vadd.f32 0.0, %v556
      %v558 = vpop.f32.mrb[0].mxu0
      %559 = vmatprep.mubr.bf16.mxu0 %v475
      %560 = vmatmul.mubr.bf16.gmra.mrb[0].mxu0 %v370
      %v561 = vpop.f32.mrb[0].mxu0
      %v562 = vadd.f32 0.0, %v561
      %v563 = vpop.f32.mrb[0].mxu0
      %v564 = vpop.f32.mrb[0].mxu0
      %v565 = vadd.f32 0.0, %v564
      %v566 = vpop.f32.mrb[0].mxu0
      %567 = vmatprep.mubr.bf16.mxu0 %v478
      %568 = vmatmul.mubr.bf16.gmra.mrb[0].mxu0 %v372
      %v569 = vpop.f32.mrb[0].mxu0
      %v570 = vadd.f32 0.0, %v569
      %v571 = vpop.f32.mrb[0].mxu0
      %v572 = vpop.f32.mrb[0].mxu0
      %v573 = vadd.f32 0.0, %v572
      %v574 = vpop.f32.mrb[0].mxu0
      %575 = vmatprep.mubr.bf16.mxu0 %v481
      %576 = vmatmul.mubr.bf16.gmra.mrb[0].mxu0 %v374
      %v577 = vpop.f32.mrb[0].mxu0
      %v578 = vadd.f32 0.0, %v577
      %v579 = vpop.f32.mrb[0].mxu0
      %v580 = vpop.f32.mrb[0].mxu0
      %v581 = vadd.f32 0.0, %v580
      %v582 = vpop.f32.mrb[0].mxu0
      %583 = vmatprep.mubr.bf16.mxu0 %v484
      %584 = vmatmul.mubr.bf16.gmra.mrb[0].mxu0 %v376
      %v585 = vpop.f32.mrb[0].mxu0
      %v586 = vadd.f32 0.0, %v585
      %v587 = vpop.f32.mrb[0].mxu0
      %v588 = vpop.f32.mrb[0].mxu0
      %v589 = vadd.f32 0.0, %v588
      %v590 = vpop.f32.mrb[0].mxu0
      %591 = vmatprep.mubr.bf16.mxu0 %v487
      %592 = vmatmul.mubr.bf16.gmra.mrb[0].mxu0 %v378
      %v593 = vpop.f32.mrb[0].mxu0
      %v594 = vadd.f32 0.0, %v593
      %v595 = vpop.f32.mrb[0].mxu0
      %v596 = vpop.f32.mrb[0].mxu0
      %v597 = vadd.f32 0.0, %v596
      %v598 = vpop.f32.mrb[0].mxu0
      %599 = vmatprep.mubr.bf16.mxu0 %v490
      %600 = vmatmul.mubr.bf16.gmra.mrb[0].mxu0 %v380
      %v601 = vpop.f32.mrb[0].mxu0
      %v602 = vadd.f32 0.0, %v601
      %v603 = vpop.f32.mrb[0].mxu0
      %v604 = vpop.f32.mrb[0].mxu0
      %v605 = vadd.f32 0.0, %v604
      %v606 = vpop.f32.mrb[0].mxu0
      %607 = vmatprep.mubr.bf16.mxu0 %v493
      %608 = vmatmul.mubr.bf16.gmra.mrb[0].mxu0 %v382
      %v609 = vpop.f32.mrb[0].mxu0
      %v610 = vadd.f32 0.0, %v609
      %v611 = vpop.f32.mrb[0].mxu0
      %v612 = vpop.f32.mrb[0].mxu0
      %v613 = vadd.f32 0.0, %v612
      %v614 = vpop.f32.mrb[0].mxu0
      %615 = vmatprep.mubr.bf16.mxu0 %v496
      %616 = vmatmul.mubr.bf16.gmra.mrb[0].mxu0 %v384
      %v617 = vpop.f32.mrb[0].mxu0
      %v618 = vadd.f32 0.0, %v617
      %v619 = vpop.f32.mrb[0].mxu0
      %v620 = vpop.f32.mrb[0].mxu0
      %v621 = vadd.f32 0.0, %v620
      %v622 = vpop.f32.mrb[0].mxu0
      %623 = vmatprep.mubr.bf16.mxu0 %v499
      %624 = vmatmul.mubr.bf16.gmra.mrb[0].mxu0 %v386
      %v625 = vpop.f32.mrb[0].mxu0
      %v626 = vadd.f32 0.0, %v625
      %v627 = vpop.f32.mrb[0].mxu0
      %v628 = vpop.f32.mrb[0].mxu0
      %v629 = vadd.f32 0.0, %v628
      %v630 = vpop.f32.mrb[0].mxu0
      %631 = vmatprep.mubr.bf16.mxu0 %v502
      %632 = vmatmul.mubr.bf16.gmra.mrb[0].mxu0 %v388
      %v633 = vpop.f32.mrb[0].mxu0
      %v634 = vadd.f32 0.0, %v633
      %v635 = vpop.f32.mrb[0].mxu0
      %v636 = vpop.f32.mrb[0].mxu0
      %v637 = vadd.f32 0.0, %v636
      %v638 = vpop.f32.mrb[0].mxu0
      %639 = vmatprep.mubr.bf16.mxu0 %v505
      %640 = vmatmul.mubr.bf16.gmra.mrb[0].mxu0 %v390
      %v641 = vpop.f32.mrb[0].mxu0
      %v642 = vadd.f32 0.0, %v641
      %v643 = vpop.f32.mrb[0].mxu0
      %v644 = vpop.f32.mrb[0].mxu0
      %v645 = vadd.f32 0.0, %v644
      %v646 = vpop.f32.mrb[0].mxu0
      %647 = vmatprep.mubr.bf16.mxu0 %v508
      %648 = vmatmul.mubr.bf16.gmra.mrb[0].mxu0 %v392
      %v649 = vpop.f32.mrb[0].mxu0
      %v650 = vadd.f32 0.0, %v649
      %v651 = vpop.f32.mrb[0].mxu0
      %v652 = vpop.f32.mrb[0].mxu0
      %v653 = vadd.f32 0.0, %v652
      %v654 = vpop.f32.mrb[0].mxu0
      %655 = vmatprep.mubr.bf16.mxu0 %v511
      %656 = vmatmul.mubr.bf16.gmra.mrb[0].mxu0 %v394
      %v657 = vpop.f32.mrb[0].mxu0
      %v658 = vadd.f32 0.0, %v657
      %v659 = vpop.f32.mrb[0].mxu0
      %v660 = vpop.f32.mrb[0].mxu0
      %v661 = vadd.f32 0.0, %v660
      %v662 = vpop.f32.mrb[0].mxu0
      %663 = vmatprep.mubr.bf16.mxu0 %v514
      %664 = vmatmul.mubr.bf16.gmra.mrb[0].mxu0 %v396
      %v665 = vpop.f32.mrb[0].mxu0
      %v666 = vadd.f32 0.0, %v665
      %v667 = vpop.f32.mrb[0].mxu0
      %v668 = vpop.f32.mrb[0].mxu0
      %v669 = vadd.f32 0.0, %v668
      %v670 = vpop.f32.mrb[0].mxu0
      %671 = vmatprep.mubr.bf16.mxu0 %v517
      %672 = vmatmul.mubr.bf16.gmra.mrb[0].mxu0 %v398
      %v673 = vpop.f32.mrb[0].mxu0
      %v674 = vadd.f32 0.0, %v673
      %v675 = vpop.f32.mrb[0].mxu0
      %v676 = vpop.f32.mrb[0].mxu0
      %v677 = vadd.f32 0.0, %v676
      %v678 = vpop.f32.mrb[0].mxu0
      %679 = vdwg.mxu0
      %680 = vst.msk [vmem:[%s213] sm:$0xff] %vm470, %v554
      %681 = vst.msk [vmem:[%s213 + $0x8] sm:$0xff] %vm470, %v557
      %682 = vst.msk [vmem:[%s213 + $0x10] sm:$0xff] %vm470, %v562
      %683 = vst.msk [vmem:[%s213 + $0x18] sm:$0xff] %vm470, %v565
      %684 = vst.msk [vmem:[%s213 + $0x20] sm:$0xff] %vm470, %v570
      %685 = vst.msk [vmem:[%s213 + $0x28] sm:$0xff] %vm470, %v573
      %686 = vst.msk [vmem:[%s213 + $0x30] sm:$0xff] %vm470, %v578
      %687 = vst.msk [vmem:[%s213 + $0x38] sm:$0xff] %vm470, %v581
      %688 = vst.msk [vmem:[%s213 + $0x40] sm:$0xff] %vm470, %v586
      %689 = vst.msk [vmem:[%s213 + $0x48] sm:$0xff] %vm470, %v589
      %690 = vst.msk [vmem:[%s213 + $0x50] sm:$0xff] %vm470, %v594
      %691 = vst.msk [vmem:[%s213 + $0x58] sm:$0xff] %vm470, %v597
      %692 = vst.msk [vmem:[%s213 + $0x60] sm:$0xff] %vm470, %v602
      %693 = vst.msk [vmem:[%s213 + $0x68] sm:$0xff] %vm470, %v605
      %694 = vst.msk [vmem:[%s213 + $0x70] sm:$0xff] %vm470, %v610
      %695 = vst.msk [vmem:[%s213 + $0x78] sm:$0xff] %vm470, %v613
      %696 = vst.msk [vmem:[%s213 + $0x80] sm:$0xff] %vm470, %v618
      %697 = vst.msk [vmem:[%s213 + $0x88] sm:$0xff] %vm470, %v621
      %698 = vst.msk [vmem:[%s213 + $0x90] sm:$0xff] %vm470, %v626
      %699 = vst.msk [vmem:[%s213 + $0x98] sm:$0xff] %vm470, %v629
      %700 = vst.msk [vmem:[%s213 + $0xa0] sm:$0xff] %vm470, %v634
      %701 = vst.msk [vmem:[%s213 + $0xa8] sm:$0xff] %vm470, %v637
      %702 = vst.msk [vmem:[%s213 + $0xb0] sm:$0xff] %vm470, %v642
      %703 = vst.msk [vmem:[%s213 + $0xb8] sm:$0xff] %vm470, %v645
      %704 = vst.msk [vmem:[%s213 + $0xc0] sm:$0xff] %vm470, %v650
      %705 = vst.msk [vmem:[%s213 + $0xc8] sm:$0xff] %vm470, %v653
      %706 = vst.msk [vmem:[%s213 + $0xd0] sm:$0xff] %vm470, %v658
      %707 = vst.msk [vmem:[%s213 + $0xd8] sm:$0xff] %vm470, %v661
      %708 = vst.msk [vmem:[%s213 + $0xe0] sm:$0xff] %vm470, %v666
      %709 = vst.msk [vmem:[%s213 + $0xe8] sm:$0xff] %vm470, %v669
      %710 = vst.msk [vmem:[%s213 + $0xf0] sm:$0xff] %vm470, %v674
      %711 = vst.msk [vmem:[%s213 + $0xf8] sm:$0xff] %vm470, %v677
      %v712 = vsel %vm470, %v554, 0.0
      %v713 = vsel %vm470, %v557, 0.0
      %v714 = vadd.f32 %v712, %v713
      %v715 = vsel %vm470, %v562, 0.0
      %v716 = vadd.f32 %v714, %v715
      %v717 = vsel %vm470, %v565, 0.0
      %v718 = vadd.f32 %v716, %v717
      %v719 = vsel %vm470, %v570, 0.0
      %v720 = vadd.f32 %v718, %v719
      %v721 = vsel %vm470, %v573, 0.0
      %v722 = vadd.f32 %v720, %v721
      %v723 = vsel %vm470, %v578, 0.0
      %v724 = vadd.f32 %v722, %v723
      %v725 = vsel %vm470, %v581, 0.0
      %v726 = vadd.f32 %v724, %v725
      %v727 = vsel %vm470, %v586, 0.0
      %v728 = vadd.f32 %v726, %v727
      %v729 = vsel %vm470, %v589, 0.0
      %v730 = vadd.f32 %v728, %v729
      %v731 = vsel %vm470, %v594, 0.0
      %v732 = vadd.f32 %v730, %v731
      %v733 = vsel %vm470, %v597, 0.0
      %v734 = vadd.f32 %v732, %v733
      %v735 = vsel %vm470, %v602, 0.0
      %v736 = vadd.f32 %v734, %v735
      %v737 = vsel %vm470, %v605, 0.0
      %v738 = vadd.f32 %v736, %v737
      %v739 = vsel %vm470, %v610, 0.0
      %v740 = vadd.f32 %v738, %v739
      %v741 = vsel %vm470, %v613, 0.0
      %v742 = vadd.f32 %v740, %v741
      %v743 = vsel %vm470, %v618, 0.0
      %v744 = vadd.f32 %v742, %v743
      %v745 = vsel %vm470, %v621, 0.0
      %v746 = vadd.f32 %v744, %v745
      %v747 = vsel %vm470, %v626, 0.0
      %v748 = vadd.f32 %v746, %v747
      %v749 = vsel %vm470, %v629, 0.0
      %v750 = vadd.f32 %v748, %v749
      %v751 = vsel %vm470, %v634, 0.0
      %v752 = vadd.f32 %v750, %v751
      %v753 = vsel %vm470, %v637, 0.0
      %v754 = vadd.f32 %v752, %v753
      %v755 = vsel %vm470, %v642, 0.0
      %v756 = vadd.f32 %v754, %v755
      %v757 = vsel %vm470, %v645, 0.0
      %v758 = vadd.f32 %v756, %v757
      %v759 = vsel %vm470, %v650, 0.0
      %v760 = vadd.f32 %v758, %v759
      %v761 = vsel %vm470, %v653, 0.0
      %v762 = vadd.f32 %v760, %v761
      %v763 = vsel %vm470, %v658, 0.0
      %v764 = vadd.f32 %v762, %v763
      %v765 = vsel %vm470, %v661, 0.0
      %v766 = vadd.f32 %v764, %v765
      %v767 = vsel %vm470, %v666, 0.0
      %v768 = vadd.f32 %v766, %v767
      %v769 = vsel %vm470, %v669, 0.0
      %v770 = vadd.f32 %v768, %v769
      %v771 = vsel %vm470, %v674, 0.0
      %v772 = vadd.f32 %v770, %v771
      %v773 = vsel %vm470, %v677, 0.0
      %v774 = vadd.f32 %v772, %v773
      %v775 = vrot.slane %v774, 4
      %v776 = vadd.f32 %v774, %v775
      %v777 = vrot.slane %v776, 2
      %v778 = vadd.f32 %v776, %v777
      %v779 = vrot.slane %v778, 1
      %v780 = vadd.f32 %v778, %v779
      %vm781 = vcmask 122880
      %782 = vst.msk [vmem:[%s217] sm:$0x1] %vm781, %v780
      %v783 = vmul.f32 %v554, %v554
      %v784 = vmul.f32 %v557, %v557
      %v785 = vmul.f32 %v562, %v562
      %v786 = vmul.f32 %v565, %v565
      %v787 = vmul.f32 %v570, %v570
      %v788 = vmul.f32 %v573, %v573
      %v789 = vmul.f32 %v578, %v578
      %v790 = vmul.f32 %v581, %v581
      %v791 = vmul.f32 %v586, %v586
      %v792 = vmul.f32 %v589, %v589
      %v793 = vmul.f32 %v594, %v594
      %v794 = vmul.f32 %v597, %v597
      %v795 = vmul.f32 %v602, %v602
      %v796 = vmul.f32 %v605, %v605
      %v797 = vmul.f32 %v610, %v610
      %v798 = vmul.f32 %v613, %v613
      %v799 = vmul.f32 %v618, %v618
      %v800 = vmul.f32 %v621, %v621
      %v801 = vmul.f32 %v626, %v626
      %v802 = vmul.f32 %v629, %v629
      %v803 = vmul.f32 %v634, %v634
      %v804 = vmul.f32 %v637, %v637
      %v805 = vmul.f32 %v642, %v642
      %v806 = vmul.f32 %v645, %v645
      %v807 = vmul.f32 %v650, %v650
      %v808 = vmul.f32 %v653, %v653
      %v809 = vmul.f32 %v658, %v658
      %v810 = vmul.f32 %v661, %v661
      %v811 = vmul.f32 %v666, %v666
      %v812 = vmul.f32 %v669, %v669
      %v813 = vmul.f32 %v674, %v674
      %v814 = vmul.f32 %v677, %v677
      %v815 = vsel %vm470, %v783, 0.0
      %v816 = vsel %vm470, %v784, 0.0
      %v817 = vadd.f32 %v815, %v816
      %v818 = vsel %vm470, %v785, 0.0
      %v819 = vadd.f32 %v817, %v818
      %v820 = vsel %vm470, %v786, 0.0
      %v821 = vadd.f32 %v819, %v820
      %v822 = vsel %vm470, %v787, 0.0
      %v823 = vadd.f32 %v821, %v822
      %v824 = vsel %vm470, %v788, 0.0
      %v825 = vadd.f32 %v823, %v824
      %v826 = vsel %vm470, %v789, 0.0
      %v827 = vadd.f32 %v825, %v826
      %v828 = vsel %vm470, %v790, 0.0
      %v829 = vadd.f32 %v827, %v828
      %v830 = vsel %vm470, %v791, 0.0
      %v831 = vadd.f32 %v829, %v830
      %v832 = vsel %vm470, %v792, 0.0
      %v833 = vadd.f32 %v831, %v832
      %v834 = vsel %vm470, %v793, 0.0
      %v835 = vadd.f32 %v833, %v834
      %v836 = vsel %vm470, %v794, 0.0
      %v837 = vadd.f32 %v835, %v836
      %v838 = vsel %vm470, %v795, 0.0
      %v839 = vadd.f32 %v837, %v838
      %v840 = vsel %vm470, %v796, 0.0
      %v841 = vadd.f32 %v839, %v840
      %v842 = vsel %vm470, %v797, 0.0
      %v843 = vadd.f32 %v841, %v842
      %v844 = vsel %vm470, %v798, 0.0
      %v845 = vadd.f32 %v843, %v844
      %v846 = vsel %vm470, %v799, 0.0
      %v847 = vadd.f32 %v845, %v846
      %v848 = vsel %vm470, %v800, 0.0
      %v849 = vadd.f32 %v847, %v848
      %v850 = vsel %vm470, %v801, 0.0
      %v851 = vadd.f32 %v849, %v850
      %v852 = vsel %vm470, %v802, 0.0
      %v853 = vadd.f32 %v851, %v852
      %v854 = vsel %vm470, %v803, 0.0
      %v855 = vadd.f32 %v853, %v854
      %v856 = vsel %vm470, %v804, 0.0
      %v857 = vadd.f32 %v855, %v856
      %v858 = vsel %vm470, %v805, 0.0
      %v859 = vadd.f32 %v857, %v858
      %v860 = vsel %vm470, %v806, 0.0
      %v861 = vadd.f32 %v859, %v860
      %v862 = vsel %vm470, %v807, 0.0
      %v863 = vadd.f32 %v861, %v862
      %v864 = vsel %vm470, %v808, 0.0
      %v865 = vadd.f32 %v863, %v864
      %v866 = vsel %vm470, %v809, 0.0
      %v867 = vadd.f32 %v865, %v866
      %v868 = vsel %vm470, %v810, 0.0
      %v869 = vadd.f32 %v867, %v868
      %v870 = vsel %vm470, %v811, 0.0
      %v871 = vadd.f32 %v869, %v870
      %v872 = vsel %vm470, %v812, 0.0
      %v873 = vadd.f32 %v871, %v872
      %v874 = vsel %vm470, %v813, 0.0
      %v875 = vadd.f32 %v873, %v874
      %v876 = vsel %vm470, %v814, 0.0
      %v877 = vadd.f32 %v875, %v876
      %v878 = vrot.slane %v877, 4
      %v879 = vadd.f32 %v877, %v878
      %v880 = vrot.slane %v879, 2
      %v881 = vadd.f32 %v879, %v880
      %v882 = vrot.slane %v881, 1
      %v883 = vadd.f32 %v881, %v882
      %884 = vst.msk [vmem:[%s220] sm:$0x1] %vm781, %v883
      %s885 = smul.u32 32, %s16
      %p886 = scmp.lt.s32.totalorder %s885, 63
      %s887 = scalar_select %p886, %s885, 63
      %s888 = smul.addr %s887, 8
      %s889 = scalar_lea.vmem %s2, %s888
      %p890 = scmp.lt.s32.totalorder %s16, 1
      %s891 = scalar_select %p890, %s16, 1
      %s892 = scalar_lea.vmem %s3, %s891
      %p893 = scmp.lt.s32.totalorder %s16, 1
      %s894 = scalar_select %p893, %s16, 1
      %s895 = scalar_lea.vmem %s4, %s894
      // Predicated region
      $region29: #{_lambda_.40} parent=27 // pred_check
        %p896 = pneg %p81
      $region30: #{_lambda_.40} parent=27 // pred_check_branch
        %898 = sbr.rel (%p896) target = $region32
      $region31: #{_lambda_.40} parent=27 // pred_region
        %s899 = smul.u32 32, %s16
      $region32: #{_lambda_.40} parent=27 // pred_fallthru
        _
      // Predicated region
      $region33: #{_lambda_.40} parent=27 // pred_check
        %p900 = pneg %p107
      $region34: #{_lambda_.40} parent=27 // pred_check_branch
        %902 = sbr.rel (%p900) target = $region36
      $region35: #{_lambda_.40} parent=27 // pred_region
        _
      $region36: #{_lambda_.40} parent=27 // pred_fallthru
        _
      // Predicated region
      $region37: #{_lambda_.40} parent=27 // pred_check
        %p903 = pneg %p133
      $region38: #{_lambda_.40} parent=27 // pred_check_branch
        %905 = sbr.rel (%p903) target = $region40
      $region39: #{_lambda_.40} parent=27 // pred_region
        _
      $region40: #{_lambda_.40} parent=27 // pred_fallthru
        _
    $region28: #{_lambda_.40} parent=5 // pred_fallthru
      _
    %p906 = scmp.le.s32.totalorder 2, %s11
    // Predicated region
    $region41: #{_lambda_.40} parent=5 // pred_check
      %p907 = pneg %p906
    $region42: #{_lambda_.40} parent=5 // pred_check_branch
      %909 = sbr.rel (%p907) target = $region44
    $region43: #{_lambda_.40} parent=5 // pred_region
      %s910 = ssub.s32 %s11, 2
      // Predicated region
      $region45: #{_lambda_.40} parent=43 // pred_check
        %p911 = pneg %p87
      $region46: #{_lambda_.40} parent=43 // pred_check_branch
        %913 = sbr.rel (%p911) target = $region48
      $region47: #{_lambda_.40} parent=43 // pred_region
        %s914 = smul.u32 32, %s17
        %p915 = scmp.lt.s32.totalorder %s914, 63
        %s916 = scalar_select %p915, %s914, 63
        %s917 = smul.addr %s916, 8
        %s918 = scalar_lea.vmem %s2, %s917
      $region48: #{_lambda_.40} parent=43 // pred_fallthru
        _
      // Predicated region
      $region49: #{_lambda_.40} parent=43 // pred_check
        %p919 = pneg %p113
      $region50: #{_lambda_.40} parent=43 // pred_check_branch
        %921 = sbr.rel (%p919) target = $region52
      $region51: #{_lambda_.40} parent=43 // pred_region
        %p922 = scmp.lt.s32.totalorder %s17, 1
        %s923 = scalar_select %p922, %s17, 1
        %s924 = scalar_lea.vmem %s3, %s923
      $region52: #{_lambda_.40} parent=43 // pred_fallthru
        _
      // Predicated region
      $region53: #{_lambda_.40} parent=43 // pred_check
        %p925 = pneg %p139
      $region54: #{_lambda_.40} parent=43 // pred_check_branch
        %927 = sbr.rel (%p925) target = $region56
      $region55: #{_lambda_.40} parent=43 // pred_region
        %p928 = scmp.lt.s32.totalorder %s17, 1
        %s929 = scalar_select %p928, %s17, 1
        %s930 = scalar_lea.vmem %s4, %s929
      $region56: #{_lambda_.40} parent=43 // pred_fallthru
        _
    $region44: #{_lambda_.40} parent=5 // pred_fallthru
      _
  $region6: #{_lambda_.40} parent=0 // loop_footer
    %s15 = sadd.s32 1, %s11
  $region7: #{_lambda_.40} parent=0 // loop_footer_branch
    %10 = sbr.rel target = $region3
  $region8: #{_lambda_.40} parent=0 // loop_exit
    _

// kernel: _lambda_.48
$region0: #{_lambda_.48}
  #allocation0 [shape = 'u32[]', space=smem, size = 0x4, offset = 0x4, fixed_abs, tag = 'smem constant byte address 0x4 - core index']
  #allocation1 [shape = 'u32[144,128]{1,0:T(1,128)}', space=vmem, size = 0x12000, scoped, tag = 'internal scratch']
  %s0 = inlined_call_operand.vmem [shape: bf16[128,144], index: 0, kind: input, shape index: {}]
  %s1 = inlined_call_operand.vmem [shape: bf16[144,32], index: 1, kind: input, shape index: {}]
  %s2 = inlined_call_operand.vmem [shape: f32[128,32], index: 2, kind: output, shape index: {0}]
  %s3 = inlined_call_operand.vmem [shape: f32[1,1,32], index: 3, kind: output, shape index: {1}]
  %s4 = inlined_call_operand.vmem [shape: f32[1,1,32], index: 4, kind: output, shape index: {2}]
  %5 = xla_tuple %s2, %s3, %s4
  %s6 = sld [smem:[#allocation0]]
  $region34: #{_lambda_.48} parent=0
    _
  %s8 = ssub.s32 1, %s6
  %s9 = scalar_select 0, %s8, %s6
  // Predicated region
  $region2: #{_lambda_.48} parent=0 // pred_check
    _
  $region3: #{_lambda_.48} parent=0 // pred_check_branch
    %11 = sbr.rel (0) target = $region5
  $region4: #{_lambda_.48} parent=0 // pred_region
    _
  $region5: #{_lambda_.48} parent=0 // pred_fallthru
    _
  // Predicated region
  $region6: #{_lambda_.48} parent=0 // pred_check
    _
  $region7: #{_lambda_.48} parent=0 // pred_check_branch
    %13 = sbr.rel (0) target = $region9
  $region8: #{_lambda_.48} parent=0 // pred_region
    _
  $region9: #{_lambda_.48} parent=0 // pred_fallthru
    _
  %v15 = vld [vmem:[%s0] sm:$0xff]
  %v16 = vld [vmem:[%s0 + $0x8] sm:$0xff]
  %v17 = vld [vmem:[%s0 + $0x10] sm:$0xff]
  %v18 = vld [vmem:[%s0 + $0x18] sm:$0xff]
  %v19 = vld [vmem:[%s0 + $0x20] sm:$0xff]
  %v20 = vld [vmem:[%s0 + $0x28] sm:$0xff]
  %v21 = vld [vmem:[%s0 + $0x30] sm:$0xff]
  %v22 = vld [vmem:[%s0 + $0x38] sm:$0xff]
  %v23 = vld [vmem:[%s0 + $0x40] sm:$0xff]
  %v24 = vld [vmem:[%s0 + $0x48] sm:$0xff]
  %v25 = vld [vmem:[%s0 + $0x50] sm:$0xff]
  %v26 = vld [vmem:[%s0 + $0x58] sm:$0xff]
  %v27 = vld [vmem:[%s0 + $0x60] sm:$0xff]
  %v28 = vld [vmem:[%s0 + $0x68] sm:$0xff]
  %v29 = vld [vmem:[%s0 + $0x70] sm:$0xff]
  %v30 = vld [vmem:[%s0 + $0x78] sm:$0xff]
  %v31 = vld [vmem:[%s1] sm:$0xf]
  %v32 = vld [vmem:[%s1 + $0x4] sm:$0xf]
  %v33 = vld [vmem:[%s1 + $0x8] sm:$0xf]
  %v34 = vld [vmem:[%s1 + $0xc] sm:$0xf]
  %v35 = vld [vmem:[%s1 + $0x10] sm:$0xf]
  %v36 = vld [vmem:[%s1 + $0x14] sm:$0xf]
  %v37 = vld [vmem:[%s1 + $0x18] sm:$0xf]
  %v38 = vld [vmem:[%s1 + $0x1c] sm:$0xf]
  %v39 = vld [vmem:[%s1 + $0x20] sm:$0xf]
  %v40 = vld [vmem:[%s1 + $0x24] sm:$0xf]
  %v41 = vld [vmem:[%s1 + $0x28] sm:$0xf]
  %v42 = vld [vmem:[%s1 + $0x2c] sm:$0xf]
  %v43 = vld [vmem:[%s1 + $0x30] sm:$0xf]
  %v44 = vld [vmem:[%s1 + $0x34] sm:$0xf]
  %v45 = vld [vmem:[%s1 + $0x38] sm:$0xf]
  %v46 = vld [vmem:[%s1 + $0x3c] sm:$0xf]
  %v47 = vld [vmem:[%s1 + $0x40] sm:$0xf]
  %v48 = vld [vmem:[%s1 + $0x44] sm:$0xf]
  %v65 = vunpack.c.l.b16 %v15
  %v66 = vunpack.c.h.b16 %v15
  %v67 = vunpack.c.l.b16 %v16
  %v68 = vunpack.c.h.b16 %v16
  %v69 = vunpack.c.l.b16 %v17
  %v70 = vunpack.c.h.b16 %v17
  %v71 = vunpack.c.l.b16 %v18
  %v72 = vunpack.c.h.b16 %v18
  %v73 = vunpack.c.l.b16 %v19
  %v74 = vunpack.c.h.b16 %v19
  %v75 = vunpack.c.l.b16 %v20
  %v76 = vunpack.c.h.b16 %v20
  %v77 = vunpack.c.l.b16 %v21
  %v78 = vunpack.c.h.b16 %v21
  %v79 = vunpack.c.l.b16 %v22
  %v80 = vunpack.c.h.b16 %v22
  %v81 = vunpack.c.l.b16 %v23
  %v82 = vunpack.c.h.b16 %v23
  %v83 = vunpack.c.l.b16 %v24
  %v84 = vunpack.c.h.b16 %v24
  %v85 = vunpack.c.l.b16 %v25
  %v86 = vunpack.c.h.b16 %v25
  %v87 = vunpack.c.l.b16 %v26
  %v88 = vunpack.c.h.b16 %v26
  %v89 = vunpack.c.l.b16 %v27
  %v90 = vunpack.c.h.b16 %v27
  %v91 = vunpack.c.l.b16 %v28
  %v92 = vunpack.c.h.b16 %v28
  %v93 = vunpack.c.l.b16 %v29
  %v94 = vunpack.c.h.b16 %v29
  %v95 = vunpack.c.l.b16 %v30
  %v96 = vunpack.c.h.b16 %v30
  %v97 = vpack.c.b16 %v67, %v65
  %v98 = vpack.c.b16 %v68, %v66
  %v99 = vpack.c.b16 %v71, %v69
  %v100 = vpack.c.b16 %v72, %v70
  %v101 = vpack.c.b16 %v75, %v73
  %v102 = vpack.c.b16 %v76, %v74
  %v103 = vpack.c.b16 %v79, %v77
  %v104 = vpack.c.b16 %v80, %v78
  %v105 = vpack.c.b16 %v83, %v81
  %v106 = vpack.c.b16 %v84, %v82
  %v107 = vpack.c.b16 %v87, %v85
  %v108 = vpack.c.b16 %v88, %v86
  %v109 = vpack.c.b16 %v91, %v89
  %v110 = vpack.c.b16 %v92, %v90
  %v111 = vpack.c.b16 %v95, %v93
  %v112 = vpack.c.b16 %v96, %v94
  %v139 = vunpack.c.l.b16 %v31
  %v140 = vunpack.c.l.b16 %v32
  %v141 = vunpack.c.l.b16 %v33
  %v142 = vunpack.c.l.b16 %v34
  %v143 = vunpack.c.l.b16 %v35
  %v144 = vunpack.c.l.b16 %v36
  %v145 = vunpack.c.l.b16 %v37
  %v146 = vunpack.c.l.b16 %v38
  %v147 = vunpack.c.l.b16 %v39
  %v148 = vunpack.c.l.b16 %v40
  %v149 = vunpack.c.l.b16 %v41
  %v150 = vunpack.c.l.b16 %v42
  %v151 = vunpack.c.l.b16 %v43
  %v152 = vunpack.c.l.b16 %v44
  %v153 = vunpack.c.l.b16 %v45
  %v154 = vunpack.c.l.b16 %v46
  %v155 = vunpack.c.l.b16 %v47
  %v156 = vunpack.c.l.b16 %v48
  %v157 = vpack.c.b16 %v140, %v139
  %v158 = vpack.c.b16 %v142, %v141
  %v159 = vpack.c.b16 %v144, %v143
  %v160 = vpack.c.b16 %v146, %v145
  %v161 = vpack.c.b16 %v148, %v147
  %v162 = vpack.c.b16 %v150, %v149
  %v163 = vpack.c.b16 %v152, %v151
  %v164 = vpack.c.b16 %v154, %v153
  %v165 = vpack.c.b16 %v156, %v155
  %vm175 = vcmask 130048
  %v177 = vsel %vm175, %v98, 0
  %v180 = vsel %vm175, %v100, 0
  %v183 = vsel %vm175, %v102, 0
  %v186 = vsel %vm175, %v104, 0
  %v189 = vsel %vm175, %v106, 0
  %v192 = vsel %vm175, %v108, 0
  %v195 = vsel %vm175, %v110, 0
  %v198 = vsel %vm175, %v112, 0
  %200 = vmatprep.subr.bf16.mxu0 0
  %201 = vmatpush1.bf16.msra.mxu0 %v157
  %202 = vmatprep.subr.bf16.mxu0 0
  %203 = vmatpush1.bf16.msra.mxu0 %v158
  %204 = vmatprep.subr.bf16.mxu0 0
  %205 = vmatpush1.bf16.msra.mxu0 %v159
  %206 = vmatprep.subr.bf16.mxu0 0
  %207 = vmatpush1.bf16.msra.mxu0 %v160
  %208 = vmatprep.subr.bf16.mxu0 0
  %209 = vmatpush1.bf16.msra.mxu0 %v161
  %210 = vmatprep.subr.bf16.mxu0 0
  %211 = vmatpush1.bf16.msra.mxu0 %v162
  %212 = vmatprep.subr.bf16.mxu0 0
  %213 = vmatpush1.bf16.msra.mxu0 %v163
  %214 = vmatprep.subr.bf16.mxu0 0
  %215 = vmatpush1.bf16.msra.mxu0 %v164
  %216 = vmatprep.subr.bf16.mxu0 0
  %217 = vmatpush1.bf16.msra.mxu0 %v165
  %218 = vmatprep.subr.bf16.mxu0 0
  %219 = vmatpush1.bf16.msra.mxu0 0
  %220 = vmatprep.subr.bf16.mxu0 0
  %221 = vmatpush1.bf16.msra.mxu0 0
  %222 = vmatprep.subr.bf16.mxu0 0
  %223 = vmatpush1.bf16.msra.mxu0 0
  %224 = vmatprep.subr.bf16.mxu0 0
  %225 = vmatpush1.bf16.msra.mxu0 0
  %226 = vmatprep.subr.bf16.mxu0 0
  %227 = vmatpush1.bf16.msra.mxu0 0
  %228 = vmatprep.subr.bf16.mxu0 0
  %229 = vmatpush1.bf16.msra.mxu0 0
  %230 = vmatprep.subr.bf16.mxu0 0
  %231 = vmatpush1.bf16.msra.mxu0 0
  %232 = vmatprep.mubr.bf16.mxu0 %v177
  %233 = vmatmul.mubr.bf16.gmra.mrb[0].mxu0 %v97
  %v234 = vpop.f32.mrb[0].mxu0
  %v235 = vadd.f32 0.0, %v234
  %v236 = vpop.f32.mrb[0].mxu0
  %v237 = vpop.f32.mrb[0].mxu0
  %v238 = vadd.f32 0.0, %v237
  %v239 = vpop.f32.mrb[0].mxu0
  %240 = vmatprep.mubr.bf16.mxu0 %v180
  %241 = vmatmul.mubr.bf16.gmra.mrb[0].mxu0 %v99
  %v242 = vpop.f32.mrb[0].mxu0
  %v243 = vadd.f32 0.0, %v242
  %v244 = vpop.f32.mrb[0].mxu0
  %v245 = vpop.f32.mrb[0].mxu0
  %v246 = vadd.f32 0.0, %v245
  %v247 = vpop.f32.mrb[0].mxu0
  %248 = vmatprep.mubr.bf16.mxu0 %v183
  %249 = vmatmul.mubr.bf16.gmra.mrb[0].mxu0 %v101
  %v250 = vpop.f32.mrb[0].mxu0
  %v251 = vadd.f32 0.0, %v250
  %v252 = vpop.f32.mrb[0].mxu0
  %v253 = vpop.f32.mrb[0].mxu0
  %v254 = vadd.f32 0.0, %v253
  %v255 = vpop.f32.mrb[0].mxu0
  %256 = vmatprep.mubr.bf16.mxu0 %v186
  %257 = vmatmul.mubr.bf16.gmra.mrb[0].mxu0 %v103
  %v258 = vpop.f32.mrb[0].mxu0
  %v259 = vadd.f32 0.0, %v258
  %v260 = vpop.f32.mrb[0].mxu0
  %v261 = vpop.f32.mrb[0].mxu0
  %v262 = vadd.f32 0.0, %v261
  %v263 = vpop.f32.mrb[0].mxu0
  %264 = vmatprep.mubr.bf16.mxu0 %v189
  %265 = vmatmul.mubr.bf16.gmra.mrb[0].mxu0 %v105
  %v266 = vpop.f32.mrb[0].mxu0
  %v267 = vadd.f32 0.0, %v266
  %v268 = vpop.f32.mrb[0].mxu0
  %v269 = vpop.f32.mrb[0].mxu0
  %v270 = vadd.f32 0.0, %v269
  %v271 = vpop.f32.mrb[0].mxu0
  %272 = vmatprep.mubr.bf16.mxu0 %v192
  %273 = vmatmul.mubr.bf16.gmra.mrb[0].mxu0 %v107
  %v274 = vpop.f32.mrb[0].mxu0
  %v275 = vadd.f32 0.0, %v274
  %v276 = vpop.f32.mrb[0].mxu0
  %v277 = vpop.f32.mrb[0].mxu0
  %v278 = vadd.f32 0.0, %v277
  %v279 = vpop.f32.mrb[0].mxu0
  %280 = vmatprep.mubr.bf16.mxu0 %v195
  %281 = vmatmul.mubr.bf16.gmra.mrb[0].mxu0 %v109
  %v282 = vpop.f32.mrb[0].mxu0
  %v283 = vadd.f32 0.0, %v282
  %v284 = vpop.f32.mrb[0].mxu0
  %v285 = vpop.f32.mrb[0].mxu0
  %v286 = vadd.f32 0.0, %v285
  %v287 = vpop.f32.mrb[0].mxu0
  %288 = vmatprep.mubr.bf16.mxu0 %v198
  %289 = vmatmul.mubr.bf16.gmra.mrb[0].mxu0 %v111
  %v290 = vpop.f32.mrb[0].mxu0
  %v291 = vadd.f32 0.0, %v290
  %v292 = vpop.f32.mrb[0].mxu0
  %v293 = vpop.f32.mrb[0].mxu0
  %v294 = vadd.f32 0.0, %v293
  %v295 = vpop.f32.mrb[0].mxu0
  %296 = vdwg.mxu0
  %vm297 = vcmask 261120
  %298 = vst.msk [vmem:[%s2] sm:$0xff] %vm297, %v235
  %299 = vst.msk [vmem:[%s2 + $0x8] sm:$0xff] %vm297, %v238
  %300 = vst.msk [vmem:[%s2 + $0x10] sm:$0xff] %vm297, %v243
  %301 = vst.msk [vmem:[%s2 + $0x18] sm:$0xff] %vm297, %v246
  %302 = vst.msk [vmem:[%s2 + $0x20] sm:$0xff] %vm297, %v251
  %303 = vst.msk [vmem:[%s2 + $0x28] sm:$0xff] %vm297, %v254
  %304 = vst.msk [vmem:[%s2 + $0x30] sm:$0xff] %vm297, %v259
  %305 = vst.msk [vmem:[%s2 + $0x38] sm:$0xff] %vm297, %v262
  %306 = vst.msk [vmem:[%s2 + $0x40] sm:$0xff] %vm297, %v267
  %307 = vst.msk [vmem:[%s2 + $0x48] sm:$0xff] %vm297, %v270
  %308 = vst.msk [vmem:[%s2 + $0x50] sm:$0xff] %vm297, %v275
  %309 = vst.msk [vmem:[%s2 + $0x58] sm:$0xff] %vm297, %v278
  %310 = vst.msk [vmem:[%s2 + $0x60] sm:$0xff] %vm297, %v283
  %311 = vst.msk [vmem:[%s2 + $0x68] sm:$0xff] %vm297, %v286
  %312 = vst.msk [vmem:[%s2 + $0x70] sm:$0xff] %vm297, %v291
  %313 = vst.msk [vmem:[%s2 + $0x78] sm:$0xff] %vm297, %v294
  %v314 = vsel %vm297, %v235, 0.0
  %v315 = vsel %vm297, %v238, 0.0
  %v316 = vadd.f32 %v314, %v315
  %v317 = vsel %vm297, %v243, 0.0
  %v318 = vadd.f32 %v316, %v317
  %v319 = vsel %vm297, %v246, 0.0
  %v320 = vadd.f32 %v318, %v319
  %v321 = vsel %vm297, %v251, 0.0
  %v322 = vadd.f32 %v320, %v321
  %v323 = vsel %vm297, %v254, 0.0
  %v324 = vadd.f32 %v322, %v323
  %v325 = vsel %vm297, %v259, 0.0
  %v326 = vadd.f32 %v324, %v325
  %v327 = vsel %vm297, %v262, 0.0
  %v328 = vadd.f32 %v326, %v327
  %v329 = vsel %vm297, %v267, 0.0
  %v330 = vadd.f32 %v328, %v329
  %v331 = vsel %vm297, %v270, 0.0
  %v332 = vadd.f32 %v330, %v331
  %v333 = vsel %vm297, %v275, 0.0
  %v334 = vadd.f32 %v332, %v333
  %v335 = vsel %vm297, %v278, 0.0
  %v336 = vadd.f32 %v334, %v335
  %v337 = vsel %vm297, %v283, 0.0
  %v338 = vadd.f32 %v336, %v337
  %v339 = vsel %vm297, %v286, 0.0
  %v340 = vadd.f32 %v338, %v339
  %v341 = vsel %vm297, %v291, 0.0
  %v342 = vadd.f32 %v340, %v341
  %v343 = vsel %vm297, %v294, 0.0
  %v344 = vadd.f32 %v342, %v343
  %v345 = vrot.slane %v344, 4
  %v346 = vadd.f32 %v344, %v345
  %v347 = vrot.slane %v346, 2
  %v348 = vadd.f32 %v346, %v347
  %v349 = vrot.slane %v348, 1
  %v350 = vadd.f32 %v348, %v349
  %vm351 = vcmask 253952
  %352 = vst.msk [vmem:[%s3] sm:$0x1] %vm351, %v350
  %v353 = vmul.f32 %v235, %v235
  %v354 = vmul.f32 %v238, %v238
  %v355 = vmul.f32 %v243, %v243
  %v356 = vmul.f32 %v246, %v246
  %v357 = vmul.f32 %v251, %v251
  %v358 = vmul.f32 %v254, %v254
  %v359 = vmul.f32 %v259, %v259
  %v360 = vmul.f32 %v262, %v262
  %v361 = vmul.f32 %v267, %v267
  %v362 = vmul.f32 %v270, %v270
  %v363 = vmul.f32 %v275, %v275
  %v364 = vmul.f32 %v278, %v278
  %v365 = vmul.f32 %v283, %v283
  %v366 = vmul.f32 %v286, %v286
  %v367 = vmul.f32 %v291, %v291
  %v368 = vmul.f32 %v294, %v294
  %v369 = vsel %vm297, %v353, 0.0
  %v370 = vsel %vm297, %v354, 0.0
  %v371 = vadd.f32 %v369, %v370
  %v372 = vsel %vm297, %v355, 0.0
  %v373 = vadd.f32 %v371, %v372
  %v374 = vsel %vm297, %v356, 0.0
  %v375 = vadd.f32 %v373, %v374
  %v376 = vsel %vm297, %v357, 0.0
  %v377 = vadd.f32 %v375, %v376
  %v378 = vsel %vm297, %v358, 0.0
  %v379 = vadd.f32 %v377, %v378
  %v380 = vsel %vm297, %v359, 0.0
  %v381 = vadd.f32 %v379, %v380
  %v382 = vsel %vm297, %v360, 0.0
  %v383 = vadd.f32 %v381, %v382
  %v384 = vsel %vm297, %v361, 0.0
  %v385 = vadd.f32 %v383, %v384
  %v386 = vsel %vm297, %v362, 0.0
  %v387 = vadd.f32 %v385, %v386
  %v388 = vsel %vm297, %v363, 0.0
  %v389 = vadd.f32 %v387, %v388
  %v390 = vsel %vm297, %v364, 0.0
  %v391 = vadd.f32 %v389, %v390
  %v392 = vsel %vm297, %v365, 0.0
  %v393 = vadd.f32 %v391, %v392
  %v394 = vsel %vm297, %v366, 0.0
  %v395 = vadd.f32 %v393, %v394
  %v396 = vsel %vm297, %v367, 0.0
  %v397 = vadd.f32 %v395, %v396
  %v398 = vsel %vm297, %v368, 0.0
  %v399 = vadd.f32 %v397, %v398
  %v400 = vrot.slane %v399, 4
  %v401 = vadd.f32 %v399, %v400
  %v402 = vrot.slane %v401, 2
  %v403 = vadd.f32 %v401, %v402
  %v404 = vrot.slane %v403, 1
  %v405 = vadd.f32 %v403, %v404
  %406 = vst.msk [vmem:[%s4] sm:$0x1] %vm351, %v405
  // Predicated region
  $region10: #{_lambda_.48} parent=0 // pred_check
    _
  $region11: #{_lambda_.48} parent=0 // pred_check_branch
    %408 = sbr.rel (0) target = $region13
  $region12: #{_lambda_.48} parent=0 // pred_region
    _
  $region13: #{_lambda_.48} parent=0 // pred_fallthru
    _
  // Predicated region
  $region14: #{_lambda_.48} parent=0 // pred_check
    _
  $region15: #{_lambda_.48} parent=0 // pred_check_branch
    %410 = sbr.rel (0) target = $region17
  $region16: #{_lambda_.48} parent=0 // pred_region
    _
  $region17: #{_lambda_.48} parent=0 // pred_fallthru
    _
  // Predicated region
  $region18: #{_lambda_.48} parent=0 // pred_check
    _
  $region19: #{_lambda_.48} parent=0 // pred_check_branch
    %412 = sbr.rel (0) target = $region21
  $region20: #{_lambda_.48} parent=0 // pred_region
    _
  $region21: #{_lambda_.48} parent=0 // pred_fallthru
    _
  // Predicated region
  $region22: #{_lambda_.48} parent=0 // pred_check
    _
  $region23: #{_lambda_.48} parent=0 // pred_check_branch
    %414 = sbr.rel (0) target = $region25
  $region24: #{_lambda_.48} parent=0 // pred_region
    _
  $region25: #{_lambda_.48} parent=0 // pred_fallthru
    _
  // Predicated region
  $region26: #{_lambda_.48} parent=0 // pred_check
    _
  $region27: #{_lambda_.48} parent=0 // pred_check_branch
    %416 = sbr.rel (0) target = $region29
  $region28: #{_lambda_.48} parent=0 // pred_region
    _
  $region29: #{_lambda_.48} parent=0 // pred_fallthru
    _
  // Predicated region
  $region30: #{_lambda_.48} parent=0 // pred_check
    _
  $region31: #{_lambda_.48} parent=0 // pred_check_branch
    %418 = sbr.rel (0) target = $region33
  $region32: #{_lambda_.48} parent=0 // pred_region
    _
  $region33: #{_lambda_.48} parent=0 // pred_fallthru
    _

// kernel: _lambda_.49
$region0: #{_lambda_.49}
  #allocation0 [shape = 'u32[]', space=smem, size = 0x4, offset = 0x4, fixed_abs, tag = 'smem constant byte address 0x4 - core index']
  #allocation1 [shape = 'u32[144,128]{1,0:T(1,128)}', space=vmem, size = 0x12000, scoped, tag = 'internal scratch']
  %s0 = inlined_call_operand.vmem [shape: f32[128,32], index: 0, kind: input, shape index: {}, may-alias: {0,3}]
  %s1 = inlined_call_operand.vmem [shape: f32[1,32], index: 1, kind: input, shape index: {}]
  %s2 = inlined_call_operand.vmem [shape: f32[1,32], index: 2, kind: input, shape index: {}]
  %s3 = inlined_call_operand.vmem [shape: f32[128,32], index: 3, kind: output, shape index: {}, may-alias: {0,3}]
  %s4 = sld [smem:[#allocation0]]
  $region22: #{_lambda_.49} parent=0
    _
  %s6 = ssub.s32 1, %s4
  %s7 = scalar_select 0, %s6, %s4
  // Predicated region
  $region2: #{_lambda_.49} parent=0 // pred_check
    _
  $region3: #{_lambda_.49} parent=0 // pred_check_branch
    %9 = sbr.rel (0) target = $region5
  $region4: #{_lambda_.49} parent=0 // pred_region
    _
  $region5: #{_lambda_.49} parent=0 // pred_fallthru
    _
  // Predicated region
  $region6: #{_lambda_.49} parent=0 // pred_check
    _
  $region7: #{_lambda_.49} parent=0 // pred_check_branch
    %11 = sbr.rel (0) target = $region9
  $region8: #{_lambda_.49} parent=0 // pred_region
    _
  $region9: #{_lambda_.49} parent=0 // pred_fallthru
    _
  // Predicated region
  $region10: #{_lambda_.49} parent=0 // pred_check
    _
  $region11: #{_lambda_.49} parent=0 // pred_check_branch
    %13 = sbr.rel (0) target = $region13
  $region12: #{_lambda_.49} parent=0 // pred_region
    _
  $region13: #{_lambda_.49} parent=0 // pred_fallthru
    _
  %v14 = vld [vmem:[%s0] sm:$0xff]
  %v15 = vld [vmem:[%s0 + $0x8] sm:$0xff]
  %v16 = vld [vmem:[%s0 + $0x10] sm:$0xff]
  %v17 = vld [vmem:[%s0 + $0x18] sm:$0xff]
  %v18 = vld [vmem:[%s0 + $0x20] sm:$0xff]
  %v19 = vld [vmem:[%s0 + $0x28] sm:$0xff]
  %v20 = vld [vmem:[%s0 + $0x30] sm:$0xff]
  %v21 = vld [vmem:[%s0 + $0x38] sm:$0xff]
  %v22 = vld [vmem:[%s0 + $0x40] sm:$0xff]
  %v23 = vld [vmem:[%s0 + $0x48] sm:$0xff]
  %v24 = vld [vmem:[%s0 + $0x50] sm:$0xff]
  %v25 = vld [vmem:[%s0 + $0x58] sm:$0xff]
  %v26 = vld [vmem:[%s0 + $0x60] sm:$0xff]
  %v27 = vld [vmem:[%s0 + $0x68] sm:$0xff]
  %v28 = vld [vmem:[%s0 + $0x70] sm:$0xff]
  %v29 = vld [vmem:[%s0 + $0x78] sm:$0xff]
  %v30 = vld [vmem:[%s1] sm:$0x1]
  %v32 = vlaneseq
  %v33 = vshrl.u32 %v32, 7
  %v34 = vsub.s32 0, %v33
  %v35 = vrot.slane %v30, %v34
  %v37 = vmul.f32 %v14, %v35
  %v38 = vmul.f32 %v15, %v35
  %v39 = vmul.f32 %v16, %v35
  %v40 = vmul.f32 %v17, %v35
  %v41 = vmul.f32 %v18, %v35
  %v42 = vmul.f32 %v19, %v35
  %v43 = vmul.f32 %v20, %v35
  %v44 = vmul.f32 %v21, %v35
  %v45 = vmul.f32 %v22, %v35
  %v46 = vmul.f32 %v23, %v35
  %v47 = vmul.f32 %v24, %v35
  %v48 = vmul.f32 %v25, %v35
  %v49 = vmul.f32 %v26, %v35
  %v50 = vmul.f32 %v27, %v35
  %v51 = vmul.f32 %v28, %v35
  %v52 = vmul.f32 %v29, %v35
  %v53 = vld [vmem:[%s2] sm:$0x1]
  %v55 = vlaneseq
  %v56 = vshrl.u32 %v55, 7
  %v57 = vsub.s32 0, %v56
  %v58 = vrot.slane %v53, %v57
  %v60 = vadd.f32 %v37, %v58
  %v61 = vadd.f32 %v38, %v58
  %v62 = vadd.f32 %v39, %v58
  %v63 = vadd.f32 %v40, %v58
  %v64 = vadd.f32 %v41, %v58
  %v65 = vadd.f32 %v42, %v58
  %v66 = vadd.f32 %v43, %v58
  %v67 = vadd.f32 %v44, %v58
  %v68 = vadd.f32 %v45, %v58
  %v69 = vadd.f32 %v46, %v58
  %v70 = vadd.f32 %v47, %v58
  %v71 = vadd.f32 %v48, %v58
  %v72 = vadd.f32 %v49, %v58
  %v73 = vadd.f32 %v50, %v58
  %v74 = vadd.f32 %v51, %v58
  %v75 = vadd.f32 %v52, %v58
  %v76 = vmax.f32 %v60, 0.0
  %v77 = vmax.f32 %v61, 0.0
  %v78 = vmax.f32 %v62, 0.0
  %v79 = vmax.f32 %v63, 0.0
  %v80 = vmax.f32 %v64, 0.0
  %v81 = vmax.f32 %v65, 0.0
  %v82 = vmax.f32 %v66, 0.0
  %v83 = vmax.f32 %v67, 0.0
  %v84 = vmax.f32 %v68, 0.0
  %v85 = vmax.f32 %v69, 0.0
  %v86 = vmax.f32 %v70, 0.0
  %v87 = vmax.f32 %v71, 0.0
  %v88 = vmax.f32 %v72, 0.0
  %v89 = vmax.f32 %v73, 0.0
  %v90 = vmax.f32 %v74, 0.0
  %v91 = vmax.f32 %v75, 0.0
  %vm92 = vcmask 261120
  %93 = vst.msk [vmem:[%s3] sm:$0xff] %vm92, %v76
  %94 = vst.msk [vmem:[%s3 + $0x8] sm:$0xff] %vm92, %v77
  %95 = vst.msk [vmem:[%s3 + $0x10] sm:$0xff] %vm92, %v78
  %96 = vst.msk [vmem:[%s3 + $0x18] sm:$0xff] %vm92, %v79
  %97 = vst.msk [vmem:[%s3 + $0x20] sm:$0xff] %vm92, %v80
  %98 = vst.msk [vmem:[%s3 + $0x28] sm:$0xff] %vm92, %v81
  %99 = vst.msk [vmem:[%s3 + $0x30] sm:$0xff] %vm92, %v82
  %100 = vst.msk [vmem:[%s3 + $0x38] sm:$0xff] %vm92, %v83
  %101 = vst.msk [vmem:[%s3 + $0x40] sm:$0xff] %vm92, %v84
  %102 = vst.msk [vmem:[%s3 + $0x48] sm:$0xff] %vm92, %v85
  %103 = vst.msk [vmem:[%s3 + $0x50] sm:$0xff] %vm92, %v86
  %104 = vst.msk [vmem:[%s3 + $0x58] sm:$0xff] %vm92, %v87
  %105 = vst.msk [vmem:[%s3 + $0x60] sm:$0xff] %vm92, %v88
  %106 = vst.msk [vmem:[%s3 + $0x68] sm:$0xff] %vm92, %v89
  %107 = vst.msk [vmem:[%s3 + $0x70] sm:$0xff] %vm92, %v90
  %108 = vst.msk [vmem:[%s3 + $0x78] sm:$0xff] %vm92, %v91
  // Predicated region
  $region14: #{_lambda_.49} parent=0 // pred_check
    _
  $region15: #{_lambda_.49} parent=0 // pred_check_branch
    %110 = sbr.rel (0) target = $region17
  $region16: #{_lambda_.49} parent=0 // pred_region
    _
  $region17: #{_lambda_.49} parent=0 // pred_fallthru
    _
  // Predicated region
  $region18: #{_lambda_.49} parent=0 // pred_check
    _
  $region19: #{_lambda_.49} parent=0 // pred_check_branch
    %112 = sbr.rel (0) target = $region21
  $region20: #{_lambda_.49} parent=0 // pred_region
    _
  $region21: #{_lambda_.49} parent=0 // pred_fallthru
    _

// kernel: _lambda_.50
$region0: #{_lambda_.50}
  #allocation0 [shape = 'u32[]', space=smem, size = 0x4, offset = 0x4, fixed_abs, tag = 'smem constant byte address 0x4 - core index']
  #allocation1 [shape = 'u32[144,128]{1,0:T(1,128)}', space=vmem, size = 0x12000, scoped, tag = 'internal scratch']
  %s0 = inlined_call_operand.vmem [shape: bf16[128,288], index: 0, kind: input, shape index: {}]
  %s1 = inlined_call_operand.vmem [shape: bf16[288,32], index: 1, kind: input, shape index: {}]
  %s2 = inlined_call_operand.vmem [shape: f32[128,32], index: 2, kind: output, shape index: {0}]
  %s3 = inlined_call_operand.vmem [shape: f32[1,1,32], index: 3, kind: output, shape index: {1}]
  %s4 = inlined_call_operand.vmem [shape: f32[1,1,32], index: 4, kind: output, shape index: {2}]
  %5 = xla_tuple %s2, %s3, %s4
  %s6 = sld [smem:[#allocation0]]
  $region34: #{_lambda_.50} parent=0
    _
  %s8 = ssub.s32 1, %s6
  %s9 = scalar_select 0, %s8, %s6
  // Predicated region
  $region2: #{_lambda_.50} parent=0 // pred_check
    _
  $region3: #{_lambda_.50} parent=0 // pred_check_branch
    %11 = sbr.rel (0) target = $region5
  $region4: #{_lambda_.50} parent=0 // pred_region
    _
  $region5: #{_lambda_.50} parent=0 // pred_fallthru
    _
  // Predicated region
  $region6: #{_lambda_.50} parent=0 // pred_check
    _
  $region7: #{_lambda_.50} parent=0 // pred_check_branch
    %13 = sbr.rel (0) target = $region9
  $region8: #{_lambda_.50} parent=0 // pred_region
    _
  $region9: #{_lambda_.50} parent=0 // pred_fallthru
    _
  %v15 = vld [vmem:[%s0] sm:$0xff]
  %v16 = vld [vmem:[%s0 + $0x8] sm:$0xf]
  %v17 = vld [vmem:[%s0 + $0xc] sm:$0xff]
  %v18 = vld [vmem:[%s0 + $0x14] sm:$0xf]
  %v19 = vld [vmem:[%s0 + $0x18] sm:$0xff]
  %v20 = vld [vmem:[%s0 + $0x20] sm:$0xf]
  %v21 = vld [vmem:[%s0 + $0x24] sm:$0xff]
  %v22 = vld [vmem:[%s0 + $0x2c] sm:$0xf]
  %v23 = vld [vmem:[%s0 + $0x30] sm:$0xff]
  %v24 = vld [vmem:[%s0 + $0x38] sm:$0xf]
  %v25 = vld [vmem:[%s0 + $0x3c] sm:$0xff]
  %v26 = vld [vmem:[%s0 + $0x44] sm:$0xf]
  %v27 = vld [vmem:[%s0 + $0x48] sm:$0xff]
  %v28 = vld [vmem:[%s0 + $0x50] sm:$0xf]
  %v29 = vld [vmem:[%s0 + $0x54] sm:$0xff]
  %v30 = vld [vmem:[%s0 + $0x5c] sm:$0xf]
  %v31 = vld [vmem:[%s0 + $0x60] sm:$0xff]
  %v32 = vld [vmem:[%s0 + $0x68] sm:$0xf]
  %v33 = vld [vmem:[%s0 + $0x6c] sm:$0xff]
  %v34 = vld [vmem:[%s0 + $0x74] sm:$0xf]
  %v35 = vld [vmem:[%s0 + $0x78] sm:$0xff]
  %v36 = vld [vmem:[%s0 + $0x80] sm:$0xf]
  %v37 = vld [vmem:[%s0 + $0x84] sm:$0xff]
  %v38 = vld [vmem:[%s0 + $0x8c] sm:$0xf]
  %v39 = vld [vmem:[%s0 + $0x90] sm:$0xff]
  %v40 = vld [vmem:[%s0 + $0x98] sm:$0xf]
  %v41 = vld [vmem:[%s0 + $0x9c] sm:$0xff]
  %v42 = vld [vmem:[%s0 + $0xa4] sm:$0xf]
  %v43 = vld [vmem:[%s0 + $0xa8] sm:$0xff]
  %v44 = vld [vmem:[%s0 + $0xb0] sm:$0xf]
  %v45 = vld [vmem:[%s0 + $0xb4] sm:$0xff]
  %v46 = vld [vmem:[%s0 + $0xbc] sm:$0xf]
  %v47 = vld [vmem:[%s1] sm:$0xf]
  %v48 = vld [vmem:[%s1 + $0x4] sm:$0xf]
  %v49 = vld [vmem:[%s1 + $0x8] sm:$0xf]
  %v50 = vld [vmem:[%s1 + $0xc] sm:$0xf]
  %v51 = vld [vmem:[%s1 + $0x10] sm:$0xf]
  %v52 = vld [vmem:[%s1 + $0x14] sm:$0xf]
  %v53 = vld [vmem:[%s1 + $0x18] sm:$0xf]
  %v54 = vld [vmem:[%s1 + $0x1c] sm:$0xf]
  %v55 = vld [vmem:[%s1 + $0x20] sm:$0xf]
  %v56 = vld [vmem:[%s1 + $0x24] sm:$0xf]
  %v57 = vld [vmem:[%s1 + $0x28] sm:$0xf]
  %v58 = vld [vmem:[%s1 + $0x2c] sm:$0xf]
  %v59 = vld [vmem:[%s1 + $0x30] sm:$0xf]
  %v60 = vld [vmem:[%s1 + $0x34] sm:$0xf]
  %v61 = vld [vmem:[%s1 + $0x38] sm:$0xf]
  %v62 = vld [vmem:[%s1 + $0x3c] sm:$0xf]
  %v63 = vld [vmem:[%s1 + $0x40] sm:$0xf]
  %v64 = vld [vmem:[%s1 + $0x44] sm:$0xf]
  %v65 = vld [vmem:[%s1 + $0x48] sm:$0xf]
  %v66 = vld [vmem:[%s1 + $0x4c] sm:$0xf]
  %v67 = vld [vmem:[%s1 + $0x50] sm:$0xf]
  %v68 = vld [vmem:[%s1 + $0x54] sm:$0xf]
  %v69 = vld [vmem:[%s1 + $0x58] sm:$0xf]
  %v70 = vld [vmem:[%s1 + $0x5c] sm:$0xf]
  %v71 = vld [vmem:[%s1 + $0x60] sm:$0xf]
  %v72 = vld [vmem:[%s1 + $0x64] sm:$0xf]
  %v73 = vld [vmem:[%s1 + $0x68] sm:$0xf]
  %v74 = vld [vmem:[%s1 + $0x6c] sm:$0xf]
  %v75 = vld [vmem:[%s1 + $0x70] sm:$0xf]
  %v76 = vld [vmem:[%s1 + $0x74] sm:$0xf]
  %v77 = vld [vmem:[%s1 + $0x78] sm:$0xf]
  %v78 = vld [vmem:[%s1 + $0x7c] sm:$0xf]
  %v79 = vld [vmem:[%s1 + $0x80] sm:$0xf]
  %v80 = vld [vmem:[%s1 + $0x84] sm:$0xf]
  %v81 = vld [vmem:[%s1 + $0x88] sm:$0xf]
  %v82 = vld [vmem:[%s1 + $0x8c] sm:$0xf]
  %v115 = vunpack.c.l.b16 %v15
  %v116 = vunpack.c.h.b16 %v15
  %v117 = vunpack.c.l.b16 %v16
  %v118 = vunpack.c.l.b16 %v17
  %v119 = vunpack.c.h.b16 %v17
  %v120 = vunpack.c.l.b16 %v18
  %v121 = vunpack.c.l.b16 %v19
  %v122 = vunpack.c.h.b16 %v19
  %v123 = vunpack.c.l.b16 %v20
  %v124 = vunpack.c.l.b16 %v21
  %v125 = vunpack.c.h.b16 %v21
  %v126 = vunpack.c.l.b16 %v22
  %v127 = vunpack.c.l.b16 %v23
  %v128 = vunpack.c.h.b16 %v23
  %v129 = vunpack.c.l.b16 %v24
  %v130 = vunpack.c.l.b16 %v25
  %v131 = vunpack.c.h.b16 %v25
  %v132 = vunpack.c.l.b16 %v26
  %v133 = vunpack.c.l.b16 %v27
  %v134 = vunpack.c.h.b16 %v27
  %v135 = vunpack.c.l.b16 %v28
  %v136 = vunpack.c.l.b16 %v29
  %v137 = vunpack.c.h.b16 %v29
  %v138 = vunpack.c.l.b16 %v30
  %v139 = vunpack.c.l.b16 %v31
  %v140 = vunpack.c.h.b16 %v31
  %v141 = vunpack.c.l.b16 %v32
  %v142 = vunpack.c.l.b16 %v33
  %v143 = vunpack.c.h.b16 %v33
  %v144 = vunpack.c.l.b16 %v34
  %v145 = vunpack.c.l.b16 %v35
  %v146 = vunpack.c.h.b16 %v35
  %v147 = vunpack.c.l.b16 %v36
  %v148 = vunpack.c.l.b16 %v37
  %v149 = vunpack.c.h.b16 %v37
  %v150 = vunpack.c.l.b16 %v38
  %v151 = vunpack.c.l.b16 %v39
  %v152 = vunpack.c.h.b16 %v39
  %v153 = vunpack.c.l.b16 %v40
  %v154 = vunpack.c.l.b16 %v41
  %v155 = vunpack.c.h.b16 %v41
  %v156 = vunpack.c.l.b16 %v42
  %v157 = vunpack.c.l.b16 %v43
  %v158 = vunpack.c.h.b16 %v43
  %v159 = vunpack.c.l.b16 %v44
  %v160 = vunpack.c.l.b16 %v45
  %v161 = vunpack.c.h.b16 %v45
  %v162 = vunpack.c.l.b16 %v46
  %v163 = vpack.c.b16 %v118, %v115
  %v164 = vpack.c.b16 %v119, %v116
  %v165 = vpack.c.b16 %v120, %v117
  %v166 = vpack.c.b16 %v124, %v121
  %v167 = vpack.c.b16 %v125, %v122
  %v168 = vpack.c.b16 %v126, %v123
  %v169 = vpack.c.b16 %v130, %v127
  %v170 = vpack.c.b16 %v131, %v128
  %v171 = vpack.c.b16 %v132, %v129
  %v172 = vpack.c.b16 %v136, %v133
  %v173 = vpack.c.b16 %v137, %v134
  %v174 = vpack.c.b16 %v138, %v135
  %v175 = vpack.c.b16 %v142, %v139
  %v176 = vpack.c.b16 %v143, %v140
  %v177 = vpack.c.b16 %v144, %v141
  %v178 = vpack.c.b16 %v148, %v145
  %v179 = vpack.c.b16 %v149, %v146
  %v180 = vpack.c.b16 %v150, %v147
  %v181 = vpack.c.b16 %v154, %v151
  %v182 = vpack.c.b16 %v155, %v152
  %v183 = vpack.c.b16 %v156, %v153
  %v184 = vpack.c.b16 %v160, %v157
  %v185 = vpack.c.b16 %v161, %v158
  %v186 = vpack.c.b16 %v162, %v159
  %v239 = vunpack.c.l.b16 %v47
  %v240 = vunpack.c.l.b16 %v48
  %v241 = vunpack.c.l.b16 %v49
  %v242 = vunpack.c.l.b16 %v50
  %v243 = vunpack.c.l.b16 %v51
  %v244 = vunpack.c.l.b16 %v52
  %v245 = vunpack.c.l.b16 %v53
  %v246 = vunpack.c.l.b16 %v54
  %v247 = vunpack.c.l.b16 %v55
  %v248 = vunpack.c.l.b16 %v56
  %v249 = vunpack.c.l.b16 %v57
  %v250 = vunpack.c.l.b16 %v58
  %v251 = vunpack.c.l.b16 %v59
  %v252 = vunpack.c.l.b16 %v60
  %v253 = vunpack.c.l.b16 %v61
  %v254 = vunpack.c.l.b16 %v62
  %v255 = vunpack.c.l.b16 %v63
  %v256 = vunpack.c.l.b16 %v64
  %v257 = vunpack.c.l.b16 %v65
  %v258 = vunpack.c.l.b16 %v66
  %v259 = vunpack.c.l.b16 %v67
  %v260 = vunpack.c.l.b16 %v68
  %v261 = vunpack.c.l.b16 %v69
  %v262 = vunpack.c.l.b16 %v70
  %v263 = vunpack.c.l.b16 %v71
  %v264 = vunpack.c.l.b16 %v72
  %v265 = vunpack.c.l.b16 %v73
  %v266 = vunpack.c.l.b16 %v74
  %v267 = vunpack.c.l.b16 %v75
  %v268 = vunpack.c.l.b16 %v76
  %v269 = vunpack.c.l.b16 %v77
  %v270 = vunpack.c.l.b16 %v78
  %v271 = vunpack.c.l.b16 %v79
  %v272 = vunpack.c.l.b16 %v80
  %v273 = vunpack.c.l.b16 %v81
  %v274 = vunpack.c.l.b16 %v82
  %v275 = vpack.c.b16 %v240, %v239
  %v276 = vpack.c.b16 %v242, %v241
  %v277 = vpack.c.b16 %v244, %v243
  %v278 = vpack.c.b16 %v246, %v245
  %v279 = vpack.c.b16 %v248, %v247
  %v280 = vpack.c.b16 %v250, %v249
  %v281 = vpack.c.b16 %v252, %v251
  %v282 = vpack.c.b16 %v254, %v253
  %v283 = vpack.c.b16 %v256, %v255
  %v284 = vpack.c.b16 %v258, %v257
  %v285 = vpack.c.b16 %v260, %v259
  %v286 = vpack.c.b16 %v262, %v261
  %v287 = vpack.c.b16 %v264, %v263
  %v288 = vpack.c.b16 %v266, %v265
  %v289 = vpack.c.b16 %v268, %v267
  %v290 = vpack.c.b16 %v270, %v269
  %v291 = vpack.c.b16 %v272, %v271
  %v292 = vpack.c.b16 %v274, %v273
  %vm311 = vcmask 261120
  %v313 = vsel %vm311, %v165, 0
  %v316 = vsel %vm311, %v168, 0
  %v319 = vsel %vm311, %v171, 0
  %v322 = vsel %vm311, %v174, 0
  %v325 = vsel %vm311, %v177, 0
  %v328 = vsel %vm311, %v180, 0
  %v331 = vsel %vm311, %v183, 0
  %v334 = vsel %vm311, %v186, 0
  %336 = vmatprep.subr.bf16.mxu0 0
  %337 = vmatpush1.bf16.msra.mxu0 %v275
  %338 = vmatprep.subr.bf16.mxu0 0
  %339 = vmatpush1.bf16.msra.mxu0 %v276
  %340 = vmatprep.subr.bf16.mxu0 0
  %341 = vmatpush1.bf16.msra.mxu0 %v277
  %342 = vmatprep.subr.bf16.mxu0 0
  %343 = vmatpush1.bf16.msra.mxu0 %v278
  %344 = vmatprep.subr.bf16.mxu0 0
  %345 = vmatpush1.bf16.msra.mxu0 %v279
  %346 = vmatprep.subr.bf16.mxu0 0
  %347 = vmatpush1.bf16.msra.mxu0 %v280
  %348 = vmatprep.subr.bf16.mxu0 0
  %349 = vmatpush1.bf16.msra.mxu0 %v281
  %350 = vmatprep.subr.bf16.mxu0 0
  %351 = vmatpush1.bf16.msra.mxu0 %v282
  %352 = vmatprep.subr.bf16.mxu0 0
  %353 = vmatpush1.bf16.msra.mxu0 %v283
  %354 = vmatprep.subr.bf16.mxu0 0
  %355 = vmatpush1.bf16.msra.mxu0 %v284
  %356 = vmatprep.subr.bf16.mxu0 0
  %357 = vmatpush1.bf16.msra.mxu0 %v285
  %358 = vmatprep.subr.bf16.mxu0 0
  %359 = vmatpush1.bf16.msra.mxu0 %v286
  %360 = vmatprep.subr.bf16.mxu0 0
  %361 = vmatpush1.bf16.msra.mxu0 %v287
  %362 = vmatprep.subr.bf16.mxu0 0
  %363 = vmatpush1.bf16.msra.mxu0 %v288
  %364 = vmatprep.subr.bf16.mxu0 0
  %365 = vmatpush1.bf16.msra.mxu0 %v289
  %366 = vmatprep.subr.bf16.mxu0 0
  %367 = vmatpush1.bf16.msra.mxu0 %v290
  %368 = vmatprep.mubr.bf16.mxu0 %v164
  %369 = vmatmul.mubr.bf16.gmra.mrb[0].mxu0 %v163
  %v370 = vpop.f32.mrb[0].mxu0
  %v371 = vadd.f32 0.0, %v370
  %v372 = vpop.f32.mrb[0].mxu0
  %v373 = vpop.f32.mrb[0].mxu0
  %v374 = vadd.f32 0.0, %v373
  %v375 = vpop.f32.mrb[0].mxu0
  %376 = vmatprep.mubr.bf16.mxu0 %v167
  %377 = vmatmul.mubr.bf16.gmra.mrb[0].mxu0 %v166
  %v378 = vpop.f32.mrb[0].mxu0
  %v379 = vadd.f32 0.0, %v378
  %v380 = vpop.f32.mrb[0].mxu0
  %v381 = vpop.f32.mrb[0].mxu0
  %v382 = vadd.f32 0.0, %v381
  %v383 = vpop.f32.mrb[0].mxu0
  %384 = vmatprep.mubr.bf16.mxu0 %v170
  %385 = vmatmul.mubr.bf16.gmra.mrb[0].mxu0 %v169
  %v386 = vpop.f32.mrb[0].mxu0
  %v387 = vadd.f32 0.0, %v386
  %v388 = vpop.f32.mrb[0].mxu0
  %v389 = vpop.f32.mrb[0].mxu0
  %v390 = vadd.f32 0.0, %v389
  %v391 = vpop.f32.mrb[0].mxu0
  %392 = vmatprep.mubr.bf16.mxu0 %v173
  %393 = vmatmul.mubr.bf16.gmra.mrb[0].mxu0 %v172
  %v394 = vpop.f32.mrb[0].mxu0
  %v395 = vadd.f32 0.0, %v394
  %v396 = vpop.f32.mrb[0].mxu0
  %v397 = vpop.f32.mrb[0].mxu0
  %v398 = vadd.f32 0.0, %v397
  %v399 = vpop.f32.mrb[0].mxu0
  %400 = vmatprep.mubr.bf16.mxu0 %v176
  %401 = vmatmul.mubr.bf16.gmra.mrb[0].mxu0 %v175
  %v402 = vpop.f32.mrb[0].mxu0
  %v403 = vadd.f32 0.0, %v402
  %v404 = vpop.f32.mrb[0].mxu0
  %v405 = vpop.f32.mrb[0].mxu0
  %v406 = vadd.f32 0.0, %v405
  %v407 = vpop.f32.mrb[0].mxu0
  %408 = vmatprep.mubr.bf16.mxu0 %v179
  %409 = vmatmul.mubr.bf16.gmra.mrb[0].mxu0 %v178
  %v410 = vpop.f32.mrb[0].mxu0
  %v411 = vadd.f32 0.0, %v410
  %v412 = vpop.f32.mrb[0].mxu0
  %v413 = vpop.f32.mrb[0].mxu0
  %v414 = vadd.f32 0.0, %v413
  %v415 = vpop.f32.mrb[0].mxu0
  %416 = vmatprep.mubr.bf16.mxu0 %v182
  %417 = vmatmul.mubr.bf16.gmra.mrb[0].mxu0 %v181
  %v418 = vpop.f32.mrb[0].mxu0
  %v419 = vadd.f32 0.0, %v418
  %v420 = vpop.f32.mrb[0].mxu0
  %v421 = vpop.f32.mrb[0].mxu0
  %v422 = vadd.f32 0.0, %v421
  %v423 = vpop.f32.mrb[0].mxu0
  %424 = vmatprep.mubr.bf16.mxu0 %v185
  %425 = vmatmul.mubr.bf16.gmra.mrb[0].mxu0 %v184
  %v426 = vpop.f32.mrb[0].mxu0
  %v427 = vadd.f32 0.0, %v426
  %v428 = vpop.f32.mrb[0].mxu0
  %v429 = vpop.f32.mrb[0].mxu0
  %v430 = vadd.f32 0.0, %v429
  %v431 = vpop.f32.mrb[0].mxu0
  %432 = vdwg.mxu0
  %433 = vmatprep.subr.bf16.mxu0 0
  %434 = vmatpush1.bf16.msra.mxu0 %v291
  %435 = vmatprep.subr.bf16.mxu0 0
  %436 = vmatpush1.bf16.msra.mxu0 %v292
  %437 = vmatprep.subr.bf16.mxu0 0
  %438 = vmatpush1.bf16.msra.mxu0 0
  %439 = vmatprep.subr.bf16.mxu0 0
  %440 = vmatpush1.bf16.msra.mxu0 0
  %441 = vmatprep.subr.bf16.mxu0 0
  %442 = vmatpush1.bf16.msra.mxu0 0
  %443 = vmatprep.subr.bf16.mxu0 0
  %444 = vmatpush1.bf16.msra.mxu0 0
  %445 = vmatprep.subr.bf16.mxu0 0
  %446 = vmatpush1.bf16.msra.mxu0 0
  %447 = vmatprep.subr.bf16.mxu0 0
  %448 = vmatpush1.bf16.msra.mxu0 0
  %449 = vmatprep.subr.bf16.mxu0 0
  %450 = vmatpush1.bf16.msra.mxu0 0
  %451 = vmatprep.subr.bf16.mxu0 0
  %452 = vmatpush1.bf16.msra.mxu0 0
  %453 = vmatprep.subr.bf16.mxu0 0
  %454 = vmatpush1.bf16.msra.mxu0 0
  %455 = vmatprep.subr.bf16.mxu0 0
  %456 = vmatpush1.bf16.msra.mxu0 0
  %457 = vmatprep.subr.bf16.mxu0 0
  %458 = vmatpush1.bf16.msra.mxu0 0
  %459 = vmatprep.subr.bf16.mxu0 0
  %460 = vmatpush1.bf16.msra.mxu0 0
  %461 = vmatprep.subr.bf16.mxu0 0
  %462 = vmatpush1.bf16.msra.mxu0 0
  %463 = vmatprep.subr.bf16.mxu0 0
  %464 = vmatpush1.bf16.msra.mxu0 0
  %465 = vmatprep.mubr.bf16.mxu0 0
  %466 = vmatmul.mubr.bf16.gmra.mrb[0].mxu0 %v313
  %v467 = vpop.f32.mrb[0].mxu0
  %v468 = vadd.f32 %v371, %v467
  %v469 = vpop.f32.mrb[0].mxu0
  %v470 = vpop.f32.mrb[0].mxu0
  %v471 = vadd.f32 %v374, %v470
  %v472 = vpop.f32.mrb[0].mxu0
  %473 = vmatprep.mubr.bf16.mxu0 0
  %474 = vmatmul.mubr.bf16.gmra.mrb[0].mxu0 %v316
  %v475 = vpop.f32.mrb[0].mxu0
  %v476 = vadd.f32 %v379, %v475
  %v477 = vpop.f32.mrb[0].mxu0
  %v478 = vpop.f32.mrb[0].mxu0
  %v479 = vadd.f32 %v382, %v478
  %v480 = vpop.f32.mrb[0].mxu0
  %481 = vmatprep.mubr.bf16.mxu0 0
  %482 = vmatmul.mubr.bf16.gmra.mrb[0].mxu0 %v319
  %v483 = vpop.f32.mrb[0].mxu0
  %v484 = vadd.f32 %v387, %v483
  %v485 = vpop.f32.mrb[0].mxu0
  %v486 = vpop.f32.mrb[0].mxu0
  %v487 = vadd.f32 %v390, %v486
  %v488 = vpop.f32.mrb[0].mxu0
  %489 = vmatprep.mubr.bf16.mxu0 0
  %490 = vmatmul.mubr.bf16.gmra.mrb[0].mxu0 %v322
  %v491 = vpop.f32.mrb[0].mxu0
  %v492 = vadd.f32 %v395, %v491
  %v493 = vpop.f32.mrb[0].mxu0
  %v494 = vpop.f32.mrb[0].mxu0
  %v495 = vadd.f32 %v398, %v494
  %v496 = vpop.f32.mrb[0].mxu0
  %497 = vmatprep.mubr.bf16.mxu0 0
  %498 = vmatmul.mubr.bf16.gmra.mrb[0].mxu0 %v325
  %v499 = vpop.f32.mrb[0].mxu0
  %v500 = vadd.f32 %v403, %v499
  %v501 = vpop.f32.mrb[0].mxu0
  %v502 = vpop.f32.mrb[0].mxu0
  %v503 = vadd.f32 %v406, %v502
  %v504 = vpop.f32.mrb[0].mxu0
  %505 = vmatprep.mubr.bf16.mxu0 0
  %506 = vmatmul.mubr.bf16.gmra.mrb[0].mxu0 %v328
  %v507 = vpop.f32.mrb[0].mxu0
  %v508 = vadd.f32 %v411, %v507
  %v509 = vpop.f32.mrb[0].mxu0
  %v510 = vpop.f32.mrb[0].mxu0
  %v511 = vadd.f32 %v414, %v510
  %v512 = vpop.f32.mrb[0].mxu0
  %513 = vmatprep.mubr.bf16.mxu0 0
  %514 = vmatmul.mubr.bf16.gmra.mrb[0].mxu0 %v331
  %v515 = vpop.f32.mrb[0].mxu0
  %v516 = vadd.f32 %v419, %v515
  %v517 = vpop.f32.mrb[0].mxu0
  %v518 = vpop.f32.mrb[0].mxu0
  %v519 = vadd.f32 %v422, %v518
  %v520 = vpop.f32.mrb[0].mxu0
  %521 = vmatprep.mubr.bf16.mxu0 0
  %522 = vmatmul.mubr.bf16.gmra.mrb[0].mxu0 %v334
  %v523 = vpop.f32.mrb[0].mxu0
  %v524 = vadd.f32 %v427, %v523
  %v525 = vpop.f32.mrb[0].mxu0
  %v526 = vpop.f32.mrb[0].mxu0
  %v527 = vadd.f32 %v430, %v526
  %v528 = vpop.f32.mrb[0].mxu0
  %529 = vdwg.mxu0
  %530 = vst.msk [vmem:[%s2] sm:$0xff] %vm311, %v468
  %531 = vst.msk [vmem:[%s2 + $0x8] sm:$0xff] %vm311, %v471
  %532 = vst.msk [vmem:[%s2 + $0x10] sm:$0xff] %vm311, %v476
  %533 = vst.msk [vmem:[%s2 + $0x18] sm:$0xff] %vm311, %v479
  %534 = vst.msk [vmem:[%s2 + $0x20] sm:$0xff] %vm311, %v484
  %535 = vst.msk [vmem:[%s2 + $0x28] sm:$0xff] %vm311, %v487
  %536 = vst.msk [vmem:[%s2 + $0x30] sm:$0xff] %vm311, %v492
  %537 = vst.msk [vmem:[%s2 + $0x38] sm:$0xff] %vm311, %v495
  %538 = vst.msk [vmem:[%s2 + $0x40] sm:$0xff] %vm311, %v500
  %539 = vst.msk [vmem:[%s2 + $0x48] sm:$0xff] %vm311, %v503
  %540 = vst.msk [vmem:[%s2 + $0x50] sm:$0xff] %vm311, %v508
  %541 = vst.msk [vmem:[%s2 + $0x58] sm:$0xff] %vm311, %v511
  %542 = vst.msk [vmem:[%s2 + $0x60] sm:$0xff] %vm311, %v516
  %543 = vst.msk [vmem:[%s2 + $0x68] sm:$0xff] %vm311, %v519
  %544 = vst.msk [vmem:[%s2 + $0x70] sm:$0xff] %vm311, %v524
  %545 = vst.msk [vmem:[%s2 + $0x78] sm:$0xff] %vm311, %v527
  %v546 = vsel %vm311, %v468, 0.0
  %v547 = vsel %vm311, %v471, 0.0
  %v548 = vadd.f32 %v546, %v547
  %v549 = vsel %vm311, %v476, 0.0
  %v550 = vadd.f32 %v548, %v549
  %v551 = vsel %vm311, %v479, 0.0
  %v552 = vadd.f32 %v550, %v551
  %v553 = vsel %vm311, %v484, 0.0
  %v554 = vadd.f32 %v552, %v553
  %v555 = vsel %vm311, %v487, 0.0
  %v556 = vadd.f32 %v554, %v555
  %v557 = vsel %vm311, %v492, 0.0
  %v558 = vadd.f32 %v556, %v557
  %v559 = vsel %vm311, %v495, 0.0
  %v560 = vadd.f32 %v558, %v559
  %v561 = vsel %vm311, %v500, 0.0
  %v562 = vadd.f32 %v560, %v561
  %v563 = vsel %vm311, %v503, 0.0
  %v564 = vadd.f32 %v562, %v563
  %v565 = vsel %vm311, %v508, 0.0
  %v566 = vadd.f32 %v564, %v565
  %v567 = vsel %vm311, %v511, 0.0
  %v568 = vadd.f32 %v566, %v567
  %v569 = vsel %vm311, %v516, 0.0
  %v570 = vadd.f32 %v568, %v569
  %v571 = vsel %vm311, %v519, 0.0
  %v572 = vadd.f32 %v570, %v571
  %v573 = vsel %vm311, %v524, 0.0
  %v574 = vadd.f32 %v572, %v573
  %v575 = vsel %vm311, %v527, 0.0
  %v576 = vadd.f32 %v574, %v575
  %v577 = vrot.slane %v576, 4
  %v578 = vadd.f32 %v576, %v577
  %v579 = vrot.slane %v578, 2
  %v580 = vadd.f32 %v578, %v579
  %v581 = vrot.slane %v580, 1
  %v582 = vadd.f32 %v580, %v581
  %vm583 = vcmask 253952
  %584 = vst.msk [vmem:[%s3] sm:$0x1] %vm583, %v582
  %v585 = vmul.f32 %v468, %v468
  %v586 = vmul.f32 %v471, %v471
  %v587 = vmul.f32 %v476, %v476
  %v588 = vmul.f32 %v479, %v479
  %v589 = vmul.f32 %v484, %v484
  %v590 = vmul.f32 %v487, %v487
  %v591 = vmul.f32 %v492, %v492
  %v592 = vmul.f32 %v495, %v495
  %v593 = vmul.f32 %v500, %v500
  %v594 = vmul.f32 %v503, %v503
  %v595 = vmul.f32 %v508, %v508
  %v596 = vmul.f32 %v511, %v511
  %v597 = vmul.f32 %v516, %v516
  %v598 = vmul.f32 %v519, %v519
  %v599 = vmul.f32 %v524, %v524
  %v600 = vmul.f32 %v527, %v527
  %v601 = vsel %vm311, %v585, 0.0
  %v602 = vsel %vm311, %v586, 0.0
  %v603 = vadd.f32 %v601, %v602
  %v604 = vsel %vm311, %v587, 0.0
  %v605 = vadd.f32 %v603, %v604
  %v606 = vsel %vm311, %v588, 0.0
  %v607 = vadd.f32 %v605, %v606
  %v608 = vsel %vm311, %v589, 0.0
  %v609 = vadd.f32 %v607, %v608
  %v610 = vsel %vm311, %v590, 0.0
  %v611 = vadd.f32 %v609, %v610
  %v612 = vsel %vm311, %v591, 0.0
  %v613 = vadd.f32 %v611, %v612
  %v614 = vsel %vm311, %v592, 0.0
  %v615 = vadd.f32 %v613, %v614
  %v616 = vsel %vm311, %v593, 0.0
  %v617 = vadd.f32 %v615, %v616
  %v618 = vsel %vm311, %v594, 0.0
  %v619 = vadd.f32 %v617, %v618
  %v620 = vsel %vm311, %v595, 0.0
  %v621 = vadd.f32 %v619, %v620
  %v622 = vsel %vm311, %v596, 0.0
  %v623 = vadd.f32 %v621, %v622
  %v624 = vsel %vm311, %v597, 0.0
  %v625 = vadd.f32 %v623, %v624
  %v626 = vsel %vm311, %v598, 0.0
  %v627 = vadd.f32 %v625, %v626
  %v628 = vsel %vm311, %v599, 0.0
  %v629 = vadd.f32 %v627, %v628
  %v630 = vsel %vm311, %v600, 0.0
  %v631 = vadd.f32 %v629, %v630
  %v632 = vrot.slane %v631, 4
  %v633 = vadd.f32 %v631, %v632
  %v634 = vrot.slane %v633, 2
  %v635 = vadd.f32 %v633, %v634
  %v636 = vrot.slane %v635, 1
  %v637 = vadd.f32 %v635, %v636
  %638 = vst.msk [vmem:[%s4] sm:$0x1] %vm583, %v637
  // Predicated region
  $region10: #{_lambda_.50} parent=0 // pred_check
    _
  $region11: #{_lambda_.50} parent=0 // pred_check_branch
    %640 = sbr.rel (0) target = $region13
  $region12: #{_lambda_.50} parent=0 // pred_region
    _
  $region13: #{_lambda_.50} parent=0 // pred_fallthru
    _
  // Predicated region
  $region14: #{_lambda_.50} parent=0 // pred_check
    _
  $region15: #{_lambda_.50} parent=0 // pred_check_branch
    %642 = sbr.rel (0) target = $region17
  $region16: #{_lambda_.50} parent=0 // pred_region
    _
  $region17: #{_lambda_.50} parent=0 // pred_fallthru
    _
  // Predicated region
  $region18: #{_lambda_.50} parent=0 // pred_check
    _
  $region19: #{_lambda_.50} parent=0 // pred_check_branch
    %644 = sbr.rel (0) target = $region21
  $region20: #{_lambda_.50} parent=0 // pred_region
    _
  $region21: #{_lambda_.50} parent=0 // pred_fallthru
    _
  // Predicated region
  $region22: #{_lambda_.50} parent=0 // pred_check
    _
  $region23: #{_lambda_.50} parent=0 // pred_check_branch
    %646 = sbr.rel (0) target = $region25
  $region24: #{_lambda_.50} parent=0 // pred_region
    _
  $region25: #{_lambda_.50} parent=0 // pred_fallthru
    _
  // Predicated region
  $region26: #{_lambda_.50} parent=0 // pred_check
    _
  $region27: #{_lambda_.50} parent=0 // pred_check_branch
    %648 = sbr.rel (0) target = $region29
  $region28: #{_lambda_.50} parent=0 // pred_region
    _
  $region29: #{_lambda_.50} parent=0 // pred_fallthru
    _
  // Predicated region
  $region30: #{_lambda_.50} parent=0 // pred_check
    _
  $region31: #{_lambda_.50} parent=0 // pred_check_branch
    %650 = sbr.rel (0) target = $region33
  $region32: #{_lambda_.50} parent=0 // pred_region
    _
  $region33: #{_lambda_.50} parent=0 // pred_fallthru
    _

// kernel: _lambda_.51
$region0: #{_lambda_.51}
  #allocation0 [shape = 'u32[]', space=smem, size = 0x4, offset = 0x4, fixed_abs, tag = 'smem constant byte address 0x4 - core index']
  #allocation1 [shape = 'u32[144,128]{1,0:T(1,128)}', space=vmem, size = 0x12000, scoped, tag = 'internal scratch']
  %s0 = inlined_call_operand.vmem [shape: bf16[128,16], index: 0, kind: input, shape index: {}]
  %s1 = inlined_call_operand.vmem [shape: bf16[16,32], index: 1, kind: input, shape index: {}]
  %s2 = inlined_call_operand.vmem [shape: f32[128,32], index: 2, kind: output, shape index: {0}]
  %s3 = inlined_call_operand.vmem [shape: f32[1,1,32], index: 3, kind: output, shape index: {1}]
  %s4 = inlined_call_operand.vmem [shape: f32[1,1,32], index: 4, kind: output, shape index: {2}]
  %5 = xla_tuple %s2, %s3, %s4
  %s6 = sld [smem:[#allocation0]]
  $region34: #{_lambda_.51} parent=0
    _
  %s8 = ssub.s32 1, %s6
  %s9 = scalar_select 0, %s8, %s6
  // Predicated region
  $region2: #{_lambda_.51} parent=0 // pred_check
    _
  $region3: #{_lambda_.51} parent=0 // pred_check_branch
    %11 = sbr.rel (0) target = $region5
  $region4: #{_lambda_.51} parent=0 // pred_region
    _
  $region5: #{_lambda_.51} parent=0 // pred_fallthru
    _
  // Predicated region
  $region6: #{_lambda_.51} parent=0 // pred_check
    _
  $region7: #{_lambda_.51} parent=0 // pred_check_branch
    %13 = sbr.rel (0) target = $region9
  $region8: #{_lambda_.51} parent=0 // pred_region
    _
  $region9: #{_lambda_.51} parent=0 // pred_fallthru
    _
  %v15 = vld [vmem:[%s0] sm:$0xf]
  %v16 = vld [vmem:[%s0 + $0x4] sm:$0xf]
  %v17 = vld [vmem:[%s0 + $0x8] sm:$0xf]
  %v18 = vld [vmem:[%s0 + $0xc] sm:$0xf]
  %v19 = vld [vmem:[%s0 + $0x10] sm:$0xf]
  %v20 = vld [vmem:[%s0 + $0x14] sm:$0xf]
  %v21 = vld [vmem:[%s0 + $0x18] sm:$0xf]
  %v22 = vld [vmem:[%s0 + $0x1c] sm:$0xf]
  %v23 = vld [vmem:[%s0 + $0x20] sm:$0xf]
  %v24 = vld [vmem:[%s0 + $0x24] sm:$0xf]
  %v25 = vld [vmem:[%s0 + $0x28] sm:$0xf]
  %v26 = vld [vmem:[%s0 + $0x2c] sm:$0xf]
  %v27 = vld [vmem:[%s0 + $0x30] sm:$0xf]
  %v28 = vld [vmem:[%s0 + $0x34] sm:$0xf]
  %v29 = vld [vmem:[%s0 + $0x38] sm:$0xf]
  %v30 = vld [vmem:[%s0 + $0x3c] sm:$0xf]
  %v31 = vld [vmem:[%s1] sm:$0xf]
  %v32 = vld [vmem:[%s1 + $0x4] sm:$0xf]
  %v49 = vunpack.c.l.b16 %v15
  %v50 = vunpack.c.l.b16 %v16
  %v51 = vunpack.c.l.b16 %v17
  %v52 = vunpack.c.l.b16 %v18
  %v53 = vunpack.c.l.b16 %v19
  %v54 = vunpack.c.l.b16 %v20
  %v55 = vunpack.c.l.b16 %v21
  %v56 = vunpack.c.l.b16 %v22
  %v57 = vunpack.c.l.b16 %v23
  %v58 = vunpack.c.l.b16 %v24
  %v59 = vunpack.c.l.b16 %v25
  %v60 = vunpack.c.l.b16 %v26
  %v61 = vunpack.c.l.b16 %v27
  %v62 = vunpack.c.l.b16 %v28
  %v63 = vunpack.c.l.b16 %v29
  %v64 = vunpack.c.l.b16 %v30
  %v65 = vpack.c.b16 %v50, %v49
  %v66 = vpack.c.b16 %v52, %v51
  %v67 = vpack.c.b16 %v54, %v53
  %v68 = vpack.c.b16 %v56, %v55
  %v69 = vpack.c.b16 %v58, %v57
  %v70 = vpack.c.b16 %v60, %v59
  %v71 = vpack.c.b16 %v62, %v61
  %v72 = vpack.c.b16 %v64, %v63
  %v75 = vunpack.c.l.b16 %v31
  %v76 = vunpack.c.l.b16 %v32
  %v77 = vpack.c.b16 %v76, %v75
  %vm79 = vcmask 130048
  %v81 = vsel %vm79, %v65, 0
  %v84 = vsel %vm79, %v66, 0
  %v87 = vsel %vm79, %v67, 0
  %v90 = vsel %vm79, %v68, 0
  %v93 = vsel %vm79, %v69, 0
  %v96 = vsel %vm79, %v70, 0
  %v99 = vsel %vm79, %v71, 0
  %v102 = vsel %vm79, %v72, 0
  %104 = vmatprep.subr.bf16.mxu0 0
  %105 = vmatpush1.bf16.msra.mxu0 %v77
  %106 = vmatprep.subr.bf16.mxu0 0
  %107 = vmatpush1.bf16.msra.mxu0 0
  %108 = vmatprep.subr.bf16.mxu0 0
  %109 = vmatpush1.bf16.msra.mxu0 0
  %110 = vmatprep.subr.bf16.mxu0 0
  %111 = vmatpush1.bf16.msra.mxu0 0
  %112 = vmatprep.subr.bf16.mxu0 0
  %113 = vmatpush1.bf16.msra.mxu0 0
  %114 = vmatprep.subr.bf16.mxu0 0
  %115 = vmatpush1.bf16.msra.mxu0 0
  %116 = vmatprep.subr.bf16.mxu0 0
  %117 = vmatpush1.bf16.msra.mxu0 0
  %118 = vmatprep.subr.bf16.mxu0 0
  %119 = vmatpush1.bf16.msra.mxu0 0
  %120 = vmatprep.subr.bf16.mxu0 0
  %121 = vmatpush1.bf16.msra.mxu0 0
  %122 = vmatprep.subr.bf16.mxu0 0
  %123 = vmatpush1.bf16.msra.mxu0 0
  %124 = vmatprep.subr.bf16.mxu0 0
  %125 = vmatpush1.bf16.msra.mxu0 0
  %126 = vmatprep.subr.bf16.mxu0 0
  %127 = vmatpush1.bf16.msra.mxu0 0
  %128 = vmatprep.subr.bf16.mxu0 0
  %129 = vmatpush1.bf16.msra.mxu0 0
  %130 = vmatprep.subr.bf16.mxu0 0
  %131 = vmatpush1.bf16.msra.mxu0 0
  %132 = vmatprep.subr.bf16.mxu0 0
  %133 = vmatpush1.bf16.msra.mxu0 0
  %134 = vmatprep.subr.bf16.mxu0 0
  %135 = vmatpush1.bf16.msra.mxu0 0
  %136 = vmatprep.mubr.bf16.mxu0 0
  %137 = vmatmul.mubr.bf16.gmra.mrb[0].mxu0 %v81
  %v138 = vpop.f32.mrb[0].mxu0
  %v139 = vadd.f32 0.0, %v138
  %v140 = vpop.f32.mrb[0].mxu0
  %v141 = vpop.f32.mrb[0].mxu0
  %v142 = vadd.f32 0.0, %v141
  %v143 = vpop.f32.mrb[0].mxu0
  %144 = vmatprep.mubr.bf16.mxu0 0
  %145 = vmatmul.mubr.bf16.gmra.mrb[0].mxu0 %v84
  %v146 = vpop.f32.mrb[0].mxu0
  %v147 = vadd.f32 0.0, %v146
  %v148 = vpop.f32.mrb[0].mxu0
  %v149 = vpop.f32.mrb[0].mxu0
  %v150 = vadd.f32 0.0, %v149
  %v151 = vpop.f32.mrb[0].mxu0
  %152 = vmatprep.mubr.bf16.mxu0 0
  %153 = vmatmul.mubr.bf16.gmra.mrb[0].mxu0 %v87
  %v154 = vpop.f32.mrb[0].mxu0
  %v155 = vadd.f32 0.0, %v154
  %v156 = vpop.f32.mrb[0].mxu0
  %v157 = vpop.f32.mrb[0].mxu0
  %v158 = vadd.f32 0.0, %v157
  %v159 = vpop.f32.mrb[0].mxu0
  %160 = vmatprep.mubr.bf16.mxu0 0
  %161 = vmatmul.mubr.bf16.gmra.mrb[0].mxu0 %v90
  %v162 = vpop.f32.mrb[0].mxu0
  %v163 = vadd.f32 0.0, %v162
  %v164 = vpop.f32.mrb[0].mxu0
  %v165 = vpop.f32.mrb[0].mxu0
  %v166 = vadd.f32 0.0, %v165
  %v167 = vpop.f32.mrb[0].mxu0
  %168 = vmatprep.mubr.bf16.mxu0 0
  %169 = vmatmul.mubr.bf16.gmra.mrb[0].mxu0 %v93
  %v170 = vpop.f32.mrb[0].mxu0
  %v171 = vadd.f32 0.0, %v170
  %v172 = vpop.f32.mrb[0].mxu0
  %v173 = vpop.f32.mrb[0].mxu0
  %v174 = vadd.f32 0.0, %v173
  %v175 = vpop.f32.mrb[0].mxu0
  %176 = vmatprep.mubr.bf16.mxu0 0
  %177 = vmatmul.mubr.bf16.gmra.mrb[0].mxu0 %v96
  %v178 = vpop.f32.mrb[0].mxu0
  %v179 = vadd.f32 0.0, %v178
  %v180 = vpop.f32.mrb[0].mxu0
  %v181 = vpop.f32.mrb[0].mxu0
  %v182 = vadd.f32 0.0, %v181
  %v183 = vpop.f32.mrb[0].mxu0
  %184 = vmatprep.mubr.bf16.mxu0 0
  %185 = vmatmul.mubr.bf16.gmra.mrb[0].mxu0 %v99
  %v186 = vpop.f32.mrb[0].mxu0
  %v187 = vadd.f32 0.0, %v186
  %v188 = vpop.f32.mrb[0].mxu0
  %v189 = vpop.f32.mrb[0].mxu0
  %v190 = vadd.f32 0.0, %v189
  %v191 = vpop.f32.mrb[0].mxu0
  %192 = vmatprep.mubr.bf16.mxu0 0
  %193 = vmatmul.mubr.bf16.gmra.mrb[0].mxu0 %v102
  %v194 = vpop.f32.mrb[0].mxu0
  %v195 = vadd.f32 0.0, %v194
  %v196 = vpop.f32.mrb[0].mxu0
  %v197 = vpop.f32.mrb[0].mxu0
  %v198 = vadd.f32 0.0, %v197
  %v199 = vpop.f32.mrb[0].mxu0
  %200 = vdwg.mxu0
  %vm201 = vcmask 261120
  %202 = vst.msk [vmem:[%s2] sm:$0xff] %vm201, %v139
  %203 = vst.msk [vmem:[%s2 + $0x8] sm:$0xff] %vm201, %v142
  %204 = vst.msk [vmem:[%s2 + $0x10] sm:$0xff] %vm201, %v147
  %205 = vst.msk [vmem:[%s2 + $0x18] sm:$0xff] %vm201, %v150
  %206 = vst.msk [vmem:[%s2 + $0x20] sm:$0xff] %vm201, %v155
  %207 = vst.msk [vmem:[%s2 + $0x28] sm:$0xff] %vm201, %v158
  %208 = vst.msk [vmem:[%s2 + $0x30] sm:$0xff] %vm201, %v163
  %209 = vst.msk [vmem:[%s2 + $0x38] sm:$0xff] %vm201, %v166
  %210 = vst.msk [vmem:[%s2 + $0x40] sm:$0xff] %vm201, %v171
  %211 = vst.msk [vmem:[%s2 + $0x48] sm:$0xff] %vm201, %v174
  %212 = vst.msk [vmem:[%s2 + $0x50] sm:$0xff] %vm201, %v179
  %213 = vst.msk [vmem:[%s2 + $0x58] sm:$0xff] %vm201, %v182
  %214 = vst.msk [vmem:[%s2 + $0x60] sm:$0xff] %vm201, %v187
  %215 = vst.msk [vmem:[%s2 + $0x68] sm:$0xff] %vm201, %v190
  %216 = vst.msk [vmem:[%s2 + $0x70] sm:$0xff] %vm201, %v195
  %217 = vst.msk [vmem:[%s2 + $0x78] sm:$0xff] %vm201, %v198
  %v218 = vsel %vm201, %v139, 0.0
  %v219 = vsel %vm201, %v142, 0.0
  %v220 = vadd.f32 %v218, %v219
  %v221 = vsel %vm201, %v147, 0.0
  %v222 = vadd.f32 %v220, %v221
  %v223 = vsel %vm201, %v150, 0.0
  %v224 = vadd.f32 %v222, %v223
  %v225 = vsel %vm201, %v155, 0.0
  %v226 = vadd.f32 %v224, %v225
  %v227 = vsel %vm201, %v158, 0.0
  %v228 = vadd.f32 %v226, %v227
  %v229 = vsel %vm201, %v163, 0.0
  %v230 = vadd.f32 %v228, %v229
  %v231 = vsel %vm201, %v166, 0.0
  %v232 = vadd.f32 %v230, %v231
  %v233 = vsel %vm201, %v171, 0.0
  %v234 = vadd.f32 %v232, %v233
  %v235 = vsel %vm201, %v174, 0.0
  %v236 = vadd.f32 %v234, %v235
  %v237 = vsel %vm201, %v179, 0.0
  %v238 = vadd.f32 %v236, %v237
  %v239 = vsel %vm201, %v182, 0.0
  %v240 = vadd.f32 %v238, %v239
  %v241 = vsel %vm201, %v187, 0.0
  %v242 = vadd.f32 %v240, %v241
  %v243 = vsel %vm201, %v190, 0.0
  %v244 = vadd.f32 %v242, %v243
  %v245 = vsel %vm201, %v195, 0.0
  %v246 = vadd.f32 %v244, %v245
  %v247 = vsel %vm201, %v198, 0.0
  %v248 = vadd.f32 %v246, %v247
  %v249 = vrot.slane %v248, 4
  %v250 = vadd.f32 %v248, %v249
  %v251 = vrot.slane %v250, 2
  %v252 = vadd.f32 %v250, %v251
  %v253 = vrot.slane %v252, 1
  %v254 = vadd.f32 %v252, %v253
  %vm255 = vcmask 253952
  %256 = vst.msk [vmem:[%s3] sm:$0x1] %vm255, %v254
  %v257 = vmul.f32 %v139, %v139
  %v258 = vmul.f32 %v142, %v142
  %v259 = vmul.f32 %v147, %v147
  %v260 = vmul.f32 %v150, %v150
  %v261 = vmul.f32 %v155, %v155
  %v262 = vmul.f32 %v158, %v158
  %v263 = vmul.f32 %v163, %v163
  %v264 = vmul.f32 %v166, %v166
  %v265 = vmul.f32 %v171, %v171
  %v266 = vmul.f32 %v174, %v174
  %v267 = vmul.f32 %v179, %v179
  %v268 = vmul.f32 %v182, %v182
  %v269 = vmul.f32 %v187, %v187
  %v270 = vmul.f32 %v190, %v190
  %v271 = vmul.f32 %v195, %v195
  %v272 = vmul.f32 %v198, %v198
  %v273 = vsel %vm201, %v257, 0.0
  %v274 = vsel %vm201, %v258, 0.0
  %v275 = vadd.f32 %v273, %v274
  %v276 = vsel %vm201, %v259, 0.0
  %v277 = vadd.f32 %v275, %v276
  %v278 = vsel %vm201, %v260, 0.0
  %v279 = vadd.f32 %v277, %v278
  %v280 = vsel %vm201, %v261, 0.0
  %v281 = vadd.f32 %v279, %v280
  %v282 = vsel %vm201, %v262, 0.0
  %v283 = vadd.f32 %v281, %v282
  %v284 = vsel %vm201, %v263, 0.0
  %v285 = vadd.f32 %v283, %v284
  %v286 = vsel %vm201, %v264, 0.0
  %v287 = vadd.f32 %v285, %v286
  %v288 = vsel %vm201, %v265, 0.0
  %v289 = vadd.f32 %v287, %v288
  %v290 = vsel %vm201, %v266, 0.0
  %v291 = vadd.f32 %v289, %v290
  %v292 = vsel %vm201, %v267, 0.0
  %v293 = vadd.f32 %v291, %v292
  %v294 = vsel %vm201, %v268, 0.0
  %v295 = vadd.f32 %v293, %v294
  %v296 = vsel %vm201, %v269, 0.0
  %v297 = vadd.f32 %v295, %v296
  %v298 = vsel %vm201, %v270, 0.0
  %v299 = vadd.f32 %v297, %v298
  %v300 = vsel %vm201, %v271, 0.0
  %v301 = vadd.f32 %v299, %v300
  %v302 = vsel %vm201, %v272, 0.0
  %v303 = vadd.f32 %v301, %v302
  %v304 = vrot.slane %v303, 4
  %v305 = vadd.f32 %v303, %v304
  %v306 = vrot.slane %v305, 2
  %v307 = vadd.f32 %v305, %v306
  %v308 = vrot.slane %v307, 1
  %v309 = vadd.f32 %v307, %v308
  %310 = vst.msk [vmem:[%s4] sm:$0x1] %vm255, %v309
  // Predicated region
  $region10: #{_lambda_.51} parent=0 // pred_check
    _
  $region11: #{_lambda_.51} parent=0 // pred_check_branch
    %312 = sbr.rel (0) target = $region13
  $region12: #{_lambda_.51} parent=0 // pred_region
    _
  $region13: #{_lambda_.51} parent=0 // pred_fallthru
    _
  // Predicated region
  $region14: #{_lambda_.51} parent=0 // pred_check
    _
  $region15: #{_lambda_.51} parent=0 // pred_check_branch
    %314 = sbr.rel (0) target = $region17
  $region16: #{_lambda_.51} parent=0 // pred_region
    _
  $region17: #{_lambda_.51} parent=0 // pred_fallthru
    _
  // Predicated region
  $region18: #{_lambda_.51} parent=0 // pred_check
    _
  $region19: #{_lambda_.51} parent=0 // pred_check_branch
    %316 = sbr.rel (0) target = $region21
  $region20: #{_lambda_.51} parent=0 // pred_region
    _
  $region21: #{_lambda_.51} parent=0 // pred_fallthru
    _
  // Predicated region
  $region22: #{_lambda_.51} parent=0 // pred_check
    _
  $region23: #{_lambda_.51} parent=0 // pred_check_branch
    %318 = sbr.rel (0) target = $region25
  $region24: #{_lambda_.51} parent=0 // pred_region
    _
  $region25: #{_lambda_.51} parent=0 // pred_fallthru
    _
  // Predicated region
  $region26: #{_lambda_.51} parent=0 // pred_check
    _
  $region27: #{_lambda_.51} parent=0 // pred_check_branch
    %320 = sbr.rel (0) target = $region29
  $region28: #{_lambda_.51} parent=0 // pred_region
    _
  $region29: #{_lambda_.51} parent=0 // pred_fallthru
    _
  // Predicated region
  $region30: #{_lambda_.51} parent=0 // pred_check
    _
  $region31: #{_lambda_.51} parent=0 // pred_check_branch
    %322 = sbr.rel (0) target = $region33
  $region32: #{_lambda_.51} parent=0 // pred_region
    _
  $region33: #{_lambda_.51} parent=0 // pred_fallthru
    _

// kernel: _lambda_.52
$region0: #{_lambda_.52}
  #allocation0 [shape = 'u32[]', space=smem, size = 0x4, offset = 0x4, fixed_abs, tag = 'smem constant byte address 0x4 - core index']
  #allocation1 [shape = 'u32[144,128]{1,0:T(1,128)}', space=vmem, size = 0x12000, scoped, tag = 'internal scratch']
  %s0 = inlined_call_operand.vmem [shape: f32[128,32], index: 0, kind: input, shape index: {}, may-alias: {0,6}]
  %s1 = inlined_call_operand.vmem [shape: f32[1,32], index: 1, kind: input, shape index: {}]
  %s2 = inlined_call_operand.vmem [shape: f32[1,32], index: 2, kind: input, shape index: {}]
  %s3 = inlined_call_operand.vmem [shape: f32[128,32], index: 3, kind: input, shape index: {}]
  %s4 = inlined_call_operand.vmem [shape: f32[1,32], index: 4, kind: input, shape index: {}]
  %s5 = inlined_call_operand.vmem [shape: f32[1,32], index: 5, kind: input, shape index: {}]
  %s6 = inlined_call_operand.vmem [shape: f32[128,32], index: 6, kind: output, shape index: {}, may-alias: {0,6}]
  %s7 = sld [smem:[#allocation0]]
  $region34: #{_lambda_.52} parent=0
    _
  %s9 = ssub.s32 1, %s7
  %s10 = scalar_select 0, %s9, %s7
  // Predicated region
  $region2: #{_lambda_.52} parent=0 // pred_check
    _
  $region3: #{_lambda_.52} parent=0 // pred_check_branch
    %12 = sbr.rel (0) target = $region5
  $region4: #{_lambda_.52} parent=0 // pred_region
    _
  $region5: #{_lambda_.52} parent=0 // pred_fallthru
    _
  // Predicated region
  $region6: #{_lambda_.52} parent=0 // pred_check
    _
  $region7: #{_lambda_.52} parent=0 // pred_check_branch
    %14 = sbr.rel (0) target = $region9
  $region8: #{_lambda_.52} parent=0 // pred_region
    _
  $region9: #{_lambda_.52} parent=0 // pred_fallthru
    _
  // Predicated region
  $region10: #{_lambda_.52} parent=0 // pred_check
    _
  $region11: #{_lambda_.52} parent=0 // pred_check_branch
    %16 = sbr.rel (0) target = $region13
  $region12: #{_lambda_.52} parent=0 // pred_region
    _
  $region13: #{_lambda_.52} parent=0 // pred_fallthru
    _
  // Predicated region
  $region14: #{_lambda_.52} parent=0 // pred_check
    _
  $region15: #{_lambda_.52} parent=0 // pred_check_branch
    %18 = sbr.rel (0) target = $region17
  $region16: #{_lambda_.52} parent=0 // pred_region
    _
  $region17: #{_lambda_.52} parent=0 // pred_fallthru
    _
  // Predicated region
  $region18: #{_lambda_.52} parent=0 // pred_check
    _
  $region19: #{_lambda_.52} parent=0 // pred_check_branch
    %20 = sbr.rel (0) target = $region21
  $region20: #{_lambda_.52} parent=0 // pred_region
    _
  $region21: #{_lambda_.52} parent=0 // pred_fallthru
    _
  // Predicated region
  $region22: #{_lambda_.52} parent=0 // pred_check
    _
  $region23: #{_lambda_.52} parent=0 // pred_check_branch
    %22 = sbr.rel (0) target = $region25
  $region24: #{_lambda_.52} parent=0 // pred_region
    _
  $region25: #{_lambda_.52} parent=0 // pred_fallthru
    _
  %v23 = vld [vmem:[%s0] sm:$0xff]
  %v24 = vld [vmem:[%s0 + $0x8] sm:$0xff]
  %v25 = vld [vmem:[%s0 + $0x10] sm:$0xff]
  %v26 = vld [vmem:[%s0 + $0x18] sm:$0xff]
  %v27 = vld [vmem:[%s0 + $0x20] sm:$0xff]
  %v28 = vld [vmem:[%s0 + $0x28] sm:$0xff]
  %v29 = vld [vmem:[%s0 + $0x30] sm:$0xff]
  %v30 = vld [vmem:[%s0 + $0x38] sm:$0xff]
  %v31 = vld [vmem:[%s0 + $0x40] sm:$0xff]
  %v32 = vld [vmem:[%s0 + $0x48] sm:$0xff]
  %v33 = vld [vmem:[%s0 + $0x50] sm:$0xff]
  %v34 = vld [vmem:[%s0 + $0x58] sm:$0xff]
  %v35 = vld [vmem:[%s0 + $0x60] sm:$0xff]
  %v36 = vld [vmem:[%s0 + $0x68] sm:$0xff]
  %v37 = vld [vmem:[%s0 + $0x70] sm:$0xff]
  %v38 = vld [vmem:[%s0 + $0x78] sm:$0xff]
  %v39 = vld [vmem:[%s1] sm:$0x1]
  %v41 = vlaneseq
  %v42 = vshrl.u32 %v41, 7
  %v43 = vsub.s32 0, %v42
  %v44 = vrot.slane %v39, %v43
  %v46 = vmul.f32 %v23, %v44
  %v47 = vmul.f32 %v24, %v44
  %v48 = vmul.f32 %v25, %v44
  %v49 = vmul.f32 %v26, %v44
  %v50 = vmul.f32 %v27, %v44
  %v51 = vmul.f32 %v28, %v44
  %v52 = vmul.f32 %v29, %v44
  %v53 = vmul.f32 %v30, %v44
  %v54 = vmul.f32 %v31, %v44
  %v55 = vmul.f32 %v32, %v44
  %v56 = vmul.f32 %v33, %v44
  %v57 = vmul.f32 %v34, %v44
  %v58 = vmul.f32 %v35, %v44
  %v59 = vmul.f32 %v36, %v44
  %v60 = vmul.f32 %v37, %v44
  %v61 = vmul.f32 %v38, %v44
  %v62 = vld [vmem:[%s2] sm:$0x1]
  %v64 = vlaneseq
  %v65 = vshrl.u32 %v64, 7
  %v66 = vsub.s32 0, %v65
  %v67 = vrot.slane %v62, %v66
  %v69 = vadd.f32 %v46, %v67
  %v70 = vadd.f32 %v47, %v67
  %v71 = vadd.f32 %v48, %v67
  %v72 = vadd.f32 %v49, %v67
  %v73 = vadd.f32 %v50, %v67
  %v74 = vadd.f32 %v51, %v67
  %v75 = vadd.f32 %v52, %v67
  %v76 = vadd.f32 %v53, %v67
  %v77 = vadd.f32 %v54, %v67
  %v78 = vadd.f32 %v55, %v67
  %v79 = vadd.f32 %v56, %v67
  %v80 = vadd.f32 %v57, %v67
  %v81 = vadd.f32 %v58, %v67
  %v82 = vadd.f32 %v59, %v67
  %v83 = vadd.f32 %v60, %v67
  %v84 = vadd.f32 %v61, %v67
  %v85 = vld [vmem:[%s3] sm:$0xff]
  %v86 = vld [vmem:[%s3 + $0x8] sm:$0xff]
  %v87 = vld [vmem:[%s3 + $0x10] sm:$0xff]
  %v88 = vld [vmem:[%s3 + $0x18] sm:$0xff]
  %v89 = vld [vmem:[%s3 + $0x20] sm:$0xff]
  %v90 = vld [vmem:[%s3 + $0x28] sm:$0xff]
  %v91 = vld [vmem:[%s3 + $0x30] sm:$0xff]
  %v92 = vld [vmem:[%s3 + $0x38] sm:$0xff]
  %v93 = vld [vmem:[%s3 + $0x40] sm:$0xff]
  %v94 = vld [vmem:[%s3 + $0x48] sm:$0xff]
  %v95 = vld [vmem:[%s3 + $0x50] sm:$0xff]
  %v96 = vld [vmem:[%s3 + $0x58] sm:$0xff]
  %v97 = vld [vmem:[%s3 + $0x60] sm:$0xff]
  %v98 = vld [vmem:[%s3 + $0x68] sm:$0xff]
  %v99 = vld [vmem:[%s3 + $0x70] sm:$0xff]
  %v100 = vld [vmem:[%s3 + $0x78] sm:$0xff]
  %v101 = vld [vmem:[%s4] sm:$0x1]
  %v103 = vlaneseq
  %v104 = vshrl.u32 %v103, 7
  %v105 = vsub.s32 0, %v104
  %v106 = vrot.slane %v101, %v105
  %v108 = vmul.f32 %v85, %v106
  %v109 = vmul.f32 %v86, %v106
  %v110 = vmul.f32 %v87, %v106
  %v111 = vmul.f32 %v88, %v106
  %v112 = vmul.f32 %v89, %v106
  %v113 = vmul.f32 %v90, %v106
  %v114 = vmul.f32 %v91, %v106
  %v115 = vmul.f32 %v92, %v106
  %v116 = vmul.f32 %v93, %v106
  %v117 = vmul.f32 %v94, %v106
  %v118 = vmul.f32 %v95, %v106
  %v119 = vmul.f32 %v96, %v106
  %v120 = vmul.f32 %v97, %v106
  %v121 = vmul.f32 %v98, %v106
  %v122 = vmul.f32 %v99, %v106
  %v123 = vmul.f32 %v100, %v106
  %v124 = vadd.f32 %v69, %v108
  %v125 = vadd.f32 %v70, %v109
  %v126 = vadd.f32 %v71, %v110
  %v127 = vadd.f32 %v72, %v111
  %v128 = vadd.f32 %v73, %v112
  %v129 = vadd.f32 %v74, %v113
  %v130 = vadd.f32 %v75, %v114
  %v131 = vadd.f32 %v76, %v115
  %v132 = vadd.f32 %v77, %v116
  %v133 = vadd.f32 %v78, %v117
  %v134 = vadd.f32 %v79, %v118
  %v135 = vadd.f32 %v80, %v119
  %v136 = vadd.f32 %v81, %v120
  %v137 = vadd.f32 %v82, %v121
  %v138 = vadd.f32 %v83, %v122
  %v139 = vadd.f32 %v84, %v123
  %v140 = vld [vmem:[%s5] sm:$0x1]
  %v142 = vlaneseq
  %v143 = vshrl.u32 %v142, 7
  %v144 = vsub.s32 0, %v143
  %v145 = vrot.slane %v140, %v144
  %v147 = vadd.f32 %v124, %v145
  %v148 = vadd.f32 %v125, %v145
  %v149 = vadd.f32 %v126, %v145
  %v150 = vadd.f32 %v127, %v145
  %v151 = vadd.f32 %v128, %v145
  %v152 = vadd.f32 %v129, %v145
  %v153 = vadd.f32 %v130, %v145
  %v154 = vadd.f32 %v131, %v145
  %v155 = vadd.f32 %v132, %v145
  %v156 = vadd.f32 %v133, %v145
  %v157 = vadd.f32 %v134, %v145
  %v158 = vadd.f32 %v135, %v145
  %v159 = vadd.f32 %v136, %v145
  %v160 = vadd.f32 %v137, %v145
  %v161 = vadd.f32 %v138, %v145
  %v162 = vadd.f32 %v139, %v145
  %v163 = vmax.f32 %v147, 0.0
  %v164 = vmax.f32 %v148, 0.0
  %v165 = vmax.f32 %v149, 0.0
  %v166 = vmax.f32 %v150, 0.0
  %v167 = vmax.f32 %v151, 0.0
  %v168 = vmax.f32 %v152, 0.0
  %v169 = vmax.f32 %v153, 0.0
  %v170 = vmax.f32 %v154, 0.0
  %v171 = vmax.f32 %v155, 0.0
  %v172 = vmax.f32 %v156, 0.0
  %v173 = vmax.f32 %v157, 0.0
  %v174 = vmax.f32 %v158, 0.0
  %v175 = vmax.f32 %v159, 0.0
  %v176 = vmax.f32 %v160, 0.0
  %v177 = vmax.f32 %v161, 0.0
  %v178 = vmax.f32 %v162, 0.0
  %vm179 = vcmask 261120
  %180 = vst.msk [vmem:[%s6] sm:$0xff] %vm179, %v163
  %181 = vst.msk [vmem:[%s6 + $0x8] sm:$0xff] %vm179, %v164
  %182 = vst.msk [vmem:[%s6 + $0x10] sm:$0xff] %vm179, %v165
  %183 = vst.msk [vmem:[%s6 + $0x18] sm:$0xff] %vm179, %v166
  %184 = vst.msk [vmem:[%s6 + $0x20] sm:$0xff] %vm179, %v167
  %185 = vst.msk [vmem:[%s6 + $0x28] sm:$0xff] %vm179, %v168
  %186 = vst.msk [vmem:[%s6 + $0x30] sm:$0xff] %vm179, %v169
  %187 = vst.msk [vmem:[%s6 + $0x38] sm:$0xff] %vm179, %v170
  %188 = vst.msk [vmem:[%s6 + $0x40] sm:$0xff] %vm179, %v171
  %189 = vst.msk [vmem:[%s6 + $0x48] sm:$0xff] %vm179, %v172
  %190 = vst.msk [vmem:[%s6 + $0x50] sm:$0xff] %vm179, %v173
  %191 = vst.msk [vmem:[%s6 + $0x58] sm:$0xff] %vm179, %v174
  %192 = vst.msk [vmem:[%s6 + $0x60] sm:$0xff] %vm179, %v175
  %193 = vst.msk [vmem:[%s6 + $0x68] sm:$0xff] %vm179, %v176
  %194 = vst.msk [vmem:[%s6 + $0x70] sm:$0xff] %vm179, %v177
  %195 = vst.msk [vmem:[%s6 + $0x78] sm:$0xff] %vm179, %v178
  // Predicated region
  $region26: #{_lambda_.52} parent=0 // pred_check
    _
  $region27: #{_lambda_.52} parent=0 // pred_check_branch
    %197 = sbr.rel (0) target = $region29
  $region28: #{_lambda_.52} parent=0 // pred_region
    _
  $region29: #{_lambda_.52} parent=0 // pred_fallthru
    _
  // Predicated region
  $region30: #{_lambda_.52} parent=0 // pred_check
    _
  $region31: #{_lambda_.52} parent=0 // pred_check_branch
    %199 = sbr.rel (0) target = $region33
  $region32: #{_lambda_.52} parent=0 // pred_region
    _
  $region33: #{_lambda_.52} parent=0 // pred_fallthru
    _

// kernel: _lambda_.60
$region0: #{_lambda_.60}
  #allocation0 [shape = 'u32[]', space=smem, size = 0x4, offset = 0x4, fixed_abs, tag = 'smem constant byte address 0x4 - core index']
  #allocation1 [shape = 'u32[144,128]{1,0:T(1,128)}', space=vmem, size = 0x12000, scoped, tag = 'internal scratch']
  %s0 = inlined_call_operand.vmem [shape: bf16[32,32], index: 0, kind: input, shape index: {}]
  %s1 = inlined_call_operand.vmem [shape: bf16[32,64], index: 1, kind: input, shape index: {}]
  %s2 = inlined_call_operand.vmem [shape: f32[32,64], index: 2, kind: output, shape index: {0}]
  %s3 = inlined_call_operand.vmem [shape: f32[1,1,64], index: 3, kind: output, shape index: {1}]
  %s4 = inlined_call_operand.vmem [shape: f32[1,1,64], index: 4, kind: output, shape index: {2}]
  %5 = xla_tuple %s2, %s3, %s4
  %s6 = sld [smem:[#allocation0]]
  $region34: #{_lambda_.60} parent=0
    _
  %s8 = ssub.s32 1, %s6
  %s9 = scalar_select 0, %s8, %s6
  // Predicated region
  $region2: #{_lambda_.60} parent=0 // pred_check
    _
  $region3: #{_lambda_.60} parent=0 // pred_check_branch
    %11 = sbr.rel (0) target = $region5
  $region4: #{_lambda_.60} parent=0 // pred_region
    _
  $region5: #{_lambda_.60} parent=0 // pred_fallthru
    _
  // Predicated region
  $region6: #{_lambda_.60} parent=0 // pred_check
    _
  $region7: #{_lambda_.60} parent=0 // pred_check_branch
    %13 = sbr.rel (0) target = $region9
  $region8: #{_lambda_.60} parent=0 // pred_region
    _
  $region9: #{_lambda_.60} parent=0 // pred_fallthru
    _
  %v15 = vld [vmem:[%s0] sm:$0xf]
  %v16 = vld [vmem:[%s0 + $0x4] sm:$0xf]
  %v17 = vld [vmem:[%s0 + $0x8] sm:$0xf]
  %v18 = vld [vmem:[%s0 + $0xc] sm:$0xf]
  %v19 = vld [vmem:[%s1] sm:$0xf]
  %v20 = vld [vmem:[%s1 + $0x4] sm:$0xf]
  %v21 = vld [vmem:[%s1 + $0x8] sm:$0xf]
  %v22 = vld [vmem:[%s1 + $0xc] sm:$0xf]
  %v27 = vunpack.c.l.b16 %v15
  %v28 = vunpack.c.l.b16 %v16
  %v29 = vunpack.c.l.b16 %v17
  %v30 = vunpack.c.l.b16 %v18
  %v31 = vpack.c.b16 %v28, %v27
  %v32 = vpack.c.b16 %v30, %v29
  %v37 = vunpack.c.l.b16 %v19
  %v38 = vunpack.c.l.b16 %v20
  %v39 = vunpack.c.l.b16 %v21
  %v40 = vunpack.c.l.b16 %v22
  %v41 = vpack.c.b16 %v38, %v37
  %v42 = vpack.c.b16 %v40, %v39
  %vm45 = vcmask 261120
  %v47 = vsel %vm45, %v31, 0
  %v50 = vsel %vm45, %v32, 0
  %52 = vmatprep.subr.bf16.mxu0 0
  %53 = vmatpush1.bf16.msra.mxu0 %v41
  %54 = vmatprep.subr.bf16.mxu0 0
  %55 = vmatpush1.bf16.msra.mxu0 %v42
  %56 = vmatprep.subr.bf16.mxu0 0
  %57 = vmatpush1.bf16.msra.mxu0 0
  %58 = vmatprep.subr.bf16.mxu0 0
  %59 = vmatpush1.bf16.msra.mxu0 0
  %60 = vmatprep.subr.bf16.mxu0 0
  %61 = vmatpush1.bf16.msra.mxu0 0
  %62 = vmatprep.subr.bf16.mxu0 0
  %63 = vmatpush1.bf16.msra.mxu0 0
  %64 = vmatprep.subr.bf16.mxu0 0
  %65 = vmatpush1.bf16.msra.mxu0 0
  %66 = vmatprep.subr.bf16.mxu0 0
  %67 = vmatpush1.bf16.msra.mxu0 0
  %68 = vmatprep.subr.bf16.mxu0 0
  %69 = vmatpush1.bf16.msra.mxu0 0
  %70 = vmatprep.subr.bf16.mxu0 0
  %71 = vmatpush1.bf16.msra.mxu0 0
  %72 = vmatprep.subr.bf16.mxu0 0
  %73 = vmatpush1.bf16.msra.mxu0 0
  %74 = vmatprep.subr.bf16.mxu0 0
  %75 = vmatpush1.bf16.msra.mxu0 0
  %76 = vmatprep.subr.bf16.mxu0 0
  %77 = vmatpush1.bf16.msra.mxu0 0
  %78 = vmatprep.subr.bf16.mxu0 0
  %79 = vmatpush1.bf16.msra.mxu0 0
  %80 = vmatprep.subr.bf16.mxu0 0
  %81 = vmatpush1.bf16.msra.mxu0 0
  %82 = vmatprep.subr.bf16.mxu0 0
  %83 = vmatpush1.bf16.msra.mxu0 0
  %84 = vmatprep.mubr.bf16.mxu0 0
  %85 = vmatmul.mubr.bf16.gmra.mrb[0].mxu0 %v47
  %v86 = vpop.f32.mrb[0].mxu0
  %v87 = vadd.f32 0.0, %v86
  %v88 = vpop.f32.mrb[0].mxu0
  %v89 = vpop.f32.mrb[0].mxu0
  %v90 = vadd.f32 0.0, %v89
  %v91 = vpop.f32.mrb[0].mxu0
  %92 = vmatprep.mubr.bf16.mxu0 0
  %93 = vmatmul.mubr.bf16.gmra.mrb[0].mxu0 %v50
  %v94 = vpop.f32.mrb[0].mxu0
  %v95 = vadd.f32 0.0, %v94
  %v96 = vpop.f32.mrb[0].mxu0
  %v97 = vpop.f32.mrb[0].mxu0
  %v98 = vadd.f32 0.0, %v97
  %v99 = vpop.f32.mrb[0].mxu0
  %100 = vdwg.mxu0
  %vm101 = vcmask 523264
  %102 = vst.msk [vmem:[%s2] sm:$0xff] %vm101, %v87
  %103 = vst.msk [vmem:[%s2 + $0x8] sm:$0xff] %vm101, %v90
  %104 = vst.msk [vmem:[%s2 + $0x10] sm:$0xff] %vm101, %v95
  %105 = vst.msk [vmem:[%s2 + $0x18] sm:$0xff] %vm101, %v98
  %v106 = vsel %vm101, %v87, 0.0
  %v107 = vsel %vm101, %v90, 0.0
  %v108 = vadd.f32 %v106, %v107
  %v109 = vsel %vm101, %v95, 0.0
  %v110 = vadd.f32 %v108, %v109
  %v111 = vsel %vm101, %v98, 0.0
  %v112 = vadd.f32 %v110, %v111
  %v113 = vrot.slane %v112, 4
  %v114 = vadd.f32 %v112, %v113
  %v115 = vrot.slane %v114, 2
  %v116 = vadd.f32 %v114, %v115
  %v117 = vrot.slane %v116, 1
  %v118 = vadd.f32 %v116, %v117
  %vm119 = vcmask 516096
  %120 = vst.msk [vmem:[%s3] sm:$0x1] %vm119, %v118
  %v121 = vmul.f32 %v87, %v87
  %v122 = vmul.f32 %v90, %v90
  %v123 = vmul.f32 %v95, %v95
  %v124 = vmul.f32 %v98, %v98
  %v125 = vsel %vm101, %v121, 0.0
  %v126 = vsel %vm101, %v122, 0.0
  %v127 = vadd.f32 %v125, %v126
  %v128 = vsel %vm101, %v123, 0.0
  %v129 = vadd.f32 %v127, %v128
  %v130 = vsel %vm101, %v124, 0.0
  %v131 = vadd.f32 %v129, %v130
  %v132 = vrot.slane %v131, 4
  %v133 = vadd.f32 %v131, %v132
  %v134 = vrot.slane %v133, 2
  %v135 = vadd.f32 %v133, %v134
  %v136 = vrot.slane %v135, 1
  %v137 = vadd.f32 %v135, %v136
  %138 = vst.msk [vmem:[%s4] sm:$0x1] %vm119, %v137
  // Predicated region
  $region10: #{_lambda_.60} parent=0 // pred_check
    _
  $region11: #{_lambda_.60} parent=0 // pred_check_branch
    %140 = sbr.rel (0) target = $region13
  $region12: #{_lambda_.60} parent=0 // pred_region
    _
  $region13: #{_lambda_.60} parent=0 // pred_fallthru
    _
  // Predicated region
  $region14: #{_lambda_.60} parent=0 // pred_check
    _
  $region15: #{_lambda_.60} parent=0 // pred_check_branch
    %142 = sbr.rel (0) target = $region17
  $region16: #{_lambda_.60} parent=0 // pred_region
    _
  $region17: #{_lambda_.60} parent=0 // pred_fallthru
    _
  // Predicated region
  $region18: #{_lambda_.60} parent=0 // pred_check
    _
  $region19: #{_lambda_.60} parent=0 // pred_check_branch
    %144 = sbr.rel (0) target = $region21
  $region20: #{_lambda_.60} parent=0 // pred_region
    _
  $region21: #{_lambda_.60} parent=0 // pred_fallthru
    _
  // Predicated region
  $region22: #{_lambda_.60} parent=0 // pred_check
    _
  $region23: #{_lambda_.60} parent=0 // pred_check_branch
    %146 = sbr.rel (0) target = $region25
  $region24: #{_lambda_.60} parent=0 // pred_region
    _
  $region25: #{_lambda_.60} parent=0 // pred_fallthru
    _
  // Predicated region
  $region26: #{_lambda_.60} parent=0 // pred_check
    _
  $region27: #{_lambda_.60} parent=0 // pred_check_branch
    %148 = sbr.rel (0) target = $region29
  $region28: #{_lambda_.60} parent=0 // pred_region
    _
  $region29: #{_lambda_.60} parent=0 // pred_fallthru
    _
  // Predicated region
  $region30: #{_lambda_.60} parent=0 // pred_check
    _
  $region31: #{_lambda_.60} parent=0 // pred_check_branch
    %150 = sbr.rel (0) target = $region33
  $region32: #{_lambda_.60} parent=0 // pred_region
    _
  $region33: #{_lambda_.60} parent=0 // pred_fallthru
    _

// kernel: _lambda_.56
$region0: #{_lambda_.56}
  #allocation0 [shape = 'u32[]', space=smem, size = 0x4, offset = 0x4, fixed_abs, tag = 'smem constant byte address 0x4 - core index']
  #allocation1 [shape = 'u32[144,128]{1,0:T(1,128)}', space=vmem, size = 0x12000, scoped, tag = 'internal scratch']
  %s0 = inlined_call_operand.vmem [shape: f32[128,32], index: 0, kind: input, shape index: {}, may-alias: {0,4}]
  %s1 = inlined_call_operand.vmem [shape: f32[1,32], index: 1, kind: input, shape index: {}]
  %s2 = inlined_call_operand.vmem [shape: f32[1,32], index: 2, kind: input, shape index: {}]
  %s3 = inlined_call_operand.vmem [shape: f32[128,32], index: 3, kind: input, shape index: {}]
  %s4 = inlined_call_operand.vmem [shape: f32[128,32], index: 4, kind: output, shape index: {}, may-alias: {0,4}]
  %s5 = sld [smem:[#allocation0]]
  $region26: #{_lambda_.56} parent=0
    _
  %s7 = ssub.s32 1, %s5
  %s8 = scalar_select 0, %s7, %s5
  // Predicated region
  $region2: #{_lambda_.56} parent=0 // pred_check
    _
  $region3: #{_lambda_.56} parent=0 // pred_check_branch
    %10 = sbr.rel (0) target = $region5
  $region4: #{_lambda_.56} parent=0 // pred_region
    _
  $region5: #{_lambda_.56} parent=0 // pred_fallthru
    _
  // Predicated region
  $region6: #{_lambda_.56} parent=0 // pred_check
    _
  $region7: #{_lambda_.56} parent=0 // pred_check_branch
    %12 = sbr.rel (0) target = $region9
  $region8: #{_lambda_.56} parent=0 // pred_region
    _
  $region9: #{_lambda_.56} parent=0 // pred_fallthru
    _
  // Predicated region
  $region10: #{_lambda_.56} parent=0 // pred_check
    _
  $region11: #{_lambda_.56} parent=0 // pred_check_branch
    %14 = sbr.rel (0) target = $region13
  $region12: #{_lambda_.56} parent=0 // pred_region
    _
  $region13: #{_lambda_.56} parent=0 // pred_fallthru
    _
  // Predicated region
  $region14: #{_lambda_.56} parent=0 // pred_check
    _
  $region15: #{_lambda_.56} parent=0 // pred_check_branch
    %16 = sbr.rel (0) target = $region17
  $region16: #{_lambda_.56} parent=0 // pred_region
    _
  $region17: #{_lambda_.56} parent=0 // pred_fallthru
    _
  %v17 = vld [vmem:[%s0] sm:$0xff]
  %v18 = vld [vmem:[%s0 + $0x8] sm:$0xff]
  %v19 = vld [vmem:[%s0 + $0x10] sm:$0xff]
  %v20 = vld [vmem:[%s0 + $0x18] sm:$0xff]
  %v21 = vld [vmem:[%s0 + $0x20] sm:$0xff]
  %v22 = vld [vmem:[%s0 + $0x28] sm:$0xff]
  %v23 = vld [vmem:[%s0 + $0x30] sm:$0xff]
  %v24 = vld [vmem:[%s0 + $0x38] sm:$0xff]
  %v25 = vld [vmem:[%s0 + $0x40] sm:$0xff]
  %v26 = vld [vmem:[%s0 + $0x48] sm:$0xff]
  %v27 = vld [vmem:[%s0 + $0x50] sm:$0xff]
  %v28 = vld [vmem:[%s0 + $0x58] sm:$0xff]
  %v29 = vld [vmem:[%s0 + $0x60] sm:$0xff]
  %v30 = vld [vmem:[%s0 + $0x68] sm:$0xff]
  %v31 = vld [vmem:[%s0 + $0x70] sm:$0xff]
  %v32 = vld [vmem:[%s0 + $0x78] sm:$0xff]
  %v33 = vld [vmem:[%s1] sm:$0x1]
  %v35 = vlaneseq
  %v36 = vshrl.u32 %v35, 7
  %v37 = vsub.s32 0, %v36
  %v38 = vrot.slane %v33, %v37
  %v40 = vmul.f32 %v17, %v38
  %v41 = vmul.f32 %v18, %v38
  %v42 = vmul.f32 %v19, %v38
  %v43 = vmul.f32 %v20, %v38
  %v44 = vmul.f32 %v21, %v38
  %v45 = vmul.f32 %v22, %v38
  %v46 = vmul.f32 %v23, %v38
  %v47 = vmul.f32 %v24, %v38
  %v48 = vmul.f32 %v25, %v38
  %v49 = vmul.f32 %v26, %v38
  %v50 = vmul.f32 %v27, %v38
  %v51 = vmul.f32 %v28, %v38
  %v52 = vmul.f32 %v29, %v38
  %v53 = vmul.f32 %v30, %v38
  %v54 = vmul.f32 %v31, %v38
  %v55 = vmul.f32 %v32, %v38
  %v56 = vld [vmem:[%s2] sm:$0x1]
  %v58 = vlaneseq
  %v59 = vshrl.u32 %v58, 7
  %v60 = vsub.s32 0, %v59
  %v61 = vrot.slane %v56, %v60
  %v63 = vadd.f32 %v40, %v61
  %v64 = vadd.f32 %v41, %v61
  %v65 = vadd.f32 %v42, %v61
  %v66 = vadd.f32 %v43, %v61
  %v67 = vadd.f32 %v44, %v61
  %v68 = vadd.f32 %v45, %v61
  %v69 = vadd.f32 %v46, %v61
  %v70 = vadd.f32 %v47, %v61
  %v71 = vadd.f32 %v48, %v61
  %v72 = vadd.f32 %v49, %v61
  %v73 = vadd.f32 %v50, %v61
  %v74 = vadd.f32 %v51, %v61
  %v75 = vadd.f32 %v52, %v61
  %v76 = vadd.f32 %v53, %v61
  %v77 = vadd.f32 %v54, %v61
  %v78 = vadd.f32 %v55, %v61
  %v79 = vld [vmem:[%s3] sm:$0xff]
  %v80 = vld [vmem:[%s3 + $0x8] sm:$0xff]
  %v81 = vld [vmem:[%s3 + $0x10] sm:$0xff]
  %v82 = vld [vmem:[%s3 + $0x18] sm:$0xff]
  %v83 = vld [vmem:[%s3 + $0x20] sm:$0xff]
  %v84 = vld [vmem:[%s3 + $0x28] sm:$0xff]
  %v85 = vld [vmem:[%s3 + $0x30] sm:$0xff]
  %v86 = vld [vmem:[%s3 + $0x38] sm:$0xff]
  %v87 = vld [vmem:[%s3 + $0x40] sm:$0xff]
  %v88 = vld [vmem:[%s3 + $0x48] sm:$0xff]
  %v89 = vld [vmem:[%s3 + $0x50] sm:$0xff]
  %v90 = vld [vmem:[%s3 + $0x58] sm:$0xff]
  %v91 = vld [vmem:[%s3 + $0x60] sm:$0xff]
  %v92 = vld [vmem:[%s3 + $0x68] sm:$0xff]
  %v93 = vld [vmem:[%s3 + $0x70] sm:$0xff]
  %v94 = vld [vmem:[%s3 + $0x78] sm:$0xff]
  %v95 = vadd.f32 %v63, %v79
  %v96 = vadd.f32 %v64, %v80
  %v97 = vadd.f32 %v65, %v81
  %v98 = vadd.f32 %v66, %v82
  %v99 = vadd.f32 %v67, %v83
  %v100 = vadd.f32 %v68, %v84
  %v101 = vadd.f32 %v69, %v85
  %v102 = vadd.f32 %v70, %v86
  %v103 = vadd.f32 %v71, %v87
  %v104 = vadd.f32 %v72, %v88
  %v105 = vadd.f32 %v73, %v89
  %v106 = vadd.f32 %v74, %v90
  %v107 = vadd.f32 %v75, %v91
  %v108 = vadd.f32 %v76, %v92
  %v109 = vadd.f32 %v77, %v93
  %v110 = vadd.f32 %v78, %v94
  %v111 = vmax.f32 %v95, 0.0
  %v112 = vmax.f32 %v96, 0.0
  %v113 = vmax.f32 %v97, 0.0
  %v114 = vmax.f32 %v98, 0.0
  %v115 = vmax.f32 %v99, 0.0
  %v116 = vmax.f32 %v100, 0.0
  %v117 = vmax.f32 %v101, 0.0
  %v118 = vmax.f32 %v102, 0.0
  %v119 = vmax.f32 %v103, 0.0
  %v120 = vmax.f32 %v104, 0.0
  %v121 = vmax.f32 %v105, 0.0
  %v122 = vmax.f32 %v106, 0.0
  %v123 = vmax.f32 %v107, 0.0
  %v124 = vmax.f32 %v108, 0.0
  %v125 = vmax.f32 %v109, 0.0
  %v126 = vmax.f32 %v110, 0.0
  %vm127 = vcmask 261120
  %128 = vst.msk [vmem:[%s4] sm:$0xff] %vm127, %v111
  %129 = vst.msk [vmem:[%s4 + $0x8] sm:$0xff] %vm127, %v112
  %130 = vst.msk [vmem:[%s4 + $0x10] sm:$0xff] %vm127, %v113
  %131 = vst.msk [vmem:[%s4 + $0x18] sm:$0xff] %vm127, %v114
  %132 = vst.msk [vmem:[%s4 + $0x20] sm:$0xff] %vm127, %v115
  %133 = vst.msk [vmem:[%s4 + $0x28] sm:$0xff] %vm127, %v116
  %134 = vst.msk [vmem:[%s4 + $0x30] sm:$0xff] %vm127, %v117
  %135 = vst.msk [vmem:[%s4 + $0x38] sm:$0xff] %vm127, %v118
  %136 = vst.msk [vmem:[%s4 + $0x40] sm:$0xff] %vm127, %v119
  %137 = vst.msk [vmem:[%s4 + $0x48] sm:$0xff] %vm127, %v120
  %138 = vst.msk [vmem:[%s4 + $0x50] sm:$0xff] %vm127, %v121
  %139 = vst.msk [vmem:[%s4 + $0x58] sm:$0xff] %vm127, %v122
  %140 = vst.msk [vmem:[%s4 + $0x60] sm:$0xff] %vm127, %v123
  %141 = vst.msk [vmem:[%s4 + $0x68] sm:$0xff] %vm127, %v124
  %142 = vst.msk [vmem:[%s4 + $0x70] sm:$0xff] %vm127, %v125
  %143 = vst.msk [vmem:[%s4 + $0x78] sm:$0xff] %vm127, %v126
  // Predicated region
  $region18: #{_lambda_.56} parent=0 // pred_check
    _
  $region19: #{_lambda_.56} parent=0 // pred_check_branch
    %145 = sbr.rel (0) target = $region21
  $region20: #{_lambda_.56} parent=0 // pred_region
    _
  $region21: #{_lambda_.56} parent=0 // pred_fallthru
    _
  // Predicated region
  $region22: #{_lambda_.56} parent=0 // pred_check
    _
  $region23: #{_lambda_.56} parent=0 // pred_check_branch
    %147 = sbr.rel (0) target = $region25
  $region24: #{_lambda_.56} parent=0 // pred_region
    _
  $region25: #{_lambda_.56} parent=0 // pred_fallthru
    _

// kernel: _lambda_.58
$region0: #{_lambda_.58}
  #allocation0 [shape = 'u32[]', space=smem, size = 0x4, offset = 0x4, fixed_abs, tag = 'smem constant byte address 0x4 - core index']
  #allocation1 [shape = 'u32[144,128]{1,0:T(1,128)}', space=vmem, size = 0x12000, scoped, tag = 'internal scratch']
  %s0 = inlined_call_operand.vmem [shape: f32[32,64], index: 0, kind: input, shape index: {}, may-alias: {0,3}]
  %s1 = inlined_call_operand.vmem [shape: f32[1,64], index: 1, kind: input, shape index: {}]
  %s2 = inlined_call_operand.vmem [shape: f32[1,64], index: 2, kind: input, shape index: {}]
  %s3 = inlined_call_operand.vmem [shape: f32[32,64], index: 3, kind: output, shape index: {}, may-alias: {0,3}]
  %s4 = sld [smem:[#allocation0]]
  $region22: #{_lambda_.58} parent=0
    _
  %s6 = ssub.s32 1, %s4
  %s7 = scalar_select 0, %s6, %s4
  // Predicated region
  $region2: #{_lambda_.58} parent=0 // pred_check
    _
  $region3: #{_lambda_.58} parent=0 // pred_check_branch
    %9 = sbr.rel (0) target = $region5
  $region4: #{_lambda_.58} parent=0 // pred_region
    _
  $region5: #{_lambda_.58} parent=0 // pred_fallthru
    _
  // Predicated region
  $region6: #{_lambda_.58} parent=0 // pred_check
    _
  $region7: #{_lambda_.58} parent=0 // pred_check_branch
    %11 = sbr.rel (0) target = $region9
  $region8: #{_lambda_.58} parent=0 // pred_region
    _
  $region9: #{_lambda_.58} parent=0 // pred_fallthru
    _
  // Predicated region
  $region10: #{_lambda_.58} parent=0 // pred_check
    _
  $region11: #{_lambda_.58} parent=0 // pred_check_branch
    %13 = sbr.rel (0) target = $region13
  $region12: #{_lambda_.58} parent=0 // pred_region
    _
  $region13: #{_lambda_.58} parent=0 // pred_fallthru
    _
  %v14 = vld [vmem:[%s0] sm:$0xff]
  %v15 = vld [vmem:[%s0 + $0x8] sm:$0xff]
  %v16 = vld [vmem:[%s0 + $0x10] sm:$0xff]
  %v17 = vld [vmem:[%s0 + $0x18] sm:$0xff]
  %v18 = vld [vmem:[%s1] sm:$0x1]
  %v20 = vlaneseq
  %v21 = vshrl.u32 %v20, 7
  %v22 = vsub.s32 0, %v21
  %v23 = vrot.slane %v18, %v22
  %v25 = vmul.f32 %v14, %v23
  %v26 = vmul.f32 %v15, %v23
  %v27 = vmul.f32 %v16, %v23
  %v28 = vmul.f32 %v17, %v23
  %v29 = vld [vmem:[%s2] sm:$0x1]
  %v31 = vlaneseq
  %v32 = vshrl.u32 %v31, 7
  %v33 = vsub.s32 0, %v32
  %v34 = vrot.slane %v29, %v33
  %v36 = vadd.f32 %v25, %v34
  %v37 = vadd.f32 %v26, %v34
  %v38 = vadd.f32 %v27, %v34
  %v39 = vadd.f32 %v28, %v34
  %v40 = vmax.f32 %v36, 0.0
  %v41 = vmax.f32 %v37, 0.0
  %v42 = vmax.f32 %v38, 0.0
  %v43 = vmax.f32 %v39, 0.0
  %vm44 = vcmask 523264
  %45 = vst.msk [vmem:[%s3] sm:$0xff] %vm44, %v40
  %46 = vst.msk [vmem:[%s3 + $0x8] sm:$0xff] %vm44, %v41
  %47 = vst.msk [vmem:[%s3 + $0x10] sm:$0xff] %vm44, %v42
  %48 = vst.msk [vmem:[%s3 + $0x18] sm:$0xff] %vm44, %v43
  // Predicated region
  $region14: #{_lambda_.58} parent=0 // pred_check
    _
  $region15: #{_lambda_.58} parent=0 // pred_check_branch
    %50 = sbr.rel (0) target = $region17
  $region16: #{_lambda_.58} parent=0 // pred_region
    _
  $region17: #{_lambda_.58} parent=0 // pred_fallthru
    _
  // Predicated region
  $region18: #{_lambda_.58} parent=0 // pred_check
    _
  $region19: #{_lambda_.58} parent=0 // pred_check_branch
    %52 = sbr.rel (0) target = $region21
  $region20: #{_lambda_.58} parent=0 // pred_region
    _
  $region21: #{_lambda_.58} parent=0 // pred_fallthru
    _

// kernel: _lambda_.57
$region0: #{_lambda_.57}
  #allocation0 [shape = 'u32[]', space=smem, size = 0x4, offset = 0x4, fixed_abs, tag = 'smem constant byte address 0x4 - core index']
  #allocation1 [shape = 'u32[144,128]{1,0:T(1,128)}', space=vmem, size = 0x12000, scoped, tag = 'internal scratch']
  %s0 = inlined_call_operand.vmem [shape: bf16[32,288], index: 0, kind: input, shape index: {}]
  %s1 = inlined_call_operand.vmem [shape: bf16[288,64], index: 1, kind: input, shape index: {}]
  %s2 = inlined_call_operand.vmem [shape: f32[32,64], index: 2, kind: output, shape index: {0}]
  %s3 = inlined_call_operand.vmem [shape: f32[1,1,64], index: 3, kind: output, shape index: {1}]
  %s4 = inlined_call_operand.vmem [shape: f32[1,1,64], index: 4, kind: output, shape index: {2}]
  %5 = xla_tuple %s2, %s3, %s4
  %s6 = sld [smem:[#allocation0]]
  $region34: #{_lambda_.57} parent=0
    _
  %s8 = ssub.s32 1, %s6
  %s9 = scalar_select 0, %s8, %s6
  // Predicated region
  $region2: #{_lambda_.57} parent=0 // pred_check
    _
  $region3: #{_lambda_.57} parent=0 // pred_check_branch
    %11 = sbr.rel (0) target = $region5
  $region4: #{_lambda_.57} parent=0 // pred_region
    _
  $region5: #{_lambda_.57} parent=0 // pred_fallthru
    _
  // Predicated region
  $region6: #{_lambda_.57} parent=0 // pred_check
    _
  $region7: #{_lambda_.57} parent=0 // pred_check_branch
    %13 = sbr.rel (0) target = $region9
  $region8: #{_lambda_.57} parent=0 // pred_region
    _
  $region9: #{_lambda_.57} parent=0 // pred_fallthru
    _
  %v15 = vld [vmem:[%s0] sm:$0xff]
  %v16 = vld [vmem:[%s0 + $0x8] sm:$0xf]
  %v17 = vld [vmem:[%s0 + $0xc] sm:$0xff]
  %v18 = vld [vmem:[%s0 + $0x14] sm:$0xf]
  %v19 = vld [vmem:[%s0 + $0x18] sm:$0xff]
  %v20 = vld [vmem:[%s0 + $0x20] sm:$0xf]
  %v21 = vld [vmem:[%s0 + $0x24] sm:$0xff]
  %v22 = vld [vmem:[%s0 + $0x2c] sm:$0xf]
  %v23 = vld [vmem:[%s1] sm:$0xf]
  %v24 = vld [vmem:[%s1 + $0x4] sm:$0xf]
  %v25 = vld [vmem:[%s1 + $0x8] sm:$0xf]
  %v26 = vld [vmem:[%s1 + $0xc] sm:$0xf]
  %v27 = vld [vmem:[%s1 + $0x10] sm:$0xf]
  %v28 = vld [vmem:[%s1 + $0x14] sm:$0xf]
  %v29 = vld [vmem:[%s1 + $0x18] sm:$0xf]
  %v30 = vld [vmem:[%s1 + $0x1c] sm:$0xf]
  %v31 = vld [vmem:[%s1 + $0x20] sm:$0xf]
  %v32 = vld [vmem:[%s1 + $0x24] sm:$0xf]
  %v33 = vld [vmem:[%s1 + $0x28] sm:$0xf]
  %v34 = vld [vmem:[%s1 + $0x2c] sm:$0xf]
  %v35 = vld [vmem:[%s1 + $0x30] sm:$0xf]
  %v36 = vld [vmem:[%s1 + $0x34] sm:$0xf]
  %v37 = vld [vmem:[%s1 + $0x38] sm:$0xf]
  %v38 = vld [vmem:[%s1 + $0x3c] sm:$0xf]
  %v39 = vld [vmem:[%s1 + $0x40] sm:$0xf]
  %v40 = vld [vmem:[%s1 + $0x44] sm:$0xf]
  %v41 = vld [vmem:[%s1 + $0x48] sm:$0xf]
  %v42 = vld [vmem:[%s1 + $0x4c] sm:$0xf]
  %v43 = vld [vmem:[%s1 + $0x50] sm:$0xf]
  %v44 = vld [vmem:[%s1 + $0x54] sm:$0xf]
  %v45 = vld [vmem:[%s1 + $0x58] sm:$0xf]
  %v46 = vld [vmem:[%s1 + $0x5c] sm:$0xf]
  %v47 = vld [vmem:[%s1 + $0x60] sm:$0xf]
  %v48 = vld [vmem:[%s1 + $0x64] sm:$0xf]
  %v49 = vld [vmem:[%s1 + $0x68] sm:$0xf]
  %v50 = vld [vmem:[%s1 + $0x6c] sm:$0xf]
  %v51 = vld [vmem:[%s1 + $0x70] sm:$0xf]
  %v52 = vld [vmem:[%s1 + $0x74] sm:$0xf]
  %v53 = vld [vmem:[%s1 + $0x78] sm:$0xf]
  %v54 = vld [vmem:[%s1 + $0x7c] sm:$0xf]
  %v55 = vld [vmem:[%s1 + $0x80] sm:$0xf]
  %v56 = vld [vmem:[%s1 + $0x84] sm:$0xf]
  %v57 = vld [vmem:[%s1 + $0x88] sm:$0xf]
  %v58 = vld [vmem:[%s1 + $0x8c] sm:$0xf]
  %v67 = vunpack.c.l.b16 %v15
  %v68 = vunpack.c.h.b16 %v15
  %v69 = vunpack.c.l.b16 %v16
  %v70 = vunpack.c.l.b16 %v17
  %v71 = vunpack.c.h.b16 %v17
  %v72 = vunpack.c.l.b16 %v18
  %v73 = vunpack.c.l.b16 %v19
  %v74 = vunpack.c.h.b16 %v19
  %v75 = vunpack.c.l.b16 %v20
  %v76 = vunpack.c.l.b16 %v21
  %v77 = vunpack.c.h.b16 %v21
  %v78 = vunpack.c.l.b16 %v22
  %v79 = vpack.c.b16 %v70, %v67
  %v80 = vpack.c.b16 %v71, %v68
  %v81 = vpack.c.b16 %v72, %v69
  %v82 = vpack.c.b16 %v76, %v73
  %v83 = vpack.c.b16 %v77, %v74
  %v84 = vpack.c.b16 %v78, %v75
  %v125 = vunpack.c.l.b16 %v23
  %v126 = vunpack.c.l.b16 %v24
  %v127 = vunpack.c.l.b16 %v25
  %v128 = vunpack.c.l.b16 %v26
  %v129 = vunpack.c.l.b16 %v27
  %v130 = vunpack.c.l.b16 %v28
  %v131 = vunpack.c.l.b16 %v29
  %v132 = vunpack.c.l.b16 %v30
  %v133 = vunpack.c.l.b16 %v31
  %v134 = vunpack.c.l.b16 %v32
  %v135 = vunpack.c.l.b16 %v33
  %v136 = vunpack.c.l.b16 %v34
  %v137 = vunpack.c.l.b16 %v35
  %v138 = vunpack.c.l.b16 %v36
  %v139 = vunpack.c.l.b16 %v37
  %v140 = vunpack.c.l.b16 %v38
  %v141 = vunpack.c.l.b16 %v39
  %v142 = vunpack.c.l.b16 %v40
  %v143 = vunpack.c.l.b16 %v41
  %v144 = vunpack.c.l.b16 %v42
  %v145 = vunpack.c.l.b16 %v43
  %v146 = vunpack.c.l.b16 %v44
  %v147 = vunpack.c.l.b16 %v45
  %v148 = vunpack.c.l.b16 %v46
  %v149 = vunpack.c.l.b16 %v47
  %v150 = vunpack.c.l.b16 %v48
  %v151 = vunpack.c.l.b16 %v49
  %v152 = vunpack.c.l.b16 %v50
  %v153 = vunpack.c.l.b16 %v51
  %v154 = vunpack.c.l.b16 %v52
  %v155 = vunpack.c.l.b16 %v53
  %v156 = vunpack.c.l.b16 %v54
  %v157 = vunpack.c.l.b16 %v55
  %v158 = vunpack.c.l.b16 %v56
  %v159 = vunpack.c.l.b16 %v57
  %v160 = vunpack.c.l.b16 %v58
  %v161 = vpack.c.b16 %v126, %v125
  %v162 = vpack.c.b16 %v128, %v127
  %v163 = vpack.c.b16 %v130, %v129
  %v164 = vpack.c.b16 %v132, %v131
  %v165 = vpack.c.b16 %v134, %v133
  %v166 = vpack.c.b16 %v136, %v135
  %v167 = vpack.c.b16 %v138, %v137
  %v168 = vpack.c.b16 %v140, %v139
  %v169 = vpack.c.b16 %v142, %v141
  %v170 = vpack.c.b16 %v144, %v143
  %v171 = vpack.c.b16 %v146, %v145
  %v172 = vpack.c.b16 %v148, %v147
  %v173 = vpack.c.b16 %v150, %v149
  %v174 = vpack.c.b16 %v152, %v151
  %v175 = vpack.c.b16 %v154, %v153
  %v176 = vpack.c.b16 %v156, %v155
  %v177 = vpack.c.b16 %v158, %v157
  %v178 = vpack.c.b16 %v160, %v159
  %vm197 = vcmask 261120
  %v199 = vsel %vm197, %v81, 0
  %v202 = vsel %vm197, %v84, 0
  %204 = vmatprep.subr.bf16.mxu0 0
  %205 = vmatpush1.bf16.msra.mxu0 %v161
  %206 = vmatprep.subr.bf16.mxu0 0
  %207 = vmatpush1.bf16.msra.mxu0 %v162
  %208 = vmatprep.subr.bf16.mxu0 0
  %209 = vmatpush1.bf16.msra.mxu0 %v163
  %210 = vmatprep.subr.bf16.mxu0 0
  %211 = vmatpush1.bf16.msra.mxu0 %v164
  %212 = vmatprep.subr.bf16.mxu0 0
  %213 = vmatpush1.bf16.msra.mxu0 %v165
  %214 = vmatprep.subr.bf16.mxu0 0
  %215 = vmatpush1.bf16.msra.mxu0 %v166
  %216 = vmatprep.subr.bf16.mxu0 0
  %217 = vmatpush1.bf16.msra.mxu0 %v167
  %218 = vmatprep.subr.bf16.mxu0 0
  %219 = vmatpush1.bf16.msra.mxu0 %v168
  %220 = vmatprep.subr.bf16.mxu0 0
  %221 = vmatpush1.bf16.msra.mxu0 %v169
  %222 = vmatprep.subr.bf16.mxu0 0
  %223 = vmatpush1.bf16.msra.mxu0 %v170
  %224 = vmatprep.subr.bf16.mxu0 0
  %225 = vmatpush1.bf16.msra.mxu0 %v171
  %226 = vmatprep.subr.bf16.mxu0 0
  %227 = vmatpush1.bf16.msra.mxu0 %v172
  %228 = vmatprep.subr.bf16.mxu0 0
  %229 = vmatpush1.bf16.msra.mxu0 %v173
  %230 = vmatprep.subr.bf16.mxu0 0
  %231 = vmatpush1.bf16.msra.mxu0 %v174
  %232 = vmatprep.subr.bf16.mxu0 0
  %233 = vmatpush1.bf16.msra.mxu0 %v175
  %234 = vmatprep.subr.bf16.mxu0 0
  %235 = vmatpush1.bf16.msra.mxu0 %v176
  %236 = vmatprep.mubr.bf16.mxu0 %v80
  %237 = vmatmul.mubr.bf16.gmra.mrb[0].mxu0 %v79
  %v238 = vpop.f32.mrb[0].mxu0
  %v239 = vadd.f32 0.0, %v238
  %v240 = vpop.f32.mrb[0].mxu0
  %v241 = vpop.f32.mrb[0].mxu0
  %v242 = vadd.f32 0.0, %v241
  %v243 = vpop.f32.mrb[0].mxu0
  %244 = vmatprep.mubr.bf16.mxu0 %v83
  %245 = vmatmul.mubr.bf16.gmra.mrb[0].mxu0 %v82
  %v246 = vpop.f32.mrb[0].mxu0
  %v247 = vadd.f32 0.0, %v246
  %v248 = vpop.f32.mrb[0].mxu0
  %v249 = vpop.f32.mrb[0].mxu0
  %v250 = vadd.f32 0.0, %v249
  %v251 = vpop.f32.mrb[0].mxu0
  %252 = vdwg.mxu0
  %253 = vmatprep.subr.bf16.mxu0 0
  %254 = vmatpush1.bf16.msra.mxu0 %v177
  %255 = vmatprep.subr.bf16.mxu0 0
  %256 = vmatpush1.bf16.msra.mxu0 %v178
  %257 = vmatprep.subr.bf16.mxu0 0
  %258 = vmatpush1.bf16.msra.mxu0 0
  %259 = vmatprep.subr.bf16.mxu0 0
  %260 = vmatpush1.bf16.msra.mxu0 0
  %261 = vmatprep.subr.bf16.mxu0 0
  %262 = vmatpush1.bf16.msra.mxu0 0
  %263 = vmatprep.subr.bf16.mxu0 0
  %264 = vmatpush1.bf16.msra.mxu0 0
  %265 = vmatprep.subr.bf16.mxu0 0
  %266 = vmatpush1.bf16.msra.mxu0 0
  %267 = vmatprep.subr.bf16.mxu0 0
  %268 = vmatpush1.bf16.msra.mxu0 0
  %269 = vmatprep.subr.bf16.mxu0 0
  %270 = vmatpush1.bf16.msra.mxu0 0
  %271 = vmatprep.subr.bf16.mxu0 0
  %272 = vmatpush1.bf16.msra.mxu0 0
  %273 = vmatprep.subr.bf16.mxu0 0
  %274 = vmatpush1.bf16.msra.mxu0 0
  %275 = vmatprep.subr.bf16.mxu0 0
  %276 = vmatpush1.bf16.msra.mxu0 0
  %277 = vmatprep.subr.bf16.mxu0 0
  %278 = vmatpush1.bf16.msra.mxu0 0
  %279 = vmatprep.subr.bf16.mxu0 0
  %280 = vmatpush1.bf16.msra.mxu0 0
  %281 = vmatprep.subr.bf16.mxu0 0
  %282 = vmatpush1.bf16.msra.mxu0 0
  %283 = vmatprep.subr.bf16.mxu0 0
  %284 = vmatpush1.bf16.msra.mxu0 0
  %285 = vmatprep.mubr.bf16.mxu0 0
  %286 = vmatmul.mubr.bf16.gmra.mrb[0].mxu0 %v199
  %v287 = vpop.f32.mrb[0].mxu0
  %v288 = vadd.f32 %v239, %v287
  %v289 = vpop.f32.mrb[0].mxu0
  %v290 = vpop.f32.mrb[0].mxu0
  %v291 = vadd.f32 %v242, %v290
  %v292 = vpop.f32.mrb[0].mxu0
  %293 = vmatprep.mubr.bf16.mxu0 0
  %294 = vmatmul.mubr.bf16.gmra.mrb[0].mxu0 %v202
  %v295 = vpop.f32.mrb[0].mxu0
  %v296 = vadd.f32 %v247, %v295
  %v297 = vpop.f32.mrb[0].mxu0
  %v298 = vpop.f32.mrb[0].mxu0
  %v299 = vadd.f32 %v250, %v298
  %v300 = vpop.f32.mrb[0].mxu0
  %301 = vdwg.mxu0
  %vm302 = vcmask 523264
  %303 = vst.msk [vmem:[%s2] sm:$0xff] %vm302, %v288
  %304 = vst.msk [vmem:[%s2 + $0x8] sm:$0xff] %vm302, %v291
  %305 = vst.msk [vmem:[%s2 + $0x10] sm:$0xff] %vm302, %v296
  %306 = vst.msk [vmem:[%s2 + $0x18] sm:$0xff] %vm302, %v299
  %v307 = vsel %vm302, %v288, 0.0
  %v308 = vsel %vm302, %v291, 0.0
  %v309 = vadd.f32 %v307, %v308
  %v310 = vsel %vm302, %v296, 0.0
  %v311 = vadd.f32 %v309, %v310
  %v312 = vsel %vm302, %v299, 0.0
  %v313 = vadd.f32 %v311, %v312
  %v314 = vrot.slane %v313, 4
  %v315 = vadd.f32 %v313, %v314
  %v316 = vrot.slane %v315, 2
  %v317 = vadd.f32 %v315, %v316
  %v318 = vrot.slane %v317, 1
  %v319 = vadd.f32 %v317, %v318
  %vm320 = vcmask 516096
  %321 = vst.msk [vmem:[%s3] sm:$0x1] %vm320, %v319
  %v322 = vmul.f32 %v288, %v288
  %v323 = vmul.f32 %v291, %v291
  %v324 = vmul.f32 %v296, %v296
  %v325 = vmul.f32 %v299, %v299
  %v326 = vsel %vm302, %v322, 0.0
  %v327 = vsel %vm302, %v323, 0.0
  %v328 = vadd.f32 %v326, %v327
  %v329 = vsel %vm302, %v324, 0.0
  %v330 = vadd.f32 %v328, %v329
  %v331 = vsel %vm302, %v325, 0.0
  %v332 = vadd.f32 %v330, %v331
  %v333 = vrot.slane %v332, 4
  %v334 = vadd.f32 %v332, %v333
  %v335 = vrot.slane %v334, 2
  %v336 = vadd.f32 %v334, %v335
  %v337 = vrot.slane %v336, 1
  %v338 = vadd.f32 %v336, %v337
  %339 = vst.msk [vmem:[%s4] sm:$0x1] %vm320, %v338
  // Predicated region
  $region10: #{_lambda_.57} parent=0 // pred_check
    _
  $region11: #{_lambda_.57} parent=0 // pred_check_branch
    %341 = sbr.rel (0) target = $region13
  $region12: #{_lambda_.57} parent=0 // pred_region
    _
  $region13: #{_lambda_.57} parent=0 // pred_fallthru
    _
  // Predicated region
  $region14: #{_lambda_.57} parent=0 // pred_check
    _
  $region15: #{_lambda_.57} parent=0 // pred_check_branch
    %343 = sbr.rel (0) target = $region17
  $region16: #{_lambda_.57} parent=0 // pred_region
    _
  $region17: #{_lambda_.57} parent=0 // pred_fallthru
    _
  // Predicated region
  $region18: #{_lambda_.57} parent=0 // pred_check
    _
  $region19: #{_lambda_.57} parent=0 // pred_check_branch
    %345 = sbr.rel (0) target = $region21
  $region20: #{_lambda_.57} parent=0 // pred_region
    _
  $region21: #{_lambda_.57} parent=0 // pred_fallthru
    _
  // Predicated region
  $region22: #{_lambda_.57} parent=0 // pred_check
    _
  $region23: #{_lambda_.57} parent=0 // pred_check_branch
    %347 = sbr.rel (0) target = $region25
  $region24: #{_lambda_.57} parent=0 // pred_region
    _
  $region25: #{_lambda_.57} parent=0 // pred_fallthru
    _
  // Predicated region
  $region26: #{_lambda_.57} parent=0 // pred_check
    _
  $region27: #{_lambda_.57} parent=0 // pred_check_branch
    %349 = sbr.rel (0) target = $region29
  $region28: #{_lambda_.57} parent=0 // pred_region
    _
  $region29: #{_lambda_.57} parent=0 // pred_fallthru
    _
  // Predicated region
  $region30: #{_lambda_.57} parent=0 // pred_check
    _
  $region31: #{_lambda_.57} parent=0 // pred_check_branch
    %351 = sbr.rel (0) target = $region33
  $region32: #{_lambda_.57} parent=0 // pred_region
    _
  $region33: #{_lambda_.57} parent=0 // pred_fallthru
    _

// kernel: _lambda_.61
$region0: #{_lambda_.61}
  #allocation0 [shape = 'u32[]', space=smem, size = 0x4, offset = 0x4, fixed_abs, tag = 'smem constant byte address 0x4 - core index']
  #allocation1 [shape = 'u32[144,128]{1,0:T(1,128)}', space=vmem, size = 0x12000, scoped, tag = 'internal scratch']
  %s0 = inlined_call_operand.vmem [shape: f32[32,64], index: 0, kind: input, shape index: {}, may-alias: {0,6}]
  %s1 = inlined_call_operand.vmem [shape: f32[1,64], index: 1, kind: input, shape index: {}]
  %s2 = inlined_call_operand.vmem [shape: f32[1,64], index: 2, kind: input, shape index: {}]
  %s3 = inlined_call_operand.vmem [shape: f32[32,64], index: 3, kind: input, shape index: {}]
  %s4 = inlined_call_operand.vmem [shape: f32[1,64], index: 4, kind: input, shape index: {}]
  %s5 = inlined_call_operand.vmem [shape: f32[1,64], index: 5, kind: input, shape index: {}]
  %s6 = inlined_call_operand.vmem [shape: f32[32,64], index: 6, kind: output, shape index: {}, may-alias: {0,6}]
  %s7 = sld [smem:[#allocation0]]
  $region34: #{_lambda_.61} parent=0
    _
  %s9 = ssub.s32 1, %s7
  %s10 = scalar_select 0, %s9, %s7
  // Predicated region
  $region2: #{_lambda_.61} parent=0 // pred_check
    _
  $region3: #{_lambda_.61} parent=0 // pred_check_branch
    %12 = sbr.rel (0) target = $region5
  $region4: #{_lambda_.61} parent=0 // pred_region
    _
  $region5: #{_lambda_.61} parent=0 // pred_fallthru
    _
  // Predicated region
  $region6: #{_lambda_.61} parent=0 // pred_check
    _
  $region7: #{_lambda_.61} parent=0 // pred_check_branch
    %14 = sbr.rel (0) target = $region9
  $region8: #{_lambda_.61} parent=0 // pred_region
    _
  $region9: #{_lambda_.61} parent=0 // pred_fallthru
    _
  // Predicated region
  $region10: #{_lambda_.61} parent=0 // pred_check
    _
  $region11: #{_lambda_.61} parent=0 // pred_check_branch
    %16 = sbr.rel (0) target = $region13
  $region12: #{_lambda_.61} parent=0 // pred_region
    _
  $region13: #{_lambda_.61} parent=0 // pred_fallthru
    _
  // Predicated region
  $region14: #{_lambda_.61} parent=0 // pred_check
    _
  $region15: #{_lambda_.61} parent=0 // pred_check_branch
    %18 = sbr.rel (0) target = $region17
  $region16: #{_lambda_.61} parent=0 // pred_region
    _
  $region17: #{_lambda_.61} parent=0 // pred_fallthru
    _
  // Predicated region
  $region18: #{_lambda_.61} parent=0 // pred_check
    _
  $region19: #{_lambda_.61} parent=0 // pred_check_branch
    %20 = sbr.rel (0) target = $region21
  $region20: #{_lambda_.61} parent=0 // pred_region
    _
  $region21: #{_lambda_.61} parent=0 // pred_fallthru
    _
  // Predicated region
  $region22: #{_lambda_.61} parent=0 // pred_check
    _
  $region23: #{_lambda_.61} parent=0 // pred_check_branch
    %22 = sbr.rel (0) target = $region25
  $region24: #{_lambda_.61} parent=0 // pred_region
    _
  $region25: #{_lambda_.61} parent=0 // pred_fallthru
    _
  %v23 = vld [vmem:[%s0] sm:$0xff]
  %v24 = vld [vmem:[%s0 + $0x8] sm:$0xff]
  %v25 = vld [vmem:[%s0 + $0x10] sm:$0xff]
  %v26 = vld [vmem:[%s0 + $0x18] sm:$0xff]
  %v27 = vld [vmem:[%s1] sm:$0x1]
  %v29 = vlaneseq
  %v30 = vshrl.u32 %v29, 7
  %v31 = vsub.s32 0, %v30
  %v32 = vrot.slane %v27, %v31
  %v34 = vmul.f32 %v23, %v32
  %v35 = vmul.f32 %v24, %v32
  %v36 = vmul.f32 %v25, %v32
  %v37 = vmul.f32 %v26, %v32
  %v38 = vld [vmem:[%s2] sm:$0x1]
  %v40 = vlaneseq
  %v41 = vshrl.u32 %v40, 7
  %v42 = vsub.s32 0, %v41
  %v43 = vrot.slane %v38, %v42
  %v45 = vadd.f32 %v34, %v43
  %v46 = vadd.f32 %v35, %v43
  %v47 = vadd.f32 %v36, %v43
  %v48 = vadd.f32 %v37, %v43
  %v49 = vld [vmem:[%s3] sm:$0xff]
  %v50 = vld [vmem:[%s3 + $0x8] sm:$0xff]
  %v51 = vld [vmem:[%s3 + $0x10] sm:$0xff]
  %v52 = vld [vmem:[%s3 + $0x18] sm:$0xff]
  %v53 = vld [vmem:[%s4] sm:$0x1]
  %v55 = vlaneseq
  %v56 = vshrl.u32 %v55, 7
  %v57 = vsub.s32 0, %v56
  %v58 = vrot.slane %v53, %v57
  %v60 = vmul.f32 %v49, %v58
  %v61 = vmul.f32 %v50, %v58
  %v62 = vmul.f32 %v51, %v58
  %v63 = vmul.f32 %v52, %v58
  %v64 = vadd.f32 %v45, %v60
  %v65 = vadd.f32 %v46, %v61
  %v66 = vadd.f32 %v47, %v62
  %v67 = vadd.f32 %v48, %v63
  %v68 = vld [vmem:[%s5] sm:$0x1]
  %v70 = vlaneseq
  %v71 = vshrl.u32 %v70, 7
  %v72 = vsub.s32 0, %v71
  %v73 = vrot.slane %v68, %v72
  %v75 = vadd.f32 %v64, %v73
  %v76 = vadd.f32 %v65, %v73
  %v77 = vadd.f32 %v66, %v73
  %v78 = vadd.f32 %v67, %v73
  %v79 = vmax.f32 %v75, 0.0
  %v80 = vmax.f32 %v76, 0.0
  %v81 = vmax.f32 %v77, 0.0
  %v82 = vmax.f32 %v78, 0.0
  %vm83 = vcmask 523264
  %84 = vst.msk [vmem:[%s6] sm:$0xff] %vm83, %v79
  %85 = vst.msk [vmem:[%s6 + $0x8] sm:$0xff] %vm83, %v80
  %86 = vst.msk [vmem:[%s6 + $0x10] sm:$0xff] %vm83, %v81
  %87 = vst.msk [vmem:[%s6 + $0x18] sm:$0xff] %vm83, %v82
  // Predicated region
  $region26: #{_lambda_.61} parent=0 // pred_check
    _
  $region27: #{_lambda_.61} parent=0 // pred_check_branch
    %89 = sbr.rel (0) target = $region29
  $region28: #{_lambda_.61} parent=0 // pred_region
    _
  $region29: #{_lambda_.61} parent=0 // pred_fallthru
    _
  // Predicated region
  $region30: #{_lambda_.61} parent=0 // pred_check
    _
  $region31: #{_lambda_.61} parent=0 // pred_check_branch
    %91 = sbr.rel (0) target = $region33
  $region32: #{_lambda_.61} parent=0 // pred_region
    _
  $region33: #{_lambda_.61} parent=0 // pred_fallthru
    _

// kernel: _lambda_.59
$region0: #{_lambda_.59}
  #allocation0 [shape = 'u32[]', space=smem, size = 0x4, offset = 0x4, fixed_abs, tag = 'smem constant byte address 0x4 - core index']
  #allocation1 [shape = 'u32[144,128]{1,0:T(1,128)}', space=vmem, size = 0x12000, scoped, tag = 'internal scratch']
  %s0 = inlined_call_operand.vmem [shape: bf16[32,576], index: 0, kind: input, shape index: {}]
  %s1 = inlined_call_operand.vmem [shape: bf16[576,64], index: 1, kind: input, shape index: {}]
  %s2 = inlined_call_operand.vmem [shape: f32[32,64], index: 2, kind: output, shape index: {0}]
  %s3 = inlined_call_operand.vmem [shape: f32[1,1,64], index: 3, kind: output, shape index: {1}]
  %s4 = inlined_call_operand.vmem [shape: f32[1,1,64], index: 4, kind: output, shape index: {2}]
  %5 = xla_tuple %s2, %s3, %s4
  %s6 = sld [smem:[#allocation0]]
  $region34: #{_lambda_.59} parent=0
    _
  %s8 = ssub.s32 1, %s6
  %s9 = scalar_select 0, %s8, %s6
  // Predicated region
  $region2: #{_lambda_.59} parent=0 // pred_check
    _
  $region3: #{_lambda_.59} parent=0 // pred_check_branch
    %11 = sbr.rel (0) target = $region5
  $region4: #{_lambda_.59} parent=0 // pred_region
    _
  $region5: #{_lambda_.59} parent=0 // pred_fallthru
    _
  // Predicated region
  $region6: #{_lambda_.59} parent=0 // pred_check
    _
  $region7: #{_lambda_.59} parent=0 // pred_check_branch
    %13 = sbr.rel (0) target = $region9
  $region8: #{_lambda_.59} parent=0 // pred_region
    _
  $region9: #{_lambda_.59} parent=0 // pred_fallthru
    _
  %v15 = vld [vmem:[%s0] sm:$0xff]
  %v16 = vld [vmem:[%s0 + $0x8] sm:$0xff]
  %v17 = vld [vmem:[%s0 + $0x10] sm:$0xf]
  %v18 = vld [vmem:[%s0 + $0x14] sm:$0xff]
  %v19 = vld [vmem:[%s0 + $0x1c] sm:$0xff]
  %v20 = vld [vmem:[%s0 + $0x24] sm:$0xf]
  %v21 = vld [vmem:[%s0 + $0x28] sm:$0xff]
  %v22 = vld [vmem:[%s0 + $0x30] sm:$0xff]
  %v23 = vld [vmem:[%s0 + $0x38] sm:$0xf]
  %v24 = vld [vmem:[%s0 + $0x3c] sm:$0xff]
  %v25 = vld [vmem:[%s0 + $0x44] sm:$0xff]
  %v26 = vld [vmem:[%s0 + $0x4c] sm:$0xf]
  %v27 = vld [vmem:[%s1] sm:$0xf]
  %v28 = vld [vmem:[%s1 + $0x4] sm:$0xf]
  %v29 = vld [vmem:[%s1 + $0x8] sm:$0xf]
  %v30 = vld [vmem:[%s1 + $0xc] sm:$0xf]
  %v31 = vld [vmem:[%s1 + $0x10] sm:$0xf]
  %v32 = vld [vmem:[%s1 + $0x14] sm:$0xf]
  %v33 = vld [vmem:[%s1 + $0x18] sm:$0xf]
  %v34 = vld [vmem:[%s1 + $0x1c] sm:$0xf]
  %v35 = vld [vmem:[%s1 + $0x20] sm:$0xf]
  %v36 = vld [vmem:[%s1 + $0x24] sm:$0xf]
  %v37 = vld [vmem:[%s1 + $0x28] sm:$0xf]
  %v38 = vld [vmem:[%s1 + $0x2c] sm:$0xf]
  %v39 = vld [vmem:[%s1 + $0x30] sm:$0xf]
  %v40 = vld [vmem:[%s1 + $0x34] sm:$0xf]
  %v41 = vld [vmem:[%s1 + $0x38] sm:$0xf]
  %v42 = vld [vmem:[%s1 + $0x3c] sm:$0xf]
  %v43 = vld [vmem:[%s1 + $0x40] sm:$0xf]
  %v44 = vld [vmem:[%s1 + $0x44] sm:$0xf]
  %v45 = vld [vmem:[%s1 + $0x48] sm:$0xf]
  %v46 = vld [vmem:[%s1 + $0x4c] sm:$0xf]
  %v47 = vld [vmem:[%s1 + $0x50] sm:$0xf]
  %v48 = vld [vmem:[%s1 + $0x54] sm:$0xf]
  %v49 = vld [vmem:[%s1 + $0x58] sm:$0xf]
  %v50 = vld [vmem:[%s1 + $0x5c] sm:$0xf]
  %v51 = vld [vmem:[%s1 + $0x60] sm:$0xf]
  %v52 = vld [vmem:[%s1 + $0x64] sm:$0xf]
  %v53 = vld [vmem:[%s1 + $0x68] sm:$0xf]
  %v54 = vld [vmem:[%s1 + $0x6c] sm:$0xf]
  %v55 = vld [vmem:[%s1 + $0x70] sm:$0xf]
  %v56 = vld [vmem:[%s1 + $0x74] sm:$0xf]
  %v57 = vld [vmem:[%s1 + $0x78] sm:$0xf]
  %v58 = vld [vmem:[%s1 + $0x7c] sm:$0xf]
  %v59 = vld [vmem:[%s1 + $0x80] sm:$0xf]
  %v60 = vld [vmem:[%s1 + $0x84] sm:$0xf]
  %v61 = vld [vmem:[%s1 + $0x88] sm:$0xf]
  %v62 = vld [vmem:[%s1 + $0x8c] sm:$0xf]
  %v63 = vld [vmem:[%s1 + $0x90] sm:$0xf]
  %v64 = vld [vmem:[%s1 + $0x94] sm:$0xf]
  %v65 = vld [vmem:[%s1 + $0x98] sm:$0xf]
  %v66 = vld [vmem:[%s1 + $0x9c] sm:$0xf]
  %v67 = vld [vmem:[%s1 + $0xa0] sm:$0xf]
  %v68 = vld [vmem:[%s1 + $0xa4] sm:$0xf]
  %v69 = vld [vmem:[%s1 + $0xa8] sm:$0xf]
  %v70 = vld [vmem:[%s1 + $0xac] sm:$0xf]
  %v71 = vld [vmem:[%s1 + $0xb0] sm:$0xf]
  %v72 = vld [vmem:[%s1 + $0xb4] sm:$0xf]
  %v73 = vld [vmem:[%s1 + $0xb8] sm:$0xf]
  %v74 = vld [vmem:[%s1 + $0xbc] sm:$0xf]
  %v75 = vld [vmem:[%s1 + $0xc0] sm:$0xf]
  %v76 = vld [vmem:[%s1 + $0xc4] sm:$0xf]
  %v77 = vld [vmem:[%s1 + $0xc8] sm:$0xf]
  %v78 = vld [vmem:[%s1 + $0xcc] sm:$0xf]
  %v79 = vld [vmem:[%s1 + $0xd0] sm:$0xf]
  %v80 = vld [vmem:[%s1 + $0xd4] sm:$0xf]
  %v81 = vld [vmem:[%s1 + $0xd8] sm:$0xf]
  %v82 = vld [vmem:[%s1 + $0xdc] sm:$0xf]
  %v83 = vld [vmem:[%s1 + $0xe0] sm:$0xf]
  %v84 = vld [vmem:[%s1 + $0xe4] sm:$0xf]
  %v85 = vld [vmem:[%s1 + $0xe8] sm:$0xf]
  %v86 = vld [vmem:[%s1 + $0xec] sm:$0xf]
  %v87 = vld [vmem:[%s1 + $0xf0] sm:$0xf]
  %v88 = vld [vmem:[%s1 + $0xf4] sm:$0xf]
  %v89 = vld [vmem:[%s1 + $0xf8] sm:$0xf]
  %v90 = vld [vmem:[%s1 + $0xfc] sm:$0xf]
  %v91 = vld [vmem:[%s1 + $0x100] sm:$0xf]
  %v92 = vld [vmem:[%s1 + $0x104] sm:$0xf]
  %v93 = vld [vmem:[%s1 + $0x108] sm:$0xf]
  %v94 = vld [vmem:[%s1 + $0x10c] sm:$0xf]
  %v95 = vld [vmem:[%s1 + $0x110] sm:$0xf]
  %v96 = vld [vmem:[%s1 + $0x114] sm:$0xf]
  %v97 = vld [vmem:[%s1 + $0x118] sm:$0xf]
  %v98 = vld [vmem:[%s1 + $0x11c] sm:$0xf]
  %v111 = vunpack.c.l.b16 %v15
  %v112 = vunpack.c.h.b16 %v15
  %v113 = vunpack.c.l.b16 %v16
  %v114 = vunpack.c.h.b16 %v16
  %v115 = vunpack.c.l.b16 %v17
  %v116 = vunpack.c.l.b16 %v18
  %v117 = vunpack.c.h.b16 %v18
  %v118 = vunpack.c.l.b16 %v19
  %v119 = vunpack.c.h.b16 %v19
  %v120 = vunpack.c.l.b16 %v20
  %v121 = vunpack.c.l.b16 %v21
  %v122 = vunpack.c.h.b16 %v21
  %v123 = vunpack.c.l.b16 %v22
  %v124 = vunpack.c.h.b16 %v22
  %v125 = vunpack.c.l.b16 %v23
  %v126 = vunpack.c.l.b16 %v24
  %v127 = vunpack.c.h.b16 %v24
  %v128 = vunpack.c.l.b16 %v25
  %v129 = vunpack.c.h.b16 %v25
  %v130 = vunpack.c.l.b16 %v26
  %v131 = vpack.c.b16 %v116, %v111
  %v132 = vpack.c.b16 %v117, %v112
  %v133 = vpack.c.b16 %v118, %v113
  %v134 = vpack.c.b16 %v119, %v114
  %v135 = vpack.c.b16 %v120, %v115
  %v136 = vpack.c.b16 %v126, %v121
  %v137 = vpack.c.b16 %v127, %v122
  %v138 = vpack.c.b16 %v128, %v123
  %v139 = vpack.c.b16 %v129, %v124
  %v140 = vpack.c.b16 %v130, %v125
  %v221 = vunpack.c.l.b16 %v27
  %v222 = vunpack.c.l.b16 %v28
  %v223 = vunpack.c.l.b16 %v29
  %v224 = vunpack.c.l.b16 %v30
  %v225 = vunpack.c.l.b16 %v31
  %v226 = vunpack.c.l.b16 %v32
  %v227 = vunpack.c.l.b16 %v33
  %v228 = vunpack.c.l.b16 %v34
  %v229 = vunpack.c.l.b16 %v35
  %v230 = vunpack.c.l.b16 %v36
  %v231 = vunpack.c.l.b16 %v37
  %v232 = vunpack.c.l.b16 %v38
  %v233 = vunpack.c.l.b16 %v39
  %v234 = vunpack.c.l.b16 %v40
  %v235 = vunpack.c.l.b16 %v41
  %v236 = vunpack.c.l.b16 %v42
  %v237 = vunpack.c.l.b16 %v43
  %v238 = vunpack.c.l.b16 %v44
  %v239 = vunpack.c.l.b16 %v45
  %v240 = vunpack.c.l.b16 %v46
  %v241 = vunpack.c.l.b16 %v47
  %v242 = vunpack.c.l.b16 %v48
  %v243 = vunpack.c.l.b16 %v49
  %v244 = vunpack.c.l.b16 %v50
  %v245 = vunpack.c.l.b16 %v51
  %v246 = vunpack.c.l.b16 %v52
  %v247 = vunpack.c.l.b16 %v53
  %v248 = vunpack.c.l.b16 %v54
  %v249 = vunpack.c.l.b16 %v55
  %v250 = vunpack.c.l.b16 %v56
  %v251 = vunpack.c.l.b16 %v57
  %v252 = vunpack.c.l.b16 %v58
  %v253 = vunpack.c.l.b16 %v59
  %v254 = vunpack.c.l.b16 %v60
  %v255 = vunpack.c.l.b16 %v61
  %v256 = vunpack.c.l.b16 %v62
  %v257 = vunpack.c.l.b16 %v63
  %v258 = vunpack.c.l.b16 %v64
  %v259 = vunpack.c.l.b16 %v65
  %v260 = vunpack.c.l.b16 %v66
  %v261 = vunpack.c.l.b16 %v67
  %v262 = vunpack.c.l.b16 %v68
  %v263 = vunpack.c.l.b16 %v69
  %v264 = vunpack.c.l.b16 %v70
  %v265 = vunpack.c.l.b16 %v71
  %v266 = vunpack.c.l.b16 %v72
  %v267 = vunpack.c.l.b16 %v73
  %v268 = vunpack.c.l.b16 %v74
  %v269 = vunpack.c.l.b16 %v75
  %v270 = vunpack.c.l.b16 %v76
  %v271 = vunpack.c.l.b16 %v77
  %v272 = vunpack.c.l.b16 %v78
  %v273 = vunpack.c.l.b16 %v79
  %v274 = vunpack.c.l.b16 %v80
  %v275 = vunpack.c.l.b16 %v81
  %v276 = vunpack.c.l.b16 %v82
  %v277 = vunpack.c.l.b16 %v83
  %v278 = vunpack.c.l.b16 %v84
  %v279 = vunpack.c.l.b16 %v85
  %v280 = vunpack.c.l.b16 %v86
  %v281 = vunpack.c.l.b16 %v87
  %v282 = vunpack.c.l.b16 %v88
  %v283 = vunpack.c.l.b16 %v89
  %v284 = vunpack.c.l.b16 %v90
  %v285 = vunpack.c.l.b16 %v91
  %v286 = vunpack.c.l.b16 %v92
  %v287 = vunpack.c.l.b16 %v93
  %v288 = vunpack.c.l.b16 %v94
  %v289 = vunpack.c.l.b16 %v95
  %v290 = vunpack.c.l.b16 %v96
  %v291 = vunpack.c.l.b16 %v97
  %v292 = vunpack.c.l.b16 %v98
  %v293 = vpack.c.b16 %v222, %v221
  %v294 = vpack.c.b16 %v224, %v223
  %v295 = vpack.c.b16 %v226, %v225
  %v296 = vpack.c.b16 %v228, %v227
  %v297 = vpack.c.b16 %v230, %v229
  %v298 = vpack.c.b16 %v232, %v231
  %v299 = vpack.c.b16 %v234, %v233
  %v300 = vpack.c.b16 %v236, %v235
  %v301 = vpack.c.b16 %v238, %v237
  %v302 = vpack.c.b16 %v240, %v239
  %v303 = vpack.c.b16 %v242, %v241
  %v304 = vpack.c.b16 %v244, %v243
  %v305 = vpack.c.b16 %v246, %v245
  %v306 = vpack.c.b16 %v248, %v247
  %v307 = vpack.c.b16 %v250, %v249
  %v308 = vpack.c.b16 %v252, %v251
  %v309 = vpack.c.b16 %v254, %v253
  %v310 = vpack.c.b16 %v256, %v255
  %v311 = vpack.c.b16 %v258, %v257
  %v312 = vpack.c.b16 %v260, %v259
  %v313 = vpack.c.b16 %v262, %v261
  %v314 = vpack.c.b16 %v264, %v263
  %v315 = vpack.c.b16 %v266, %v265
  %v316 = vpack.c.b16 %v268, %v267
  %v317 = vpack.c.b16 %v270, %v269
  %v318 = vpack.c.b16 %v272, %v271
  %v319 = vpack.c.b16 %v274, %v273
  %v320 = vpack.c.b16 %v276, %v275
  %v321 = vpack.c.b16 %v278, %v277
  %v322 = vpack.c.b16 %v280, %v279
  %v323 = vpack.c.b16 %v282, %v281
  %v324 = vpack.c.b16 %v284, %v283
  %v325 = vpack.c.b16 %v286, %v285
  %v326 = vpack.c.b16 %v288, %v287
  %v327 = vpack.c.b16 %v290, %v289
  %v328 = vpack.c.b16 %v292, %v291
  %vm365 = vcmask 523264
  %v367 = vsel %vm365, %v135, 0
  %v370 = vsel %vm365, %v140, 0
  %372 = vmatprep.subr.bf16.mxu0 0
  %373 = vmatpush1.bf16.msra.mxu0 %v293
  %374 = vmatprep.subr.bf16.mxu0 0
  %375 = vmatpush1.bf16.msra.mxu0 %v294
  %376 = vmatprep.subr.bf16.mxu0 0
  %377 = vmatpush1.bf16.msra.mxu0 %v295
  %378 = vmatprep.subr.bf16.mxu0 0
  %379 = vmatpush1.bf16.msra.mxu0 %v296
  %380 = vmatprep.subr.bf16.mxu0 0
  %381 = vmatpush1.bf16.msra.mxu0 %v297
  %382 = vmatprep.subr.bf16.mxu0 0
  %383 = vmatpush1.bf16.msra.mxu0 %v298
  %384 = vmatprep.subr.bf16.mxu0 0
  %385 = vmatpush1.bf16.msra.mxu0 %v299
  %386 = vmatprep.subr.bf16.mxu0 0
  %387 = vmatpush1.bf16.msra.mxu0 %v300
  %388 = vmatprep.subr.bf16.mxu0 0
  %389 = vmatpush1.bf16.msra.mxu0 %v301
  %390 = vmatprep.subr.bf16.mxu0 0
  %391 = vmatpush1.bf16.msra.mxu0 %v302
  %392 = vmatprep.subr.bf16.mxu0 0
  %393 = vmatpush1.bf16.msra.mxu0 %v303
  %394 = vmatprep.subr.bf16.mxu0 0
  %395 = vmatpush1.bf16.msra.mxu0 %v304
  %396 = vmatprep.subr.bf16.mxu0 0
  %397 = vmatpush1.bf16.msra.mxu0 %v305
  %398 = vmatprep.subr.bf16.mxu0 0
  %399 = vmatpush1.bf16.msra.mxu0 %v306
  %400 = vmatprep.subr.bf16.mxu0 0
  %401 = vmatpush1.bf16.msra.mxu0 %v307
  %402 = vmatprep.subr.bf16.mxu0 0
  %403 = vmatpush1.bf16.msra.mxu0 %v308
  %404 = vmatprep.mubr.bf16.mxu0 %v132
  %405 = vmatmul.mubr.bf16.gmra.mrb[0].mxu0 %v131
  %v406 = vpop.f32.mrb[0].mxu0
  %v407 = vadd.f32 0.0, %v406
  %v408 = vpop.f32.mrb[0].mxu0
  %v409 = vpop.f32.mrb[0].mxu0
  %v410 = vadd.f32 0.0, %v409
  %v411 = vpop.f32.mrb[0].mxu0
  %412 = vmatprep.mubr.bf16.mxu0 %v137
  %413 = vmatmul.mubr.bf16.gmra.mrb[0].mxu0 %v136
  %v414 = vpop.f32.mrb[0].mxu0
  %v415 = vadd.f32 0.0, %v414
  %v416 = vpop.f32.mrb[0].mxu0
  %v417 = vpop.f32.mrb[0].mxu0
  %v418 = vadd.f32 0.0, %v417
  %v419 = vpop.f32.mrb[0].mxu0
  %420 = vdwg.mxu0
  %421 = vmatprep.subr.bf16.mxu0 0
  %422 = vmatpush1.bf16.msra.mxu0 %v309
  %423 = vmatprep.subr.bf16.mxu0 0
  %424 = vmatpush1.bf16.msra.mxu0 %v310
  %425 = vmatprep.subr.bf16.mxu0 0
  %426 = vmatpush1.bf16.msra.mxu0 %v311
  %427 = vmatprep.subr.bf16.mxu0 0
  %428 = vmatpush1.bf16.msra.mxu0 %v312
  %429 = vmatprep.subr.bf16.mxu0 0
  %430 = vmatpush1.bf16.msra.mxu0 %v313
  %431 = vmatprep.subr.bf16.mxu0 0
  %432 = vmatpush1.bf16.msra.mxu0 %v314
  %433 = vmatprep.subr.bf16.mxu0 0
  %434 = vmatpush1.bf16.msra.mxu0 %v315
  %435 = vmatprep.subr.bf16.mxu0 0
  %436 = vmatpush1.bf16.msra.mxu0 %v316
  %437 = vmatprep.subr.bf16.mxu0 0
  %438 = vmatpush1.bf16.msra.mxu0 %v317
  %439 = vmatprep.subr.bf16.mxu0 0
  %440 = vmatpush1.bf16.msra.mxu0 %v318
  %441 = vmatprep.subr.bf16.mxu0 0
  %442 = vmatpush1.bf16.msra.mxu0 %v319
  %443 = vmatprep.subr.bf16.mxu0 0
  %444 = vmatpush1.bf16.msra.mxu0 %v320
  %445 = vmatprep.subr.bf16.mxu0 0
  %446 = vmatpush1.bf16.msra.mxu0 %v321
  %447 = vmatprep.subr.bf16.mxu0 0
  %448 = vmatpush1.bf16.msra.mxu0 %v322
  %449 = vmatprep.subr.bf16.mxu0 0
  %450 = vmatpush1.bf16.msra.mxu0 %v323
  %451 = vmatprep.subr.bf16.mxu0 0
  %452 = vmatpush1.bf16.msra.mxu0 %v324
  %453 = vmatprep.mubr.bf16.mxu0 %v134
  %454 = vmatmul.mubr.bf16.gmra.mrb[0].mxu0 %v133
  %v455 = vpop.f32.mrb[0].mxu0
  %v456 = vadd.f32 %v407, %v455
  %v457 = vpop.f32.mrb[0].mxu0
  %v458 = vpop.f32.mrb[0].mxu0
  %v459 = vadd.f32 %v410, %v458
  %v460 = vpop.f32.mrb[0].mxu0
  %461 = vmatprep.mubr.bf16.mxu0 %v139
  %462 = vmatmul.mubr.bf16.gmra.mrb[0].mxu0 %v138
  %v463 = vpop.f32.mrb[0].mxu0
  %v464 = vadd.f32 %v415, %v463
  %v465 = vpop.f32.mrb[0].mxu0
  %v466 = vpop.f32.mrb[0].mxu0
  %v467 = vadd.f32 %v418, %v466
  %v468 = vpop.f32.mrb[0].mxu0
  %469 = vdwg.mxu0
  %470 = vmatprep.subr.bf16.mxu0 0
  %471 = vmatpush1.bf16.msra.mxu0 %v325
  %472 = vmatprep.subr.bf16.mxu0 0
  %473 = vmatpush1.bf16.msra.mxu0 %v326
  %474 = vmatprep.subr.bf16.mxu0 0
  %475 = vmatpush1.bf16.msra.mxu0 %v327
  %476 = vmatprep.subr.bf16.mxu0 0
  %477 = vmatpush1.bf16.msra.mxu0 %v328
  %478 = vmatprep.subr.bf16.mxu0 0
  %479 = vmatpush1.bf16.msra.mxu0 0
  %480 = vmatprep.subr.bf16.mxu0 0
  %481 = vmatpush1.bf16.msra.mxu0 0
  %482 = vmatprep.subr.bf16.mxu0 0
  %483 = vmatpush1.bf16.msra.mxu0 0
  %484 = vmatprep.subr.bf16.mxu0 0
  %485 = vmatpush1.bf16.msra.mxu0 0
  %486 = vmatprep.subr.bf16.mxu0 0
  %487 = vmatpush1.bf16.msra.mxu0 0
  %488 = vmatprep.subr.bf16.mxu0 0
  %489 = vmatpush1.bf16.msra.mxu0 0
  %490 = vmatprep.subr.bf16.mxu0 0
  %491 = vmatpush1.bf16.msra.mxu0 0
  %492 = vmatprep.subr.bf16.mxu0 0
  %493 = vmatpush1.bf16.msra.mxu0 0
  %494 = vmatprep.subr.bf16.mxu0 0
  %495 = vmatpush1.bf16.msra.mxu0 0
  %496 = vmatprep.subr.bf16.mxu0 0
  %497 = vmatpush1.bf16.msra.mxu0 0
  %498 = vmatprep.subr.bf16.mxu0 0
  %499 = vmatpush1.bf16.msra.mxu0 0
  %500 = vmatprep.subr.bf16.mxu0 0
  %501 = vmatpush1.bf16.msra.mxu0 0
  %502 = vmatprep.mubr.bf16.mxu0 0
  %503 = vmatmul.mubr.bf16.gmra.mrb[0].mxu0 %v367
  %v504 = vpop.f32.mrb[0].mxu0
  %v505 = vadd.f32 %v456, %v504
  %v506 = vpop.f32.mrb[0].mxu0
  %v507 = vpop.f32.mrb[0].mxu0
  %v508 = vadd.f32 %v459, %v507
  %v509 = vpop.f32.mrb[0].mxu0
  %510 = vmatprep.mubr.bf16.mxu0 0
  %511 = vmatmul.mubr.bf16.gmra.mrb[0].mxu0 %v370
  %v512 = vpop.f32.mrb[0].mxu0
  %v513 = vadd.f32 %v464, %v512
  %v514 = vpop.f32.mrb[0].mxu0
  %v515 = vpop.f32.mrb[0].mxu0
  %v516 = vadd.f32 %v467, %v515
  %v517 = vpop.f32.mrb[0].mxu0
  %518 = vdwg.mxu0
  %519 = vst.msk [vmem:[%s2] sm:$0xff] %vm365, %v505
  %520 = vst.msk [vmem:[%s2 + $0x8] sm:$0xff] %vm365, %v508
  %521 = vst.msk [vmem:[%s2 + $0x10] sm:$0xff] %vm365, %v513
  %522 = vst.msk [vmem:[%s2 + $0x18] sm:$0xff] %vm365, %v516
  %v523 = vsel %vm365, %v505, 0.0
  %v524 = vsel %vm365, %v508, 0.0
  %v525 = vadd.f32 %v523, %v524
  %v526 = vsel %vm365, %v513, 0.0
  %v527 = vadd.f32 %v525, %v526
  %v528 = vsel %vm365, %v516, 0.0
  %v529 = vadd.f32 %v527, %v528
  %v530 = vrot.slane %v529, 4
  %v531 = vadd.f32 %v529, %v530
  %v532 = vrot.slane %v531, 2
  %v533 = vadd.f32 %v531, %v532
  %v534 = vrot.slane %v533, 1
  %v535 = vadd.f32 %v533, %v534
  %vm536 = vcmask 516096
  %537 = vst.msk [vmem:[%s3] sm:$0x1] %vm536, %v535
  %v538 = vmul.f32 %v505, %v505
  %v539 = vmul.f32 %v508, %v508
  %v540 = vmul.f32 %v513, %v513
  %v541 = vmul.f32 %v516, %v516
  %v542 = vsel %vm365, %v538, 0.0
  %v543 = vsel %vm365, %v539, 0.0
  %v544 = vadd.f32 %v542, %v543
  %v545 = vsel %vm365, %v540, 0.0
  %v546 = vadd.f32 %v544, %v545
  %v547 = vsel %vm365, %v541, 0.0
  %v548 = vadd.f32 %v546, %v547
  %v549 = vrot.slane %v548, 4
  %v550 = vadd.f32 %v548, %v549
  %v551 = vrot.slane %v550, 2
  %v552 = vadd.f32 %v550, %v551
  %v553 = vrot.slane %v552, 1
  %v554 = vadd.f32 %v552, %v553
  %555 = vst.msk [vmem:[%s4] sm:$0x1] %vm536, %v554
  // Predicated region
  $region10: #{_lambda_.59} parent=0 // pred_check
    _
  $region11: #{_lambda_.59} parent=0 // pred_check_branch
    %557 = sbr.rel (0) target = $region13
  $region12: #{_lambda_.59} parent=0 // pred_region
    _
  $region13: #{_lambda_.59} parent=0 // pred_fallthru
    _
  // Predicated region
  $region14: #{_lambda_.59} parent=0 // pred_check
    _
  $region15: #{_lambda_.59} parent=0 // pred_check_branch
    %559 = sbr.rel (0) target = $region17
  $region16: #{_lambda_.59} parent=0 // pred_region
    _
  $region17: #{_lambda_.59} parent=0 // pred_fallthru
    _
  // Predicated region
  $region18: #{_lambda_.59} parent=0 // pred_check
    _
  $region19: #{_lambda_.59} parent=0 // pred_check_branch
    %561 = sbr.rel (0) target = $region21
  $region20: #{_lambda_.59} parent=0 // pred_region
    _
  $region21: #{_lambda_.59} parent=0 // pred_fallthru
    _
  // Predicated region
  $region22: #{_lambda_.59} parent=0 // pred_check
    _
  $region23: #{_lambda_.59} parent=0 // pred_check_branch
    %563 = sbr.rel (0) target = $region25
  $region24: #{_lambda_.59} parent=0 // pred_region
    _
  $region25: #{_lambda_.59} parent=0 // pred_fallthru
    _
  // Predicated region
  $region26: #{_lambda_.59} parent=0 // pred_check
    _
  $region27: #{_lambda_.59} parent=0 // pred_check_branch
    %565 = sbr.rel (0) target = $region29
  $region28: #{_lambda_.59} parent=0 // pred_region
    _
  $region29: #{_lambda_.59} parent=0 // pred_fallthru
    _
  // Predicated region
  $region30: #{_lambda_.59} parent=0 // pred_check
    _
  $region31: #{_lambda_.59} parent=0 // pred_check_branch
    %567 = sbr.rel (0) target = $region33
  $region32: #{_lambda_.59} parent=0 // pred_region
    _
  $region33: #{_lambda_.59} parent=0 // pred_fallthru
    _

// kernel: _lambda_.65
$region0: #{_lambda_.65}
  #allocation0 [shape = 'u32[]', space=smem, size = 0x4, offset = 0x4, fixed_abs, tag = 'smem constant byte address 0x4 - core index']
  #allocation1 [shape = 'u32[144,128]{1,0:T(1,128)}', space=vmem, size = 0x12000, scoped, tag = 'internal scratch']
  %s0 = inlined_call_operand.vmem [shape: f32[32,64], index: 0, kind: input, shape index: {}, may-alias: {0,4}]
  %s1 = inlined_call_operand.vmem [shape: f32[1,64], index: 1, kind: input, shape index: {}]
  %s2 = inlined_call_operand.vmem [shape: f32[1,64], index: 2, kind: input, shape index: {}]
  %s3 = inlined_call_operand.vmem [shape: f32[32,64], index: 3, kind: input, shape index: {}]
  %s4 = inlined_call_operand.vmem [shape: f32[32,64], index: 4, kind: output, shape index: {}, may-alias: {0,4}]
  %s5 = sld [smem:[#allocation0]]
  $region26: #{_lambda_.65} parent=0
    _
  %s7 = ssub.s32 1, %s5
  %s8 = scalar_select 0, %s7, %s5
  // Predicated region
  $region2: #{_lambda_.65} parent=0 // pred_check
    _
  $region3: #{_lambda_.65} parent=0 // pred_check_branch
    %10 = sbr.rel (0) target = $region5
  $region4: #{_lambda_.65} parent=0 // pred_region
    _
  $region5: #{_lambda_.65} parent=0 // pred_fallthru
    _
  // Predicated region
  $region6: #{_lambda_.65} parent=0 // pred_check
    _
  $region7: #{_lambda_.65} parent=0 // pred_check_branch
    %12 = sbr.rel (0) target = $region9
  $region8: #{_lambda_.65} parent=0 // pred_region
    _
  $region9: #{_lambda_.65} parent=0 // pred_fallthru
    _
  // Predicated region
  $region10: #{_lambda_.65} parent=0 // pred_check
    _
  $region11: #{_lambda_.65} parent=0 // pred_check_branch
    %14 = sbr.rel (0) target = $region13
  $region12: #{_lambda_.65} parent=0 // pred_region
    _
  $region13: #{_lambda_.65} parent=0 // pred_fallthru
    _
  // Predicated region
  $region14: #{_lambda_.65} parent=0 // pred_check
    _
  $region15: #{_lambda_.65} parent=0 // pred_check_branch
    %16 = sbr.rel (0) target = $region17
  $region16: #{_lambda_.65} parent=0 // pred_region
    _
  $region17: #{_lambda_.65} parent=0 // pred_fallthru
    _
  %v17 = vld [vmem:[%s0] sm:$0xff]
  %v18 = vld [vmem:[%s0 + $0x8] sm:$0xff]
  %v19 = vld [vmem:[%s0 + $0x10] sm:$0xff]
  %v20 = vld [vmem:[%s0 + $0x18] sm:$0xff]
  %v21 = vld [vmem:[%s1] sm:$0x1]
  %v23 = vlaneseq
  %v24 = vshrl.u32 %v23, 7
  %v25 = vsub.s32 0, %v24
  %v26 = vrot.slane %v21, %v25
  %v28 = vmul.f32 %v17, %v26
  %v29 = vmul.f32 %v18, %v26
  %v30 = vmul.f32 %v19, %v26
  %v31 = vmul.f32 %v20, %v26
  %v32 = vld [vmem:[%s2] sm:$0x1]
  %v34 = vlaneseq
  %v35 = vshrl.u32 %v34, 7
  %v36 = vsub.s32 0, %v35
  %v37 = vrot.slane %v32, %v36
  %v39 = vadd.f32 %v28, %v37
  %v40 = vadd.f32 %v29, %v37
  %v41 = vadd.f32 %v30, %v37
  %v42 = vadd.f32 %v31, %v37
  %v43 = vld [vmem:[%s3] sm:$0xff]
  %v44 = vld [vmem:[%s3 + $0x8] sm:$0xff]
  %v45 = vld [vmem:[%s3 + $0x10] sm:$0xff]
  %v46 = vld [vmem:[%s3 + $0x18] sm:$0xff]
  %v47 = vadd.f32 %v39, %v43
  %v48 = vadd.f32 %v40, %v44
  %v49 = vadd.f32 %v41, %v45
  %v50 = vadd.f32 %v42, %v46
  %v51 = vmax.f32 %v47, 0.0
  %v52 = vmax.f32 %v48, 0.0
  %v53 = vmax.f32 %v49, 0.0
  %v54 = vmax.f32 %v50, 0.0
  %vm55 = vcmask 523264
  %56 = vst.msk [vmem:[%s4] sm:$0xff] %vm55, %v51
  %57 = vst.msk [vmem:[%s4 + $0x8] sm:$0xff] %vm55, %v52
  %58 = vst.msk [vmem:[%s4 + $0x10] sm:$0xff] %vm55, %v53
  %59 = vst.msk [vmem:[%s4 + $0x18] sm:$0xff] %vm55, %v54
  // Predicated region
  $region18: #{_lambda_.65} parent=0 // pred_check
    _
  $region19: #{_lambda_.65} parent=0 // pred_check_branch
    %61 = sbr.rel (0) target = $region21
  $region20: #{_lambda_.65} parent=0 // pred_region
    _
  $region21: #{_lambda_.65} parent=0 // pred_fallthru
    _
  // Predicated region
  $region22: #{_lambda_.65} parent=0 // pred_check
    _
  $region23: #{_lambda_.65} parent=0 // pred_check_branch
    %63 = sbr.rel (0) target = $region25
  $region24: #{_lambda_.65} parent=0 // pred_region
    _
  $region25: #{_lambda_.65} parent=0 // pred_fallthru
    _

// kernel: _lambda_.69
$region0: #{_lambda_.69}
  #allocation0 [shape = 'u32[]', space=smem, size = 0x4, offset = 0x4, fixed_abs, tag = 'smem constant byte address 0x4 - core index']
  #allocation1 [shape = 'u32[144,128]{1,0:T(1,128)}', space=vmem, size = 0x12000, scoped, tag = 'internal scratch']
  %s0 = inlined_call_operand.vmem [shape: bf16[8,64], index: 0, kind: input, shape index: {}]
  %s1 = inlined_call_operand.vmem [shape: bf16[64,128], index: 1, kind: input, shape index: {}]
  %s2 = inlined_call_operand.vmem [shape: f32[8,128], index: 2, kind: output, shape index: {0}]
  %s3 = inlined_call_operand.vmem [shape: f32[1,1,128], index: 3, kind: output, shape index: {1}]
  %s4 = inlined_call_operand.vmem [shape: f32[1,1,128], index: 4, kind: output, shape index: {2}]
  %5 = xla_tuple %s2, %s3, %s4
  %s6 = sld [smem:[#allocation0]]
  $region34: #{_lambda_.69} parent=0
    _
  %s8 = ssub.s32 1, %s6
  %s9 = scalar_select 0, %s8, %s6
  // Predicated region
  $region2: #{_lambda_.69} parent=0 // pred_check
    _
  $region3: #{_lambda_.69} parent=0 // pred_check_branch
    %11 = sbr.rel (0) target = $region5
  $region4: #{_lambda_.69} parent=0 // pred_region
    _
  $region5: #{_lambda_.69} parent=0 // pred_fallthru
    _
  // Predicated region
  $region6: #{_lambda_.69} parent=0 // pred_check
    _
  $region7: #{_lambda_.69} parent=0 // pred_check_branch
    %13 = sbr.rel (0) target = $region9
  $region8: #{_lambda_.69} parent=0 // pred_region
    _
  $region9: #{_lambda_.69} parent=0 // pred_fallthru
    _
  %v15 = vld [vmem:[%s0] sm:$0xf]
  %v16 = vld [vmem:[%s1] sm:$0xf]
  %v17 = vld [vmem:[%s1 + $0x4] sm:$0xf]
  %v18 = vld [vmem:[%s1 + $0x8] sm:$0xf]
  %v19 = vld [vmem:[%s1 + $0xc] sm:$0xf]
  %v20 = vld [vmem:[%s1 + $0x10] sm:$0xf]
  %v21 = vld [vmem:[%s1 + $0x14] sm:$0xf]
  %v22 = vld [vmem:[%s1 + $0x18] sm:$0xf]
  %v23 = vld [vmem:[%s1 + $0x1c] sm:$0xf]
  %v32 = vunpack.c.l.b16 %v16
  %v33 = vunpack.c.l.b16 %v17
  %v34 = vunpack.c.l.b16 %v18
  %v35 = vunpack.c.l.b16 %v19
  %v36 = vunpack.c.l.b16 %v20
  %v37 = vunpack.c.l.b16 %v21
  %v38 = vunpack.c.l.b16 %v22
  %v39 = vunpack.c.l.b16 %v23
  %v40 = vpack.c.b16 %v33, %v32
  %v41 = vpack.c.b16 %v35, %v34
  %v42 = vpack.c.b16 %v37, %v36
  %v43 = vpack.c.b16 %v39, %v38
  %vm48 = vcmask 523264
  %v50 = vsel %vm48, %v15, 0
  %52 = vmatprep.subr.bf16.mxu0 0
  %53 = vmatpush1.bf16.msra.mxu0 %v40
  %54 = vmatprep.subr.bf16.mxu0 0
  %55 = vmatpush1.bf16.msra.mxu0 %v41
  %56 = vmatprep.subr.bf16.mxu0 0
  %57 = vmatpush1.bf16.msra.mxu0 %v42
  %58 = vmatprep.subr.bf16.mxu0 0
  %59 = vmatpush1.bf16.msra.mxu0 %v43
  %60 = vmatprep.subr.bf16.mxu0 0
  %61 = vmatpush1.bf16.msra.mxu0 0
  %62 = vmatprep.subr.bf16.mxu0 0
  %63 = vmatpush1.bf16.msra.mxu0 0
  %64 = vmatprep.subr.bf16.mxu0 0
  %65 = vmatpush1.bf16.msra.mxu0 0
  %66 = vmatprep.subr.bf16.mxu0 0
  %67 = vmatpush1.bf16.msra.mxu0 0
  %68 = vmatprep.subr.bf16.mxu0 0
  %69 = vmatpush1.bf16.msra.mxu0 0
  %70 = vmatprep.subr.bf16.mxu0 0
  %71 = vmatpush1.bf16.msra.mxu0 0
  %72 = vmatprep.subr.bf16.mxu0 0
  %73 = vmatpush1.bf16.msra.mxu0 0
  %74 = vmatprep.subr.bf16.mxu0 0
  %75 = vmatpush1.bf16.msra.mxu0 0
  %76 = vmatprep.subr.bf16.mxu0 0
  %77 = vmatpush1.bf16.msra.mxu0 0
  %78 = vmatprep.subr.bf16.mxu0 0
  %79 = vmatpush1.bf16.msra.mxu0 0
  %80 = vmatprep.subr.bf16.mxu0 0
  %81 = vmatpush1.bf16.msra.mxu0 0
  %82 = vmatprep.subr.bf16.mxu0 0
  %83 = vmatpush1.bf16.msra.mxu0 0
  %84 = vmatprep.mubr.bf16.mxu0 0
  %85 = vmatmul.mubr.bf16.gmra.mrb[0].mxu0 %v50
  %v86 = vpop.f32.mrb[0].mxu0
  %v87 = vadd.f32 0.0, %v86
  %v88 = vpop.f32.mrb[0].mxu0
  %v89 = vpop.f32.mrb[0].mxu0
  %v90 = vpop.f32.mrb[0].mxu0
  %91 = vdwg.mxu0
  %92 = vst [vmem:[%s2] sm:$0xff] %v87
  %v93 = vrot.slane %v87, 4
  %v94 = vadd.f32 %v87, %v93
  %v95 = vrot.slane %v94, 2
  %v96 = vadd.f32 %v94, %v95
  %v97 = vrot.slane %v96, 1
  %v98 = vadd.f32 %v96, %v97
  %99 = vst [vmem:[%s3] sm:$0x1] %v98
  %v100 = vmul.f32 %v87, %v87
  %v101 = vrot.slane %v100, 4
  %v102 = vadd.f32 %v100, %v101
  %v103 = vrot.slane %v102, 2
  %v104 = vadd.f32 %v102, %v103
  %v105 = vrot.slane %v104, 1
  %v106 = vadd.f32 %v104, %v105
  %107 = vst [vmem:[%s4] sm:$0x1] %v106
  // Predicated region
  $region10: #{_lambda_.69} parent=0 // pred_check
    _
  $region11: #{_lambda_.69} parent=0 // pred_check_branch
    %109 = sbr.rel (0) target = $region13
  $region12: #{_lambda_.69} parent=0 // pred_region
    _
  $region13: #{_lambda_.69} parent=0 // pred_fallthru
    _
  // Predicated region
  $region14: #{_lambda_.69} parent=0 // pred_check
    _
  $region15: #{_lambda_.69} parent=0 // pred_check_branch
    %111 = sbr.rel (0) target = $region17
  $region16: #{_lambda_.69} parent=0 // pred_region
    _
  $region17: #{_lambda_.69} parent=0 // pred_fallthru
    _
  // Predicated region
  $region18: #{_lambda_.69} parent=0 // pred_check
    _
  $region19: #{_lambda_.69} parent=0 // pred_check_branch
    %113 = sbr.rel (0) target = $region21
  $region20: #{_lambda_.69} parent=0 // pred_region
    _
  $region21: #{_lambda_.69} parent=0 // pred_fallthru
    _
  // Predicated region
  $region22: #{_lambda_.69} parent=0 // pred_check
    _
  $region23: #{_lambda_.69} parent=0 // pred_check_branch
    %115 = sbr.rel (0) target = $region25
  $region24: #{_lambda_.69} parent=0 // pred_region
    _
  $region25: #{_lambda_.69} parent=0 // pred_fallthru
    _
  // Predicated region
  $region26: #{_lambda_.69} parent=0 // pred_check
    _
  $region27: #{_lambda_.69} parent=0 // pred_check_branch
    %117 = sbr.rel (0) target = $region29
  $region28: #{_lambda_.69} parent=0 // pred_region
    _
  $region29: #{_lambda_.69} parent=0 // pred_fallthru
    _
  // Predicated region
  $region30: #{_lambda_.69} parent=0 // pred_check
    _
  $region31: #{_lambda_.69} parent=0 // pred_check_branch
    %119 = sbr.rel (0) target = $region33
  $region32: #{_lambda_.69} parent=0 // pred_region
    _
  $region33: #{_lambda_.69} parent=0 // pred_fallthru
    _

// kernel: _lambda_.67
$region0: #{_lambda_.67}
  #allocation0 [shape = 'u32[]', space=smem, size = 0x4, offset = 0x4, fixed_abs, tag = 'smem constant byte address 0x4 - core index']
  #allocation1 [shape = 'u32[144,128]{1,0:T(1,128)}', space=vmem, size = 0x12000, scoped, tag = 'internal scratch']
  %s0 = inlined_call_operand.vmem [shape: f32[8,128], index: 0, kind: input, shape index: {}, may-alias: {0,3}]
  %s1 = inlined_call_operand.vmem [shape: f32[1,128], index: 1, kind: input, shape index: {}]
  %s2 = inlined_call_operand.vmem [shape: f32[1,128], index: 2, kind: input, shape index: {}]
  %s3 = inlined_call_operand.vmem [shape: f32[8,128], index: 3, kind: output, shape index: {}, may-alias: {0,3}]
  %s4 = sld [smem:[#allocation0]]
  $region22: #{_lambda_.67} parent=0
    _
  %s6 = ssub.s32 1, %s4
  %s7 = scalar_select 0, %s6, %s4
  // Predicated region
  $region2: #{_lambda_.67} parent=0 // pred_check
    _
  $region3: #{_lambda_.67} parent=0 // pred_check_branch
    %9 = sbr.rel (0) target = $region5
  $region4: #{_lambda_.67} parent=0 // pred_region
    _
  $region5: #{_lambda_.67} parent=0 // pred_fallthru
    _
  // Predicated region
  $region6: #{_lambda_.67} parent=0 // pred_check
    _
  $region7: #{_lambda_.67} parent=0 // pred_check_branch
    %11 = sbr.rel (0) target = $region9
  $region8: #{_lambda_.67} parent=0 // pred_region
    _
  $region9: #{_lambda_.67} parent=0 // pred_fallthru
    _
  // Predicated region
  $region10: #{_lambda_.67} parent=0 // pred_check
    _
  $region11: #{_lambda_.67} parent=0 // pred_check_branch
    %13 = sbr.rel (0) target = $region13
  $region12: #{_lambda_.67} parent=0 // pred_region
    _
  $region13: #{_lambda_.67} parent=0 // pred_fallthru
    _
  %v14 = vld [vmem:[%s0] sm:$0xff]
  %v15 = vld [vmem:[%s1] sm:$0x1]
  %v17 = vlaneseq
  %v18 = vshrl.u32 %v17, 7
  %v19 = vsub.s32 0, %v18
  %v20 = vrot.slane %v15, %v19
  %v22 = vmul.f32 %v14, %v20
  %v23 = vld [vmem:[%s2] sm:$0x1]
  %v25 = vlaneseq
  %v26 = vshrl.u32 %v25, 7
  %v27 = vsub.s32 0, %v26
  %v28 = vrot.slane %v23, %v27
  %v30 = vadd.f32 %v22, %v28
  %v31 = vmax.f32 %v30, 0.0
  %32 = vst [vmem:[%s3] sm:$0xff] %v31
  // Predicated region
  $region14: #{_lambda_.67} parent=0 // pred_check
    _
  $region15: #{_lambda_.67} parent=0 // pred_check_branch
    %34 = sbr.rel (0) target = $region17
  $region16: #{_lambda_.67} parent=0 // pred_region
    _
  $region17: #{_lambda_.67} parent=0 // pred_fallthru
    _
  // Predicated region
  $region18: #{_lambda_.67} parent=0 // pred_check
    _
  $region19: #{_lambda_.67} parent=0 // pred_check_branch
    %36 = sbr.rel (0) target = $region21
  $region20: #{_lambda_.67} parent=0 // pred_region
    _
  $region21: #{_lambda_.67} parent=0 // pred_fallthru
    _

// kernel: _lambda_.66
$region0: #{_lambda_.66}
  #allocation0 [shape = 'u32[]', space=smem, size = 0x4, offset = 0x4, fixed_abs, tag = 'smem constant byte address 0x4 - core index']
  #allocation1 [shape = 'u32[144,128]{1,0:T(1,128)}', space=vmem, size = 0x12000, scoped, tag = 'internal scratch']
  %s0 = inlined_call_operand.vmem [shape: bf16[8,576], index: 0, kind: input, shape index: {}]
  %s1 = inlined_call_operand.vmem [shape: bf16[576,128], index: 1, kind: input, shape index: {}]
  %s2 = inlined_call_operand.vmem [shape: f32[8,128], index: 2, kind: output, shape index: {0}]
  %s3 = inlined_call_operand.vmem [shape: f32[1,1,128], index: 3, kind: output, shape index: {1}]
  %s4 = inlined_call_operand.vmem [shape: f32[1,1,128], index: 4, kind: output, shape index: {2}]
  %5 = xla_tuple %s2, %s3, %s4
  %s6 = sld [smem:[#allocation0]]
  $region34: #{_lambda_.66} parent=0
    _
  %s8 = ssub.s32 1, %s6
  %s9 = scalar_select 0, %s8, %s6
  // Predicated region
  $region2: #{_lambda_.66} parent=0 // pred_check
    _
  $region3: #{_lambda_.66} parent=0 // pred_check_branch
    %11 = sbr.rel (0) target = $region5
  $region4: #{_lambda_.66} parent=0 // pred_region
    _
  $region5: #{_lambda_.66} parent=0 // pred_fallthru
    _
  // Predicated region
  $region6: #{_lambda_.66} parent=0 // pred_check
    _
  $region7: #{_lambda_.66} parent=0 // pred_check_branch
    %13 = sbr.rel (0) target = $region9
  $region8: #{_lambda_.66} parent=0 // pred_region
    _
  $region9: #{_lambda_.66} parent=0 // pred_fallthru
    _
  %v15 = vld [vmem:[%s0] sm:$0xff]
  %v16 = vld [vmem:[%s0 + $0x8] sm:$0xff]
  %v17 = vld [vmem:[%s0 + $0x10] sm:$0xf]
  %v18 = vld [vmem:[%s1] sm:$0xf]
  %v19 = vld [vmem:[%s1 + $0x4] sm:$0xf]
  %v20 = vld [vmem:[%s1 + $0x8] sm:$0xf]
  %v21 = vld [vmem:[%s1 + $0xc] sm:$0xf]
  %v22 = vld [vmem:[%s1 + $0x10] sm:$0xf]
  %v23 = vld [vmem:[%s1 + $0x14] sm:$0xf]
  %v24 = vld [vmem:[%s1 + $0x18] sm:$0xf]
  %v25 = vld [vmem:[%s1 + $0x1c] sm:$0xf]
  %v26 = vld [vmem:[%s1 + $0x20] sm:$0xf]
  %v27 = vld [vmem:[%s1 + $0x24] sm:$0xf]
  %v28 = vld [vmem:[%s1 + $0x28] sm:$0xf]
  %v29 = vld [vmem:[%s1 + $0x2c] sm:$0xf]
  %v30 = vld [vmem:[%s1 + $0x30] sm:$0xf]
  %v31 = vld [vmem:[%s1 + $0x34] sm:$0xf]
  %v32 = vld [vmem:[%s1 + $0x38] sm:$0xf]
  %v33 = vld [vmem:[%s1 + $0x3c] sm:$0xf]
  %v34 = vld [vmem:[%s1 + $0x40] sm:$0xf]
  %v35 = vld [vmem:[%s1 + $0x44] sm:$0xf]
  %v36 = vld [vmem:[%s1 + $0x48] sm:$0xf]
  %v37 = vld [vmem:[%s1 + $0x4c] sm:$0xf]
  %v38 = vld [vmem:[%s1 + $0x50] sm:$0xf]
  %v39 = vld [vmem:[%s1 + $0x54] sm:$0xf]
  %v40 = vld [vmem:[%s1 + $0x58] sm:$0xf]
  %v41 = vld [vmem:[%s1 + $0x5c] sm:$0xf]
  %v42 = vld [vmem:[%s1 + $0x60] sm:$0xf]
  %v43 = vld [vmem:[%s1 + $0x64] sm:$0xf]
  %v44 = vld [vmem:[%s1 + $0x68] sm:$0xf]
  %v45 = vld [vmem:[%s1 + $0x6c] sm:$0xf]
  %v46 = vld [vmem:[%s1 + $0x70] sm:$0xf]
  %v47 = vld [vmem:[%s1 + $0x74] sm:$0xf]
  %v48 = vld [vmem:[%s1 + $0x78] sm:$0xf]
  %v49 = vld [vmem:[%s1 + $0x7c] sm:$0xf]
  %v50 = vld [vmem:[%s1 + $0x80] sm:$0xf]
  %v51 = vld [vmem:[%s1 + $0x84] sm:$0xf]
  %v52 = vld [vmem:[%s1 + $0x88] sm:$0xf]
  %v53 = vld [vmem:[%s1 + $0x8c] sm:$0xf]
  %v54 = vld [vmem:[%s1 + $0x90] sm:$0xf]
  %v55 = vld [vmem:[%s1 + $0x94] sm:$0xf]
  %v56 = vld [vmem:[%s1 + $0x98] sm:$0xf]
  %v57 = vld [vmem:[%s1 + $0x9c] sm:$0xf]
  %v58 = vld [vmem:[%s1 + $0xa0] sm:$0xf]
  %v59 = vld [vmem:[%s1 + $0xa4] sm:$0xf]
  %v60 = vld [vmem:[%s1 + $0xa8] sm:$0xf]
  %v61 = vld [vmem:[%s1 + $0xac] sm:$0xf]
  %v62 = vld [vmem:[%s1 + $0xb0] sm:$0xf]
  %v63 = vld [vmem:[%s1 + $0xb4] sm:$0xf]
  %v64 = vld [vmem:[%s1 + $0xb8] sm:$0xf]
  %v65 = vld [vmem:[%s1 + $0xbc] sm:$0xf]
  %v66 = vld [vmem:[%s1 + $0xc0] sm:$0xf]
  %v67 = vld [vmem:[%s1 + $0xc4] sm:$0xf]
  %v68 = vld [vmem:[%s1 + $0xc8] sm:$0xf]
  %v69 = vld [vmem:[%s1 + $0xcc] sm:$0xf]
  %v70 = vld [vmem:[%s1 + $0xd0] sm:$0xf]
  %v71 = vld [vmem:[%s1 + $0xd4] sm:$0xf]
  %v72 = vld [vmem:[%s1 + $0xd8] sm:$0xf]
  %v73 = vld [vmem:[%s1 + $0xdc] sm:$0xf]
  %v74 = vld [vmem:[%s1 + $0xe0] sm:$0xf]
  %v75 = vld [vmem:[%s1 + $0xe4] sm:$0xf]
  %v76 = vld [vmem:[%s1 + $0xe8] sm:$0xf]
  %v77 = vld [vmem:[%s1 + $0xec] sm:$0xf]
  %v78 = vld [vmem:[%s1 + $0xf0] sm:$0xf]
  %v79 = vld [vmem:[%s1 + $0xf4] sm:$0xf]
  %v80 = vld [vmem:[%s1 + $0xf8] sm:$0xf]
  %v81 = vld [vmem:[%s1 + $0xfc] sm:$0xf]
  %v82 = vld [vmem:[%s1 + $0x100] sm:$0xf]
  %v83 = vld [vmem:[%s1 + $0x104] sm:$0xf]
  %v84 = vld [vmem:[%s1 + $0x108] sm:$0xf]
  %v85 = vld [vmem:[%s1 + $0x10c] sm:$0xf]
  %v86 = vld [vmem:[%s1 + $0x110] sm:$0xf]
  %v87 = vld [vmem:[%s1 + $0x114] sm:$0xf]
  %v88 = vld [vmem:[%s1 + $0x118] sm:$0xf]
  %v89 = vld [vmem:[%s1 + $0x11c] sm:$0xf]
  %v93 = vunpack.c.l.b16 %v15
  %v94 = vunpack.c.h.b16 %v15
  %v95 = vunpack.c.l.b16 %v16
  %v96 = vunpack.c.h.b16 %v16
  %v97 = vunpack.c.l.b16 %v17
  %v98 = vpack.c.b16 %v93, %v93
  %v99 = vpack.c.b16 %v94, %v94
  %v100 = vpack.c.b16 %v95, %v95
  %v101 = vpack.c.b16 %v96, %v96
  %v102 = vpack.c.b16 %v97, %v97
  %v179 = vunpack.c.l.b16 %v18
  %v180 = vunpack.c.l.b16 %v19
  %v181 = vunpack.c.l.b16 %v20
  %v182 = vunpack.c.l.b16 %v21
  %v183 = vunpack.c.l.b16 %v22
  %v184 = vunpack.c.l.b16 %v23
  %v185 = vunpack.c.l.b16 %v24
  %v186 = vunpack.c.l.b16 %v25
  %v187 = vunpack.c.l.b16 %v26
  %v188 = vunpack.c.l.b16 %v27
  %v189 = vunpack.c.l.b16 %v28
  %v190 = vunpack.c.l.b16 %v29
  %v191 = vunpack.c.l.b16 %v30
  %v192 = vunpack.c.l.b16 %v31
  %v193 = vunpack.c.l.b16 %v32
  %v194 = vunpack.c.l.b16 %v33
  %v195 = vunpack.c.l.b16 %v34
  %v196 = vunpack.c.l.b16 %v35
  %v197 = vunpack.c.l.b16 %v36
  %v198 = vunpack.c.l.b16 %v37
  %v199 = vunpack.c.l.b16 %v38
  %v200 = vunpack.c.l.b16 %v39
  %v201 = vunpack.c.l.b16 %v40
  %v202 = vunpack.c.l.b16 %v41
  %v203 = vunpack.c.l.b16 %v42
  %v204 = vunpack.c.l.b16 %v43
  %v205 = vunpack.c.l.b16 %v44
  %v206 = vunpack.c.l.b16 %v45
  %v207 = vunpack.c.l.b16 %v46
  %v208 = vunpack.c.l.b16 %v47
  %v209 = vunpack.c.l.b16 %v48
  %v210 = vunpack.c.l.b16 %v49
  %v211 = vunpack.c.l.b16 %v50
  %v212 = vunpack.c.l.b16 %v51
  %v213 = vunpack.c.l.b16 %v52
  %v214 = vunpack.c.l.b16 %v53
  %v215 = vunpack.c.l.b16 %v54
  %v216 = vunpack.c.l.b16 %v55
  %v217 = vunpack.c.l.b16 %v56
  %v218 = vunpack.c.l.b16 %v57
  %v219 = vunpack.c.l.b16 %v58
  %v220 = vunpack.c.l.b16 %v59
  %v221 = vunpack.c.l.b16 %v60
  %v222 = vunpack.c.l.b16 %v61
  %v223 = vunpack.c.l.b16 %v62
  %v224 = vunpack.c.l.b16 %v63
  %v225 = vunpack.c.l.b16 %v64
  %v226 = vunpack.c.l.b16 %v65
  %v227 = vunpack.c.l.b16 %v66
  %v228 = vunpack.c.l.b16 %v67
  %v229 = vunpack.c.l.b16 %v68
  %v230 = vunpack.c.l.b16 %v69
  %v231 = vunpack.c.l.b16 %v70
  %v232 = vunpack.c.l.b16 %v71
  %v233 = vunpack.c.l.b16 %v72
  %v234 = vunpack.c.l.b16 %v73
  %v235 = vunpack.c.l.b16 %v74
  %v236 = vunpack.c.l.b16 %v75
  %v237 = vunpack.c.l.b16 %v76
  %v238 = vunpack.c.l.b16 %v77
  %v239 = vunpack.c.l.b16 %v78
  %v240 = vunpack.c.l.b16 %v79
  %v241 = vunpack.c.l.b16 %v80
  %v242 = vunpack.c.l.b16 %v81
  %v243 = vunpack.c.l.b16 %v82
  %v244 = vunpack.c.l.b16 %v83
  %v245 = vunpack.c.l.b16 %v84
  %v246 = vunpack.c.l.b16 %v85
  %v247 = vunpack.c.l.b16 %v86
  %v248 = vunpack.c.l.b16 %v87
  %v249 = vunpack.c.l.b16 %v88
  %v250 = vunpack.c.l.b16 %v89
  %v251 = vpack.c.b16 %v180, %v179
  %v252 = vpack.c.b16 %v182, %v181
  %v253 = vpack.c.b16 %v184, %v183
  %v254 = vpack.c.b16 %v186, %v185
  %v255 = vpack.c.b16 %v188, %v187
  %v256 = vpack.c.b16 %v190, %v189
  %v257 = vpack.c.b16 %v192, %v191
  %v258 = vpack.c.b16 %v194, %v193
  %v259 = vpack.c.b16 %v196, %v195
  %v260 = vpack.c.b16 %v198, %v197
  %v261 = vpack.c.b16 %v200, %v199
  %v262 = vpack.c.b16 %v202, %v201
  %v263 = vpack.c.b16 %v204, %v203
  %v264 = vpack.c.b16 %v206, %v205
  %v265 = vpack.c.b16 %v208, %v207
  %v266 = vpack.c.b16 %v210, %v209
  %v267 = vpack.c.b16 %v212, %v211
  %v268 = vpack.c.b16 %v214, %v213
  %v269 = vpack.c.b16 %v216, %v215
  %v270 = vpack.c.b16 %v218, %v217
  %v271 = vpack.c.b16 %v220, %v219
  %v272 = vpack.c.b16 %v222, %v221
  %v273 = vpack.c.b16 %v224, %v223
  %v274 = vpack.c.b16 %v226, %v225
  %v275 = vpack.c.b16 %v228, %v227
  %v276 = vpack.c.b16 %v230, %v229
  %v277 = vpack.c.b16 %v232, %v231
  %v278 = vpack.c.b16 %v234, %v233
  %v279 = vpack.c.b16 %v236, %v235
  %v280 = vpack.c.b16 %v238, %v237
  %v281 = vpack.c.b16 %v240, %v239
  %v282 = vpack.c.b16 %v242, %v241
  %v283 = vpack.c.b16 %v244, %v243
  %v284 = vpack.c.b16 %v246, %v245
  %v285 = vpack.c.b16 %v248, %v247
  %v286 = vpack.c.b16 %v250, %v249
  %vm323 = vcmask 523264
  %v325 = vsel %vm323, %v102, 0
  %327 = vmatprep.subr.bf16.mxu0 0
  %328 = vmatpush1.bf16.msra.mxu0 %v251
  %329 = vmatprep.subr.bf16.mxu0 0
  %330 = vmatpush1.bf16.msra.mxu0 %v252
  %331 = vmatprep.subr.bf16.mxu0 0
  %332 = vmatpush1.bf16.msra.mxu0 %v253
  %333 = vmatprep.subr.bf16.mxu0 0
  %334 = vmatpush1.bf16.msra.mxu0 %v254
  %335 = vmatprep.subr.bf16.mxu0 0
  %336 = vmatpush1.bf16.msra.mxu0 %v255
  %337 = vmatprep.subr.bf16.mxu0 0
  %338 = vmatpush1.bf16.msra.mxu0 %v256
  %339 = vmatprep.subr.bf16.mxu0 0
  %340 = vmatpush1.bf16.msra.mxu0 %v257
  %341 = vmatprep.subr.bf16.mxu0 0
  %342 = vmatpush1.bf16.msra.mxu0 %v258
  %343 = vmatprep.subr.bf16.mxu0 0
  %344 = vmatpush1.bf16.msra.mxu0 %v259
  %345 = vmatprep.subr.bf16.mxu0 0
  %346 = vmatpush1.bf16.msra.mxu0 %v260
  %347 = vmatprep.subr.bf16.mxu0 0
  %348 = vmatpush1.bf16.msra.mxu0 %v261
  %349 = vmatprep.subr.bf16.mxu0 0
  %350 = vmatpush1.bf16.msra.mxu0 %v262
  %351 = vmatprep.subr.bf16.mxu0 0
  %352 = vmatpush1.bf16.msra.mxu0 %v263
  %353 = vmatprep.subr.bf16.mxu0 0
  %354 = vmatpush1.bf16.msra.mxu0 %v264
  %355 = vmatprep.subr.bf16.mxu0 0
  %356 = vmatpush1.bf16.msra.mxu0 %v265
  %357 = vmatprep.subr.bf16.mxu0 0
  %358 = vmatpush1.bf16.msra.mxu0 %v266
  %359 = vmatprep.mubr.bf16.mxu0 %v99
  %360 = vmatmul.mubr.bf16.gmra.mrb[0].mxu0 %v98
  %v361 = vpop.f32.mrb[0].mxu0
  %v362 = vadd.f32 0.0, %v361
  %v363 = vpop.f32.mrb[0].mxu0
  %v364 = vpop.f32.mrb[0].mxu0
  %v365 = vpop.f32.mrb[0].mxu0
  %366 = vdwg.mxu0
  %367 = vmatprep.subr.bf16.mxu0 0
  %368 = vmatpush1.bf16.msra.mxu0 %v267
  %369 = vmatprep.subr.bf16.mxu0 0
  %370 = vmatpush1.bf16.msra.mxu0 %v268
  %371 = vmatprep.subr.bf16.mxu0 0
  %372 = vmatpush1.bf16.msra.mxu0 %v269
  %373 = vmatprep.subr.bf16.mxu0 0
  %374 = vmatpush1.bf16.msra.mxu0 %v270
  %375 = vmatprep.subr.bf16.mxu0 0
  %376 = vmatpush1.bf16.msra.mxu0 %v271
  %377 = vmatprep.subr.bf16.mxu0 0
  %378 = vmatpush1.bf16.msra.mxu0 %v272
  %379 = vmatprep.subr.bf16.mxu0 0
  %380 = vmatpush1.bf16.msra.mxu0 %v273
  %381 = vmatprep.subr.bf16.mxu0 0
  %382 = vmatpush1.bf16.msra.mxu0 %v274
  %383 = vmatprep.subr.bf16.mxu0 0
  %384 = vmatpush1.bf16.msra.mxu0 %v275
  %385 = vmatprep.subr.bf16.mxu0 0
  %386 = vmatpush1.bf16.msra.mxu0 %v276
  %387 = vmatprep.subr.bf16.mxu0 0
  %388 = vmatpush1.bf16.msra.mxu0 %v277
  %389 = vmatprep.subr.bf16.mxu0 0
  %390 = vmatpush1.bf16.msra.mxu0 %v278
  %391 = vmatprep.subr.bf16.mxu0 0
  %392 = vmatpush1.bf16.msra.mxu0 %v279
  %393 = vmatprep.subr.bf16.mxu0 0
  %394 = vmatpush1.bf16.msra.mxu0 %v280
  %395 = vmatprep.subr.bf16.mxu0 0
  %396 = vmatpush1.bf16.msra.mxu0 %v281
  %397 = vmatprep.subr.bf16.mxu0 0
  %398 = vmatpush1.bf16.msra.mxu0 %v282
  %399 = vmatprep.mubr.bf16.mxu0 %v101
  %400 = vmatmul.mubr.bf16.gmra.mrb[0].mxu0 %v100
  %v401 = vpop.f32.mrb[0].mxu0
  %v402 = vadd.f32 %v362, %v401
  %v403 = vpop.f32.mrb[0].mxu0
  %v404 = vpop.f32.mrb[0].mxu0
  %v405 = vpop.f32.mrb[0].mxu0
  %406 = vdwg.mxu0
  %407 = vmatprep.subr.bf16.mxu0 0
  %408 = vmatpush1.bf16.msra.mxu0 %v283
  %409 = vmatprep.subr.bf16.mxu0 0
  %410 = vmatpush1.bf16.msra.mxu0 %v284
  %411 = vmatprep.subr.bf16.mxu0 0
  %412 = vmatpush1.bf16.msra.mxu0 %v285
  %413 = vmatprep.subr.bf16.mxu0 0
  %414 = vmatpush1.bf16.msra.mxu0 %v286
  %415 = vmatprep.subr.bf16.mxu0 0
  %416 = vmatpush1.bf16.msra.mxu0 0
  %417 = vmatprep.subr.bf16.mxu0 0
  %418 = vmatpush1.bf16.msra.mxu0 0
  %419 = vmatprep.subr.bf16.mxu0 0
  %420 = vmatpush1.bf16.msra.mxu0 0
  %421 = vmatprep.subr.bf16.mxu0 0
  %422 = vmatpush1.bf16.msra.mxu0 0
  %423 = vmatprep.subr.bf16.mxu0 0
  %424 = vmatpush1.bf16.msra.mxu0 0
  %425 = vmatprep.subr.bf16.mxu0 0
  %426 = vmatpush1.bf16.msra.mxu0 0
  %427 = vmatprep.subr.bf16.mxu0 0
  %428 = vmatpush1.bf16.msra.mxu0 0
  %429 = vmatprep.subr.bf16.mxu0 0
  %430 = vmatpush1.bf16.msra.mxu0 0
  %431 = vmatprep.subr.bf16.mxu0 0
  %432 = vmatpush1.bf16.msra.mxu0 0
  %433 = vmatprep.subr.bf16.mxu0 0
  %434 = vmatpush1.bf16.msra.mxu0 0
  %435 = vmatprep.subr.bf16.mxu0 0
  %436 = vmatpush1.bf16.msra.mxu0 0
  %437 = vmatprep.subr.bf16.mxu0 0
  %438 = vmatpush1.bf16.msra.mxu0 0
  %439 = vmatprep.mubr.bf16.mxu0 0
  %440 = vmatmul.mubr.bf16.gmra.mrb[0].mxu0 %v325
  %v441 = vpop.f32.mrb[0].mxu0
  %v442 = vadd.f32 %v402, %v441
  %v443 = vpop.f32.mrb[0].mxu0
  %v444 = vpop.f32.mrb[0].mxu0
  %v445 = vpop.f32.mrb[0].mxu0
  %446 = vdwg.mxu0
  %447 = vst [vmem:[%s2] sm:$0xff] %v442
  %v448 = vrot.slane %v442, 4
  %v449 = vadd.f32 %v442, %v448
  %v450 = vrot.slane %v449, 2
  %v451 = vadd.f32 %v449, %v450
  %v452 = vrot.slane %v451, 1
  %v453 = vadd.f32 %v451, %v452
  %454 = vst [vmem:[%s3] sm:$0x1] %v453
  %v455 = vmul.f32 %v442, %v442
  %v456 = vrot.slane %v455, 4
  %v457 = vadd.f32 %v455, %v456
  %v458 = vrot.slane %v457, 2
  %v459 = vadd.f32 %v457, %v458
  %v460 = vrot.slane %v459, 1
  %v461 = vadd.f32 %v459, %v460
  %462 = vst [vmem:[%s4] sm:$0x1] %v461
  // Predicated region
  $region10: #{_lambda_.66} parent=0 // pred_check
    _
  $region11: #{_lambda_.66} parent=0 // pred_check_branch
    %464 = sbr.rel (0) target = $region13
  $region12: #{_lambda_.66} parent=0 // pred_region
    _
  $region13: #{_lambda_.66} parent=0 // pred_fallthru
    _
  // Predicated region
  $region14: #{_lambda_.66} parent=0 // pred_check
    _
  $region15: #{_lambda_.66} parent=0 // pred_check_branch
    %466 = sbr.rel (0) target = $region17
  $region16: #{_lambda_.66} parent=0 // pred_region
    _
  $region17: #{_lambda_.66} parent=0 // pred_fallthru
    _
  // Predicated region
  $region18: #{_lambda_.66} parent=0 // pred_check
    _
  $region19: #{_lambda_.66} parent=0 // pred_check_branch
    %468 = sbr.rel (0) target = $region21
  $region20: #{_lambda_.66} parent=0 // pred_region
    _
  $region21: #{_lambda_.66} parent=0 // pred_fallthru
    _
  // Predicated region
  $region22: #{_lambda_.66} parent=0 // pred_check
    _
  $region23: #{_lambda_.66} parent=0 // pred_check_branch
    %470 = sbr.rel (0) target = $region25
  $region24: #{_lambda_.66} parent=0 // pred_region
    _
  $region25: #{_lambda_.66} parent=0 // pred_fallthru
    _
  // Predicated region
  $region26: #{_lambda_.66} parent=0 // pred_check
    _
  $region27: #{_lambda_.66} parent=0 // pred_check_branch
    %472 = sbr.rel (0) target = $region29
  $region28: #{_lambda_.66} parent=0 // pred_region
    _
  $region29: #{_lambda_.66} parent=0 // pred_fallthru
    _
  // Predicated region
  $region30: #{_lambda_.66} parent=0 // pred_check
    _
  $region31: #{_lambda_.66} parent=0 // pred_check_branch
    %474 = sbr.rel (0) target = $region33
  $region32: #{_lambda_.66} parent=0 // pred_region
    _
  $region33: #{_lambda_.66} parent=0 // pred_fallthru
    _

// kernel: _lambda_.70
$region0: #{_lambda_.70}
  #allocation0 [shape = 'u32[]', space=smem, size = 0x4, offset = 0x4, fixed_abs, tag = 'smem constant byte address 0x4 - core index']
  #allocation1 [shape = 'u32[144,128]{1,0:T(1,128)}', space=vmem, size = 0x12000, scoped, tag = 'internal scratch']
  %s0 = inlined_call_operand.vmem [shape: f32[8,128], index: 0, kind: input, shape index: {}, may-alias: {0,6}]
  %s1 = inlined_call_operand.vmem [shape: f32[1,128], index: 1, kind: input, shape index: {}]
  %s2 = inlined_call_operand.vmem [shape: f32[1,128], index: 2, kind: input, shape index: {}]
  %s3 = inlined_call_operand.vmem [shape: f32[8,128], index: 3, kind: input, shape index: {}]
  %s4 = inlined_call_operand.vmem [shape: f32[1,128], index: 4, kind: input, shape index: {}]
  %s5 = inlined_call_operand.vmem [shape: f32[1,128], index: 5, kind: input, shape index: {}]
  %s6 = inlined_call_operand.vmem [shape: f32[8,128], index: 6, kind: output, shape index: {}, may-alias: {0,6}]
  %s7 = sld [smem:[#allocation0]]
  $region34: #{_lambda_.70} parent=0
    _
  %s9 = ssub.s32 1, %s7
  %s10 = scalar_select 0, %s9, %s7
  // Predicated region
  $region2: #{_lambda_.70} parent=0 // pred_check
    _
  $region3: #{_lambda_.70} parent=0 // pred_check_branch
    %12 = sbr.rel (0) target = $region5
  $region4: #{_lambda_.70} parent=0 // pred_region
    _
  $region5: #{_lambda_.70} parent=0 // pred_fallthru
    _
  // Predicated region
  $region6: #{_lambda_.70} parent=0 // pred_check
    _
  $region7: #{_lambda_.70} parent=0 // pred_check_branch
    %14 = sbr.rel (0) target = $region9
  $region8: #{_lambda_.70} parent=0 // pred_region
    _
  $region9: #{_lambda_.70} parent=0 // pred_fallthru
    _
  // Predicated region
  $region10: #{_lambda_.70} parent=0 // pred_check
    _
  $region11: #{_lambda_.70} parent=0 // pred_check_branch
    %16 = sbr.rel (0) target = $region13
  $region12: #{_lambda_.70} parent=0 // pred_region
    _
  $region13: #{_lambda_.70} parent=0 // pred_fallthru
    _
  // Predicated region
  $region14: #{_lambda_.70} parent=0 // pred_check
    _
  $region15: #{_lambda_.70} parent=0 // pred_check_branch
    %18 = sbr.rel (0) target = $region17
  $region16: #{_lambda_.70} parent=0 // pred_region
    _
  $region17: #{_lambda_.70} parent=0 // pred_fallthru
    _
  // Predicated region
  $region18: #{_lambda_.70} parent=0 // pred_check
    _
  $region19: #{_lambda_.70} parent=0 // pred_check_branch
    %20 = sbr.rel (0) target = $region21
  $region20: #{_lambda_.70} parent=0 // pred_region
    _
  $region21: #{_lambda_.70} parent=0 // pred_fallthru
    _
  // Predicated region
  $region22: #{_lambda_.70} parent=0 // pred_check
    _
  $region23: #{_lambda_.70} parent=0 // pred_check_branch
    %22 = sbr.rel (0) target = $region25
  $region24: #{_lambda_.70} parent=0 // pred_region
    _
  $region25: #{_lambda_.70} parent=0 // pred_fallthru
    _
  %v23 = vld [vmem:[%s0] sm:$0xff]
  %v24 = vld [vmem:[%s1] sm:$0x1]
  %v26 = vlaneseq
  %v27 = vshrl.u32 %v26, 7
  %v28 = vsub.s32 0, %v27
  %v29 = vrot.slane %v24, %v28
  %v31 = vmul.f32 %v23, %v29
  %v32 = vld [vmem:[%s2] sm:$0x1]
  %v34 = vlaneseq
  %v35 = vshrl.u32 %v34, 7
  %v36 = vsub.s32 0, %v35
  %v37 = vrot.slane %v32, %v36
  %v39 = vadd.f32 %v31, %v37
  %v40 = vld [vmem:[%s3] sm:$0xff]
  %v41 = vld [vmem:[%s4] sm:$0x1]
  %v43 = vlaneseq
  %v44 = vshrl.u32 %v43, 7
  %v45 = vsub.s32 0, %v44
  %v46 = vrot.slane %v41, %v45
  %v48 = vmul.f32 %v40, %v46
  %v49 = vadd.f32 %v39, %v48
  %v50 = vld [vmem:[%s5] sm:$0x1]
  %v52 = vlaneseq
  %v53 = vshrl.u32 %v52, 7
  %v54 = vsub.s32 0, %v53
  %v55 = vrot.slane %v50, %v54
  %v57 = vadd.f32 %v49, %v55
  %v58 = vmax.f32 %v57, 0.0
  %59 = vst [vmem:[%s6] sm:$0xff] %v58
  // Predicated region
  $region26: #{_lambda_.70} parent=0 // pred_check
    _
  $region27: #{_lambda_.70} parent=0 // pred_check_branch
    %61 = sbr.rel (0) target = $region29
  $region28: #{_lambda_.70} parent=0 // pred_region
    _
  $region29: #{_lambda_.70} parent=0 // pred_fallthru
    _
  // Predicated region
  $region30: #{_lambda_.70} parent=0 // pred_check
    _
  $region31: #{_lambda_.70} parent=0 // pred_check_branch
    %63 = sbr.rel (0) target = $region33
  $region32: #{_lambda_.70} parent=0 // pred_region
    _
  $region33: #{_lambda_.70} parent=0 // pred_fallthru
    _

// kernel: _lambda_.74
$region0: #{_lambda_.74}
  #allocation0 [shape = 'u32[]', space=smem, size = 0x4, offset = 0x4, fixed_abs, tag = 'smem constant byte address 0x4 - core index']
  #allocation1 [shape = 'u32[144,128]{1,0:T(1,128)}', space=vmem, size = 0x12000, scoped, tag = 'internal scratch']
  %s0 = inlined_call_operand.vmem [shape: f32[8,128], index: 0, kind: input, shape index: {}, may-alias: {0,4}]
  %s1 = inlined_call_operand.vmem [shape: f32[1,128], index: 1, kind: input, shape index: {}]
  %s2 = inlined_call_operand.vmem [shape: f32[1,128], index: 2, kind: input, shape index: {}]
  %s3 = inlined_call_operand.vmem [shape: f32[8,128], index: 3, kind: input, shape index: {}]
  %s4 = inlined_call_operand.vmem [shape: f32[8,128], index: 4, kind: output, shape index: {}, may-alias: {0,4}]
  %s5 = sld [smem:[#allocation0]]
  $region26: #{_lambda_.74} parent=0
    _
  %s7 = ssub.s32 1, %s5
  %s8 = scalar_select 0, %s7, %s5
  // Predicated region
  $region2: #{_lambda_.74} parent=0 // pred_check
    _
  $region3: #{_lambda_.74} parent=0 // pred_check_branch
    %10 = sbr.rel (0) target = $region5
  $region4: #{_lambda_.74} parent=0 // pred_region
    _
  $region5: #{_lambda_.74} parent=0 // pred_fallthru
    _
  // Predicated region
  $region6: #{_lambda_.74} parent=0 // pred_check
    _
  $region7: #{_lambda_.74} parent=0 // pred_check_branch
    %12 = sbr.rel (0) target = $region9
  $region8: #{_lambda_.74} parent=0 // pred_region
    _
  $region9: #{_lambda_.74} parent=0 // pred_fallthru
    _
  // Predicated region
  $region10: #{_lambda_.74} parent=0 // pred_check
    _
  $region11: #{_lambda_.74} parent=0 // pred_check_branch
    %14 = sbr.rel (0) target = $region13
  $region12: #{_lambda_.74} parent=0 // pred_region
    _
  $region13: #{_lambda_.74} parent=0 // pred_fallthru
    _
  // Predicated region
  $region14: #{_lambda_.74} parent=0 // pred_check
    _
  $region15: #{_lambda_.74} parent=0 // pred_check_branch
    %16 = sbr.rel (0) target = $region17
  $region16: #{_lambda_.74} parent=0 // pred_region
    _
  $region17: #{_lambda_.74} parent=0 // pred_fallthru
    _
  %v17 = vld [vmem:[%s0] sm:$0xff]
  %v18 = vld [vmem:[%s1] sm:$0x1]
  %v20 = vlaneseq
  %v21 = vshrl.u32 %v20, 7
  %v22 = vsub.s32 0, %v21
  %v23 = vrot.slane %v18, %v22
  %v25 = vmul.f32 %v17, %v23
  %v26 = vld [vmem:[%s2] sm:$0x1]
  %v28 = vlaneseq
  %v29 = vshrl.u32 %v28, 7
  %v30 = vsub.s32 0, %v29
  %v31 = vrot.slane %v26, %v30
  %v33 = vadd.f32 %v25, %v31
  %v34 = vld [vmem:[%s3] sm:$0xff]
  %v35 = vadd.f32 %v33, %v34
  %v36 = vmax.f32 %v35, 0.0
  %37 = vst [vmem:[%s4] sm:$0xff] %v36
  // Predicated region
  $region18: #{_lambda_.74} parent=0 // pred_check
    _
  $region19: #{_lambda_.74} parent=0 // pred_check_branch
    %39 = sbr.rel (0) target = $region21
  $region20: #{_lambda_.74} parent=0 // pred_region
    _
  $region21: #{_lambda_.74} parent=0 // pred_fallthru
    _
  // Predicated region
  $region22: #{_lambda_.74} parent=0 // pred_check
    _
  $region23: #{_lambda_.74} parent=0 // pred_check_branch
    %41 = sbr.rel (0) target = $region25
  $region24: #{_lambda_.74} parent=0 // pred_region
    _
  $region25: #{_lambda_.74} parent=0 // pred_fallthru
    _

// kernel: _lambda_.68
$region0: #{_lambda_.68}
  #allocation0 [shape = 'u32[]', space=smem, size = 0x4, offset = 0x4, fixed_abs, tag = 'smem constant byte address 0x4 - core index']
  #allocation1 [shape = 'u32[144,128]{1,0:T(1,128)}', space=vmem, size = 0x12000, scoped, tag = 'internal scratch']
  %s0 = inlined_call_operand.vmem [shape: bf16[8,1152], index: 0, kind: input, shape index: {}]
  %s1 = inlined_call_operand.vmem [shape: bf16[1152,128], index: 1, kind: input, shape index: {}]
  %s2 = inlined_call_operand.vmem [shape: f32[8,128], index: 2, kind: output, shape index: {0}]
  %s3 = inlined_call_operand.vmem [shape: f32[1,1,128], index: 3, kind: output, shape index: {1}]
  %s4 = inlined_call_operand.vmem [shape: f32[1,1,128], index: 4, kind: output, shape index: {2}]
  %5 = xla_tuple %s2, %s3, %s4
  %s6 = sld [smem:[#allocation0]]
  $region34: #{_lambda_.68} parent=0
    _
  %s8 = ssub.s32 1, %s6
  %s9 = scalar_select 0, %s8, %s6
  // Predicated region
  $region2: #{_lambda_.68} parent=0 // pred_check
    _
  $region3: #{_lambda_.68} parent=0 // pred_check_branch
    %11 = sbr.rel (0) target = $region5
  $region4: #{_lambda_.68} parent=0 // pred_region
    _
  $region5: #{_lambda_.68} parent=0 // pred_fallthru
    _
  // Predicated region
  $region6: #{_lambda_.68} parent=0 // pred_check
    _
  $region7: #{_lambda_.68} parent=0 // pred_check_branch
    %13 = sbr.rel (0) target = $region9
  $region8: #{_lambda_.68} parent=0 // pred_region
    _
  $region9: #{_lambda_.68} parent=0 // pred_fallthru
    _
  %v15 = vld [vmem:[%s0] sm:$0xff]
  %v16 = vld [vmem:[%s0 + $0x8] sm:$0xff]
  %v17 = vld [vmem:[%s0 + $0x10] sm:$0xff]
  %v18 = vld [vmem:[%s0 + $0x18] sm:$0xff]
  %v19 = vld [vmem:[%s0 + $0x20] sm:$0xf]
  %v20 = vld [vmem:[%s1] sm:$0xf]
  %v21 = vld [vmem:[%s1 + $0x4] sm:$0xf]
  %v22 = vld [vmem:[%s1 + $0x8] sm:$0xf]
  %v23 = vld [vmem:[%s1 + $0xc] sm:$0xf]
  %v24 = vld [vmem:[%s1 + $0x10] sm:$0xf]
  %v25 = vld [vmem:[%s1 + $0x14] sm:$0xf]
  %v26 = vld [vmem:[%s1 + $0x18] sm:$0xf]
  %v27 = vld [vmem:[%s1 + $0x1c] sm:$0xf]
  %v28 = vld [vmem:[%s1 + $0x20] sm:$0xf]
  %v29 = vld [vmem:[%s1 + $0x24] sm:$0xf]
  %v30 = vld [vmem:[%s1 + $0x28] sm:$0xf]
  %v31 = vld [vmem:[%s1 + $0x2c] sm:$0xf]
  %v32 = vld [vmem:[%s1 + $0x30] sm:$0xf]
  %v33 = vld [vmem:[%s1 + $0x34] sm:$0xf]
  %v34 = vld [vmem:[%s1 + $0x38] sm:$0xf]
  %v35 = vld [vmem:[%s1 + $0x3c] sm:$0xf]
  %v36 = vld [vmem:[%s1 + $0x40] sm:$0xf]
  %v37 = vld [vmem:[%s1 + $0x44] sm:$0xf]
  %v38 = vld [vmem:[%s1 + $0x48] sm:$0xf]
  %v39 = vld [vmem:[%s1 + $0x4c] sm:$0xf]
  %v40 = vld [vmem:[%s1 + $0x50] sm:$0xf]
  %v41 = vld [vmem:[%s1 + $0x54] sm:$0xf]
  %v42 = vld [vmem:[%s1 + $0x58] sm:$0xf]
  %v43 = vld [vmem:[%s1 + $0x5c] sm:$0xf]
  %v44 = vld [vmem:[%s1 + $0x60] sm:$0xf]
  %v45 = vld [vmem:[%s1 + $0x64] sm:$0xf]
  %v46 = vld [vmem:[%s1 + $0x68] sm:$0xf]
  %v47 = vld [vmem:[%s1 + $0x6c] sm:$0xf]
  %v48 = vld [vmem:[%s1 + $0x70] sm:$0xf]
  %v49 = vld [vmem:[%s1 + $0x74] sm:$0xf]
  %v50 = vld [vmem:[%s1 + $0x78] sm:$0xf]
  %v51 = vld [vmem:[%s1 + $0x7c] sm:$0xf]
  %v52 = vld [vmem:[%s1 + $0x80] sm:$0xf]
  %v53 = vld [vmem:[%s1 + $0x84] sm:$0xf]
  %v54 = vld [vmem:[%s1 + $0x88] sm:$0xf]
  %v55 = vld [vmem:[%s1 + $0x8c] sm:$0xf]
  %v56 = vld [vmem:[%s1 + $0x90] sm:$0xf]
  %v57 = vld [vmem:[%s1 + $0x94] sm:$0xf]
  %v58 = vld [vmem:[%s1 + $0x98] sm:$0xf]
  %v59 = vld [vmem:[%s1 + $0x9c] sm:$0xf]
  %v60 = vld [vmem:[%s1 + $0xa0] sm:$0xf]
  %v61 = vld [vmem:[%s1 + $0xa4] sm:$0xf]
  %v62 = vld [vmem:[%s1 + $0xa8] sm:$0xf]
  %v63 = vld [vmem:[%s1 + $0xac] sm:$0xf]
  %v64 = vld [vmem:[%s1 + $0xb0] sm:$0xf]
  %v65 = vld [vmem:[%s1 + $0xb4] sm:$0xf]
  %v66 = vld [vmem:[%s1 + $0xb8] sm:$0xf]
  %v67 = vld [vmem:[%s1 + $0xbc] sm:$0xf]
  %v68 = vld [vmem:[%s1 + $0xc0] sm:$0xf]
  %v69 = vld [vmem:[%s1 + $0xc4] sm:$0xf]
  %v70 = vld [vmem:[%s1 + $0xc8] sm:$0xf]
  %v71 = vld [vmem:[%s1 + $0xcc] sm:$0xf]
  %v72 = vld [vmem:[%s1 + $0xd0] sm:$0xf]
  %v73 = vld [vmem:[%s1 + $0xd4] sm:$0xf]
  %v74 = vld [vmem:[%s1 + $0xd8] sm:$0xf]
  %v75 = vld [vmem:[%s1 + $0xdc] sm:$0xf]
  %v76 = vld [vmem:[%s1 + $0xe0] sm:$0xf]
  %v77 = vld [vmem:[%s1 + $0xe4] sm:$0xf]
  %v78 = vld [vmem:[%s1 + $0xe8] sm:$0xf]
  %v79 = vld [vmem:[%s1 + $0xec] sm:$0xf]
  %v80 = vld [vmem:[%s1 + $0xf0] sm:$0xf]
  %v81 = vld [vmem:[%s1 + $0xf4] sm:$0xf]
  %v82 = vld [vmem:[%s1 + $0xf8] sm:$0xf]
  %v83 = vld [vmem:[%s1 + $0xfc] sm:$0xf]
  %v84 = vld [vmem:[%s1 + $0x100] sm:$0xf]
  %v85 = vld [vmem:[%s1 + $0x104] sm:$0xf]
  %v86 = vld [vmem:[%s1 + $0x108] sm:$0xf]
  %v87 = vld [vmem:[%s1 + $0x10c] sm:$0xf]
  %v88 = vld [vmem:[%s1 + $0x110] sm:$0xf]
  %v89 = vld [vmem:[%s1 + $0x114] sm:$0xf]
  %v90 = vld [vmem:[%s1 + $0x118] sm:$0xf]
  %v91 = vld [vmem:[%s1 + $0x11c] sm:$0xf]
  %v92 = vld [vmem:[%s1 + $0x120] sm:$0xf]
  %v93 = vld [vmem:[%s1 + $0x124] sm:$0xf]
  %v94 = vld [vmem:[%s1 + $0x128] sm:$0xf]
  %v95 = vld [vmem:[%s1 + $0x12c] sm:$0xf]
  %v96 = vld [vmem:[%s1 + $0x130] sm:$0xf]
  %v97 = vld [vmem:[%s1 + $0x134] sm:$0xf]
  %v98 = vld [vmem:[%s1 + $0x138] sm:$0xf]
  %v99 = vld [vmem:[%s1 + $0x13c] sm:$0xf]
  %v100 = vld [vmem:[%s1 + $0x140] sm:$0xf]
  %v101 = vld [vmem:[%s1 + $0x144] sm:$0xf]
  %v102 = vld [vmem:[%s1 + $0x148] sm:$0xf]
  %v103 = vld [vmem:[%s1 + $0x14c] sm:$0xf]
  %v104 = vld [vmem:[%s1 + $0x150] sm:$0xf]
  %v105 = vld [vmem:[%s1 + $0x154] sm:$0xf]
  %v106 = vld [vmem:[%s1 + $0x158] sm:$0xf]
  %v107 = vld [vmem:[%s1 + $0x15c] sm:$0xf]
  %v108 = vld [vmem:[%s1 + $0x160] sm:$0xf]
  %v109 = vld [vmem:[%s1 + $0x164] sm:$0xf]
  %v110 = vld [vmem:[%s1 + $0x168] sm:$0xf]
  %v111 = vld [vmem:[%s1 + $0x16c] sm:$0xf]
  %v112 = vld [vmem:[%s1 + $0x170] sm:$0xf]
  %v113 = vld [vmem:[%s1 + $0x174] sm:$0xf]
  %v114 = vld [vmem:[%s1 + $0x178] sm:$0xf]
  %v115 = vld [vmem:[%s1 + $0x17c] sm:$0xf]
  %v116 = vld [vmem:[%s1 + $0x180] sm:$0xf]
  %v117 = vld [vmem:[%s1 + $0x184] sm:$0xf]
  %v118 = vld [vmem:[%s1 + $0x188] sm:$0xf]
  %v119 = vld [vmem:[%s1 + $0x18c] sm:$0xf]
  %v120 = vld [vmem:[%s1 + $0x190] sm:$0xf]
  %v121 = vld [vmem:[%s1 + $0x194] sm:$0xf]
  %v122 = vld [vmem:[%s1 + $0x198] sm:$0xf]
  %v123 = vld [vmem:[%s1 + $0x19c] sm:$0xf]
  %v124 = vld [vmem:[%s1 + $0x1a0] sm:$0xf]
  %v125 = vld [vmem:[%s1 + $0x1a4] sm:$0xf]
  %v126 = vld [vmem:[%s1 + $0x1a8] sm:$0xf]
  %v127 = vld [vmem:[%s1 + $0x1ac] sm:$0xf]
  %v128 = vld [vmem:[%s1 + $0x1b0] sm:$0xf]
  %v129 = vld [vmem:[%s1 + $0x1b4] sm:$0xf]
  %v130 = vld [vmem:[%s1 + $0x1b8] sm:$0xf]
  %v131 = vld [vmem:[%s1 + $0x1bc] sm:$0xf]
  %v132 = vld [vmem:[%s1 + $0x1c0] sm:$0xf]
  %v133 = vld [vmem:[%s1 + $0x1c4] sm:$0xf]
  %v134 = vld [vmem:[%s1 + $0x1c8] sm:$0xf]
  %v135 = vld [vmem:[%s1 + $0x1cc] sm:$0xf]
  %v136 = vld [vmem:[%s1 + $0x1d0] sm:$0xf]
  %v137 = vld [vmem:[%s1 + $0x1d4] sm:$0xf]
  %v138 = vld [vmem:[%s1 + $0x1d8] sm:$0xf]
  %v139 = vld [vmem:[%s1 + $0x1dc] sm:$0xf]
  %v140 = vld [vmem:[%s1 + $0x1e0] sm:$0xf]
  %v141 = vld [vmem:[%s1 + $0x1e4] sm:$0xf]
  %v142 = vld [vmem:[%s1 + $0x1e8] sm:$0xf]
  %v143 = vld [vmem:[%s1 + $0x1ec] sm:$0xf]
  %v144 = vld [vmem:[%s1 + $0x1f0] sm:$0xf]
  %v145 = vld [vmem:[%s1 + $0x1f4] sm:$0xf]
  %v146 = vld [vmem:[%s1 + $0x1f8] sm:$0xf]
  %v147 = vld [vmem:[%s1 + $0x1fc] sm:$0xf]
  %v148 = vld [vmem:[%s1 + $0x200] sm:$0xf]
  %v149 = vld [vmem:[%s1 + $0x204] sm:$0xf]
  %v150 = vld [vmem:[%s1 + $0x208] sm:$0xf]
  %v151 = vld [vmem:[%s1 + $0x20c] sm:$0xf]
  %v152 = vld [vmem:[%s1 + $0x210] sm:$0xf]
  %v153 = vld [vmem:[%s1 + $0x214] sm:$0xf]
  %v154 = vld [vmem:[%s1 + $0x218] sm:$0xf]
  %v155 = vld [vmem:[%s1 + $0x21c] sm:$0xf]
  %v156 = vld [vmem:[%s1 + $0x220] sm:$0xf]
  %v157 = vld [vmem:[%s1 + $0x224] sm:$0xf]
  %v158 = vld [vmem:[%s1 + $0x228] sm:$0xf]
  %v159 = vld [vmem:[%s1 + $0x22c] sm:$0xf]
  %v160 = vld [vmem:[%s1 + $0x230] sm:$0xf]
  %v161 = vld [vmem:[%s1 + $0x234] sm:$0xf]
  %v162 = vld [vmem:[%s1 + $0x238] sm:$0xf]
  %v163 = vld [vmem:[%s1 + $0x23c] sm:$0xf]
  %v169 = vunpack.c.l.b16 %v15
  %v170 = vunpack.c.h.b16 %v15
  %v171 = vunpack.c.l.b16 %v16
  %v172 = vunpack.c.h.b16 %v16
  %v173 = vunpack.c.l.b16 %v17
  %v174 = vunpack.c.h.b16 %v17
  %v175 = vunpack.c.l.b16 %v18
  %v176 = vunpack.c.h.b16 %v18
  %v177 = vunpack.c.l.b16 %v19
  %v178 = vpack.c.b16 %v169, %v169
  %v179 = vpack.c.b16 %v170, %v170
  %v180 = vpack.c.b16 %v171, %v171
  %v181 = vpack.c.b16 %v172, %v172
  %v182 = vpack.c.b16 %v173, %v173
  %v183 = vpack.c.b16 %v174, %v174
  %v184 = vpack.c.b16 %v175, %v175
  %v185 = vpack.c.b16 %v176, %v176
  %v186 = vpack.c.b16 %v177, %v177
  %v340 = vunpack.c.l.b16 %v20
  %v341 = vunpack.c.l.b16 %v21
  %v342 = vunpack.c.l.b16 %v22
  %v343 = vunpack.c.l.b16 %v23
  %v344 = vunpack.c.l.b16 %v24
  %v345 = vunpack.c.l.b16 %v25
  %v346 = vunpack.c.l.b16 %v26
  %v347 = vunpack.c.l.b16 %v27
  %v348 = vunpack.c.l.b16 %v28
  %v349 = vunpack.c.l.b16 %v29
  %v350 = vunpack.c.l.b16 %v30
  %v351 = vunpack.c.l.b16 %v31
  %v352 = vunpack.c.l.b16 %v32
  %v353 = vunpack.c.l.b16 %v33
  %v354 = vunpack.c.l.b16 %v34
  %v355 = vunpack.c.l.b16 %v35
  %v356 = vunpack.c.l.b16 %v36
  %v357 = vunpack.c.l.b16 %v37
  %v358 = vunpack.c.l.b16 %v38
  %v359 = vunpack.c.l.b16 %v39
  %v360 = vunpack.c.l.b16 %v40
  %v361 = vunpack.c.l.b16 %v41
  %v362 = vunpack.c.l.b16 %v42
  %v363 = vunpack.c.l.b16 %v43
  %v364 = vunpack.c.l.b16 %v44
  %v365 = vunpack.c.l.b16 %v45
  %v366 = vunpack.c.l.b16 %v46
  %v367 = vunpack.c.l.b16 %v47
  %v368 = vunpack.c.l.b16 %v48
  %v369 = vunpack.c.l.b16 %v49
  %v370 = vunpack.c.l.b16 %v50
  %v371 = vunpack.c.l.b16 %v51
  %v372 = vunpack.c.l.b16 %v52
  %v373 = vunpack.c.l.b16 %v53
  %v374 = vunpack.c.l.b16 %v54
  %v375 = vunpack.c.l.b16 %v55
  %v376 = vunpack.c.l.b16 %v56
  %v377 = vunpack.c.l.b16 %v57
  %v378 = vunpack.c.l.b16 %v58
  %v379 = vunpack.c.l.b16 %v59
  %v380 = vunpack.c.l.b16 %v60
  %v381 = vunpack.c.l.b16 %v61
  %v382 = vunpack.c.l.b16 %v62
  %v383 = vunpack.c.l.b16 %v63
  %v384 = vunpack.c.l.b16 %v64
  %v385 = vunpack.c.l.b16 %v65
  %v386 = vunpack.c.l.b16 %v66
  %v387 = vunpack.c.l.b16 %v67
  %v388 = vunpack.c.l.b16 %v68
  %v389 = vunpack.c.l.b16 %v69
  %v390 = vunpack.c.l.b16 %v70
  %v391 = vunpack.c.l.b16 %v71
  %v392 = vunpack.c.l.b16 %v72
  %v393 = vunpack.c.l.b16 %v73
  %v394 = vunpack.c.l.b16 %v74
  %v395 = vunpack.c.l.b16 %v75
  %v396 = vunpack.c.l.b16 %v76
  %v397 = vunpack.c.l.b16 %v77
  %v398 = vunpack.c.l.b16 %v78
  %v399 = vunpack.c.l.b16 %v79
  %v400 = vunpack.c.l.b16 %v80
  %v401 = vunpack.c.l.b16 %v81
  %v402 = vunpack.c.l.b16 %v82
  %v403 = vunpack.c.l.b16 %v83
  %v404 = vunpack.c.l.b16 %v84
  %v405 = vunpack.c.l.b16 %v85
  %v406 = vunpack.c.l.b16 %v86
  %v407 = vunpack.c.l.b16 %v87
  %v408 = vunpack.c.l.b16 %v88
  %v409 = vunpack.c.l.b16 %v89
  %v410 = vunpack.c.l.b16 %v90
  %v411 = vunpack.c.l.b16 %v91
  %v412 = vunpack.c.l.b16 %v92
  %v413 = vunpack.c.l.b16 %v93
  %v414 = vunpack.c.l.b16 %v94
  %v415 = vunpack.c.l.b16 %v95
  %v416 = vunpack.c.l.b16 %v96
  %v417 = vunpack.c.l.b16 %v97
  %v418 = vunpack.c.l.b16 %v98
  %v419 = vunpack.c.l.b16 %v99
  %v420 = vunpack.c.l.b16 %v100
  %v421 = vunpack.c.l.b16 %v101
  %v422 = vunpack.c.l.b16 %v102
  %v423 = vunpack.c.l.b16 %v103
  %v424 = vunpack.c.l.b16 %v104
  %v425 = vunpack.c.l.b16 %v105
  %v426 = vunpack.c.l.b16 %v106
  %v427 = vunpack.c.l.b16 %v107
  %v428 = vunpack.c.l.b16 %v108
  %v429 = vunpack.c.l.b16 %v109
  %v430 = vunpack.c.l.b16 %v110
  %v431 = vunpack.c.l.b16 %v111
  %v432 = vunpack.c.l.b16 %v112
  %v433 = vunpack.c.l.b16 %v113
  %v434 = vunpack.c.l.b16 %v114
  %v435 = vunpack.c.l.b16 %v115
  %v436 = vunpack.c.l.b16 %v116
  %v437 = vunpack.c.l.b16 %v117
  %v438 = vunpack.c.l.b16 %v118
  %v439 = vunpack.c.l.b16 %v119
  %v440 = vunpack.c.l.b16 %v120
  %v441 = vunpack.c.l.b16 %v121
  %v442 = vunpack.c.l.b16 %v122
  %v443 = vunpack.c.l.b16 %v123
  %v444 = vunpack.c.l.b16 %v124
  %v445 = vunpack.c.l.b16 %v125
  %v446 = vunpack.c.l.b16 %v126
  %v447 = vunpack.c.l.b16 %v127
  %v448 = vunpack.c.l.b16 %v128
  %v449 = vunpack.c.l.b16 %v129
  %v450 = vunpack.c.l.b16 %v130
  %v451 = vunpack.c.l.b16 %v131
  %v452 = vunpack.c.l.b16 %v132
  %v453 = vunpack.c.l.b16 %v133
  %v454 = vunpack.c.l.b16 %v134
  %v455 = vunpack.c.l.b16 %v135
  %v456 = vunpack.c.l.b16 %v136
  %v457 = vunpack.c.l.b16 %v137
  %v458 = vunpack.c.l.b16 %v138
  %v459 = vunpack.c.l.b16 %v139
  %v460 = vunpack.c.l.b16 %v140
  %v461 = vunpack.c.l.b16 %v141
  %v462 = vunpack.c.l.b16 %v142
  %v463 = vunpack.c.l.b16 %v143
  %v464 = vunpack.c.l.b16 %v144
  %v465 = vunpack.c.l.b16 %v145
  %v466 = vunpack.c.l.b16 %v146
  %v467 = vunpack.c.l.b16 %v147
  %v468 = vunpack.c.l.b16 %v148
  %v469 = vunpack.c.l.b16 %v149
  %v470 = vunpack.c.l.b16 %v150
  %v471 = vunpack.c.l.b16 %v151
  %v472 = vunpack.c.l.b16 %v152
  %v473 = vunpack.c.l.b16 %v153
  %v474 = vunpack.c.l.b16 %v154
  %v475 = vunpack.c.l.b16 %v155
  %v476 = vunpack.c.l.b16 %v156
  %v477 = vunpack.c.l.b16 %v157
  %v478 = vunpack.c.l.b16 %v158
  %v479 = vunpack.c.l.b16 %v159
  %v480 = vunpack.c.l.b16 %v160
  %v481 = vunpack.c.l.b16 %v161
  %v482 = vunpack.c.l.b16 %v162
  %v483 = vunpack.c.l.b16 %v163
  %v484 = vpack.c.b16 %v341, %v340
  %v485 = vpack.c.b16 %v343, %v342
  %v486 = vpack.c.b16 %v345, %v344
  %v487 = vpack.c.b16 %v347, %v346
  %v488 = vpack.c.b16 %v349, %v348
  %v489 = vpack.c.b16 %v351, %v350
  %v490 = vpack.c.b16 %v353, %v352
  %v491 = vpack.c.b16 %v355, %v354
  %v492 = vpack.c.b16 %v357, %v356
  %v493 = vpack.c.b16 %v359, %v358
  %v494 = vpack.c.b16 %v361, %v360
  %v495 = vpack.c.b16 %v363, %v362
  %v496 = vpack.c.b16 %v365, %v364
  %v497 = vpack.c.b16 %v367, %v366
  %v498 = vpack.c.b16 %v369, %v368
  %v499 = vpack.c.b16 %v371, %v370
  %v500 = vpack.c.b16 %v373, %v372
  %v501 = vpack.c.b16 %v375, %v374
  %v502 = vpack.c.b16 %v377, %v376
  %v503 = vpack.c.b16 %v379, %v378
  %v504 = vpack.c.b16 %v381, %v380
  %v505 = vpack.c.b16 %v383, %v382
  %v506 = vpack.c.b16 %v385, %v384
  %v507 = vpack.c.b16 %v387, %v386
  %v508 = vpack.c.b16 %v389, %v388
  %v509 = vpack.c.b16 %v391, %v390
  %v510 = vpack.c.b16 %v393, %v392
  %v511 = vpack.c.b16 %v395, %v394
  %v512 = vpack.c.b16 %v397, %v396
  %v513 = vpack.c.b16 %v399, %v398
  %v514 = vpack.c.b16 %v401, %v400
  %v515 = vpack.c.b16 %v403, %v402
  %v516 = vpack.c.b16 %v405, %v404
  %v517 = vpack.c.b16 %v407, %v406
  %v518 = vpack.c.b16 %v409, %v408
  %v519 = vpack.c.b16 %v411, %v410
  %v520 = vpack.c.b16 %v413, %v412
  %v521 = vpack.c.b16 %v415, %v414
  %v522 = vpack.c.b16 %v417, %v416
  %v523 = vpack.c.b16 %v419, %v418
  %v524 = vpack.c.b16 %v421, %v420
  %v525 = vpack.c.b16 %v423, %v422
  %v526 = vpack.c.b16 %v425, %v424
  %v527 = vpack.c.b16 %v427, %v426
  %v528 = vpack.c.b16 %v429, %v428
  %v529 = vpack.c.b16 %v431, %v430
  %v530 = vpack.c.b16 %v433, %v432
  %v531 = vpack.c.b16 %v435, %v434
  %v532 = vpack.c.b16 %v437, %v436
  %v533 = vpack.c.b16 %v439, %v438
  %v534 = vpack.c.b16 %v441, %v440
  %v535 = vpack.c.b16 %v443, %v442
  %v536 = vpack.c.b16 %v445, %v444
  %v537 = vpack.c.b16 %v447, %v446
  %v538 = vpack.c.b16 %v449, %v448
  %v539 = vpack.c.b16 %v451, %v450
  %v540 = vpack.c.b16 %v453, %v452
  %v541 = vpack.c.b16 %v455, %v454
  %v542 = vpack.c.b16 %v457, %v456
  %v543 = vpack.c.b16 %v459, %v458
  %v544 = vpack.c.b16 %v461, %v460
  %v545 = vpack.c.b16 %v463, %v462
  %v546 = vpack.c.b16 %v465, %v464
  %v547 = vpack.c.b16 %v467, %v466
  %v548 = vpack.c.b16 %v469, %v468
  %v549 = vpack.c.b16 %v471, %v470
  %v550 = vpack.c.b16 %v473, %v472
  %v551 = vpack.c.b16 %v475, %v474
  %v552 = vpack.c.b16 %v477, %v476
  %v553 = vpack.c.b16 %v479, %v478
  %v554 = vpack.c.b16 %v481, %v480
  %v555 = vpack.c.b16 %v483, %v482
  %628 = vmatprep.subr.bf16.mxu0 0
  %629 = vmatpush1.bf16.msra.mxu0 %v484
  %630 = vmatprep.subr.bf16.mxu0 0
  %631 = vmatpush1.bf16.msra.mxu0 %v485
  %632 = vmatprep.subr.bf16.mxu0 0
  %633 = vmatpush1.bf16.msra.mxu0 %v486
  %634 = vmatprep.subr.bf16.mxu0 0
  %635 = vmatpush1.bf16.msra.mxu0 %v487
  %636 = vmatprep.subr.bf16.mxu0 0
  %637 = vmatpush1.bf16.msra.mxu0 %v488
  %638 = vmatprep.subr.bf16.mxu0 0
  %639 = vmatpush1.bf16.msra.mxu0 %v489
  %640 = vmatprep.subr.bf16.mxu0 0
  %641 = vmatpush1.bf16.msra.mxu0 %v490
  %642 = vmatprep.subr.bf16.mxu0 0
  %643 = vmatpush1.bf16.msra.mxu0 %v491
  %644 = vmatprep.subr.bf16.mxu0 0
  %645 = vmatpush1.bf16.msra.mxu0 %v492
  %646 = vmatprep.subr.bf16.mxu0 0
  %647 = vmatpush1.bf16.msra.mxu0 %v493
  %648 = vmatprep.subr.bf16.mxu0 0
  %649 = vmatpush1.bf16.msra.mxu0 %v494
  %650 = vmatprep.subr.bf16.mxu0 0
  %651 = vmatpush1.bf16.msra.mxu0 %v495
  %652 = vmatprep.subr.bf16.mxu0 0
  %653 = vmatpush1.bf16.msra.mxu0 %v496
  %654 = vmatprep.subr.bf16.mxu0 0
  %655 = vmatpush1.bf16.msra.mxu0 %v497
  %656 = vmatprep.subr.bf16.mxu0 0
  %657 = vmatpush1.bf16.msra.mxu0 %v498
  %658 = vmatprep.subr.bf16.mxu0 0
  %659 = vmatpush1.bf16.msra.mxu0 %v499
  %660 = vmatprep.mubr.bf16.mxu0 %v179
  %661 = vmatmul.mubr.bf16.gmra.mrb[0].mxu0 %v178
  %v662 = vpop.f32.mrb[0].mxu0
  %v663 = vadd.f32 0.0, %v662
  %v664 = vpop.f32.mrb[0].mxu0
  %v665 = vpop.f32.mrb[0].mxu0
  %v666 = vpop.f32.mrb[0].mxu0
  %667 = vdwg.mxu0
  %668 = vmatprep.subr.bf16.mxu0 0
  %669 = vmatpush1.bf16.msra.mxu0 %v500
  %670 = vmatprep.subr.bf16.mxu0 0
  %671 = vmatpush1.bf16.msra.mxu0 %v501
  %672 = vmatprep.subr.bf16.mxu0 0
  %673 = vmatpush1.bf16.msra.mxu0 %v502
  %674 = vmatprep.subr.bf16.mxu0 0
  %675 = vmatpush1.bf16.msra.mxu0 %v503
  %676 = vmatprep.subr.bf16.mxu0 0
  %677 = vmatpush1.bf16.msra.mxu0 %v504
  %678 = vmatprep.subr.bf16.mxu0 0
  %679 = vmatpush1.bf16.msra.mxu0 %v505
  %680 = vmatprep.subr.bf16.mxu0 0
  %681 = vmatpush1.bf16.msra.mxu0 %v506
  %682 = vmatprep.subr.bf16.mxu0 0
  %683 = vmatpush1.bf16.msra.mxu0 %v507
  %684 = vmatprep.subr.bf16.mxu0 0
  %685 = vmatpush1.bf16.msra.mxu0 %v508
  %686 = vmatprep.subr.bf16.mxu0 0
  %687 = vmatpush1.bf16.msra.mxu0 %v509
  %688 = vmatprep.subr.bf16.mxu0 0
  %689 = vmatpush1.bf16.msra.mxu0 %v510
  %690 = vmatprep.subr.bf16.mxu0 0
  %691 = vmatpush1.bf16.msra.mxu0 %v511
  %692 = vmatprep.subr.bf16.mxu0 0
  %693 = vmatpush1.bf16.msra.mxu0 %v512
  %694 = vmatprep.subr.bf16.mxu0 0
  %695 = vmatpush1.bf16.msra.mxu0 %v513
  %696 = vmatprep.subr.bf16.mxu0 0
  %697 = vmatpush1.bf16.msra.mxu0 %v514
  %698 = vmatprep.subr.bf16.mxu0 0
  %699 = vmatpush1.bf16.msra.mxu0 %v515
  %700 = vmatprep.mubr.bf16.mxu0 %v181
  %701 = vmatmul.mubr.bf16.gmra.mrb[0].mxu0 %v180
  %v702 = vpop.f32.mrb[0].mxu0
  %v703 = vadd.f32 %v663, %v702
  %v704 = vpop.f32.mrb[0].mxu0
  %v705 = vpop.f32.mrb[0].mxu0
  %v706 = vpop.f32.mrb[0].mxu0
  %707 = vdwg.mxu0
  %708 = vmatprep.subr.bf16.mxu0 0
  %709 = vmatpush1.bf16.msra.mxu0 %v516
  %710 = vmatprep.subr.bf16.mxu0 0
  %711 = vmatpush1.bf16.msra.mxu0 %v517
  %712 = vmatprep.subr.bf16.mxu0 0
  %713 = vmatpush1.bf16.msra.mxu0 %v518
  %714 = vmatprep.subr.bf16.mxu0 0
  %715 = vmatpush1.bf16.msra.mxu0 %v519
  %716 = vmatprep.subr.bf16.mxu0 0
  %717 = vmatpush1.bf16.msra.mxu0 %v520
  %718 = vmatprep.subr.bf16.mxu0 0
  %719 = vmatpush1.bf16.msra.mxu0 %v521
  %720 = vmatprep.subr.bf16.mxu0 0
  %721 = vmatpush1.bf16.msra.mxu0 %v522
  %722 = vmatprep.subr.bf16.mxu0 0
  %723 = vmatpush1.bf16.msra.mxu0 %v523
  %724 = vmatprep.subr.bf16.mxu0 0
  %725 = vmatpush1.bf16.msra.mxu0 %v524
  %726 = vmatprep.subr.bf16.mxu0 0
  %727 = vmatpush1.bf16.msra.mxu0 %v525
  %728 = vmatprep.subr.bf16.mxu0 0
  %729 = vmatpush1.bf16.msra.mxu0 %v526
  %730 = vmatprep.subr.bf16.mxu0 0
  %731 = vmatpush1.bf16.msra.mxu0 %v527
  %732 = vmatprep.subr.bf16.mxu0 0
  %733 = vmatpush1.bf16.msra.mxu0 %v528
  %734 = vmatprep.subr.bf16.mxu0 0
  %735 = vmatpush1.bf16.msra.mxu0 %v529
  %736 = vmatprep.subr.bf16.mxu0 0
  %737 = vmatpush1.bf16.msra.mxu0 %v530
  %738 = vmatprep.subr.bf16.mxu0 0
  %739 = vmatpush1.bf16.msra.mxu0 %v531
  %740 = vmatprep.mubr.bf16.mxu0 %v183
  %741 = vmatmul.mubr.bf16.gmra.mrb[0].mxu0 %v182
  %v742 = vpop.f32.mrb[0].mxu0
  %v743 = vadd.f32 %v703, %v742
  %v744 = vpop.f32.mrb[0].mxu0
  %v745 = vpop.f32.mrb[0].mxu0
  %v746 = vpop.f32.mrb[0].mxu0
  %747 = vdwg.mxu0
  %748 = vmatprep.subr.bf16.mxu0 0
  %749 = vmatpush1.bf16.msra.mxu0 %v532
  %750 = vmatprep.subr.bf16.mxu0 0
  %751 = vmatpush1.bf16.msra.mxu0 %v533
  %752 = vmatprep.subr.bf16.mxu0 0
  %753 = vmatpush1.bf16.msra.mxu0 %v534
  %754 = vmatprep.subr.bf16.mxu0 0
  %755 = vmatpush1.bf16.msra.mxu0 %v535
  %756 = vmatprep.subr.bf16.mxu0 0
  %757 = vmatpush1.bf16.msra.mxu0 %v536
  %758 = vmatprep.subr.bf16.mxu0 0
  %759 = vmatpush1.bf16.msra.mxu0 %v537
  %760 = vmatprep.subr.bf16.mxu0 0
  %761 = vmatpush1.bf16.msra.mxu0 %v538
  %762 = vmatprep.subr.bf16.mxu0 0
  %763 = vmatpush1.bf16.msra.mxu0 %v539
  %764 = vmatprep.subr.bf16.mxu0 0
  %765 = vmatpush1.bf16.msra.mxu0 %v540
  %766 = vmatprep.subr.bf16.mxu0 0
  %767 = vmatpush1.bf16.msra.mxu0 %v541
  %768 = vmatprep.subr.bf16.mxu0 0
  %769 = vmatpush1.bf16.msra.mxu0 %v542
  %770 = vmatprep.subr.bf16.mxu0 0
  %771 = vmatpush1.bf16.msra.mxu0 %v543
  %772 = vmatprep.subr.bf16.mxu0 0
  %773 = vmatpush1.bf16.msra.mxu0 %v544
  %774 = vmatprep.subr.bf16.mxu0 0
  %775 = vmatpush1.bf16.msra.mxu0 %v545
  %776 = vmatprep.subr.bf16.mxu0 0
  %777 = vmatpush1.bf16.msra.mxu0 %v546
  %778 = vmatprep.subr.bf16.mxu0 0
  %779 = vmatpush1.bf16.msra.mxu0 %v547
  %780 = vmatprep.mubr.bf16.mxu0 %v185
  %781 = vmatmul.mubr.bf16.gmra.mrb[0].mxu0 %v184
  %v782 = vpop.f32.mrb[0].mxu0
  %v783 = vadd.f32 %v743, %v782
  %v784 = vpop.f32.mrb[0].mxu0
  %v785 = vpop.f32.mrb[0].mxu0
  %v786 = vpop.f32.mrb[0].mxu0
  %787 = vdwg.mxu0
  %788 = vmatprep.subr.bf16.mxu0 0
  %789 = vmatpush1.bf16.msra.mxu0 %v548
  %790 = vmatprep.subr.bf16.mxu0 0
  %791 = vmatpush1.bf16.msra.mxu0 %v549
  %792 = vmatprep.subr.bf16.mxu0 0
  %793 = vmatpush1.bf16.msra.mxu0 %v550
  %794 = vmatprep.subr.bf16.mxu0 0
  %795 = vmatpush1.bf16.msra.mxu0 %v551
  %796 = vmatprep.subr.bf16.mxu0 0
  %797 = vmatpush1.bf16.msra.mxu0 %v552
  %798 = vmatprep.subr.bf16.mxu0 0
  %799 = vmatpush1.bf16.msra.mxu0 %v553
  %800 = vmatprep.subr.bf16.mxu0 0
  %801 = vmatpush1.bf16.msra.mxu0 %v554
  %802 = vmatprep.subr.bf16.mxu0 0
  %803 = vmatpush1.bf16.msra.mxu0 %v555
  %804 = vmatprep.subr.bf16.mxu0 0
  %805 = vmatpush1.bf16.msra.mxu0 0
  %806 = vmatprep.subr.bf16.mxu0 0
  %807 = vmatpush1.bf16.msra.mxu0 0
  %808 = vmatprep.subr.bf16.mxu0 0
  %809 = vmatpush1.bf16.msra.mxu0 0
  %810 = vmatprep.subr.bf16.mxu0 0
  %811 = vmatpush1.bf16.msra.mxu0 0
  %812 = vmatprep.subr.bf16.mxu0 0
  %813 = vmatpush1.bf16.msra.mxu0 0
  %814 = vmatprep.subr.bf16.mxu0 0
  %815 = vmatpush1.bf16.msra.mxu0 0
  %816 = vmatprep.subr.bf16.mxu0 0
  %817 = vmatpush1.bf16.msra.mxu0 0
  %818 = vmatprep.subr.bf16.mxu0 0
  %819 = vmatpush1.bf16.msra.mxu0 0
  %820 = vmatprep.mubr.bf16.mxu0 0
  %821 = vmatmul.mubr.bf16.gmra.mrb[0].mxu0 %v186
  %v822 = vpop.f32.mrb[0].mxu0
  %v823 = vadd.f32 %v783, %v822
  %v824 = vpop.f32.mrb[0].mxu0
  %v825 = vpop.f32.mrb[0].mxu0
  %v826 = vpop.f32.mrb[0].mxu0
  %827 = vdwg.mxu0
  %828 = vst [vmem:[%s2] sm:$0xff] %v823
  %v829 = vrot.slane %v823, 4
  %v830 = vadd.f32 %v823, %v829
  %v831 = vrot.slane %v830, 2
  %v832 = vadd.f32 %v830, %v831
  %v833 = vrot.slane %v832, 1
  %v834 = vadd.f32 %v832, %v833
  %835 = vst [vmem:[%s3] sm:$0x1] %v834
  %v836 = vmul.f32 %v823, %v823
  %v837 = vrot.slane %v836, 4
  %v838 = vadd.f32 %v836, %v837
  %v839 = vrot.slane %v838, 2
  %v840 = vadd.f32 %v838, %v839
  %v841 = vrot.slane %v840, 1
  %v842 = vadd.f32 %v840, %v841
  %843 = vst [vmem:[%s4] sm:$0x1] %v842
  // Predicated region
  $region10: #{_lambda_.68} parent=0 // pred_check
    _
  $region11: #{_lambda_.68} parent=0 // pred_check_branch
    %845 = sbr.rel (0) target = $region13
  $region12: #{_lambda_.68} parent=0 // pred_region
    _
  $region13: #{_lambda_.68} parent=0 // pred_fallthru
    _
  // Predicated region
  $region14: #{_lambda_.68} parent=0 // pred_check
    _
  $region15: #{_lambda_.68} parent=0 // pred_check_branch
    %847 = sbr.rel (0) target = $region17
  $region16: #{_lambda_.68} parent=0 // pred_region
    _
  $region17: #{_lambda_.68} parent=0 // pred_fallthru
    _
  // Predicated region
  $region18: #{_lambda_.68} parent=0 // pred_check
    _
  $region19: #{_lambda_.68} parent=0 // pred_check_branch
    %849 = sbr.rel (0) target = $region21
  $region20: #{_lambda_.68} parent=0 // pred_region
    _
  $region21: #{_lambda_.68} parent=0 // pred_fallthru
    _
  // Predicated region
  $region22: #{_lambda_.68} parent=0 // pred_check
    _
  $region23: #{_lambda_.68} parent=0 // pred_check_branch
    %851 = sbr.rel (0) target = $region25
  $region24: #{_lambda_.68} parent=0 // pred_region
    _
  $region25: #{_lambda_.68} parent=0 // pred_fallthru
    _
  // Predicated region
  $region26: #{_lambda_.68} parent=0 // pred_check
    _
  $region27: #{_lambda_.68} parent=0 // pred_check_branch
    %853 = sbr.rel (0) target = $region29
  $region28: #{_lambda_.68} parent=0 // pred_region
    _
  $region29: #{_lambda_.68} parent=0 // pred_fallthru
    _
  // Predicated region
  $region30: #{_lambda_.68} parent=0 // pred_check
    _
  $region31: #{_lambda_.68} parent=0 // pred_check_branch
    %855 = sbr.rel (0) target = $region33
  $region32: #{_lambda_.68} parent=0 // pred_region
    _
  $region33: #{_lambda_.68} parent=0 // pred_fallthru
    _

// kernel: _lambda_.75
$region0: #{_lambda_.75}
  #allocation0 [shape = 'u32[]', space=smem, size = 0x4, offset = 0x4, fixed_abs, tag = 'smem constant byte address 0x4 - core index']
  #allocation1 [shape = 'u32[144,128]{1,0:T(1,128)}', space=vmem, size = 0x12000, scoped, tag = 'internal scratch']
  %s0 = inlined_call_operand.vmem [shape: f32[2,4,128], index: 0, kind: input, shape index: {}]
  %s1 = inlined_call_operand.vmem [shape: f32[128,10], index: 1, kind: input, shape index: {}]
  %s2 = inlined_call_operand.vmem [shape: f32[1,10], index: 2, kind: input, shape index: {}]
  %s3 = inlined_call_operand.vmem [shape: f32[2,10], index: 3, kind: output, shape index: {}]
  %s4 = sld [smem:[#allocation0]]
  $region22: #{_lambda_.75} parent=0
    _
  %s6 = ssub.s32 1, %s4
  %s7 = scalar_select 0, %s6, %s4
  // Predicated region
  $region2: #{_lambda_.75} parent=0 // pred_check
    _
  $region3: #{_lambda_.75} parent=0 // pred_check_branch
    %9 = sbr.rel (0) target = $region5
  $region4: #{_lambda_.75} parent=0 // pred_region
    _
  $region5: #{_lambda_.75} parent=0 // pred_fallthru
    _
  // Predicated region
  $region6: #{_lambda_.75} parent=0 // pred_check
    _
  $region7: #{_lambda_.75} parent=0 // pred_check_branch
    %11 = sbr.rel (0) target = $region9
  $region8: #{_lambda_.75} parent=0 // pred_region
    _
  $region9: #{_lambda_.75} parent=0 // pred_fallthru
    _
  // Predicated region
  $region10: #{_lambda_.75} parent=0 // pred_check
    _
  $region11: #{_lambda_.75} parent=0 // pred_check_branch
    %13 = sbr.rel (0) target = $region13
  $region12: #{_lambda_.75} parent=0 // pred_region
    _
  $region13: #{_lambda_.75} parent=0 // pred_fallthru
    _
  %v14 = vld [vmem:[%s0] sm:$0xf]
  %v15 = vld [vmem:[%s0 + $0x4] sm:$0xf]
  %vm16 = vcmask 1043456
  %v17 = vsel %vm16, %v14, 0.0
  %v18 = vrot.slane %v17, 4
  %v19 = vadd.f32 %v17, %v18
  %v20 = vrot.slane %v19, 2
  %v21 = vadd.f32 %v19, %v20
  %v22 = vrot.slane %v21, 1
  %v23 = vadd.f32 %v21, %v22
  %v24 = vsel %vm16, %v15, 0.0
  %v25 = vrot.slane %v24, 4
  %v26 = vadd.f32 %v24, %v25
  %v27 = vrot.slane %v26, 2
  %v28 = vadd.f32 %v26, %v27
  %v29 = vrot.slane %v28, 1
  %v30 = vadd.f32 %v28, %v29
  %v31 = vrcp.pop 4.0
  %v32 = vmul.f32 %v23, %v31
  %v33 = vmul.f32 %v30, %v31
  %v34 = vld [vmem:[%s1] sm:$0xff]
  %v35 = vld [vmem:[%s1 + $0x8] sm:$0xff]
  %v36 = vld [vmem:[%s1 + $0x10] sm:$0xff]
  %v37 = vld [vmem:[%s1 + $0x18] sm:$0xff]
  %v38 = vld [vmem:[%s1 + $0x20] sm:$0xff]
  %v39 = vld [vmem:[%s1 + $0x28] sm:$0xff]
  %v40 = vld [vmem:[%s1 + $0x30] sm:$0xff]
  %v41 = vld [vmem:[%s1 + $0x38] sm:$0xff]
  %v42 = vld [vmem:[%s1 + $0x40] sm:$0xff]
  %v43 = vld [vmem:[%s1 + $0x48] sm:$0xff]
  %v44 = vld [vmem:[%s1 + $0x50] sm:$0xff]
  %v45 = vld [vmem:[%s1 + $0x58] sm:$0xff]
  %v46 = vld [vmem:[%s1 + $0x60] sm:$0xff]
  %v47 = vld [vmem:[%s1 + $0x68] sm:$0xff]
  %v48 = vld [vmem:[%s1 + $0x70] sm:$0xff]
  %v49 = vld [vmem:[%s1 + $0x78] sm:$0xff]
  %v50 = vld [vmem:[%s2] sm:$0x1]
  %v52 = vlaneseq
  %v53 = vshrl.u32 %v52, 7
  %v54 = vsub.s32 0, %v53
  %v55 = vrot.slane %v50, %v54
  %vm59 = vcmask 1041409
  %v60 = vsel %vm59, %v33, %v32
  %62 = vmatprep.subr.mxu0 0.0
  %63 = vmatpush1.msra.mxu0 %v34
  %64 = vmatprep.subr.mxu0 0.0
  %65 = vmatpush1.msra.mxu0 %v35
  %66 = vmatprep.subr.mxu0 0.0
  %67 = vmatpush1.msra.mxu0 %v36
  %68 = vmatprep.subr.mxu0 0.0
  %69 = vmatpush1.msra.mxu0 %v37
  %70 = vmatprep.subr.mxu0 0.0
  %71 = vmatpush1.msra.mxu0 %v38
  %72 = vmatprep.subr.mxu0 0.0
  %73 = vmatpush1.msra.mxu0 %v39
  %74 = vmatprep.subr.mxu0 0.0
  %75 = vmatpush1.msra.mxu0 %v40
  %76 = vmatprep.subr.mxu0 0.0
  %77 = vmatpush1.msra.mxu0 %v41
  %78 = vmatprep.subr.mxu0 0.0
  %79 = vmatpush1.msra.mxu0 %v42
  %80 = vmatprep.subr.mxu0 0.0
  %81 = vmatpush1.msra.mxu0 %v43
  %82 = vmatprep.subr.mxu0 0.0
  %83 = vmatpush1.msra.mxu0 %v44
  %84 = vmatprep.subr.mxu0 0.0
  %85 = vmatpush1.msra.mxu0 %v45
  %86 = vmatprep.subr.mxu0 0.0
  %87 = vmatpush1.msra.mxu0 %v46
  %88 = vmatprep.subr.mxu0 0.0
  %89 = vmatpush1.msra.mxu0 %v47
  %90 = vmatprep.subr.mxu0 0.0
  %91 = vmatpush1.msra.mxu0 %v48
  %92 = vmatprep.subr.mxu0 0.0
  %93 = vmatpush1.msra.mxu0 %v49
  %94 = vmatprep.subr.mxu0 0.0
  %95 = vmatpush1.msra.mxu0 0.0
  %96 = vmatprep.subr.mxu0 0.0
  %97 = vmatpush1.msra.mxu0 0.0
  %98 = vmatprep.subr.mxu0 0.0
  %99 = vmatpush1.msra.mxu0 0.0
  %100 = vmatprep.subr.mxu0 0.0
  %101 = vmatpush1.msra.mxu0 0.0
  %102 = vmatprep.subr.mxu0 0.0
  %103 = vmatpush1.msra.mxu0 0.0
  %104 = vmatprep.subr.mxu0 0.0
  %105 = vmatpush1.msra.mxu0 0.0
  %106 = vmatprep.subr.mxu0 0.0
  %107 = vmatpush1.msra.mxu0 0.0
  %108 = vmatprep.subr.mxu0 0.0
  %109 = vmatpush1.msra.mxu0 0.0
  %110 = vmatprep.subr.mxu0 0.0
  %111 = vmatpush1.msra.mxu0 0.0
  %112 = vmatprep.subr.mxu0 0.0
  %113 = vmatpush1.msra.mxu0 0.0
  %114 = vmatprep.subr.mxu0 0.0
  %115 = vmatpush1.msra.mxu0 0.0
  %116 = vmatprep.subr.mxu0 0.0
  %117 = vmatpush1.msra.mxu0 0.0
  %118 = vmatprep.subr.mxu0 0.0
  %119 = vmatpush1.msra.mxu0 0.0
  %120 = vmatprep.subr.mxu0 0.0
  %121 = vmatpush1.msra.mxu0 0.0
  %122 = vmatprep.subr.mxu0 0.0
  %123 = vmatpush1.msra.mxu0 0.0
  %124 = vmatprep.subr.mxu0 0.0
  %125 = vmatpush1.msra.mxu0 0.0
  %126 = vmatprep.mubr.f32.mxu0 0.0
  %127 = vmatmul.mubr.f32.gmra.mrb[0].mxu0 %v60
  %v128 = vpop.f32.mrb[0].mxu0
  %v129 = vadd.f32 %v55, %v128
  %v130 = vpop.f32.mrb[0].mxu0
  %131 = vdwg.mxu0
  %vm132 = vcmask 74752
  %133 = vst.msk [vmem:[%s3] sm:$0x3] %vm132, %v129
  // Predicated region
  $region14: #{_lambda_.75} parent=0 // pred_check
    _
  $region15: #{_lambda_.75} parent=0 // pred_check_branch
    %135 = sbr.rel (0) target = $region17
  $region16: #{_lambda_.75} parent=0 // pred_region
    _
  $region17: #{_lambda_.75} parent=0 // pred_fallthru
    _
  // Predicated region
  $region18: #{_lambda_.75} parent=0 // pred_check
    _
  $region19: #{_lambda_.75} parent=0 // pred_check_branch
    %137 = sbr.rel (0) target = $region21
  $region20: #{_lambda_.75} parent=0 // pred_region
    _
  $region21: #{_lambda_.75} parent=0 // pred_fallthru
    _

</llo_original>
